<compile_context>
chip_gen: v7x
topology: tpu7x:2x2x1
jax: 0.10.0
libtpu: 0.0.40
codegen_flags: <defaults>
</compile_context>

<pallas_src>
import functools

import numpy as np
import jax
import jax.numpy as jnp
from jax.experimental import pallas as pl
from jax.experimental.pallas import tpu as pltpu


# ----------------------------- Pallas kernels -----------------------------

def _fused_matmul_kernel(*refs, relu, has_bias, has_res):
    """o = [relu]( A @ B (+ bias) (+ residual) ), f32 accumulation on the MXU."""
    a_ref, b_ref = refs[0], refs[1]
    idx = 2
    bias_ref = None
    res_ref = None
    if has_bias:
        bias_ref = refs[idx]
        idx += 1
    if has_res:
        res_ref = refs[idx]
        idx += 1
    o_ref = refs[idx]

    acc = jnp.dot(a_ref[...], b_ref[...], preferred_element_type=jnp.float32)
    if has_bias:
        acc = acc + bias_ref[...]
    if has_res:
        acc = acc + res_ref[...]
    if relu:
        acc = jnp.maximum(acc, 0.0)
    o_ref[...] = acc


def fused_matmul(a, b, bias=None, residual=None, relu=False):
    """(M,K) @ (K,N) [+ bias] [+ residual] [ReLU].  A/B in bf16, f32 accumulate."""
    M, K = a.shape
    K2, N = b.shape
    assert K == K2
    a = a.astype(jnp.bfloat16)
    b = b.astype(jnp.bfloat16)

    # Tile M when it divides cleanly; otherwise a single full-extent block.
    tile_m = M
    for cand in (512, 256, 128):
        if M > cand and M % cand == 0:
            tile_m = cand
            break
    grid = (M // tile_m,)

    in_specs = [
        pl.BlockSpec((tile_m, K), lambda i: (i, 0)),
        pl.BlockSpec((K, N), lambda i: (0, 0)),
    ]
    inputs = [a, b]
    if bias is not None:
        in_specs.append(pl.BlockSpec((1, N), lambda i: (0, 0)))
        inputs.append(bias.reshape(1, N).astype(jnp.float32))
    if residual is not None:
        in_specs.append(pl.BlockSpec((tile_m, N), lambda i: (i, 0)))
        inputs.append(residual.astype(jnp.float32))

    kernel = functools.partial(_fused_matmul_kernel, relu=relu,
                               has_bias=bias is not None,
                               has_res=residual is not None)
    return pl.pallas_call(
        kernel,
        out_shape=jax.ShapeDtypeStruct((M, N), jnp.float32),
        grid=grid,
        in_specs=in_specs,
        out_specs=pl.BlockSpec((tile_m, N), lambda i: (i, 0)),
        compiler_params=pltpu.CompilerParams(
            dimension_semantics=("parallel",)),
    )(*inputs)


def _maxpool_kernel(p00_ref, p01_ref, p10_ref, p11_ref, o_ref, *, OH, OW):
    """3x3 / stride 2 / pad 1 max pool from 4 stride-phase tensors (9-tap max)."""
    phase = {(0, 0): p00_ref, (0, 1): p01_ref,
             (1, 0): p10_ref, (1, 1): p11_ref}
    out = None
    for kh in range(3):
        for kw in range(3):
            ref = phase[(kh % 2, kw % 2)]
            r0, c0 = kh // 2, kw // 2
            v = ref[:, r0:r0 + OH, c0:c0 + OW, :]
            out = v if out is None else jnp.maximum(out, v)
    o_ref[...] = out


def maxpool_3x3_s2_p1(x):
    """MaxPool2d(3, stride=2, padding=1) in one Pallas kernel (no 9x HBM stack)."""
    N, H, W, C = x.shape
    OH = (H + 2 - 3) // 2 + 1
    OW = (W + 2 - 3) // 2 + 1
    xp = jnp.pad(x, ((0, 0), (1, 1), (1, 1), (0, 0)),
                 constant_values=-jnp.inf)
    # Stride-2 phase decomposition: phase[a,b][:, i, j, :] = xp[:, 2i+a, 2j+b, :].
    phases = [xp[:, a::2, b::2, :] for a in range(2) for b in range(2)]
    PH, PW = phases[0].shape[1], phases[0].shape[2]

    kernel = functools.partial(_maxpool_kernel, OH=OH, OW=OW)
    phase_spec = pl.BlockSpec((N, PH, PW, C), lambda i: (0, 0, 0, 0))
    return pl.pallas_call(
        kernel,
        out_shape=jax.ShapeDtypeStruct((N, OH, OW, C), jnp.float32),
        grid=(1,),
        in_specs=[phase_spec] * 4,
        out_specs=pl.BlockSpec((N, OH, OW, C), lambda i: (0, 0, 0, 0)),
        compiler_params=pltpu.CompilerParams(
            dimension_semantics=("parallel",)),
    )(*[p.astype(jnp.float32) for p in phases])


# ----------------------------- Layer glue ---------------------------------

def fold_bn(w_oihw, conv_bias, bn_params, eps=1e-5):
    """Fold inference BatchNorm into the conv weight/bias."""
    gamma, beta, mean, var = bn_params
    scale = gamma / jnp.sqrt(var + eps)          # (O,)
    w = w_oihw * scale[:, None, None, None]
    b = beta - mean * scale
    if conv_bias is not None:
        b = b + conv_bias * scale
    return w, b


def conv2d_fused(x, w_oihw, bias, stride, padding, relu=False, residual=None):
    """NHWC conv (im2col glue) + fused Pallas matmul(+bias)(+residual)(+ReLU)."""
    N, H, W, Cin = x.shape
    O, Cin2, KH, KW = w_oihw.shape
    assert Cin == Cin2
    OH = (H + 2 * padding - KH) // stride + 1
    OW = (W + 2 * padding - KW) // stride + 1

    if KH == 1 and KW == 1:
        xs = x if stride == 1 else x[:, ::stride, ::stride, :]
        a = xs.reshape(N * OH * OW, Cin)
    else:
        # TODO(synk): at larger resolutions move the KH*KW tap loop inside the
        # matmul kernel (accumulate per tap) instead of materializing im2col.
        xp = jnp.pad(x, ((0, 0), (padding, padding), (padding, padding), (0, 0)))
        cols = []
        for kh in range(KH):
            for kw in range(KW):
                cols.append(xp[:, kh:kh + stride * OH:stride,
                               kw:kw + stride * OW:stride, :])
        a = jnp.stack(cols, axis=3).reshape(N * OH * OW, KH * KW * Cin)

    wm = jnp.transpose(w_oihw, (2, 3, 1, 0)).reshape(KH * KW * Cin, O)
    res = residual.reshape(N * OH * OW, O) if residual is not None else None
    out = fused_matmul(a, wm, bias=bias, residual=res, relu=relu)
    return out.reshape(N, OH, OW, O)


def _interp_matrix(n_in, n_out):
    """1-D bilinear interpolation weights (align_corners=True)."""
    A = np.zeros((n_out, n_in), np.float32)
    scale = 0.0 if n_out == 1 else (n_in - 1) / (n_out - 1)
    for i in range(n_out):
        src = i * scale
        i0 = min(int(np.floor(src)), n_in - 1)
        i1 = min(i0 + 1, n_in - 1)
        w1 = src - i0
        A[i, i0] += 1.0 - w1
        A[i, i1] += w1
    return A


def upsample_bilinear_align_corners(x, scale):
    """Separable bilinear upsample (align_corners=True): two Pallas matmuls."""
    N, H, W, C = x.shape
    Hout, Wout = H * scale, W * scale
    Kh = jnp.asarray(_interp_matrix(H, Hout))    # (Hout, H)
    Kw = jnp.asarray(_interp_matrix(W, Wout))    # (Wout, W)

    # Interpolate along H: (Hout,H) @ (H, N*W*C)
    xh = jnp.transpose(x, (1, 0, 2, 3)).reshape(H, N * W * C)
    y = fused_matmul(Kh, xh).reshape(Hout, N, W, C)
    # Interpolate along W: (Wout,W) @ (W, N*Hout*C)
    yw = jnp.transpose(y, (2, 1, 0, 3)).reshape(W, N * Hout * C)
    z = fused_matmul(Kw, yw).reshape(Wout, N, Hout, C)
    return jnp.transpose(z, (1, 2, 0, 3))        # (N, Hout, Wout, C)


def basic_block(x, p, stride, has_downsample):
    if has_downsample:
        wd, bd = fold_bn(p['down_w'], None, p['down_bn'])
        identity = conv2d_fused(x, wd, bd, stride=stride, padding=0, relu=False)
    else:
        identity = x
    w1, b1 = fold_bn(p['conv1_w'], None, p['bn1'])
    out = conv2d_fused(x, w1, b1, stride=stride, padding=1, relu=True)
    w2, b2 = fold_bn(p['conv2_w'], None, p['bn2'])
    # BN2 + residual add + ReLU all fused into conv2's matmul epilogue.
    out = conv2d_fused(out, w2, b2, stride=1, padding=1, relu=True,
                       residual=identity)
    return out


# ----------------------------- Parameters ---------------------------------

def _init_conv(key, o, i, kh, kw):
    fan_in = i * kh * kw
    return (jax.random.normal(key, (o, i, kh, kw), jnp.float32)
            / np.sqrt(fan_in)).astype(jnp.float32)


def _init_bn(key, c):
    k1, k2, k3, k4 = jax.random.split(key, 4)
    gamma = 1.0 + 0.1 * jax.random.normal(k1, (c,), jnp.float32)
    beta = 0.1 * jax.random.normal(k2, (c,), jnp.float32)
    mean = 0.1 * jax.random.normal(k3, (c,), jnp.float32)
    var = 0.5 + 0.5 * jnp.abs(jax.random.normal(k4, (c,), jnp.float32))
    return (gamma, beta, mean, var)


def init_params(key):
    ks = list(jax.random.split(key, 32))
    nxt = iter(ks)

    def block_params(cin, cout, downsample):
        p = {
            'conv1_w': _init_conv(next(nxt), cout, cin, 3, 3),
            'bn1': _init_bn(next(nxt), cout),
            'conv2_w': _init_conv(next(nxt), cout, cout, 3, 3),
            'bn2': _init_bn(next(nxt), cout),
        }
        if downsample:
            p['down_w'] = _init_conv(next(nxt), cout, cin, 1, 1)
            p['down_bn'] = _init_bn(next(nxt), cout)
        return p

    return {
        'conv1_w': _init_conv(next(nxt), 64, 3, 7, 7),
        'bn1': _init_bn(next(nxt), 64),
        'l1b0': block_params(64, 64, False),
        'l1b1': block_params(64, 64, False),
        'l2b0': block_params(64, 128, True),
        'l2b1': block_params(128, 128, False),
        'conv1k_w': _init_conv(next(nxt), 3, 192, 1, 1),
        'conv1k_b': 0.1 * jax.random.normal(next(nxt), (3,), jnp.float32),
    }


# ----------------------------- Forward ------------------------------------

def fcn_small_forward(x_nchw, params):
    # NCHW in / NCHW out (PyTorch convention); NHWC inside.
    x = jnp.transpose(x_nchw, (0, 2, 3, 1)).astype(jnp.float32)

    # self.layer1 = Sequential(conv1, bn1, relu, maxpool, resnet.layer1)
    w1, b1 = fold_bn(params['conv1_w'], None, params['bn1'])
    x = conv2d_fused(x, w1, b1, stride=2, padding=3, relu=True)
    x = maxpool_3x3_s2_p1(x)
    x = basic_block(x, params['l1b0'], stride=1, has_downsample=False)
    x = basic_block(x, params['l1b1'], stride=1, has_downsample=False)

    up1 = upsample_bilinear_align_corners(x, 4)            # (N, H, W, 64)

    # self.layer2 = resnet.layer2
    x = basic_block(x, params['l2b0'], stride=2, has_downsample=True)
    x = basic_block(x, params['l2b1'], stride=1, has_downsample=False)

    up2 = upsample_bilinear_align_corners(x, 8)            # (N, H, W, 128)

    merge = jnp.concatenate([up1, up2], axis=-1)           # (N, H, W, 192)
    N, H, W, C = merge.shape

    # Final 1x1 conv: pad 3 -> 128 output channels for lane-dense MXU/store,
    # slice the 3 real channels afterwards in glue.
    w1k = jnp.transpose(params['conv1k_w'], (2, 3, 1, 0)).reshape(C, 3)
    w1k_pad = jnp.pad(w1k, ((0, 0), (0, 125)))
    b1k_pad = jnp.pad(params['conv1k_b'], (0, 125))
    out = fused_matmul(merge.reshape(N * H * W, C), w1k_pad, bias=b1k_pad)
    out = out[:, :3].reshape(N, H, W, 3)
    # Note: self.sigmoid is defined in __init__ but NOT applied in forward().
    return jnp.transpose(out, (0, 3, 1, 2))                # NCHW


# ----------------------------- Main ----------------------------------------

if __name__ == "__main__":
    key = jax.random.PRNGKey(0)
    k_params, k_x = jax.random.split(key)
    params = init_params(k_params)

    # ResNet18 stem expects 3 input channels; 32x32 spatial survives /2,/2,/2
    # and the x4 / x8 upsamples cleanly.
    x = jax.random.normal(k_x, (2, 3, 32, 32), jnp.float32)   # NCHW

    fwd = jax.jit(fcn_small_forward)
    out = fwd(x, params)
    out = jax.block_until_ready(out)

    assert out.shape == (2, 3, 32, 32), out.shape
    assert out.dtype == jnp.float32
    assert bool(jnp.all(jnp.isfinite(out)))
    print("KERNEL_OK")
</pallas_src>

<mosaic_0001>
module attributes {stable_mosaic.version = 11 : i64} {
  func.func @_fused_matmul_kernel(%arg0: i32, %arg1: memref<256x147xbf16, #tpu.memory_space<vmem>>, %arg2: memref<147x64xbf16, #tpu.memory_space<vmem>>, %arg3: memref<1x64xf32, #tpu.memory_space<vmem>>, %arg4: memref<256x64xf32, #tpu.memory_space<vmem>>) attributes {dimension_semantics = [#tpu.dimension_semantics<parallel>], iteration_bounds = array<i64: 2>, scalar_prefetch = 0 : i64, scratch_operands = 0 : i64, tpu.core_type = #tpu.core_type<tc>, window_params = [{transform_indices = @transform_0, window_bounds = array<i64: 256, 147>}, {pipeline_mode = #tpu.pipeline_mode<synchronous>, transform_indices = @transform_1, window_bounds = array<i64: 147, 64>}, {pipeline_mode = #tpu.pipeline_mode<synchronous>, transform_indices = @transform_2, window_bounds = array<i64: 1, 64>}, {transform_indices = @transform_3, window_bounds = array<i64: 256, 64>}]} {
    %c0 = arith.constant 0 : index
    %c0_0 = arith.constant 0 : index
    %0 = vector.load %arg1[%c0, %c0_0] : memref<256x147xbf16, #tpu.memory_space<vmem>>, vector<256x147xbf16>
    %c0_1 = arith.constant 0 : index
    %c0_2 = arith.constant 0 : index
    %1 = vector.load %arg2[%c0_1, %c0_2] : memref<147x64xbf16, #tpu.memory_space<vmem>>, vector<147x64xbf16>
    %cst = arith.constant dense<0.000000e+00> : vector<256x64xf32>
    %2 = tpu.matmul %0, %1, %cst {dimension_numbers = #tpu.dot_dimension_numbers<[1], [0], [0], [1], [0, 0, 1, 1], [], []>} : vector<256x147xbf16>, vector<147x64xbf16>, vector<256x64xf32> -> vector<256x64xf32>
    %c0_3 = arith.constant 0 : index
    %c0_4 = arith.constant 0 : index
    %3 = vector.load %arg3[%c0_3, %c0_4] : memref<1x64xf32, #tpu.memory_space<vmem>>, vector<1x64xf32>
    %4 = vector.broadcast %3 : vector<1x64xf32> to vector<256x64xf32>
    %5 = arith.addf %2, %4 : vector<256x64xf32>
    %cst_5 = arith.constant 0.000000e+00 : f32
    %6 = vector.broadcast %cst_5 : f32 to vector<256x64xf32>
    %7 = arith.maximumf %5, %6 : vector<256x64xf32>
    %c0_6 = arith.constant 0 : index
    %c0_7 = arith.constant 0 : index
    %8 = vector.load %arg4[%c0_6, %c0_7] : memref<256x64xf32, #tpu.memory_space<vmem>>, vector<256x64xf32>
    tpu.vector_store %arg4[%c0_6, %c0_7], %7 {strides = array<i32>} : memref<256x64xf32, #tpu.memory_space<vmem>>, vector<256x64xf32>,
    return
  }
  func.func @transform_0(%arg0: i32) -> (i32, i32) {
    %c0_i32 = arith.constant 0 : i32
    %c0_i32_0 = arith.constant 0 : i32
    return %arg0, %c0_i32 : i32, i32
  }
  func.func @transform_1(%arg0: i32) -> (i32, i32) {
    %c0_i32 = arith.constant 0 : i32
    %c0_i32_0 = arith.constant 0 : i32
    %c0_i32_1 = arith.constant 0 : i32
    return %c0_i32, %c0_i32_0 : i32, i32
  }
  func.func @transform_2(%arg0: i32) -> (i32, i32) {
    %c0_i32 = arith.constant 0 : i32
    %c0_i32_0 = arith.constant 0 : i32
    %c0_i32_1 = arith.constant 0 : i32
    return %c0_i32, %c0_i32_0 : i32, i32
  }
  func.func @transform_3(%arg0: i32) -> (i32, i32) {
    %c0_i32 = arith.constant 0 : i32
    %c0_i32_0 = arith.constant 0 : i32
    return %arg0, %c0_i32 : i32, i32
  }
}

module attributes {stable_mosaic.version = 11 : i64} {
  func.func @_maxpool_kernel(%arg0: i32, %arg1: memref<2x9x9x64xf32, #tpu.memory_space<vmem>>, %arg2: memref<2x9x9x64xf32, #tpu.memory_space<vmem>>, %arg3: memref<2x9x9x64xf32, #tpu.memory_space<vmem>>, %arg4: memref<2x9x9x64xf32, #tpu.memory_space<vmem>>, %arg5: memref<2x8x8x64xf32, #tpu.memory_space<vmem>>) attributes {dimension_semantics = [#tpu.dimension_semantics<parallel>], iteration_bounds = array<i64: 1>, scalar_prefetch = 0 : i64, scratch_operands = 0 : i64, tpu.core_type = #tpu.core_type<tc>, window_params = [{pipeline_mode = #tpu.pipeline_mode<synchronous>, transform_indices = @transform_0, window_bounds = array<i64: 2, 9, 9, 64>}, {pipeline_mode = #tpu.pipeline_mode<synchronous>, transform_indices = @transform_1, window_bounds = array<i64: 2, 9, 9, 64>}, {pipeline_mode = #tpu.pipeline_mode<synchronous>, transform_indices = @transform_2, window_bounds = array<i64: 2, 9, 9, 64>}, {pipeline_mode = #tpu.pipeline_mode<synchronous>, transform_indices = @transform_3, window_bounds = array<i64: 2, 9, 9, 64>}, {pipeline_mode = #tpu.pipeline_mode<synchronous>, transform_indices = @transform_4, window_bounds = array<i64: 2, 8, 8, 64>}]} {
    %c0 = arith.constant 0 : index
    %c0_0 = arith.constant 0 : index
    %c0_1 = arith.constant 0 : index
    %c0_2 = arith.constant 0 : index
    %0 = vector.load %arg1[%c0, %c0_0, %c0_1, %c0_2] : memref<2x9x9x64xf32, #tpu.memory_space<vmem>>, vector<2x8x8x64xf32>
    %c0_3 = arith.constant 0 : index
    %c0_4 = arith.constant 0 : index
    %c0_5 = arith.constant 0 : index
    %c0_6 = arith.constant 0 : index
    %1 = vector.load %arg2[%c0_3, %c0_4, %c0_5, %c0_6] : memref<2x9x9x64xf32, #tpu.memory_space<vmem>>, vector<2x8x8x64xf32>
    %2 = arith.maximumf %0, %1 : vector<2x8x8x64xf32>
    %c0_7 = arith.constant 0 : index
    %c0_8 = arith.constant 0 : index
    %c1 = arith.constant 1 : index
    %c0_9 = arith.constant 0 : index
    %3 = vector.load %arg1[%c0_7, %c0_8, %c1, %c0_9] : memref<2x9x9x64xf32, #tpu.memory_space<vmem>>, vector<2x8x8x64xf32>
    %4 = arith.maximumf %2, %3 : vector<2x8x8x64xf32>
    %c0_10 = arith.constant 0 : index
    %c0_11 = arith.constant 0 : index
    %c0_12 = arith.constant 0 : index
    %c0_13 = arith.constant 0 : index
    %5 = vector.load %arg3[%c0_10, %c0_11, %c0_12, %c0_13] : memref<2x9x9x64xf32, #tpu.memory_space<vmem>>, vector<2x8x8x64xf32>
    %6 = arith.maximumf %4, %5 : vector<2x8x8x64xf32>
    %c0_14 = arith.constant 0 : index
    %c0_15 = arith.constant 0 : index
    %c0_16 = arith.constant 0 : index
    %c0_17 = arith.constant 0 : index
    %7 = vector.load %arg4[%c0_14, %c0_15, %c0_16, %c0_17] : memref<2x9x9x64xf32, #tpu.memory_space<vmem>>, vector<2x8x8x64xf32>
    %8 = arith.maximumf %6, %7 : vector<2x8x8x64xf32>
    %c0_18 = arith.constant 0 : index
    %c0_19 = arith.constant 0 : index
    %c1_20 = arith.constant 1 : index
    %c0_21 = arith.constant 0 : index
    %9 = vector.load %arg3[%c0_18, %c0_19, %c1_20, %c0_21] : memref<2x9x9x64xf32, #tpu.memory_space<vmem>>, vector<2x8x8x64xf32>
    %10 = arith.maximumf %8, %9 : vector<2x8x8x64xf32>
    %c0_22 = arith.constant 0 : index
    %c1_23 = arith.constant 1 : index
    %c0_24 = arith.constant 0 : index
    %c0_25 = arith.constant 0 : index
    %11 = vector.load %arg1[%c0_22, %c1_23, %c0_24, %c0_25] : memref<2x9x9x64xf32, #tpu.memory_space<vmem>>, vector<2x8x8x64xf32>
    %12 = arith.maximumf %10, %11 : vector<2x8x8x64xf32>
    %c0_26 = arith.constant 0 : index
    %c1_27 = arith.constant 1 : index
    %c0_28 = arith.constant 0 : index
    %c0_29 = arith.constant 0 : index
    %13 = vector.load %arg2[%c0_26, %c1_27, %c0_28, %c0_29] : memref<2x9x9x64xf32, #tpu.memory_space<vmem>>, vector<2x8x8x64xf32>
    %14 = arith.maximumf %12, %13 : vector<2x8x8x64xf32>
    %c0_30 = arith.constant 0 : index
    %c1_31 = arith.constant 1 : index
    %c1_32 = arith.constant 1 : index
    %c0_33 = arith.constant 0 : index
    %15 = vector.load %arg1[%c0_30, %c1_31, %c1_32, %c0_33] : memref<2x9x9x64xf32, #tpu.memory_space<vmem>>, vector<2x8x8x64xf32>
    %16 = arith.maximumf %14, %15 : vector<2x8x8x64xf32>
    %c0_34 = arith.constant 0 : index
    %c0_35 = arith.constant 0 : index
    %c0_36 = arith.constant 0 : index
    %c0_37 = arith.constant 0 : index
    %17 = vector.load %arg5[%c0_34, %c0_35, %c0_36, %c0_37] : memref<2x8x8x64xf32, #tpu.memory_space<vmem>>, vector<2x8x8x64xf32>
    tpu.vector_store %arg5[%c0_34, %c0_35, %c0_36, %c0_37], %16 {strides = array<i32>} : memref<2x8x8x64xf32, #tpu.memory_space<vmem>>, vector<2x8x8x64xf32>,
    return
  }
  func.func @transform_0(%arg0: i32) -> (i32, i32, i32, i32) {
    %c0_i32 = arith.constant 0 : i32
    %c0_i32_0 = arith.constant 0 : i32
    %c0_i32_1 = arith.constant 0 : i32
    %c0_i32_2 = arith.constant 0 : i32
    %c0_i32_3 = arith.constant 0 : i32
    return %c0_i32, %c0_i32_0, %c0_i32_1, %c0_i32_2 : i32, i32, i32, i32
  }
  func.func @transform_1(%arg0: i32) -> (i32, i32, i32, i32) {
    %c0_i32 = arith.constant 0 : i32
    %c0_i32_0 = arith.constant 0 : i32
    %c0_i32_1 = arith.constant 0 : i32
    %c0_i32_2 = arith.constant 0 : i32
    %c0_i32_3 = arith.constant 0 : i32
    return %c0_i32, %c0_i32_0, %c0_i32_1, %c0_i32_2 : i32, i32, i32, i32
  }
  func.func @transform_2(%arg0: i32) -> (i32, i32, i32, i32) {
    %c0_i32 = arith.constant 0 : i32
    %c0_i32_0 = arith.constant 0 : i32
    %c0_i32_1 = arith.constant 0 : i32
    %c0_i32_2 = arith.constant 0 : i32
    %c0_i32_3 = arith.constant 0 : i32
    return %c0_i32, %c0_i32_0, %c0_i32_1, %c0_i32_2 : i32, i32, i32, i32
  }
  func.func @transform_3(%arg0: i32) -> (i32, i32, i32, i32) {
    %c0_i32 = arith.constant 0 : i32
    %c0_i32_0 = arith.constant 0 : i32
    %c0_i32_1 = arith.constant 0 : i32
    %c0_i32_2 = arith.constant 0 : i32
    %c0_i32_3 = arith.constant 0 : i32
    return %c0_i32, %c0_i32_0, %c0_i32_1, %c0_i32_2 : i32, i32, i32, i32
  }
  func.func @transform_4(%arg0: i32) -> (i32, i32, i32, i32) {
    %c0_i32 = arith.constant 0 : i32
    %c0_i32_0 = arith.constant 0 : i32
    %c0_i32_1 = arith.constant 0 : i32
    %c0_i32_2 = arith.constant 0 : i32
    %c0_i32_3 = arith.constant 0 : i32
    return %c0_i32, %c0_i32_0, %c0_i32_1, %c0_i32_2 : i32, i32, i32, i32
  }
}

module attributes {stable_mosaic.version = 11 : i64} {
  func.func @_fused_matmul_kernel(%arg0: i32, %arg1: memref<128x576xbf16, #tpu.memory_space<vmem>>, %arg2: memref<576x64xbf16, #tpu.memory_space<vmem>>, %arg3: memref<1x64xf32, #tpu.memory_space<vmem>>, %arg4: memref<128x64xf32, #tpu.memory_space<vmem>>) attributes {dimension_semantics = [#tpu.dimension_semantics<parallel>], iteration_bounds = array<i64: 1>, scalar_prefetch = 0 : i64, scratch_operands = 0 : i64, tpu.core_type = #tpu.core_type<tc>, window_params = [{transform_indices = @transform_0, window_bounds = array<i64: 128, 576>}, {pipeline_mode = #tpu.pipeline_mode<synchronous>, transform_indices = @transform_1, window_bounds = array<i64: 576, 64>}, {pipeline_mode = #tpu.pipeline_mode<synchronous>, transform_indices = @transform_2, window_bounds = array<i64: 1, 64>}, {transform_indices = @transform_3, window_bounds = array<i64: 128, 64>}]} {
    %c0 = arith.constant 0 : index
    %c0_0 = arith.constant 0 : index
    %0 = vector.load %arg1[%c0, %c0_0] : memref<128x576xbf16, #tpu.memory_space<vmem>>, vector<128x576xbf16>
    %c0_1 = arith.constant 0 : index
    %c0_2 = arith.constant 0 : index
    %1 = vector.load %arg2[%c0_1, %c0_2] : memref<576x64xbf16, #tpu.memory_space<vmem>>, vector<576x64xbf16>
    %cst = arith.constant dense<0.000000e+00> : vector<128x64xf32>
    %2 = tpu.matmul %0, %1, %cst {dimension_numbers = #tpu.dot_dimension_numbers<[1], [0], [0], [1], [0, 0, 1, 1], [], []>} : vector<128x576xbf16>, vector<576x64xbf16>, vector<128x64xf32> -> vector<128x64xf32>
    %c0_3 = arith.constant 0 : index
    %c0_4 = arith.constant 0 : index
    %3 = vector.load %arg3[%c0_3, %c0_4] : memref<1x64xf32, #tpu.memory_space<vmem>>, vector<1x64xf32>
    %4 = vector.broadcast %3 : vector<1x64xf32> to vector<128x64xf32>
    %5 = arith.addf %2, %4 : vector<128x64xf32>
    %cst_5 = arith.constant 0.000000e+00 : f32
    %6 = vector.broadcast %cst_5 : f32 to vector<128x64xf32>
    %7 = arith.maximumf %5, %6 : vector<128x64xf32>
    %c0_6 = arith.constant 0 : index
    %c0_7 = arith.constant 0 : index
    %8 = vector.load %arg4[%c0_6, %c0_7] : memref<128x64xf32, #tpu.memory_space<vmem>>, vector<128x64xf32>
    tpu.vector_store %arg4[%c0_6, %c0_7], %7 {strides = array<i32>} : memref<128x64xf32, #tpu.memory_space<vmem>>, vector<128x64xf32>,
    return
  }
  func.func @transform_0(%arg0: i32) -> (i32, i32) {
    %c0_i32 = arith.constant 0 : i32
    %c0_i32_0 = arith.constant 0 : i32
    return %arg0, %c0_i32 : i32, i32
  }
  func.func @transform_1(%arg0: i32) -> (i32, i32) {
    %c0_i32 = arith.constant 0 : i32
    %c0_i32_0 = arith.constant 0 : i32
    %c0_i32_1 = arith.constant 0 : i32
    return %c0_i32, %c0_i32_0 : i32, i32
  }
  func.func @transform_2(%arg0: i32) -> (i32, i32) {
    %c0_i32 = arith.constant 0 : i32
    %c0_i32_0 = arith.constant 0 : i32
    %c0_i32_1 = arith.constant 0 : i32
    return %c0_i32, %c0_i32_0 : i32, i32
  }
  func.func @transform_3(%arg0: i32) -> (i32, i32) {
    %c0_i32 = arith.constant 0 : i32
    %c0_i32_0 = arith.constant 0 : i32
    return %arg0, %c0_i32 : i32, i32
  }
}

module attributes {stable_mosaic.version = 11 : i64} {
  func.func @_fused_matmul_kernel(%arg0: i32, %arg1: memref<128x576xbf16, #tpu.memory_space<vmem>>, %arg2: memref<576x64xbf16, #tpu.memory_space<vmem>>, %arg3: memref<1x64xf32, #tpu.memory_space<vmem>>, %arg4: memref<128x64xf32, #tpu.memory_space<vmem>>, %arg5: memref<128x64xf32, #tpu.memory_space<vmem>>) attributes {dimension_semantics = [#tpu.dimension_semantics<parallel>], iteration_bounds = array<i64: 1>, scalar_prefetch = 0 : i64, scratch_operands = 0 : i64, tpu.core_type = #tpu.core_type<tc>, window_params = [{transform_indices = @transform_0, window_bounds = array<i64: 128, 576>}, {pipeline_mode = #tpu.pipeline_mode<synchronous>, transform_indices = @transform_1, window_bounds = array<i64: 576, 64>}, {pipeline_mode = #tpu.pipeline_mode<synchronous>, transform_indices = @transform_2, window_bounds = array<i64: 1, 64>}, {transform_indices = @transform_3, window_bounds = array<i64: 128, 64>}, {transform_indices = @transform_4, window_bounds = array<i64: 128, 64>}]} {
    %c0 = arith.constant 0 : index
    %c0_0 = arith.constant 0 : index
    %0 = vector.load %arg1[%c0, %c0_0] : memref<128x576xbf16, #tpu.memory_space<vmem>>, vector<128x576xbf16>
    %c0_1 = arith.constant 0 : index
    %c0_2 = arith.constant 0 : index
    %1 = vector.load %arg2[%c0_1, %c0_2] : memref<576x64xbf16, #tpu.memory_space<vmem>>, vector<576x64xbf16>
    %cst = arith.constant dense<0.000000e+00> : vector<128x64xf32>
    %2 = tpu.matmul %0, %1, %cst {dimension_numbers = #tpu.dot_dimension_numbers<[1], [0], [0], [1], [0, 0, 1, 1], [], []>} : vector<128x576xbf16>, vector<576x64xbf16>, vector<128x64xf32> -> vector<128x64xf32>
    %c0_3 = arith.constant 0 : index
    %c0_4 = arith.constant 0 : index
    %3 = vector.load %arg3[%c0_3, %c0_4] : memref<1x64xf32, #tpu.memory_space<vmem>>, vector<1x64xf32>
    %4 = vector.broadcast %3 : vector<1x64xf32> to vector<128x64xf32>
    %5 = arith.addf %2, %4 : vector<128x64xf32>
    %c0_5 = arith.constant 0 : index
    %c0_6 = arith.constant 0 : index
    %6 = vector.load %arg4[%c0_5, %c0_6] : memref<128x64xf32, #tpu.memory_space<vmem>>, vector<128x64xf32>
    %7 = arith.addf %5, %6 : vector<128x64xf32>
    %cst_7 = arith.constant 0.000000e+00 : f32
    %8 = vector.broadcast %cst_7 : f32 to vector<128x64xf32>
    %9 = arith.maximumf %7, %8 : vector<128x64xf32>
    %c0_8 = arith.constant 0 : index
    %c0_9 = arith.constant 0 : index
    %10 = vector.load %arg5[%c0_8, %c0_9] : memref<128x64xf32, #tpu.memory_space<vmem>>, vector<128x64xf32>
    tpu.vector_store %arg5[%c0_8, %c0_9], %9 {strides = array<i32>} : memref<128x64xf32, #tpu.memory_space<vmem>>, vector<128x64xf32>,
    return
  }
  func.func @transform_0(%arg0: i32) -> (i32, i32) {
    %c0_i32 = arith.constant 0 : i32
    %c0_i32_0 = arith.constant 0 : i32
    return %arg0, %c0_i32 : i32, i32
  }
  func.func @transform_1(%arg0: i32) -> (i32, i32) {
    %c0_i32 = arith.constant 0 : i32
    %c0_i32_0 = arith.constant 0 : i32
    %c0_i32_1 = arith.constant 0 : i32
    return %c0_i32, %c0_i32_0 : i32, i32
  }
  func.func @transform_2(%arg0: i32) -> (i32, i32) {
    %c0_i32 = arith.constant 0 : i32
    %c0_i32_0 = arith.constant 0 : i32
    %c0_i32_1 = arith.constant 0 : i32
    return %c0_i32, %c0_i32_0 : i32, i32
  }
  func.func @transform_3(%arg0: i32) -> (i32, i32) {
    %c0_i32 = arith.constant 0 : i32
    %c0_i32_0 = arith.constant 0 : i32
    return %arg0, %c0_i32 : i32, i32
  }
  func.func @transform_4(%arg0: i32) -> (i32, i32) {
    %c0_i32 = arith.constant 0 : i32
    %c0_i32_0 = arith.constant 0 : i32
    return %arg0, %c0_i32 : i32, i32
  }
}

module attributes {stable_mosaic.version = 11 : i64} {
  func.func @_fused_matmul_kernel(%arg0: i32, %arg1: memref<32x576xbf16, #tpu.memory_space<vmem>>, %arg2: memref<576x128xbf16, #tpu.memory_space<vmem>>, %arg3: memref<1x128xf32, #tpu.memory_space<vmem>>, %arg4: memref<32x128xf32, #tpu.memory_space<vmem>>) attributes {dimension_semantics = [#tpu.dimension_semantics<parallel>], iteration_bounds = array<i64: 1>, scalar_prefetch = 0 : i64, scratch_operands = 0 : i64, tpu.core_type = #tpu.core_type<tc>, window_params = [{transform_indices = @transform_0, window_bounds = array<i64: 32, 576>}, {pipeline_mode = #tpu.pipeline_mode<synchronous>, transform_indices = @transform_1, window_bounds = array<i64: 576, 128>}, {pipeline_mode = #tpu.pipeline_mode<synchronous>, transform_indices = @transform_2, window_bounds = array<i64: 1, 128>}, {transform_indices = @transform_3, window_bounds = array<i64: 32, 128>}]} {
    %c0 = arith.constant 0 : index
    %c0_0 = arith.constant 0 : index
    %0 = vector.load %arg1[%c0, %c0_0] : memref<32x576xbf16, #tpu.memory_space<vmem>>, vector<32x576xbf16>
    %c0_1 = arith.constant 0 : index
    %c0_2 = arith.constant 0 : index
    %1 = vector.load %arg2[%c0_1, %c0_2] : memref<576x128xbf16, #tpu.memory_space<vmem>>, vector<576x128xbf16>
    %cst = arith.constant dense<0.000000e+00> : vector<32x128xf32>
    %2 = tpu.matmul %0, %1, %cst {dimension_numbers = #tpu.dot_dimension_numbers<[1], [0], [0], [1], [0, 0, 1, 1], [], []>} : vector<32x576xbf16>, vector<576x128xbf16>, vector<32x128xf32> -> vector<32x128xf32>
    %c0_3 = arith.constant 0 : index
    %c0_4 = arith.constant 0 : index
    %3 = vector.load %arg3[%c0_3, %c0_4] : memref<1x128xf32, #tpu.memory_space<vmem>>, vector<1x128xf32>
    %4 = vector.broadcast %3 : vector<1x128xf32> to vector<32x128xf32>
    %5 = arith.addf %2, %4 : vector<32x128xf32>
    %cst_5 = arith.constant 0.000000e+00 : f32
    %6 = vector.broadcast %cst_5 : f32 to vector<32x128xf32>
    %7 = arith.maximumf %5, %6 : vector<32x128xf32>
    %c0_6 = arith.constant 0 : index
    %c0_7 = arith.constant 0 : index
    %8 = vector.load %arg4[%c0_6, %c0_7] : memref<32x128xf32, #tpu.memory_space<vmem>>, vector<32x128xf32>
    tpu.vector_store %arg4[%c0_6, %c0_7], %7 {strides = array<i32>} : memref<32x128xf32, #tpu.memory_space<vmem>>, vector<32x128xf32>,
    return
  }
  func.func @transform_0(%arg0: i32) -> (i32, i32) {
    %c0_i32 = arith.constant 0 : i32
    %c0_i32_0 = arith.constant 0 : i32
    return %arg0, %c0_i32 : i32, i32
  }
  func.func @transform_1(%arg0: i32) -> (i32, i32) {
    %c0_i32 = arith.constant 0 : i32
    %c0_i32_0 = arith.constant 0 : i32
    %c0_i32_1 = arith.constant 0 : i32
    return %c0_i32, %c0_i32_0 : i32, i32
  }
  func.func @transform_2(%arg0: i32) -> (i32, i32) {
    %c0_i32 = arith.constant 0 : i32
    %c0_i32_0 = arith.constant 0 : i32
    %c0_i32_1 = arith.constant 0 : i32
    return %c0_i32, %c0_i32_0 : i32, i32
  }
  func.func @transform_3(%arg0: i32) -> (i32, i32) {
    %c0_i32 = arith.constant 0 : i32
    %c0_i32_0 = arith.constant 0 : i32
    return %arg0, %c0_i32 : i32, i32
  }
}

module attributes {stable_mosaic.version = 11 : i64} {
  func.func @_fused_matmul_kernel(%arg0: i32, %arg1: memref<32x64xbf16, #tpu.memory_space<vmem>>, %arg2: memref<64x128xbf16, #tpu.memory_space<vmem>>, %arg3: memref<1x128xf32, #tpu.memory_space<vmem>>, %arg4: memref<32x128xf32, #tpu.memory_space<vmem>>) attributes {dimension_semantics = [#tpu.dimension_semantics<parallel>], iteration_bounds = array<i64: 1>, scalar_prefetch = 0 : i64, scratch_operands = 0 : i64, tpu.core_type = #tpu.core_type<tc>, window_params = [{transform_indices = @transform_0, window_bounds = array<i64: 32, 64>}, {pipeline_mode = #tpu.pipeline_mode<synchronous>, transform_indices = @transform_1, window_bounds = array<i64: 64, 128>}, {pipeline_mode = #tpu.pipeline_mode<synchronous>, transform_indices = @transform_2, window_bounds = array<i64: 1, 128>}, {transform_indices = @transform_3, window_bounds = array<i64: 32, 128>}]} {
    %c0 = arith.constant 0 : index
    %c0_0 = arith.constant 0 : index
    %0 = vector.load %arg1[%c0, %c0_0] : memref<32x64xbf16, #tpu.memory_space<vmem>>, vector<32x64xbf16>
    %c0_1 = arith.constant 0 : index
    %c0_2 = arith.constant 0 : index
    %1 = vector.load %arg2[%c0_1, %c0_2] : memref<64x128xbf16, #tpu.memory_space<vmem>>, vector<64x128xbf16>
    %cst = arith.constant dense<0.000000e+00> : vector<32x128xf32>
    %2 = tpu.matmul %0, %1, %cst {dimension_numbers = #tpu.dot_dimension_numbers<[1], [0], [0], [1], [0, 0, 1, 1], [], []>} : vector<32x64xbf16>, vector<64x128xbf16>, vector<32x128xf32> -> vector<32x128xf32>
    %c0_3 = arith.constant 0 : index
    %c0_4 = arith.constant 0 : index
    %3 = vector.load %arg3[%c0_3, %c0_4] : memref<1x128xf32, #tpu.memory_space<vmem>>, vector<1x128xf32>
    %4 = vector.broadcast %3 : vector<1x128xf32> to vector<32x128xf32>
    %5 = arith.addf %2, %4 : vector<32x128xf32>
    %c0_5 = arith.constant 0 : index
    %c0_6 = arith.constant 0 : index
    %6 = vector.load %arg4[%c0_5, %c0_6] : memref<32x128xf32, #tpu.memory_space<vmem>>, vector<32x128xf32>
    tpu.vector_store %arg4[%c0_5, %c0_6], %5 {strides = array<i32>} : memref<32x128xf32, #tpu.memory_space<vmem>>, vector<32x128xf32>,
    return
  }
  func.func @transform_0(%arg0: i32) -> (i32, i32) {
    %c0_i32 = arith.constant 0 : i32
    %c0_i32_0 = arith.constant 0 : i32
    return %arg0, %c0_i32 : i32, i32
  }
  func.func @transform_1(%arg0: i32) -> (i32, i32) {
    %c0_i32 = arith.constant 0 : i32
    %c0_i32_0 = arith.constant 0 : i32
    %c0_i32_1 = arith.constant 0 : i32
    return %c0_i32, %c0_i32_0 : i32, i32
  }
  func.func @transform_2(%arg0: i32) -> (i32, i32) {
    %c0_i32 = arith.constant 0 : i32
    %c0_i32_0 = arith.constant 0 : i32
    %c0_i32_1 = arith.constant 0 : i32
    return %c0_i32, %c0_i32_0 : i32, i32
  }
  func.func @transform_3(%arg0: i32) -> (i32, i32) {
    %c0_i32 = arith.constant 0 : i32
    %c0_i32_0 = arith.constant 0 : i32
    return %arg0, %c0_i32 : i32, i32
  }
}

module attributes {stable_mosaic.version = 11 : i64} {
  func.func @_fused_matmul_kernel(%arg0: i32, %arg1: memref<32x1152xbf16, #tpu.memory_space<vmem>>, %arg2: memref<1152x128xbf16, #tpu.memory_space<vmem>>, %arg3: memref<1x128xf32, #tpu.memory_space<vmem>>, %arg4: memref<32x128xf32, #tpu.memory_space<vmem>>, %arg5: memref<32x128xf32, #tpu.memory_space<vmem>>) attributes {dimension_semantics = [#tpu.dimension_semantics<parallel>], iteration_bounds = array<i64: 1>, scalar_prefetch = 0 : i64, scratch_operands = 0 : i64, tpu.core_type = #tpu.core_type<tc>, window_params = [{transform_indices = @transform_0, window_bounds = array<i64: 32, 1152>}, {pipeline_mode = #tpu.pipeline_mode<synchronous>, transform_indices = @transform_1, window_bounds = array<i64: 1152, 128>}, {pipeline_mode = #tpu.pipeline_mode<synchronous>, transform_indices = @transform_2, window_bounds = array<i64: 1, 128>}, {transform_indices = @transform_3, window_bounds = array<i64: 32, 128>}, {transform_indices = @transform_4, window_bounds = array<i64: 32, 128>}]} {
    %c0 = arith.constant 0 : index
    %c0_0 = arith.constant 0 : index
    %0 = vector.load %arg1[%c0, %c0_0] : memref<32x1152xbf16, #tpu.memory_space<vmem>>, vector<32x1152xbf16>
    %c0_1 = arith.constant 0 : index
    %c0_2 = arith.constant 0 : index
    %1 = vector.load %arg2[%c0_1, %c0_2] : memref<1152x128xbf16, #tpu.memory_space<vmem>>, vector<1152x128xbf16>
    %cst = arith.constant dense<0.000000e+00> : vector<32x128xf32>
    %2 = tpu.matmul %0, %1, %cst {dimension_numbers = #tpu.dot_dimension_numbers<[1], [0], [0], [1], [0, 0, 1, 1], [], []>} : vector<32x1152xbf16>, vector<1152x128xbf16>, vector<32x128xf32> -> vector<32x128xf32>
    %c0_3 = arith.constant 0 : index
    %c0_4 = arith.constant 0 : index
    %3 = vector.load %arg3[%c0_3, %c0_4] : memref<1x128xf32, #tpu.memory_space<vmem>>, vector<1x128xf32>
    %4 = vector.broadcast %3 : vector<1x128xf32> to vector<32x128xf32>
    %5 = arith.addf %2, %4 : vector<32x128xf32>
    %c0_5 = arith.constant 0 : index
    %c0_6 = arith.constant 0 : index
    %6 = vector.load %arg4[%c0_5, %c0_6] : memref<32x128xf32, #tpu.memory_space<vmem>>, vector<32x128xf32>
    %7 = arith.addf %5, %6 : vector<32x128xf32>
    %cst_7 = arith.constant 0.000000e+00 : f32
    %8 = vector.broadcast %cst_7 : f32 to vector<32x128xf32>
    %9 = arith.maximumf %7, %8 : vector<32x128xf32>
    %c0_8 = arith.constant 0 : index
    %c0_9 = arith.constant 0 : index
    %10 = vector.load %arg5[%c0_8, %c0_9] : memref<32x128xf32, #tpu.memory_space<vmem>>, vector<32x128xf32>
    tpu.vector_store %arg5[%c0_8, %c0_9], %9 {strides = array<i32>} : memref<32x128xf32, #tpu.memory_space<vmem>>, vector<32x128xf32>,
    return
  }
  func.func @transform_0(%arg0: i32) -> (i32, i32) {
    %c0_i32 = arith.constant 0 : i32
    %c0_i32_0 = arith.constant 0 : i32
    return %arg0, %c0_i32 : i32, i32
  }
  func.func @transform_1(%arg0: i32) -> (i32, i32) {
    %c0_i32 = arith.constant 0 : i32
    %c0_i32_0 = arith.constant 0 : i32
    %c0_i32_1 = arith.constant 0 : i32
    return %c0_i32, %c0_i32_0 : i32, i32
  }
  func.func @transform_2(%arg0: i32) -> (i32, i32) {
    %c0_i32 = arith.constant 0 : i32
    %c0_i32_0 = arith.constant 0 : i32
    %c0_i32_1 = arith.constant 0 : i32
    return %c0_i32, %c0_i32_0 : i32, i32
  }
  func.func @transform_3(%arg0: i32) -> (i32, i32) {
    %c0_i32 = arith.constant 0 : i32
    %c0_i32_0 = arith.constant 0 : i32
    return %arg0, %c0_i32 : i32, i32
  }
  func.func @transform_4(%arg0: i32) -> (i32, i32) {
    %c0_i32 = arith.constant 0 : i32
    %c0_i32_0 = arith.constant 0 : i32
    return %arg0, %c0_i32 : i32, i32
  }
}

module attributes {stable_mosaic.version = 11 : i64} {
  func.func @_fused_matmul_kernel(%arg0: i32, %arg1: memref<32x1152xbf16, #tpu.memory_space<vmem>>, %arg2: memref<1152x128xbf16, #tpu.memory_space<vmem>>, %arg3: memref<1x128xf32, #tpu.memory_space<vmem>>, %arg4: memref<32x128xf32, #tpu.memory_space<vmem>>) attributes {dimension_semantics = [#tpu.dimension_semantics<parallel>], iteration_bounds = array<i64: 1>, scalar_prefetch = 0 : i64, scratch_operands = 0 : i64, tpu.core_type = #tpu.core_type<tc>, window_params = [{transform_indices = @transform_0, window_bounds = array<i64: 32, 1152>}, {pipeline_mode = #tpu.pipeline_mode<synchronous>, transform_indices = @transform_1, window_bounds = array<i64: 1152, 128>}, {pipeline_mode = #tpu.pipeline_mode<synchronous>, transform_indices = @transform_2, window_bounds = array<i64: 1, 128>}, {transform_indices = @transform_3, window_bounds = array<i64: 32, 128>}]} {
    %c0 = arith.constant 0 : index
    %c0_0 = arith.constant 0 : index
    %0 = vector.load %arg1[%c0, %c0_0] : memref<32x1152xbf16, #tpu.memory_space<vmem>>, vector<32x1152xbf16>
    %c0_1 = arith.constant 0 : index
    %c0_2 = arith.constant 0 : index
    %1 = vector.load %arg2[%c0_1, %c0_2] : memref<1152x128xbf16, #tpu.memory_space<vmem>>, vector<1152x128xbf16>
    %cst = arith.constant dense<0.000000e+00> : vector<32x128xf32>
    %2 = tpu.matmul %0, %1, %cst {dimension_numbers = #tpu.dot_dimension_numbers<[1], [0], [0], [1], [0, 0, 1, 1], [], []>} : vector<32x1152xbf16>, vector<1152x128xbf16>, vector<32x128xf32> -> vector<32x128xf32>
    %c0_3 = arith.constant 0 : index
    %c0_4 = arith.constant 0 : index
    %3 = vector.load %arg3[%c0_3, %c0_4] : memref<1x128xf32, #tpu.memory_space<vmem>>, vector<1x128xf32>
    %4 = vector.broadcast %3 : vector<1x128xf32> to vector<32x128xf32>
    %5 = arith.addf %2, %4 : vector<32x128xf32>
    %cst_5 = arith.constant 0.000000e+00 : f32
    %6 = vector.broadcast %cst_5 : f32 to vector<32x128xf32>
    %7 = arith.maximumf %5, %6 : vector<32x128xf32>
    %c0_6 = arith.constant 0 : index
    %c0_7 = arith.constant 0 : index
    %8 = vector.load %arg4[%c0_6, %c0_7] : memref<32x128xf32, #tpu.memory_space<vmem>>, vector<32x128xf32>
    tpu.vector_store %arg4[%c0_6, %c0_7], %7 {strides = array<i32>} : memref<32x128xf32, #tpu.memory_space<vmem>>, vector<32x128xf32>,
    return
  }
  func.func @transform_0(%arg0: i32) -> (i32, i32) {
    %c0_i32 = arith.constant 0 : i32
    %c0_i32_0 = arith.constant 0 : i32
    return %arg0, %c0_i32 : i32, i32
  }
  func.func @transform_1(%arg0: i32) -> (i32, i32) {
    %c0_i32 = arith.constant 0 : i32
    %c0_i32_0 = arith.constant 0 : i32
    %c0_i32_1 = arith.constant 0 : i32
    return %c0_i32, %c0_i32_0 : i32, i32
  }
  func.func @transform_2(%arg0: i32) -> (i32, i32) {
    %c0_i32 = arith.constant 0 : i32
    %c0_i32_0 = arith.constant 0 : i32
    %c0_i32_1 = arith.constant 0 : i32
    return %c0_i32, %c0_i32_0 : i32, i32
  }
  func.func @transform_3(%arg0: i32) -> (i32, i32) {
    %c0_i32 = arith.constant 0 : i32
    %c0_i32_0 = arith.constant 0 : i32
    return %arg0, %c0_i32 : i32, i32
  }
}

module attributes {stable_mosaic.version = 11 : i64} {
  func.func @_fused_matmul_kernel(%arg0: i32, %arg1: memref<32x4xbf16, #tpu.memory_space<vmem>>, %arg2: memref<4x1024xbf16, #tpu.memory_space<vmem>>, %arg3: memref<32x1024xf32, #tpu.memory_space<vmem>>) attributes {dimension_semantics = [#tpu.dimension_semantics<parallel>], iteration_bounds = array<i64: 1>, scalar_prefetch = 0 : i64, scratch_operands = 0 : i64, tpu.core_type = #tpu.core_type<tc>, window_params = [{transform_indices = @transform_0, window_bounds = array<i64: 32, 4>}, {pipeline_mode = #tpu.pipeline_mode<synchronous>, transform_indices = @transform_1, window_bounds = array<i64: 4, 1024>}, {transform_indices = @transform_2, window_bounds = array<i64: 32, 1024>}]} {
    %c0 = arith.constant 0 : index
    %c0_0 = arith.constant 0 : index
    %0 = vector.load %arg1[%c0, %c0_0] : memref<32x4xbf16, #tpu.memory_space<vmem>>, vector<32x4xbf16>
    %c0_1 = arith.constant 0 : index
    %c0_2 = arith.constant 0 : index
    %1 = vector.load %arg2[%c0_1, %c0_2] : memref<4x1024xbf16, #tpu.memory_space<vmem>>, vector<4x1024xbf16>
    %cst = arith.constant dense<0.000000e+00> : vector<32x1024xf32>
    %2 = tpu.matmul %0, %1, %cst {dimension_numbers = #tpu.dot_dimension_numbers<[1], [0], [0], [1], [0, 0, 1, 1], [], []>} : vector<32x4xbf16>, vector<4x1024xbf16>, vector<32x1024xf32> -> vector<32x1024xf32>
    %c0_3 = arith.constant 0 : index
    %c0_4 = arith.constant 0 : index
    %3 = vector.load %arg3[%c0_3, %c0_4] : memref<32x1024xf32, #tpu.memory_space<vmem>>, vector<32x1024xf32>
    tpu.vector_store %arg3[%c0_3, %c0_4], %2 {strides = array<i32>} : memref<32x1024xf32, #tpu.memory_space<vmem>>, vector<32x1024xf32>,
    return
  }
  func.func @transform_0(%arg0: i32) -> (i32, i32) {
    %c0_i32 = arith.constant 0 : i32
    %c0_i32_0 = arith.constant 0 : i32
    return %arg0, %c0_i32 : i32, i32
  }
  func.func @transform_1(%arg0: i32) -> (i32, i32) {
    %c0_i32 = arith.constant 0 : i32
    %c0_i32_0 = arith.constant 0 : i32
    %c0_i32_1 = arith.constant 0 : i32
    return %c0_i32, %c0_i32_0 : i32, i32
  }
  func.func @transform_2(%arg0: i32) -> (i32, i32) {
    %c0_i32 = arith.constant 0 : i32
    %c0_i32_0 = arith.constant 0 : i32
    return %arg0, %c0_i32 : i32, i32
  }
}

module attributes {stable_mosaic.version = 11 : i64} {
  func.func @_fused_matmul_kernel(%arg0: i32, %arg1: memref<32x4xbf16, #tpu.memory_space<vmem>>, %arg2: memref<4x8192xbf16, #tpu.memory_space<vmem>>, %arg3: memref<32x8192xf32, #tpu.memory_space<vmem>>) attributes {dimension_semantics = [#tpu.dimension_semantics<parallel>], iteration_bounds = array<i64: 1>, scalar_prefetch = 0 : i64, scratch_operands = 0 : i64, tpu.core_type = #tpu.core_type<tc>, window_params = [{transform_indices = @transform_0, window_bounds = array<i64: 32, 4>}, {pipeline_mode = #tpu.pipeline_mode<synchronous>, transform_indices = @transform_1, window_bounds = array<i64: 4, 8192>}, {transform_indices = @transform_2, window_bounds = array<i64: 32, 8192>}]} {
    %c0 = arith.constant 0 : index
    %c0_0 = arith.constant 0 : index
    %0 = vector.load %arg1[%c0, %c0_0] : memref<32x4xbf16, #tpu.memory_space<vmem>>, vector<32x4xbf16>
    %c0_1 = arith.constant 0 : index
    %c0_2 = arith.constant 0 : index
    %1 = vector.load %arg2[%c0_1, %c0_2] : memref<4x8192xbf16, #tpu.memory_space<vmem>>, vector<4x8192xbf16>
    %cst = arith.constant dense<0.000000e+00> : vector<32x8192xf32>
    %2 = tpu.matmul %0, %1, %cst {dimension_numbers = #tpu.dot_dimension_numbers<[1], [0], [0], [1], [0, 0, 1, 1], [], []>} : vector<32x4xbf16>, vector<4x8192xbf16>, vector<32x8192xf32> -> vector<32x8192xf32>
    %c0_3 = arith.constant 0 : index
    %c0_4 = arith.constant 0 : index
    %3 = vector.load %arg3[%c0_3, %c0_4] : memref<32x8192xf32, #tpu.memory_space<vmem>>, vector<32x8192xf32>
    tpu.vector_store %arg3[%c0_3, %c0_4], %2 {strides = array<i32>} : memref<32x8192xf32, #tpu.memory_space<vmem>>, vector<32x8192xf32>,
    return
  }
  func.func @transform_0(%arg0: i32) -> (i32, i32) {
    %c0_i32 = arith.constant 0 : i32
    %c0_i32_0 = arith.constant 0 : i32
    return %arg0, %c0_i32 : i32, i32
  }
  func.func @transform_1(%arg0: i32) -> (i32, i32) {
    %c0_i32 = arith.constant 0 : i32
    %c0_i32_0 = arith.constant 0 : i32
    %c0_i32_1 = arith.constant 0 : i32
    return %c0_i32, %c0_i32_0 : i32, i32
  }
  func.func @transform_2(%arg0: i32) -> (i32, i32) {
    %c0_i32 = arith.constant 0 : i32
    %c0_i32_0 = arith.constant 0 : i32
    return %arg0, %c0_i32 : i32, i32
  }
}

module attributes {stable_mosaic.version = 11 : i64} {
  func.func @_fused_matmul_kernel(%arg0: i32, %arg1: memref<32x8xbf16, #tpu.memory_space<vmem>>, %arg2: memref<8x1024xbf16, #tpu.memory_space<vmem>>, %arg3: memref<32x1024xf32, #tpu.memory_space<vmem>>) attributes {dimension_semantics = [#tpu.dimension_semantics<parallel>], iteration_bounds = array<i64: 1>, scalar_prefetch = 0 : i64, scratch_operands = 0 : i64, tpu.core_type = #tpu.core_type<tc>, window_params = [{transform_indices = @transform_0, window_bounds = array<i64: 32, 8>}, {pipeline_mode = #tpu.pipeline_mode<synchronous>, transform_indices = @transform_1, window_bounds = array<i64: 8, 1024>}, {transform_indices = @transform_2, window_bounds = array<i64: 32, 1024>}]} {
    %c0 = arith.constant 0 : index
    %c0_0 = arith.constant 0 : index
    %0 = vector.load %arg1[%c0, %c0_0] : memref<32x8xbf16, #tpu.memory_space<vmem>>, vector<32x8xbf16>
    %c0_1 = arith.constant 0 : index
    %c0_2 = arith.constant 0 : index
    %1 = vector.load %arg2[%c0_1, %c0_2] : memref<8x1024xbf16, #tpu.memory_space<vmem>>, vector<8x1024xbf16>
    %cst = arith.constant dense<0.000000e+00> : vector<32x1024xf32>
    %2 = tpu.matmul %0, %1, %cst {dimension_numbers = #tpu.dot_dimension_numbers<[1], [0], [0], [1], [0, 0, 1, 1], [], []>} : vector<32x8xbf16>, vector<8x1024xbf16>, vector<32x1024xf32> -> vector<32x1024xf32>
    %c0_3 = arith.constant 0 : index
    %c0_4 = arith.constant 0 : index
    %3 = vector.load %arg3[%c0_3, %c0_4] : memref<32x1024xf32, #tpu.memory_space<vmem>>, vector<32x1024xf32>
    tpu.vector_store %arg3[%c0_3, %c0_4], %2 {strides = array<i32>} : memref<32x1024xf32, #tpu.memory_space<vmem>>, vector<32x1024xf32>,
    return
  }
  func.func @transform_0(%arg0: i32) -> (i32, i32) {
    %c0_i32 = arith.constant 0 : i32
    %c0_i32_0 = arith.constant 0 : i32
    return %arg0, %c0_i32 : i32, i32
  }
  func.func @transform_1(%arg0: i32) -> (i32, i32) {
    %c0_i32 = arith.constant 0 : i32
    %c0_i32_0 = arith.constant 0 : i32
    %c0_i32_1 = arith.constant 0 : i32
    return %c0_i32, %c0_i32_0 : i32, i32
  }
  func.func @transform_2(%arg0: i32) -> (i32, i32) {
    %c0_i32 = arith.constant 0 : i32
    %c0_i32_0 = arith.constant 0 : i32
    return %arg0, %c0_i32 : i32, i32
  }
}

module attributes {stable_mosaic.version = 11 : i64} {
  func.func @_fused_matmul_kernel(%arg0: i32, %arg1: memref<32x8xbf16, #tpu.memory_space<vmem>>, %arg2: memref<8x4096xbf16, #tpu.memory_space<vmem>>, %arg3: memref<32x4096xf32, #tpu.memory_space<vmem>>) attributes {dimension_semantics = [#tpu.dimension_semantics<parallel>], iteration_bounds = array<i64: 1>, scalar_prefetch = 0 : i64, scratch_operands = 0 : i64, tpu.core_type = #tpu.core_type<tc>, window_params = [{transform_indices = @transform_0, window_bounds = array<i64: 32, 8>}, {pipeline_mode = #tpu.pipeline_mode<synchronous>, transform_indices = @transform_1, window_bounds = array<i64: 8, 4096>}, {transform_indices = @transform_2, window_bounds = array<i64: 32, 4096>}]} {
    %c0 = arith.constant 0 : index
    %c0_0 = arith.constant 0 : index
    %0 = vector.load %arg1[%c0, %c0_0] : memref<32x8xbf16, #tpu.memory_space<vmem>>, vector<32x8xbf16>
    %c0_1 = arith.constant 0 : index
    %c0_2 = arith.constant 0 : index
    %1 = vector.load %arg2[%c0_1, %c0_2] : memref<8x4096xbf16, #tpu.memory_space<vmem>>, vector<8x4096xbf16>
    %cst = arith.constant dense<0.000000e+00> : vector<32x4096xf32>
    %2 = tpu.matmul %0, %1, %cst {dimension_numbers = #tpu.dot_dimension_numbers<[1], [0], [0], [1], [0, 0, 1, 1], [], []>} : vector<32x8xbf16>, vector<8x4096xbf16>, vector<32x4096xf32> -> vector<32x4096xf32>
    %c0_3 = arith.constant 0 : index
    %c0_4 = arith.constant 0 : index
    %3 = vector.load %arg3[%c0_3, %c0_4] : memref<32x4096xf32, #tpu.memory_space<vmem>>, vector<32x4096xf32>
    tpu.vector_store %arg3[%c0_3, %c0_4], %2 {strides = array<i32>} : memref<32x4096xf32, #tpu.memory_space<vmem>>, vector<32x4096xf32>,
    return
  }
  func.func @transform_0(%arg0: i32) -> (i32, i32) {
    %c0_i32 = arith.constant 0 : i32
    %c0_i32_0 = arith.constant 0 : i32
    return %arg0, %c0_i32 : i32, i32
  }
  func.func @transform_1(%arg0: i32) -> (i32, i32) {
    %c0_i32 = arith.constant 0 : i32
    %c0_i32_0 = arith.constant 0 : i32
    %c0_i32_1 = arith.constant 0 : i32
    return %c0_i32, %c0_i32_0 : i32, i32
  }
  func.func @transform_2(%arg0: i32) -> (i32, i32) {
    %c0_i32 = arith.constant 0 : i32
    %c0_i32_0 = arith.constant 0 : i32
    return %arg0, %c0_i32 : i32, i32
  }
}

module attributes {stable_mosaic.version = 11 : i64} {
  func.func @_fused_matmul_kernel(%arg0: i32, %arg1: memref<512x192xbf16, #tpu.memory_space<vmem>>, %arg2: memref<192x128xbf16, #tpu.memory_space<vmem>>, %arg3: memref<1x128xf32, #tpu.memory_space<vmem>>, %arg4: memref<512x128xf32, #tpu.memory_space<vmem>>) attributes {dimension_semantics = [#tpu.dimension_semantics<parallel>], iteration_bounds = array<i64: 4>, scalar_prefetch = 0 : i64, scratch_operands = 0 : i64, tpu.core_type = #tpu.core_type<tc>, window_params = [{transform_indices = @transform_0, window_bounds = array<i64: 512, 192>}, {pipeline_mode = #tpu.pipeline_mode<synchronous>, transform_indices = @transform_1, window_bounds = array<i64: 192, 128>}, {pipeline_mode = #tpu.pipeline_mode<synchronous>, transform_indices = @transform_2, window_bounds = array<i64: 1, 128>}, {transform_indices = @transform_3, window_bounds = array<i64: 512, 128>}]} {
    %c0 = arith.constant 0 : index
    %c0_0 = arith.constant 0 : index
    %0 = vector.load %arg1[%c0, %c0_0] : memref<512x192xbf16, #tpu.memory_space<vmem>>, vector<512x192xbf16>
    %c0_1 = arith.constant 0 : index
    %c0_2 = arith.constant 0 : index
    %1 = vector.load %arg2[%c0_1, %c0_2] : memref<192x128xbf16, #tpu.memory_space<vmem>>, vector<192x128xbf16>
    %cst = arith.constant dense<0.000000e+00> : vector<512x128xf32>
    %2 = tpu.matmul %0, %1, %cst {dimension_numbers = #tpu.dot_dimension_numbers<[1], [0], [0], [1], [0, 0, 1, 1], [], []>} : vector<512x192xbf16>, vector<192x128xbf16>, vector<512x128xf32> -> vector<512x128xf32>
    %c0_3 = arith.constant 0 : index
    %c0_4 = arith.constant 0 : index
    %3 = vector.load %arg3[%c0_3, %c0_4] : memref<1x128xf32, #tpu.memory_space<vmem>>, vector<1x128xf32>
    %4 = vector.broadcast %3 : vector<1x128xf32> to vector<512x128xf32>
    %5 = arith.addf %2, %4 : vector<512x128xf32>
    %c0_5 = arith.constant 0 : index
    %c0_6 = arith.constant 0 : index
    %6 = vector.load %arg4[%c0_5, %c0_6] : memref<512x128xf32, #tpu.memory_space<vmem>>, vector<512x128xf32>
    tpu.vector_store %arg4[%c0_5, %c0_6], %5 {strides = array<i32>} : memref<512x128xf32, #tpu.memory_space<vmem>>, vector<512x128xf32>,
    return
  }
  func.func @transform_0(%arg0: i32) -> (i32, i32) {
    %c0_i32 = arith.constant 0 : i32
    %c0_i32_0 = arith.constant 0 : i32
    return %arg0, %c0_i32 : i32, i32
  }
  func.func @transform_1(%arg0: i32) -> (i32, i32) {
    %c0_i32 = arith.constant 0 : i32
    %c0_i32_0 = arith.constant 0 : i32
    %c0_i32_1 = arith.constant 0 : i32
    return %c0_i32, %c0_i32_0 : i32, i32
  }
  func.func @transform_2(%arg0: i32) -> (i32, i32) {
    %c0_i32 = arith.constant 0 : i32
    %c0_i32_0 = arith.constant 0 : i32
    %c0_i32_1 = arith.constant 0 : i32
    return %c0_i32, %c0_i32_0 : i32, i32
  }
  func.func @transform_3(%arg0: i32) -> (i32, i32) {
    %c0_i32 = arith.constant 0 : i32
    %c0_i32_0 = arith.constant 0 : i32
    return %arg0, %c0_i32 : i32, i32
  }
}

</mosaic_0001>

<llo_original>
// kernel: fcn_small_forward.16
$region0: #{fcn_small_forward.16}
  #allocation0 [shape = 'u32[]', space=smem, size = 0x4, offset = 0x4, fixed_abs, tag = 'smem constant byte address 0x4 - core index']
  #allocation1 [shape = 'u32[144,128]{1,0:T(1,128)}', space=vmem, size = 0x12000, scoped, tag = 'internal scratch']
  %s0 = inlined_call_operand.vmem [shape: bf16[512,147], index: 0, kind: input, shape index: {}]
  %s1 = inlined_call_operand.vmem [shape: bf16[147,64], index: 1, kind: input, shape index: {}]
  %s2 = inlined_call_operand.vmem [shape: f32[1,64], index: 2, kind: input, shape index: {}]
  %s3 = inlined_call_operand.vmem [shape: f32[512,64], index: 3, kind: output, shape index: {}]
  %s4 = sld [smem:[#allocation0]]
  $region45: #{fcn_small_forward.16} parent=0
    _
  %s6 = ssub.s32 1, %s4
  %s7 = scalar_select 0, %s6, %s4
  loop: start=0, step=1, limit=4
  $region2: #{fcn_small_forward.16} parent=0 // loop_pre_header
    _
  $region3: #{fcn_small_forward.16} parent=0 // loop_header
    %s9 = sphi 0, %s13
    %p10 = scmp.ge.s32.totalorder %s9, 4
    %s19 = sphi 0, %s21
    %s22 = sphi 0, %s19
    %s23 = sphi 0, %s22
    %s39 = sphi 0, %s23
    %s43 = sphi 0, %s43
    %s45 = sphi 0, %s43
    %s46 = sphi 0, %s45
    %s60 = sphi 0, %s46
    %s64 = sphi 0, %s64
    %s66 = sphi 0, %s64
    %s67 = sphi 0, %s66
    %s81 = sphi 0, %s67
    %s87 = sphi 0, %s89
    %s90 = sphi 0, %s87
    %s91 = sphi 0, %s90
    %s107 = sphi 0, %s91
  $region4: #{fcn_small_forward.16} parent=0 // loop_header_branch
    %12 = sbr.rel (%p10) target = $region8
  $region5: #{fcn_small_forward.16} parent=0 // loop_body
    %s14 = ssub.s32 %s9, 1
    %s15 = ssub.s32 %s9, 2
    %s16 = sadd.s32 %s9, 1
    %s17 = ssub.s32 %s9, %s16
    %p18 = scmp.eq.s32.totalorder %s17, 0
    %s20 = sadd.s32 %s19, 1
    %s21 = scalar_select %p18, %s19, %s20
    %p24 = pneg %p18
    %p25 = scmp.eq.s32.totalorder %s9, 1
    %p26 = por %p24, %p25
    %p27 = scmp.ne.s32.totalorder %s19, %s22
    %p28 = scmp.eq.s32.totalorder %s9, 0
    %p29 = por %p27, %p28
    %p30 = scmp.ne.s32.totalorder %s19, %s22
    %p31 = scmp.eq.s32.totalorder %s14, 1
    %p32 = por %p30, %p31
    %p33 = scmp.ne.s32.totalorder %s22, %s23
    %p34 = scmp.eq.s32.totalorder %s14, 0
    %p35 = por %p33, %p34
    %p36 = scmp.ne.s32.totalorder %s22, %s23
    %p37 = scmp.eq.s32.totalorder %s15, 1
    %p38 = por %p36, %p37
    %p40 = scmp.ne.s32.totalorder %s23, %s39
    %p41 = scmp.eq.s32.totalorder %s15, 0
    %p42 = por %p40, %p41
    %s44 = sadd.s32 %s43, 1
    %p47 = scmp.eq.s32.totalorder %s9, 1
    %p48 = scmp.ne.s32.totalorder %s43, %s45
    %p49 = scmp.eq.s32.totalorder %s9, 0
    %p50 = por %p48, %p49
    %p51 = scmp.ne.s32.totalorder %s43, %s45
    %p52 = scmp.eq.s32.totalorder %s14, 1
    %p53 = por %p51, %p52
    %p54 = scmp.ne.s32.totalorder %s45, %s46
    %p55 = scmp.eq.s32.totalorder %s14, 0
    %p56 = por %p54, %p55
    %p57 = scmp.ne.s32.totalorder %s45, %s46
    %p58 = scmp.eq.s32.totalorder %s15, 1
    %p59 = por %p57, %p58
    %p61 = scmp.ne.s32.totalorder %s46, %s60
    %p62 = scmp.eq.s32.totalorder %s15, 0
    %p63 = por %p61, %p62
    %s65 = sadd.s32 %s64, 1
    %p68 = scmp.eq.s32.totalorder %s9, 1
    %p69 = scmp.ne.s32.totalorder %s64, %s66
    %p70 = scmp.eq.s32.totalorder %s9, 0
    %p71 = por %p69, %p70
    %p72 = scmp.ne.s32.totalorder %s64, %s66
    %p73 = scmp.eq.s32.totalorder %s14, 1
    %p74 = por %p72, %p73
    %p75 = scmp.ne.s32.totalorder %s66, %s67
    %p76 = scmp.eq.s32.totalorder %s14, 0
    %p77 = por %p75, %p76
    %p78 = scmp.ne.s32.totalorder %s66, %s67
    %p79 = scmp.eq.s32.totalorder %s15, 1
    %p80 = por %p78, %p79
    %p82 = scmp.ne.s32.totalorder %s67, %s81
    %p83 = scmp.eq.s32.totalorder %s15, 0
    %p84 = por %p82, %p83
    %s85 = ssub.s32 %s9, %s16
    %p86 = scmp.eq.s32.totalorder %s85, 0
    %s88 = sadd.s32 %s87, 1
    %s89 = scalar_select %p86, %s87, %s88
    %p92 = pneg %p86
    %p93 = scmp.eq.s32.totalorder %s9, 1
    %p94 = por %p92, %p93
    %p95 = scmp.ne.s32.totalorder %s87, %s90
    %p96 = scmp.eq.s32.totalorder %s9, 0
    %p97 = por %p95, %p96
    %p98 = scmp.ne.s32.totalorder %s87, %s90
    %p99 = scmp.eq.s32.totalorder %s14, 1
    %p100 = por %p98, %p99
    %p101 = scmp.ne.s32.totalorder %s90, %s91
    %p102 = scmp.eq.s32.totalorder %s14, 0
    %p103 = por %p101, %p102
    %p104 = scmp.ne.s32.totalorder %s90, %s91
    %p105 = scmp.eq.s32.totalorder %s15, 1
    %p106 = por %p104, %p105
    %p108 = scmp.ne.s32.totalorder %s91, %s107
    %p109 = scmp.eq.s32.totalorder %s15, 0
    %p110 = por %p108, %p109
    %p111 = scmp.le.s32.totalorder 1, %s9
    %p112 = scmp.lt.s32.totalorder %s9, 3
    %p113 = pnand %p111, %p112
    %p114 = pneg %p113
    // Predicated region
    $region9: #{fcn_small_forward.16} parent=5 // pred_check
      _
    $region10: #{fcn_small_forward.16} parent=5 // pred_check_branch
      %116 = sbr.rel (%p113) target = $region12
    $region11: #{fcn_small_forward.16} parent=5 // pred_region
      %s117 = ssub.s32 %s9, 1
      // Predicated region
      $region13: #{fcn_small_forward.16} parent=11 // pred_check
        %p118 = pneg %p56
      $region14: #{fcn_small_forward.16} parent=11 // pred_check_branch
        %120 = sbr.rel (%p118) target = $region16
      $region15: #{fcn_small_forward.16} parent=11 // pred_region
        _
      $region16: #{fcn_small_forward.16} parent=11 // pred_fallthru
        _
      // Predicated region
      $region17: #{fcn_small_forward.16} parent=11 // pred_check
        %p121 = pneg %p77
      $region18: #{fcn_small_forward.16} parent=11 // pred_check_branch
        %123 = sbr.rel (%p121) target = $region20
      $region19: #{fcn_small_forward.16} parent=11 // pred_region
        _
      $region20: #{fcn_small_forward.16} parent=11 // pred_fallthru
        _
    $region12: #{fcn_small_forward.16} parent=5 // pred_fallthru
      _
    %p124 = scmp.lt.s32.totalorder %s9, 2
    // Predicated region
    $region21: #{fcn_small_forward.16} parent=5 // pred_check
      %p125 = pneg %p124
    $region22: #{fcn_small_forward.16} parent=5 // pred_check_branch
      %127 = sbr.rel (%p125) target = $region24
    $region23: #{fcn_small_forward.16} parent=5 // pred_region
      // Predicated region
      $region25: #{fcn_small_forward.16} parent=23 // pred_check
        %p128 = pneg %p29
      $region26: #{fcn_small_forward.16} parent=23 // pred_check_branch
        %130 = sbr.rel (%p128) target = $region28
      $region27: #{fcn_small_forward.16} parent=23 // pred_region
        %s131 = smul.u32 32, %s9
        %p132 = scmp.lt.s32.totalorder %s131, 63
        %s133 = scalar_select %p132, %s131, 63
        %s134 = smul.addr %s133, 2
        %s135 = smul.addr %s134, 4
        %s136 = scalar_lea.vmem %s0, %s135
        %s137 = smul.u32 32, %s9
      $region28: #{fcn_small_forward.16} parent=23 // pred_fallthru
        _
    $region24: #{fcn_small_forward.16} parent=5 // pred_fallthru
      _
    %p138 = scmp.le.s32.totalorder 1, %s9
    %p139 = scmp.lt.s32.totalorder %s9, 3
    %p140 = pnand %p138, %p139
    %p141 = pneg %p140
    // Predicated region
    $region29: #{fcn_small_forward.16} parent=5 // pred_check
      _
    $region30: #{fcn_small_forward.16} parent=5 // pred_check_branch
      %143 = sbr.rel (%p140) target = $region32
    $region31: #{fcn_small_forward.16} parent=5 // pred_region
      %s144 = ssub.s32 %s9, 1
      %s145 = smul.u32 32, %s14
      %p146 = scmp.lt.s32.totalorder %s145, 63
      %s147 = scalar_select %p146, %s145, 63
      %s148 = smul.addr %s147, 2
      %s149 = smul.addr %s148, 4
      %s150 = scalar_lea.vmem %s0, %s149
      %p151 = pneg %p35
      %p152 = pneg %p32
      %p153 = pneg %p56
      %p154 = pneg %p53
      %p155 = pneg %p77
      %p156 = pneg %p74
      %p157 = pneg %p103
      %p158 = pneg %p100
      %s159 = smul.u32 32, %s14
      %p160 = scmp.lt.s32.totalorder %s159, 63
      %s161 = scalar_select %p160, %s159, 63
      %s162 = smul.addr %s161, 8
      %s163 = scalar_lea.vmem %s3, %s162
      %s164 = smul.u32 32, %s14
      %p165 = scmp.lt.s32.totalorder %s164, 63
      %s166 = scalar_select %p165, %s164, 63
      %s167 = smul.addr %s166, 2
      %s168 = smul.addr %s167, 4
      %s169 = scalar_lea.vmem %s0, %s168
      %s170 = smul.u32 32, %s14
      %s171 = smul.u32 32, %s14
      %p172 = scmp.lt.s32.totalorder %s171, 63
      %s173 = scalar_select %p172, %s171, 63
      %s174 = smul.addr %s173, 8
      %s175 = scalar_lea.vmem %s3, %s174
      %s176 = smul.u32 32, %s14
      %v178 = vld [vmem:[%s169] sm:$0xff]
      %v179 = vld [vmem:[%s169 + $0x8] sm:$0xff]
      %v180 = vld [vmem:[%s169 + $0x10] sm:$0xff]
      %v181 = vld [vmem:[%s169 + $0x18] sm:$0xff]
      %v182 = vld [vmem:[%s169 + $0x20] sm:$0xff]
      %v183 = vld [vmem:[%s169 + $0x28] sm:$0xff]
      %v184 = vld [vmem:[%s169 + $0x30] sm:$0xff]
      %v185 = vld [vmem:[%s169 + $0x38] sm:$0xff]
      %v186 = vld [vmem:[%s169 + $0x40] sm:$0xff]
      %v187 = vld [vmem:[%s169 + $0x48] sm:$0xff]
      %v188 = vld [vmem:[%s169 + $0x50] sm:$0xff]
      %v189 = vld [vmem:[%s169 + $0x58] sm:$0xff]
      %v190 = vld [vmem:[%s169 + $0x60] sm:$0xff]
      %v191 = vld [vmem:[%s169 + $0x68] sm:$0xff]
      %v192 = vld [vmem:[%s169 + $0x70] sm:$0xff]
      %v193 = vld [vmem:[%s169 + $0x78] sm:$0xff]
      %v194 = vld [vmem:[%s169 + $0x80] sm:$0xff]
      %v195 = vld [vmem:[%s169 + $0x88] sm:$0xff]
      %v196 = vld [vmem:[%s169 + $0x90] sm:$0xff]
      %v197 = vld [vmem:[%s169 + $0x98] sm:$0xff]
      %v198 = vld [vmem:[%s169 + $0xa0] sm:$0xff]
      %v199 = vld [vmem:[%s169 + $0xa8] sm:$0xff]
      %v200 = vld [vmem:[%s169 + $0xb0] sm:$0xff]
      %v201 = vld [vmem:[%s169 + $0xb8] sm:$0xff]
      %v202 = vld [vmem:[%s169 + $0xc0] sm:$0xff]
      %v203 = vld [vmem:[%s169 + $0xc8] sm:$0xff]
      %v204 = vld [vmem:[%s169 + $0xd0] sm:$0xff]
      %v205 = vld [vmem:[%s169 + $0xd8] sm:$0xff]
      %v206 = vld [vmem:[%s169 + $0xe0] sm:$0xff]
      %v207 = vld [vmem:[%s169 + $0xe8] sm:$0xff]
      %v208 = vld [vmem:[%s169 + $0xf0] sm:$0xff]
      %v209 = vld [vmem:[%s169 + $0xf8] sm:$0xff]
      %v210 = vld [vmem:[%s1] sm:$0xf]
      %v211 = vld [vmem:[%s1 + $0x4] sm:$0xf]
      %v212 = vld [vmem:[%s1 + $0x8] sm:$0xf]
      %v213 = vld [vmem:[%s1 + $0xc] sm:$0xf]
      %v214 = vld [vmem:[%s1 + $0x10] sm:$0xf]
      %v215 = vld [vmem:[%s1 + $0x14] sm:$0xf]
      %v216 = vld [vmem:[%s1 + $0x18] sm:$0xf]
      %v217 = vld [vmem:[%s1 + $0x1c] sm:$0xf]
      %v218 = vld [vmem:[%s1 + $0x20] sm:$0xf]
      %v219 = vld [vmem:[%s1 + $0x24] sm:$0xf]
      %v220 = vld [vmem:[%s1 + $0x28] sm:$0xf]
      %v221 = vld [vmem:[%s1 + $0x2c] sm:$0xf]
      %v222 = vld [vmem:[%s1 + $0x30] sm:$0xf]
      %v223 = vld [vmem:[%s1 + $0x34] sm:$0xf]
      %v224 = vld [vmem:[%s1 + $0x38] sm:$0xf]
      %v225 = vld [vmem:[%s1 + $0x3c] sm:$0xf]
      %v226 = vld [vmem:[%s1 + $0x40] sm:$0xf]
      %v227 = vld [vmem:[%s1 + $0x44] sm:$0xf]
      %v228 = vld [vmem:[%s1 + $0x48] sm:$0x3]
      %v229 = vld [vmem:[%s2] sm:$0x1]
      %v231 = vlaneseq
      %v232 = vshrl.u32 %v231, 7
      %v233 = vsub.s32 0, %v232
      %v234 = vrot.slane %v229, %v233
      %v268 = vunpack.c.l.b16 %v178
      %v269 = vunpack.c.h.b16 %v178
      %v270 = vunpack.c.l.b16 %v179
      %v271 = vunpack.c.h.b16 %v179
      %v272 = vunpack.c.l.b16 %v180
      %v273 = vunpack.c.h.b16 %v180
      %v274 = vunpack.c.l.b16 %v181
      %v275 = vunpack.c.h.b16 %v181
      %v276 = vunpack.c.l.b16 %v182
      %v277 = vunpack.c.h.b16 %v182
      %v278 = vunpack.c.l.b16 %v183
      %v279 = vunpack.c.h.b16 %v183
      %v280 = vunpack.c.l.b16 %v184
      %v281 = vunpack.c.h.b16 %v184
      %v282 = vunpack.c.l.b16 %v185
      %v283 = vunpack.c.h.b16 %v185
      %v284 = vunpack.c.l.b16 %v186
      %v285 = vunpack.c.h.b16 %v186
      %v286 = vunpack.c.l.b16 %v187
      %v287 = vunpack.c.h.b16 %v187
      %v288 = vunpack.c.l.b16 %v188
      %v289 = vunpack.c.h.b16 %v188
      %v290 = vunpack.c.l.b16 %v189
      %v291 = vunpack.c.h.b16 %v189
      %v292 = vunpack.c.l.b16 %v190
      %v293 = vunpack.c.h.b16 %v190
      %v294 = vunpack.c.l.b16 %v191
      %v295 = vunpack.c.h.b16 %v191
      %v296 = vunpack.c.l.b16 %v192
      %v297 = vunpack.c.h.b16 %v192
      %v298 = vunpack.c.l.b16 %v193
      %v299 = vunpack.c.h.b16 %v193
      %v300 = vunpack.c.l.b16 %v194
      %v301 = vunpack.c.h.b16 %v194
      %v302 = vunpack.c.l.b16 %v195
      %v303 = vunpack.c.h.b16 %v195
      %v304 = vunpack.c.l.b16 %v196
      %v305 = vunpack.c.h.b16 %v196
      %v306 = vunpack.c.l.b16 %v197
      %v307 = vunpack.c.h.b16 %v197
      %v308 = vunpack.c.l.b16 %v198
      %v309 = vunpack.c.h.b16 %v198
      %v310 = vunpack.c.l.b16 %v199
      %v311 = vunpack.c.h.b16 %v199
      %v312 = vunpack.c.l.b16 %v200
      %v313 = vunpack.c.h.b16 %v200
      %v314 = vunpack.c.l.b16 %v201
      %v315 = vunpack.c.h.b16 %v201
      %v316 = vunpack.c.l.b16 %v202
      %v317 = vunpack.c.h.b16 %v202
      %v318 = vunpack.c.l.b16 %v203
      %v319 = vunpack.c.h.b16 %v203
      %v320 = vunpack.c.l.b16 %v204
      %v321 = vunpack.c.h.b16 %v204
      %v322 = vunpack.c.l.b16 %v205
      %v323 = vunpack.c.h.b16 %v205
      %v324 = vunpack.c.l.b16 %v206
      %v325 = vunpack.c.h.b16 %v206
      %v326 = vunpack.c.l.b16 %v207
      %v327 = vunpack.c.h.b16 %v207
      %v328 = vunpack.c.l.b16 %v208
      %v329 = vunpack.c.h.b16 %v208
      %v330 = vunpack.c.l.b16 %v209
      %v331 = vunpack.c.h.b16 %v209
      %v332 = vpack.c.b16 %v270, %v268
      %v333 = vpack.c.b16 %v271, %v269
      %v334 = vpack.c.b16 %v274, %v272
      %v335 = vpack.c.b16 %v275, %v273
      %v336 = vpack.c.b16 %v278, %v276
      %v337 = vpack.c.b16 %v279, %v277
      %v338 = vpack.c.b16 %v282, %v280
      %v339 = vpack.c.b16 %v283, %v281
      %v340 = vpack.c.b16 %v286, %v284
      %v341 = vpack.c.b16 %v287, %v285
      %v342 = vpack.c.b16 %v290, %v288
      %v343 = vpack.c.b16 %v291, %v289
      %v344 = vpack.c.b16 %v294, %v292
      %v345 = vpack.c.b16 %v295, %v293
      %v346 = vpack.c.b16 %v298, %v296
      %v347 = vpack.c.b16 %v299, %v297
      %v348 = vpack.c.b16 %v302, %v300
      %v349 = vpack.c.b16 %v303, %v301
      %v350 = vpack.c.b16 %v306, %v304
      %v351 = vpack.c.b16 %v307, %v305
      %v352 = vpack.c.b16 %v310, %v308
      %v353 = vpack.c.b16 %v311, %v309
      %v354 = vpack.c.b16 %v314, %v312
      %v355 = vpack.c.b16 %v315, %v313
      %v356 = vpack.c.b16 %v318, %v316
      %v357 = vpack.c.b16 %v319, %v317
      %v358 = vpack.c.b16 %v322, %v320
      %v359 = vpack.c.b16 %v323, %v321
      %v360 = vpack.c.b16 %v326, %v324
      %v361 = vpack.c.b16 %v327, %v325
      %v362 = vpack.c.b16 %v330, %v328
      %v363 = vpack.c.b16 %v331, %v329
      %v399 = vunpack.c.l.b16 %v210
      %v400 = vunpack.c.l.b16 %v211
      %v401 = vunpack.c.l.b16 %v212
      %v402 = vunpack.c.l.b16 %v213
      %v403 = vunpack.c.l.b16 %v214
      %v404 = vunpack.c.l.b16 %v215
      %v405 = vunpack.c.l.b16 %v216
      %v406 = vunpack.c.l.b16 %v217
      %v407 = vunpack.c.l.b16 %v218
      %v408 = vunpack.c.l.b16 %v219
      %v409 = vunpack.c.l.b16 %v220
      %v410 = vunpack.c.l.b16 %v221
      %v411 = vunpack.c.l.b16 %v222
      %v412 = vunpack.c.l.b16 %v223
      %v413 = vunpack.c.l.b16 %v224
      %v414 = vunpack.c.l.b16 %v225
      %v415 = vunpack.c.l.b16 %v226
      %v416 = vunpack.c.l.b16 %v227
      %v417 = vunpack.c.l.b16 %v228
      %v418 = vpack.c.b16 %v400, %v399
      %v419 = vpack.c.b16 %v402, %v401
      %v420 = vpack.c.b16 %v404, %v403
      %v421 = vpack.c.b16 %v406, %v405
      %v422 = vpack.c.b16 %v408, %v407
      %v423 = vpack.c.b16 %v410, %v409
      %v424 = vpack.c.b16 %v412, %v411
      %v425 = vpack.c.b16 %v414, %v413
      %v426 = vpack.c.b16 %v416, %v415
      %v427 = vpack.c.b16 %v417, %v417
      %vm437 = vcmask 154624
      %v439 = vsel %vm437, %v333, 0
      %v442 = vsel %vm437, %v335, 0
      %v445 = vsel %vm437, %v337, 0
      %v448 = vsel %vm437, %v339, 0
      %v451 = vsel %vm437, %v341, 0
      %v454 = vsel %vm437, %v343, 0
      %v457 = vsel %vm437, %v345, 0
      %v460 = vsel %vm437, %v347, 0
      %v463 = vsel %vm437, %v349, 0
      %v466 = vsel %vm437, %v351, 0
      %v469 = vsel %vm437, %v353, 0
      %v472 = vsel %vm437, %v355, 0
      %v475 = vsel %vm437, %v357, 0
      %v478 = vsel %vm437, %v359, 0
      %v481 = vsel %vm437, %v361, 0
      %v484 = vsel %vm437, %v363, 0
      %vm486 = vcmask 1040384
      %vm487 = vcmask 1041408
      %v488 = vsel %vm486, 4294967295, 65535
      %v489 = vsel %vm487, %v488, 0
      %v491 = vand.u32 %v427, %v489
      %493 = vmatprep.subr.bf16.mxu0 0
      %494 = vmatpush1.bf16.msra.mxu0 %v418
      %495 = vmatprep.subr.bf16.mxu0 0
      %496 = vmatpush1.bf16.msra.mxu0 %v419
      %497 = vmatprep.subr.bf16.mxu0 0
      %498 = vmatpush1.bf16.msra.mxu0 %v420
      %499 = vmatprep.subr.bf16.mxu0 0
      %500 = vmatpush1.bf16.msra.mxu0 %v421
      %501 = vmatprep.subr.bf16.mxu0 0
      %502 = vmatpush1.bf16.msra.mxu0 %v422
      %503 = vmatprep.subr.bf16.mxu0 0
      %504 = vmatpush1.bf16.msra.mxu0 %v423
      %505 = vmatprep.subr.bf16.mxu0 0
      %506 = vmatpush1.bf16.msra.mxu0 %v424
      %507 = vmatprep.subr.bf16.mxu0 0
      %508 = vmatpush1.bf16.msra.mxu0 %v425
      %509 = vmatprep.subr.bf16.mxu0 0
      %510 = vmatpush1.bf16.msra.mxu0 %v426
      %511 = vmatprep.subr.bf16.mxu0 0
      %512 = vmatpush1.bf16.msra.mxu0 %v491
      %513 = vmatprep.subr.bf16.mxu0 0
      %514 = vmatpush1.bf16.msra.mxu0 0
      %515 = vmatprep.subr.bf16.mxu0 0
      %516 = vmatpush1.bf16.msra.mxu0 0
      %517 = vmatprep.subr.bf16.mxu0 0
      %518 = vmatpush1.bf16.msra.mxu0 0
      %519 = vmatprep.subr.bf16.mxu0 0
      %520 = vmatpush1.bf16.msra.mxu0 0
      %521 = vmatprep.subr.bf16.mxu0 0
      %522 = vmatpush1.bf16.msra.mxu0 0
      %523 = vmatprep.subr.bf16.mxu0 0
      %524 = vmatpush1.bf16.msra.mxu0 0
      %525 = vmatprep.mubr.bf16.mxu0 %v439
      %526 = vmatmul.mubr.bf16.gmra.mrb[0].mxu0 %v332
      %v527 = vpop.f32.mrb[0].mxu0
      %v528 = vadd.f32 %v234, %v527
      %v529 = vpop.f32.mrb[0].mxu0
      %v530 = vpop.f32.mrb[0].mxu0
      %v531 = vadd.f32 %v234, %v530
      %v532 = vpop.f32.mrb[0].mxu0
      %533 = vmatprep.mubr.bf16.mxu0 %v442
      %534 = vmatmul.mubr.bf16.gmra.mrb[0].mxu0 %v334
      %v535 = vpop.f32.mrb[0].mxu0
      %v536 = vadd.f32 %v234, %v535
      %v537 = vpop.f32.mrb[0].mxu0
      %v538 = vpop.f32.mrb[0].mxu0
      %v539 = vadd.f32 %v234, %v538
      %v540 = vpop.f32.mrb[0].mxu0
      %541 = vmatprep.mubr.bf16.mxu0 %v445
      %542 = vmatmul.mubr.bf16.gmra.mrb[0].mxu0 %v336
      %v543 = vpop.f32.mrb[0].mxu0
      %v544 = vadd.f32 %v234, %v543
      %v545 = vpop.f32.mrb[0].mxu0
      %v546 = vpop.f32.mrb[0].mxu0
      %v547 = vadd.f32 %v234, %v546
      %v548 = vpop.f32.mrb[0].mxu0
      %549 = vmatprep.mubr.bf16.mxu0 %v448
      %550 = vmatmul.mubr.bf16.gmra.mrb[0].mxu0 %v338
      %v551 = vpop.f32.mrb[0].mxu0
      %v552 = vadd.f32 %v234, %v551
      %v553 = vpop.f32.mrb[0].mxu0
      %v554 = vpop.f32.mrb[0].mxu0
      %v555 = vadd.f32 %v234, %v554
      %v556 = vpop.f32.mrb[0].mxu0
      %557 = vmatprep.mubr.bf16.mxu0 %v451
      %558 = vmatmul.mubr.bf16.gmra.mrb[0].mxu0 %v340
      %v559 = vpop.f32.mrb[0].mxu0
      %v560 = vadd.f32 %v234, %v559
      %v561 = vpop.f32.mrb[0].mxu0
      %v562 = vpop.f32.mrb[0].mxu0
      %v563 = vadd.f32 %v234, %v562
      %v564 = vpop.f32.mrb[0].mxu0
      %565 = vmatprep.mubr.bf16.mxu0 %v454
      %566 = vmatmul.mubr.bf16.gmra.mrb[0].mxu0 %v342
      %v567 = vpop.f32.mrb[0].mxu0
      %v568 = vadd.f32 %v234, %v567
      %v569 = vpop.f32.mrb[0].mxu0
      %v570 = vpop.f32.mrb[0].mxu0
      %v571 = vadd.f32 %v234, %v570
      %v572 = vpop.f32.mrb[0].mxu0
      %573 = vmatprep.mubr.bf16.mxu0 %v457
      %574 = vmatmul.mubr.bf16.gmra.mrb[0].mxu0 %v344
      %v575 = vpop.f32.mrb[0].mxu0
      %v576 = vadd.f32 %v234, %v575
      %v577 = vpop.f32.mrb[0].mxu0
      %v578 = vpop.f32.mrb[0].mxu0
      %v579 = vadd.f32 %v234, %v578
      %v580 = vpop.f32.mrb[0].mxu0
      %581 = vmatprep.mubr.bf16.mxu0 %v460
      %582 = vmatmul.mubr.bf16.gmra.mrb[0].mxu0 %v346
      %v583 = vpop.f32.mrb[0].mxu0
      %v584 = vadd.f32 %v234, %v583
      %v585 = vpop.f32.mrb[0].mxu0
      %v586 = vpop.f32.mrb[0].mxu0
      %v587 = vadd.f32 %v234, %v586
      %v588 = vpop.f32.mrb[0].mxu0
      %589 = vmatprep.mubr.bf16.mxu0 %v463
      %590 = vmatmul.mubr.bf16.gmra.mrb[0].mxu0 %v348
      %v591 = vpop.f32.mrb[0].mxu0
      %v592 = vadd.f32 %v234, %v591
      %v593 = vpop.f32.mrb[0].mxu0
      %v594 = vpop.f32.mrb[0].mxu0
      %v595 = vadd.f32 %v234, %v594
      %v596 = vpop.f32.mrb[0].mxu0
      %597 = vmatprep.mubr.bf16.mxu0 %v466
      %598 = vmatmul.mubr.bf16.gmra.mrb[0].mxu0 %v350
      %v599 = vpop.f32.mrb[0].mxu0
      %v600 = vadd.f32 %v234, %v599
      %v601 = vpop.f32.mrb[0].mxu0
      %v602 = vpop.f32.mrb[0].mxu0
      %v603 = vadd.f32 %v234, %v602
      %v604 = vpop.f32.mrb[0].mxu0
      %605 = vmatprep.mubr.bf16.mxu0 %v469
      %606 = vmatmul.mubr.bf16.gmra.mrb[0].mxu0 %v352
      %v607 = vpop.f32.mrb[0].mxu0
      %v608 = vadd.f32 %v234, %v607
      %v609 = vpop.f32.mrb[0].mxu0
      %v610 = vpop.f32.mrb[0].mxu0
      %v611 = vadd.f32 %v234, %v610
      %v612 = vpop.f32.mrb[0].mxu0
      %613 = vmatprep.mubr.bf16.mxu0 %v472
      %614 = vmatmul.mubr.bf16.gmra.mrb[0].mxu0 %v354
      %v615 = vpop.f32.mrb[0].mxu0
      %v616 = vadd.f32 %v234, %v615
      %v617 = vpop.f32.mrb[0].mxu0
      %v618 = vpop.f32.mrb[0].mxu0
      %v619 = vadd.f32 %v234, %v618
      %v620 = vpop.f32.mrb[0].mxu0
      %621 = vmatprep.mubr.bf16.mxu0 %v475
      %622 = vmatmul.mubr.bf16.gmra.mrb[0].mxu0 %v356
      %v623 = vpop.f32.mrb[0].mxu0
      %v624 = vadd.f32 %v234, %v623
      %v625 = vpop.f32.mrb[0].mxu0
      %v626 = vpop.f32.mrb[0].mxu0
      %v627 = vadd.f32 %v234, %v626
      %v628 = vpop.f32.mrb[0].mxu0
      %629 = vmatprep.mubr.bf16.mxu0 %v478
      %630 = vmatmul.mubr.bf16.gmra.mrb[0].mxu0 %v358
      %v631 = vpop.f32.mrb[0].mxu0
      %v632 = vadd.f32 %v234, %v631
      %v633 = vpop.f32.mrb[0].mxu0
      %v634 = vpop.f32.mrb[0].mxu0
      %v635 = vadd.f32 %v234, %v634
      %v636 = vpop.f32.mrb[0].mxu0
      %637 = vmatprep.mubr.bf16.mxu0 %v481
      %638 = vmatmul.mubr.bf16.gmra.mrb[0].mxu0 %v360
      %v639 = vpop.f32.mrb[0].mxu0
      %v640 = vadd.f32 %v234, %v639
      %v641 = vpop.f32.mrb[0].mxu0
      %v642 = vpop.f32.mrb[0].mxu0
      %v643 = vadd.f32 %v234, %v642
      %v644 = vpop.f32.mrb[0].mxu0
      %645 = vmatprep.mubr.bf16.mxu0 %v484
      %646 = vmatmul.mubr.bf16.gmra.mrb[0].mxu0 %v362
      %v647 = vpop.f32.mrb[0].mxu0
      %v648 = vadd.f32 %v234, %v647
      %v649 = vpop.f32.mrb[0].mxu0
      %v650 = vpop.f32.mrb[0].mxu0
      %v651 = vadd.f32 %v234, %v650
      %v652 = vpop.f32.mrb[0].mxu0
      %653 = vdwg.mxu0
      %v654 = vmax.f32 %v528, 0.0
      %v655 = vmax.f32 %v531, 0.0
      %v656 = vmax.f32 %v536, 0.0
      %v657 = vmax.f32 %v539, 0.0
      %v658 = vmax.f32 %v544, 0.0
      %v659 = vmax.f32 %v547, 0.0
      %v660 = vmax.f32 %v552, 0.0
      %v661 = vmax.f32 %v555, 0.0
      %v662 = vmax.f32 %v560, 0.0
      %v663 = vmax.f32 %v563, 0.0
      %v664 = vmax.f32 %v568, 0.0
      %v665 = vmax.f32 %v571, 0.0
      %v666 = vmax.f32 %v576, 0.0
      %v667 = vmax.f32 %v579, 0.0
      %v668 = vmax.f32 %v584, 0.0
      %v669 = vmax.f32 %v587, 0.0
      %v670 = vmax.f32 %v592, 0.0
      %v671 = vmax.f32 %v595, 0.0
      %v672 = vmax.f32 %v600, 0.0
      %v673 = vmax.f32 %v603, 0.0
      %v674 = vmax.f32 %v608, 0.0
      %v675 = vmax.f32 %v611, 0.0
      %v676 = vmax.f32 %v616, 0.0
      %v677 = vmax.f32 %v619, 0.0
      %v678 = vmax.f32 %v624, 0.0
      %v679 = vmax.f32 %v627, 0.0
      %v680 = vmax.f32 %v632, 0.0
      %v681 = vmax.f32 %v635, 0.0
      %v682 = vmax.f32 %v640, 0.0
      %v683 = vmax.f32 %v643, 0.0
      %v684 = vmax.f32 %v648, 0.0
      %v685 = vmax.f32 %v651, 0.0
      %vm686 = vcmask 523264
      %687 = vst.msk [vmem:[%s175] sm:$0xff] %vm686, %v654
      %688 = vst.msk [vmem:[%s175 + $0x8] sm:$0xff] %vm686, %v655
      %689 = vst.msk [vmem:[%s175 + $0x10] sm:$0xff] %vm686, %v656
      %690 = vst.msk [vmem:[%s175 + $0x18] sm:$0xff] %vm686, %v657
      %691 = vst.msk [vmem:[%s175 + $0x20] sm:$0xff] %vm686, %v658
      %692 = vst.msk [vmem:[%s175 + $0x28] sm:$0xff] %vm686, %v659
      %693 = vst.msk [vmem:[%s175 + $0x30] sm:$0xff] %vm686, %v660
      %694 = vst.msk [vmem:[%s175 + $0x38] sm:$0xff] %vm686, %v661
      %695 = vst.msk [vmem:[%s175 + $0x40] sm:$0xff] %vm686, %v662
      %696 = vst.msk [vmem:[%s175 + $0x48] sm:$0xff] %vm686, %v663
      %697 = vst.msk [vmem:[%s175 + $0x50] sm:$0xff] %vm686, %v664
      %698 = vst.msk [vmem:[%s175 + $0x58] sm:$0xff] %vm686, %v665
      %699 = vst.msk [vmem:[%s175 + $0x60] sm:$0xff] %vm686, %v666
      %700 = vst.msk [vmem:[%s175 + $0x68] sm:$0xff] %vm686, %v667
      %701 = vst.msk [vmem:[%s175 + $0x70] sm:$0xff] %vm686, %v668
      %702 = vst.msk [vmem:[%s175 + $0x78] sm:$0xff] %vm686, %v669
      %703 = vst.msk [vmem:[%s175 + $0x80] sm:$0xff] %vm686, %v670
      %704 = vst.msk [vmem:[%s175 + $0x88] sm:$0xff] %vm686, %v671
      %705 = vst.msk [vmem:[%s175 + $0x90] sm:$0xff] %vm686, %v672
      %706 = vst.msk [vmem:[%s175 + $0x98] sm:$0xff] %vm686, %v673
      %707 = vst.msk [vmem:[%s175 + $0xa0] sm:$0xff] %vm686, %v674
      %708 = vst.msk [vmem:[%s175 + $0xa8] sm:$0xff] %vm686, %v675
      %709 = vst.msk [vmem:[%s175 + $0xb0] sm:$0xff] %vm686, %v676
      %710 = vst.msk [vmem:[%s175 + $0xb8] sm:$0xff] %vm686, %v677
      %711 = vst.msk [vmem:[%s175 + $0xc0] sm:$0xff] %vm686, %v678
      %712 = vst.msk [vmem:[%s175 + $0xc8] sm:$0xff] %vm686, %v679
      %713 = vst.msk [vmem:[%s175 + $0xd0] sm:$0xff] %vm686, %v680
      %714 = vst.msk [vmem:[%s175 + $0xd8] sm:$0xff] %vm686, %v681
      %715 = vst.msk [vmem:[%s175 + $0xe0] sm:$0xff] %vm686, %v682
      %716 = vst.msk [vmem:[%s175 + $0xe8] sm:$0xff] %vm686, %v683
      %717 = vst.msk [vmem:[%s175 + $0xf0] sm:$0xff] %vm686, %v684
      %718 = vst.msk [vmem:[%s175 + $0xf8] sm:$0xff] %vm686, %v685
      %s719 = smul.u32 32, %s14
      %p720 = scmp.lt.s32.totalorder %s719, 63
      %s721 = scalar_select %p720, %s719, 63
      %s722 = smul.addr %s721, 8
      %s723 = scalar_lea.vmem %s3, %s722
      // Predicated region
      $region33: #{fcn_small_forward.16} parent=31 // pred_check
        %p724 = pneg %p100
      $region34: #{fcn_small_forward.16} parent=31 // pred_check_branch
        %726 = sbr.rel (%p724) target = $region36
      $region35: #{fcn_small_forward.16} parent=31 // pred_region
        %s727 = smul.u32 32, %s14
      $region36: #{fcn_small_forward.16} parent=31 // pred_fallthru
        _
    $region32: #{fcn_small_forward.16} parent=5 // pred_fallthru
      _
    %p728 = scmp.le.s32.totalorder 2, %s9
    // Predicated region
    $region37: #{fcn_small_forward.16} parent=5 // pred_check
      %p729 = pneg %p728
    $region38: #{fcn_small_forward.16} parent=5 // pred_check_branch
      %731 = sbr.rel (%p729) target = $region40
    $region39: #{fcn_small_forward.16} parent=5 // pred_region
      %s732 = ssub.s32 %s9, 2
      // Predicated region
      $region41: #{fcn_small_forward.16} parent=39 // pred_check
        %p733 = pneg %p106
      $region42: #{fcn_small_forward.16} parent=39 // pred_check_branch
        %735 = sbr.rel (%p733) target = $region44
      $region43: #{fcn_small_forward.16} parent=39 // pred_region
        %s736 = smul.u32 32, %s15
        %p737 = scmp.lt.s32.totalorder %s736, 63
        %s738 = scalar_select %p737, %s736, 63
        %s739 = smul.addr %s738, 8
        %s740 = scalar_lea.vmem %s3, %s739
      $region44: #{fcn_small_forward.16} parent=39 // pred_fallthru
        _
    $region40: #{fcn_small_forward.16} parent=5 // pred_fallthru
      _
  $region6: #{fcn_small_forward.16} parent=0 // loop_footer
    %s13 = sadd.s32 1, %s9
  $region7: #{fcn_small_forward.16} parent=0 // loop_footer_branch
    %8 = sbr.rel target = $region3
  $region8: #{fcn_small_forward.16} parent=0 // loop_exit
    _

// kernel: fcn_small_forward.17
$region0: #{fcn_small_forward.17}
  #allocation0 [shape = 'u32[]', space=smem, size = 0x4, offset = 0x4, fixed_abs, tag = 'smem constant byte address 0x4 - core index']
  #allocation1 [shape = 'u32[144,128]{1,0:T(1,128)}', space=vmem, size = 0x12000, scoped, tag = 'internal scratch']
  %s0 = inlined_call_operand.vmem [shape: f32[2,9,9,64], index: 0, kind: input, shape index: {}]
  %s1 = inlined_call_operand.vmem [shape: f32[2,9,9,64], index: 1, kind: input, shape index: {}]
  %s2 = inlined_call_operand.vmem [shape: f32[2,9,9,64], index: 2, kind: input, shape index: {}]
  %s3 = inlined_call_operand.vmem [shape: f32[2,9,9,64], index: 3, kind: input, shape index: {}]
  %s4 = inlined_call_operand.vmem [shape: f32[2,8,8,64], index: 4, kind: output, shape index: {}]
  %s5 = sld [smem:[#allocation0]]
  $region26: #{fcn_small_forward.17} parent=0
    _
  %s7 = ssub.s32 1, %s5
  %s8 = scalar_select 0, %s7, %s5
  // Predicated region
  $region2: #{fcn_small_forward.17} parent=0 // pred_check
    _
  $region3: #{fcn_small_forward.17} parent=0 // pred_check_branch
    %10 = sbr.rel (0) target = $region5
  $region4: #{fcn_small_forward.17} parent=0 // pred_region
    _
  $region5: #{fcn_small_forward.17} parent=0 // pred_fallthru
    _
  // Predicated region
  $region6: #{fcn_small_forward.17} parent=0 // pred_check
    _
  $region7: #{fcn_small_forward.17} parent=0 // pred_check_branch
    %12 = sbr.rel (0) target = $region9
  $region8: #{fcn_small_forward.17} parent=0 // pred_region
    _
  $region9: #{fcn_small_forward.17} parent=0 // pred_fallthru
    _
  // Predicated region
  $region10: #{fcn_small_forward.17} parent=0 // pred_check
    _
  $region11: #{fcn_small_forward.17} parent=0 // pred_check_branch
    %14 = sbr.rel (0) target = $region13
  $region12: #{fcn_small_forward.17} parent=0 // pred_region
    _
  $region13: #{fcn_small_forward.17} parent=0 // pred_fallthru
    _
  // Predicated region
  $region14: #{fcn_small_forward.17} parent=0 // pred_check
    _
  $region15: #{fcn_small_forward.17} parent=0 // pred_check_branch
    %16 = sbr.rel (0) target = $region17
  $region16: #{fcn_small_forward.17} parent=0 // pred_region
    _
  $region17: #{fcn_small_forward.17} parent=0 // pred_fallthru
    _
  %v17 = vld [vmem:[%s0] sm:$0xff]
  %v18 = vld [vmem:[%s0 + $0x10] sm:$0xff]
  %v19 = vld [vmem:[%s0 + $0x20] sm:$0xff]
  %v20 = vld [vmem:[%s0 + $0x30] sm:$0xff]
  %v21 = vld [vmem:[%s0 + $0x40] sm:$0xff]
  %v22 = vld [vmem:[%s0 + $0x50] sm:$0xff]
  %v23 = vld [vmem:[%s0 + $0x60] sm:$0xff]
  %v24 = vld [vmem:[%s0 + $0x70] sm:$0xff]
  %v25 = vld [vmem:[%s0 + $0x90] sm:$0xff]
  %v26 = vld [vmem:[%s0 + $0xa0] sm:$0xff]
  %v27 = vld [vmem:[%s0 + $0xb0] sm:$0xff]
  %v28 = vld [vmem:[%s0 + $0xc0] sm:$0xff]
  %v29 = vld [vmem:[%s0 + $0xd0] sm:$0xff]
  %v30 = vld [vmem:[%s0 + $0xe0] sm:$0xff]
  %v31 = vld [vmem:[%s0 + $0xf0] sm:$0xff]
  %v32 = vld [vmem:[%s0 + $0x100] sm:$0xff]
  %v33 = vld [vmem:[%s1] sm:$0xff]
  %v34 = vld [vmem:[%s1 + $0x10] sm:$0xff]
  %v35 = vld [vmem:[%s1 + $0x20] sm:$0xff]
  %v36 = vld [vmem:[%s1 + $0x30] sm:$0xff]
  %v37 = vld [vmem:[%s1 + $0x40] sm:$0xff]
  %v38 = vld [vmem:[%s1 + $0x50] sm:$0xff]
  %v39 = vld [vmem:[%s1 + $0x60] sm:$0xff]
  %v40 = vld [vmem:[%s1 + $0x70] sm:$0xff]
  %v41 = vld [vmem:[%s1 + $0x90] sm:$0xff]
  %v42 = vld [vmem:[%s1 + $0xa0] sm:$0xff]
  %v43 = vld [vmem:[%s1 + $0xb0] sm:$0xff]
  %v44 = vld [vmem:[%s1 + $0xc0] sm:$0xff]
  %v45 = vld [vmem:[%s1 + $0xd0] sm:$0xff]
  %v46 = vld [vmem:[%s1 + $0xe0] sm:$0xff]
  %v47 = vld [vmem:[%s1 + $0xf0] sm:$0xff]
  %v48 = vld [vmem:[%s1 + $0x100] sm:$0xff]
  %v49 = vmax.f32 %v17, %v33
  %v50 = vmax.f32 %v18, %v34
  %v51 = vmax.f32 %v19, %v35
  %v52 = vmax.f32 %v20, %v36
  %v53 = vmax.f32 %v21, %v37
  %v54 = vmax.f32 %v22, %v38
  %v55 = vmax.f32 %v23, %v39
  %v56 = vmax.f32 %v24, %v40
  %v57 = vmax.f32 %v25, %v41
  %v58 = vmax.f32 %v26, %v42
  %v59 = vmax.f32 %v27, %v43
  %v60 = vmax.f32 %v28, %v44
  %v61 = vmax.f32 %v29, %v45
  %v62 = vmax.f32 %v30, %v46
  %v63 = vmax.f32 %v31, %v47
  %v64 = vmax.f32 %v32, %v48
  %v65 = vld [vmem:[%s0 + $0x1] sm:$0xff]
  %v66 = vld [vmem:[%s0 + $0x11] sm:$0xff]
  %v67 = vld [vmem:[%s0 + $0x21] sm:$0xff]
  %v68 = vld [vmem:[%s0 + $0x31] sm:$0xff]
  %v69 = vld [vmem:[%s0 + $0x41] sm:$0xff]
  %v70 = vld [vmem:[%s0 + $0x51] sm:$0xff]
  %v71 = vld [vmem:[%s0 + $0x61] sm:$0xff]
  %v72 = vld [vmem:[%s0 + $0x71] sm:$0xff]
  %v73 = vld [vmem:[%s0 + $0x91] sm:$0xff]
  %v74 = vld [vmem:[%s0 + $0xa1] sm:$0xff]
  %v75 = vld [vmem:[%s0 + $0xb1] sm:$0xff]
  %v76 = vld [vmem:[%s0 + $0xc1] sm:$0xff]
  %v77 = vld [vmem:[%s0 + $0xd1] sm:$0xff]
  %v78 = vld [vmem:[%s0 + $0xe1] sm:$0xff]
  %v79 = vld [vmem:[%s0 + $0xf1] sm:$0xff]
  %v80 = vld [vmem:[%s0 + $0x101] sm:$0xff]
  %v81 = vmax.f32 %v49, %v65
  %v82 = vmax.f32 %v50, %v66
  %v83 = vmax.f32 %v51, %v67
  %v84 = vmax.f32 %v52, %v68
  %v85 = vmax.f32 %v53, %v69
  %v86 = vmax.f32 %v54, %v70
  %v87 = vmax.f32 %v55, %v71
  %v88 = vmax.f32 %v56, %v72
  %v89 = vmax.f32 %v57, %v73
  %v90 = vmax.f32 %v58, %v74
  %v91 = vmax.f32 %v59, %v75
  %v92 = vmax.f32 %v60, %v76
  %v93 = vmax.f32 %v61, %v77
  %v94 = vmax.f32 %v62, %v78
  %v95 = vmax.f32 %v63, %v79
  %v96 = vmax.f32 %v64, %v80
  %v97 = vld [vmem:[%s2] sm:$0xff]
  %v98 = vld [vmem:[%s2 + $0x10] sm:$0xff]
  %v99 = vld [vmem:[%s2 + $0x20] sm:$0xff]
  %v100 = vld [vmem:[%s2 + $0x30] sm:$0xff]
  %v101 = vld [vmem:[%s2 + $0x40] sm:$0xff]
  %v102 = vld [vmem:[%s2 + $0x50] sm:$0xff]
  %v103 = vld [vmem:[%s2 + $0x60] sm:$0xff]
  %v104 = vld [vmem:[%s2 + $0x70] sm:$0xff]
  %v105 = vld [vmem:[%s2 + $0x90] sm:$0xff]
  %v106 = vld [vmem:[%s2 + $0xa0] sm:$0xff]
  %v107 = vld [vmem:[%s2 + $0xb0] sm:$0xff]
  %v108 = vld [vmem:[%s2 + $0xc0] sm:$0xff]
  %v109 = vld [vmem:[%s2 + $0xd0] sm:$0xff]
  %v110 = vld [vmem:[%s2 + $0xe0] sm:$0xff]
  %v111 = vld [vmem:[%s2 + $0xf0] sm:$0xff]
  %v112 = vld [vmem:[%s2 + $0x100] sm:$0xff]
  %v113 = vmax.f32 %v81, %v97
  %v114 = vmax.f32 %v82, %v98
  %v115 = vmax.f32 %v83, %v99
  %v116 = vmax.f32 %v84, %v100
  %v117 = vmax.f32 %v85, %v101
  %v118 = vmax.f32 %v86, %v102
  %v119 = vmax.f32 %v87, %v103
  %v120 = vmax.f32 %v88, %v104
  %v121 = vmax.f32 %v89, %v105
  %v122 = vmax.f32 %v90, %v106
  %v123 = vmax.f32 %v91, %v107
  %v124 = vmax.f32 %v92, %v108
  %v125 = vmax.f32 %v93, %v109
  %v126 = vmax.f32 %v94, %v110
  %v127 = vmax.f32 %v95, %v111
  %v128 = vmax.f32 %v96, %v112
  %v129 = vld [vmem:[%s3] sm:$0xff]
  %v130 = vld [vmem:[%s3 + $0x10] sm:$0xff]
  %v131 = vld [vmem:[%s3 + $0x20] sm:$0xff]
  %v132 = vld [vmem:[%s3 + $0x30] sm:$0xff]
  %v133 = vld [vmem:[%s3 + $0x40] sm:$0xff]
  %v134 = vld [vmem:[%s3 + $0x50] sm:$0xff]
  %v135 = vld [vmem:[%s3 + $0x60] sm:$0xff]
  %v136 = vld [vmem:[%s3 + $0x70] sm:$0xff]
  %v137 = vld [vmem:[%s3 + $0x90] sm:$0xff]
  %v138 = vld [vmem:[%s3 + $0xa0] sm:$0xff]
  %v139 = vld [vmem:[%s3 + $0xb0] sm:$0xff]
  %v140 = vld [vmem:[%s3 + $0xc0] sm:$0xff]
  %v141 = vld [vmem:[%s3 + $0xd0] sm:$0xff]
  %v142 = vld [vmem:[%s3 + $0xe0] sm:$0xff]
  %v143 = vld [vmem:[%s3 + $0xf0] sm:$0xff]
  %v144 = vld [vmem:[%s3 + $0x100] sm:$0xff]
  %v145 = vmax.f32 %v113, %v129
  %v146 = vmax.f32 %v114, %v130
  %v147 = vmax.f32 %v115, %v131
  %v148 = vmax.f32 %v116, %v132
  %v149 = vmax.f32 %v117, %v133
  %v150 = vmax.f32 %v118, %v134
  %v151 = vmax.f32 %v119, %v135
  %v152 = vmax.f32 %v120, %v136
  %v153 = vmax.f32 %v121, %v137
  %v154 = vmax.f32 %v122, %v138
  %v155 = vmax.f32 %v123, %v139
  %v156 = vmax.f32 %v124, %v140
  %v157 = vmax.f32 %v125, %v141
  %v158 = vmax.f32 %v126, %v142
  %v159 = vmax.f32 %v127, %v143
  %v160 = vmax.f32 %v128, %v144
  %v161 = vld [vmem:[%s2 + $0x1] sm:$0xff]
  %v162 = vld [vmem:[%s2 + $0x11] sm:$0xff]
  %v163 = vld [vmem:[%s2 + $0x21] sm:$0xff]
  %v164 = vld [vmem:[%s2 + $0x31] sm:$0xff]
  %v165 = vld [vmem:[%s2 + $0x41] sm:$0xff]
  %v166 = vld [vmem:[%s2 + $0x51] sm:$0xff]
  %v167 = vld [vmem:[%s2 + $0x61] sm:$0xff]
  %v168 = vld [vmem:[%s2 + $0x71] sm:$0xff]
  %v169 = vld [vmem:[%s2 + $0x91] sm:$0xff]
  %v170 = vld [vmem:[%s2 + $0xa1] sm:$0xff]
  %v171 = vld [vmem:[%s2 + $0xb1] sm:$0xff]
  %v172 = vld [vmem:[%s2 + $0xc1] sm:$0xff]
  %v173 = vld [vmem:[%s2 + $0xd1] sm:$0xff]
  %v174 = vld [vmem:[%s2 + $0xe1] sm:$0xff]
  %v175 = vld [vmem:[%s2 + $0xf1] sm:$0xff]
  %v176 = vld [vmem:[%s2 + $0x101] sm:$0xff]
  %v177 = vmax.f32 %v145, %v161
  %v178 = vmax.f32 %v146, %v162
  %v179 = vmax.f32 %v147, %v163
  %v180 = vmax.f32 %v148, %v164
  %v181 = vmax.f32 %v149, %v165
  %v182 = vmax.f32 %v150, %v166
  %v183 = vmax.f32 %v151, %v167
  %v184 = vmax.f32 %v152, %v168
  %v185 = vmax.f32 %v153, %v169
  %v186 = vmax.f32 %v154, %v170
  %v187 = vmax.f32 %v155, %v171
  %v188 = vmax.f32 %v156, %v172
  %v189 = vmax.f32 %v157, %v173
  %v190 = vmax.f32 %v158, %v174
  %v191 = vmax.f32 %v159, %v175
  %v192 = vmax.f32 %v160, %v176
  %s193 = scalar_lea.vmem %s0, 16
  %v194 = vld [vmem:[%s193] sm:$0xff]
  %v195 = vld [vmem:[%s193 + $0x10] sm:$0xff]
  %v196 = vld [vmem:[%s193 + $0x20] sm:$0xff]
  %v197 = vld [vmem:[%s193 + $0x30] sm:$0xff]
  %v198 = vld [vmem:[%s193 + $0x40] sm:$0xff]
  %v199 = vld [vmem:[%s193 + $0x50] sm:$0xff]
  %v200 = vld [vmem:[%s193 + $0x60] sm:$0xff]
  %v201 = vld [vmem:[%s193 + $0x70] sm:$0xff]
  %v202 = vld [vmem:[%s193 + $0x90] sm:$0xff]
  %v203 = vld [vmem:[%s193 + $0xa0] sm:$0xff]
  %v204 = vld [vmem:[%s193 + $0xb0] sm:$0xff]
  %v205 = vld [vmem:[%s193 + $0xc0] sm:$0xff]
  %v206 = vld [vmem:[%s193 + $0xd0] sm:$0xff]
  %v207 = vld [vmem:[%s193 + $0xe0] sm:$0xff]
  %v208 = vld [vmem:[%s193 + $0xf0] sm:$0xff]
  %v209 = vld [vmem:[%s193 + $0x100] sm:$0xff]
  %v210 = vmax.f32 %v177, %v194
  %v211 = vmax.f32 %v178, %v195
  %v212 = vmax.f32 %v179, %v196
  %v213 = vmax.f32 %v180, %v197
  %v214 = vmax.f32 %v181, %v198
  %v215 = vmax.f32 %v182, %v199
  %v216 = vmax.f32 %v183, %v200
  %v217 = vmax.f32 %v184, %v201
  %v218 = vmax.f32 %v185, %v202
  %v219 = vmax.f32 %v186, %v203
  %v220 = vmax.f32 %v187, %v204
  %v221 = vmax.f32 %v188, %v205
  %v222 = vmax.f32 %v189, %v206
  %v223 = vmax.f32 %v190, %v207
  %v224 = vmax.f32 %v191, %v208
  %v225 = vmax.f32 %v192, %v209
  %s226 = scalar_lea.vmem %s1, 16
  %v227 = vld [vmem:[%s226] sm:$0xff]
  %v228 = vld [vmem:[%s226 + $0x10] sm:$0xff]
  %v229 = vld [vmem:[%s226 + $0x20] sm:$0xff]
  %v230 = vld [vmem:[%s226 + $0x30] sm:$0xff]
  %v231 = vld [vmem:[%s226 + $0x40] sm:$0xff]
  %v232 = vld [vmem:[%s226 + $0x50] sm:$0xff]
  %v233 = vld [vmem:[%s226 + $0x60] sm:$0xff]
  %v234 = vld [vmem:[%s226 + $0x70] sm:$0xff]
  %v235 = vld [vmem:[%s226 + $0x90] sm:$0xff]
  %v236 = vld [vmem:[%s226 + $0xa0] sm:$0xff]
  %v237 = vld [vmem:[%s226 + $0xb0] sm:$0xff]
  %v238 = vld [vmem:[%s226 + $0xc0] sm:$0xff]
  %v239 = vld [vmem:[%s226 + $0xd0] sm:$0xff]
  %v240 = vld [vmem:[%s226 + $0xe0] sm:$0xff]
  %v241 = vld [vmem:[%s226 + $0xf0] sm:$0xff]
  %v242 = vld [vmem:[%s226 + $0x100] sm:$0xff]
  %v243 = vmax.f32 %v210, %v227
  %v244 = vmax.f32 %v211, %v228
  %v245 = vmax.f32 %v212, %v229
  %v246 = vmax.f32 %v213, %v230
  %v247 = vmax.f32 %v214, %v231
  %v248 = vmax.f32 %v215, %v232
  %v249 = vmax.f32 %v216, %v233
  %v250 = vmax.f32 %v217, %v234
  %v251 = vmax.f32 %v218, %v235
  %v252 = vmax.f32 %v219, %v236
  %v253 = vmax.f32 %v220, %v237
  %v254 = vmax.f32 %v221, %v238
  %v255 = vmax.f32 %v222, %v239
  %v256 = vmax.f32 %v223, %v240
  %v257 = vmax.f32 %v224, %v241
  %v258 = vmax.f32 %v225, %v242
  %v259 = vld [vmem:[%s193 + $0x1] sm:$0xff]
  %v260 = vld [vmem:[%s193 + $0x11] sm:$0xff]
  %v261 = vld [vmem:[%s193 + $0x21] sm:$0xff]
  %v262 = vld [vmem:[%s193 + $0x31] sm:$0xff]
  %v263 = vld [vmem:[%s193 + $0x41] sm:$0xff]
  %v264 = vld [vmem:[%s193 + $0x51] sm:$0xff]
  %v265 = vld [vmem:[%s193 + $0x61] sm:$0xff]
  %v266 = vld [vmem:[%s193 + $0x71] sm:$0xff]
  %v267 = vld [vmem:[%s193 + $0x91] sm:$0xff]
  %v268 = vld [vmem:[%s193 + $0xa1] sm:$0xff]
  %v269 = vld [vmem:[%s193 + $0xb1] sm:$0xff]
  %v270 = vld [vmem:[%s193 + $0xc1] sm:$0xff]
  %v271 = vld [vmem:[%s193 + $0xd1] sm:$0xff]
  %v272 = vld [vmem:[%s193 + $0xe1] sm:$0xff]
  %v273 = vld [vmem:[%s193 + $0xf1] sm:$0xff]
  %v274 = vld [vmem:[%s193 + $0x101] sm:$0xff]
  %v275 = vmax.f32 %v243, %v259
  %v276 = vmax.f32 %v244, %v260
  %v277 = vmax.f32 %v245, %v261
  %v278 = vmax.f32 %v246, %v262
  %v279 = vmax.f32 %v247, %v263
  %v280 = vmax.f32 %v248, %v264
  %v281 = vmax.f32 %v249, %v265
  %v282 = vmax.f32 %v250, %v266
  %v283 = vmax.f32 %v251, %v267
  %v284 = vmax.f32 %v252, %v268
  %v285 = vmax.f32 %v253, %v269
  %v286 = vmax.f32 %v254, %v270
  %v287 = vmax.f32 %v255, %v271
  %v288 = vmax.f32 %v256, %v272
  %v289 = vmax.f32 %v257, %v273
  %v290 = vmax.f32 %v258, %v274
  %vm291 = vcmask 523264
  %292 = vst.msk [vmem:[%s4] sm:$0xff] %vm291, %v275
  %293 = vst.msk [vmem:[%s4 + $0x8] sm:$0xff] %vm291, %v276
  %294 = vst.msk [vmem:[%s4 + $0x10] sm:$0xff] %vm291, %v277
  %295 = vst.msk [vmem:[%s4 + $0x18] sm:$0xff] %vm291, %v278
  %296 = vst.msk [vmem:[%s4 + $0x20] sm:$0xff] %vm291, %v279
  %297 = vst.msk [vmem:[%s4 + $0x28] sm:$0xff] %vm291, %v280
  %298 = vst.msk [vmem:[%s4 + $0x30] sm:$0xff] %vm291, %v281
  %299 = vst.msk [vmem:[%s4 + $0x38] sm:$0xff] %vm291, %v282
  %300 = vst.msk [vmem:[%s4 + $0x40] sm:$0xff] %vm291, %v283
  %301 = vst.msk [vmem:[%s4 + $0x48] sm:$0xff] %vm291, %v284
  %302 = vst.msk [vmem:[%s4 + $0x50] sm:$0xff] %vm291, %v285
  %303 = vst.msk [vmem:[%s4 + $0x58] sm:$0xff] %vm291, %v286
  %304 = vst.msk [vmem:[%s4 + $0x60] sm:$0xff] %vm291, %v287
  %305 = vst.msk [vmem:[%s4 + $0x68] sm:$0xff] %vm291, %v288
  %306 = vst.msk [vmem:[%s4 + $0x70] sm:$0xff] %vm291, %v289
  %307 = vst.msk [vmem:[%s4 + $0x78] sm:$0xff] %vm291, %v290
  // Predicated region
  $region18: #{fcn_small_forward.17} parent=0 // pred_check
    _
  $region19: #{fcn_small_forward.17} parent=0 // pred_check_branch
    %309 = sbr.rel (0) target = $region21
  $region20: #{fcn_small_forward.17} parent=0 // pred_region
    _
  $region21: #{fcn_small_forward.17} parent=0 // pred_fallthru
    _
  // Predicated region
  $region22: #{fcn_small_forward.17} parent=0 // pred_check
    _
  $region23: #{fcn_small_forward.17} parent=0 // pred_check_branch
    %311 = sbr.rel (0) target = $region25
  $region24: #{fcn_small_forward.17} parent=0 // pred_region
    _
  $region25: #{fcn_small_forward.17} parent=0 // pred_fallthru
    _

// kernel: fcn_small_forward.18
$region0: #{fcn_small_forward.18}
  #allocation0 [shape = 'u32[]', space=smem, size = 0x4, offset = 0x4, fixed_abs, tag = 'smem constant byte address 0x4 - core index']
  #allocation1 [shape = 'u32[144,128]{1,0:T(1,128)}', space=vmem, size = 0x12000, scoped, tag = 'internal scratch']
  %s0 = inlined_call_operand.vmem [shape: bf16[128,576], index: 0, kind: input, shape index: {}]
  %s1 = inlined_call_operand.vmem [shape: bf16[576,64], index: 1, kind: input, shape index: {}]
  %s2 = inlined_call_operand.vmem [shape: f32[1,64], index: 2, kind: input, shape index: {}]
  %s3 = inlined_call_operand.vmem [shape: f32[128,64], index: 3, kind: output, shape index: {}]
  %s4 = sld [smem:[#allocation0]]
  $region22: #{fcn_small_forward.18} parent=0
    _
  %s6 = ssub.s32 1, %s4
  %s7 = scalar_select 0, %s6, %s4
  // Predicated region
  $region2: #{fcn_small_forward.18} parent=0 // pred_check
    _
  $region3: #{fcn_small_forward.18} parent=0 // pred_check_branch
    %9 = sbr.rel (0) target = $region5
  $region4: #{fcn_small_forward.18} parent=0 // pred_region
    _
  $region5: #{fcn_small_forward.18} parent=0 // pred_fallthru
    _
  // Predicated region
  $region6: #{fcn_small_forward.18} parent=0 // pred_check
    _
  $region7: #{fcn_small_forward.18} parent=0 // pred_check_branch
    %11 = sbr.rel (0) target = $region9
  $region8: #{fcn_small_forward.18} parent=0 // pred_region
    _
  $region9: #{fcn_small_forward.18} parent=0 // pred_fallthru
    _
  // Predicated region
  $region10: #{fcn_small_forward.18} parent=0 // pred_check
    _
  $region11: #{fcn_small_forward.18} parent=0 // pred_check_branch
    %13 = sbr.rel (0) target = $region13
  $region12: #{fcn_small_forward.18} parent=0 // pred_region
    _
  $region13: #{fcn_small_forward.18} parent=0 // pred_fallthru
    _
  %v15 = vld [vmem:[%s0] sm:$0xff]
  %v16 = vld [vmem:[%s0 + $0x8] sm:$0xff]
  %v17 = vld [vmem:[%s0 + $0x10] sm:$0xf]
  %v18 = vld [vmem:[%s0 + $0x14] sm:$0xff]
  %v19 = vld [vmem:[%s0 + $0x1c] sm:$0xff]
  %v20 = vld [vmem:[%s0 + $0x24] sm:$0xf]
  %v21 = vld [vmem:[%s0 + $0x28] sm:$0xff]
  %v22 = vld [vmem:[%s0 + $0x30] sm:$0xff]
  %v23 = vld [vmem:[%s0 + $0x38] sm:$0xf]
  %v24 = vld [vmem:[%s0 + $0x3c] sm:$0xff]
  %v25 = vld [vmem:[%s0 + $0x44] sm:$0xff]
  %v26 = vld [vmem:[%s0 + $0x4c] sm:$0xf]
  %v27 = vld [vmem:[%s0 + $0x50] sm:$0xff]
  %v28 = vld [vmem:[%s0 + $0x58] sm:$0xff]
  %v29 = vld [vmem:[%s0 + $0x60] sm:$0xf]
  %v30 = vld [vmem:[%s0 + $0x64] sm:$0xff]
  %v31 = vld [vmem:[%s0 + $0x6c] sm:$0xff]
  %v32 = vld [vmem:[%s0 + $0x74] sm:$0xf]
  %v33 = vld [vmem:[%s0 + $0x78] sm:$0xff]
  %v34 = vld [vmem:[%s0 + $0x80] sm:$0xff]
  %v35 = vld [vmem:[%s0 + $0x88] sm:$0xf]
  %v36 = vld [vmem:[%s0 + $0x8c] sm:$0xff]
  %v37 = vld [vmem:[%s0 + $0x94] sm:$0xff]
  %v38 = vld [vmem:[%s0 + $0x9c] sm:$0xf]
  %v39 = vld [vmem:[%s0 + $0xa0] sm:$0xff]
  %v40 = vld [vmem:[%s0 + $0xa8] sm:$0xff]
  %v41 = vld [vmem:[%s0 + $0xb0] sm:$0xf]
  %v42 = vld [vmem:[%s0 + $0xb4] sm:$0xff]
  %v43 = vld [vmem:[%s0 + $0xbc] sm:$0xff]
  %v44 = vld [vmem:[%s0 + $0xc4] sm:$0xf]
  %v45 = vld [vmem:[%s0 + $0xc8] sm:$0xff]
  %v46 = vld [vmem:[%s0 + $0xd0] sm:$0xff]
  %v47 = vld [vmem:[%s0 + $0xd8] sm:$0xf]
  %v48 = vld [vmem:[%s0 + $0xdc] sm:$0xff]
  %v49 = vld [vmem:[%s0 + $0xe4] sm:$0xff]
  %v50 = vld [vmem:[%s0 + $0xec] sm:$0xf]
  %v51 = vld [vmem:[%s0 + $0xf0] sm:$0xff]
  %v52 = vld [vmem:[%s0 + $0xf8] sm:$0xff]
  %v53 = vld [vmem:[%s0 + $0x100] sm:$0xf]
  %v54 = vld [vmem:[%s0 + $0x104] sm:$0xff]
  %v55 = vld [vmem:[%s0 + $0x10c] sm:$0xff]
  %v56 = vld [vmem:[%s0 + $0x114] sm:$0xf]
  %v57 = vld [vmem:[%s0 + $0x118] sm:$0xff]
  %v58 = vld [vmem:[%s0 + $0x120] sm:$0xff]
  %v59 = vld [vmem:[%s0 + $0x128] sm:$0xf]
  %v60 = vld [vmem:[%s0 + $0x12c] sm:$0xff]
  %v61 = vld [vmem:[%s0 + $0x134] sm:$0xff]
  %v62 = vld [vmem:[%s0 + $0x13c] sm:$0xf]
  %v63 = vld [vmem:[%s1] sm:$0xf]
  %v64 = vld [vmem:[%s1 + $0x4] sm:$0xf]
  %v65 = vld [vmem:[%s1 + $0x8] sm:$0xf]
  %v66 = vld [vmem:[%s1 + $0xc] sm:$0xf]
  %v67 = vld [vmem:[%s1 + $0x10] sm:$0xf]
  %v68 = vld [vmem:[%s1 + $0x14] sm:$0xf]
  %v69 = vld [vmem:[%s1 + $0x18] sm:$0xf]
  %v70 = vld [vmem:[%s1 + $0x1c] sm:$0xf]
  %v71 = vld [vmem:[%s1 + $0x20] sm:$0xf]
  %v72 = vld [vmem:[%s1 + $0x24] sm:$0xf]
  %v73 = vld [vmem:[%s1 + $0x28] sm:$0xf]
  %v74 = vld [vmem:[%s1 + $0x2c] sm:$0xf]
  %v75 = vld [vmem:[%s1 + $0x30] sm:$0xf]
  %v76 = vld [vmem:[%s1 + $0x34] sm:$0xf]
  %v77 = vld [vmem:[%s1 + $0x38] sm:$0xf]
  %v78 = vld [vmem:[%s1 + $0x3c] sm:$0xf]
  %v79 = vld [vmem:[%s1 + $0x40] sm:$0xf]
  %v80 = vld [vmem:[%s1 + $0x44] sm:$0xf]
  %v81 = vld [vmem:[%s1 + $0x48] sm:$0xf]
  %v82 = vld [vmem:[%s1 + $0x4c] sm:$0xf]
  %v83 = vld [vmem:[%s1 + $0x50] sm:$0xf]
  %v84 = vld [vmem:[%s1 + $0x54] sm:$0xf]
  %v85 = vld [vmem:[%s1 + $0x58] sm:$0xf]
  %v86 = vld [vmem:[%s1 + $0x5c] sm:$0xf]
  %v87 = vld [vmem:[%s1 + $0x60] sm:$0xf]
  %v88 = vld [vmem:[%s1 + $0x64] sm:$0xf]
  %v89 = vld [vmem:[%s1 + $0x68] sm:$0xf]
  %v90 = vld [vmem:[%s1 + $0x6c] sm:$0xf]
  %v91 = vld [vmem:[%s1 + $0x70] sm:$0xf]
  %v92 = vld [vmem:[%s1 + $0x74] sm:$0xf]
  %v93 = vld [vmem:[%s1 + $0x78] sm:$0xf]
  %v94 = vld [vmem:[%s1 + $0x7c] sm:$0xf]
  %v95 = vld [vmem:[%s1 + $0x80] sm:$0xf]
  %v96 = vld [vmem:[%s1 + $0x84] sm:$0xf]
  %v97 = vld [vmem:[%s1 + $0x88] sm:$0xf]
  %v98 = vld [vmem:[%s1 + $0x8c] sm:$0xf]
  %v99 = vld [vmem:[%s1 + $0x90] sm:$0xf]
  %v100 = vld [vmem:[%s1 + $0x94] sm:$0xf]
  %v101 = vld [vmem:[%s1 + $0x98] sm:$0xf]
  %v102 = vld [vmem:[%s1 + $0x9c] sm:$0xf]
  %v103 = vld [vmem:[%s1 + $0xa0] sm:$0xf]
  %v104 = vld [vmem:[%s1 + $0xa4] sm:$0xf]
  %v105 = vld [vmem:[%s1 + $0xa8] sm:$0xf]
  %v106 = vld [vmem:[%s1 + $0xac] sm:$0xf]
  %v107 = vld [vmem:[%s1 + $0xb0] sm:$0xf]
  %v108 = vld [vmem:[%s1 + $0xb4] sm:$0xf]
  %v109 = vld [vmem:[%s1 + $0xb8] sm:$0xf]
  %v110 = vld [vmem:[%s1 + $0xbc] sm:$0xf]
  %v111 = vld [vmem:[%s1 + $0xc0] sm:$0xf]
  %v112 = vld [vmem:[%s1 + $0xc4] sm:$0xf]
  %v113 = vld [vmem:[%s1 + $0xc8] sm:$0xf]
  %v114 = vld [vmem:[%s1 + $0xcc] sm:$0xf]
  %v115 = vld [vmem:[%s1 + $0xd0] sm:$0xf]
  %v116 = vld [vmem:[%s1 + $0xd4] sm:$0xf]
  %v117 = vld [vmem:[%s1 + $0xd8] sm:$0xf]
  %v118 = vld [vmem:[%s1 + $0xdc] sm:$0xf]
  %v119 = vld [vmem:[%s1 + $0xe0] sm:$0xf]
  %v120 = vld [vmem:[%s1 + $0xe4] sm:$0xf]
  %v121 = vld [vmem:[%s1 + $0xe8] sm:$0xf]
  %v122 = vld [vmem:[%s1 + $0xec] sm:$0xf]
  %v123 = vld [vmem:[%s1 + $0xf0] sm:$0xf]
  %v124 = vld [vmem:[%s1 + $0xf4] sm:$0xf]
  %v125 = vld [vmem:[%s1 + $0xf8] sm:$0xf]
  %v126 = vld [vmem:[%s1 + $0xfc] sm:$0xf]
  %v127 = vld [vmem:[%s1 + $0x100] sm:$0xf]
  %v128 = vld [vmem:[%s1 + $0x104] sm:$0xf]
  %v129 = vld [vmem:[%s1 + $0x108] sm:$0xf]
  %v130 = vld [vmem:[%s1 + $0x10c] sm:$0xf]
  %v131 = vld [vmem:[%s1 + $0x110] sm:$0xf]
  %v132 = vld [vmem:[%s1 + $0x114] sm:$0xf]
  %v133 = vld [vmem:[%s1 + $0x118] sm:$0xf]
  %v134 = vld [vmem:[%s1 + $0x11c] sm:$0xf]
  %v135 = vld [vmem:[%s2] sm:$0x1]
  %v137 = vlaneseq
  %v138 = vshrl.u32 %v137, 7
  %v139 = vsub.s32 0, %v138
  %v140 = vrot.slane %v135, %v139
  %v190 = vunpack.c.l.b16 %v15
  %v191 = vunpack.c.h.b16 %v15
  %v192 = vunpack.c.l.b16 %v16
  %v193 = vunpack.c.h.b16 %v16
  %v194 = vunpack.c.l.b16 %v17
  %v195 = vunpack.c.l.b16 %v18
  %v196 = vunpack.c.h.b16 %v18
  %v197 = vunpack.c.l.b16 %v19
  %v198 = vunpack.c.h.b16 %v19
  %v199 = vunpack.c.l.b16 %v20
  %v200 = vunpack.c.l.b16 %v21
  %v201 = vunpack.c.h.b16 %v21
  %v202 = vunpack.c.l.b16 %v22
  %v203 = vunpack.c.h.b16 %v22
  %v204 = vunpack.c.l.b16 %v23
  %v205 = vunpack.c.l.b16 %v24
  %v206 = vunpack.c.h.b16 %v24
  %v207 = vunpack.c.l.b16 %v25
  %v208 = vunpack.c.h.b16 %v25
  %v209 = vunpack.c.l.b16 %v26
  %v210 = vunpack.c.l.b16 %v27
  %v211 = vunpack.c.h.b16 %v27
  %v212 = vunpack.c.l.b16 %v28
  %v213 = vunpack.c.h.b16 %v28
  %v214 = vunpack.c.l.b16 %v29
  %v215 = vunpack.c.l.b16 %v30
  %v216 = vunpack.c.h.b16 %v30
  %v217 = vunpack.c.l.b16 %v31
  %v218 = vunpack.c.h.b16 %v31
  %v219 = vunpack.c.l.b16 %v32
  %v220 = vunpack.c.l.b16 %v33
  %v221 = vunpack.c.h.b16 %v33
  %v222 = vunpack.c.l.b16 %v34
  %v223 = vunpack.c.h.b16 %v34
  %v224 = vunpack.c.l.b16 %v35
  %v225 = vunpack.c.l.b16 %v36
  %v226 = vunpack.c.h.b16 %v36
  %v227 = vunpack.c.l.b16 %v37
  %v228 = vunpack.c.h.b16 %v37
  %v229 = vunpack.c.l.b16 %v38
  %v230 = vunpack.c.l.b16 %v39
  %v231 = vunpack.c.h.b16 %v39
  %v232 = vunpack.c.l.b16 %v40
  %v233 = vunpack.c.h.b16 %v40
  %v234 = vunpack.c.l.b16 %v41
  %v235 = vunpack.c.l.b16 %v42
  %v236 = vunpack.c.h.b16 %v42
  %v237 = vunpack.c.l.b16 %v43
  %v238 = vunpack.c.h.b16 %v43
  %v239 = vunpack.c.l.b16 %v44
  %v240 = vunpack.c.l.b16 %v45
  %v241 = vunpack.c.h.b16 %v45
  %v242 = vunpack.c.l.b16 %v46
  %v243 = vunpack.c.h.b16 %v46
  %v244 = vunpack.c.l.b16 %v47
  %v245 = vunpack.c.l.b16 %v48
  %v246 = vunpack.c.h.b16 %v48
  %v247 = vunpack.c.l.b16 %v49
  %v248 = vunpack.c.h.b16 %v49
  %v249 = vunpack.c.l.b16 %v50
  %v250 = vunpack.c.l.b16 %v51
  %v251 = vunpack.c.h.b16 %v51
  %v252 = vunpack.c.l.b16 %v52
  %v253 = vunpack.c.h.b16 %v52
  %v254 = vunpack.c.l.b16 %v53
  %v255 = vunpack.c.l.b16 %v54
  %v256 = vunpack.c.h.b16 %v54
  %v257 = vunpack.c.l.b16 %v55
  %v258 = vunpack.c.h.b16 %v55
  %v259 = vunpack.c.l.b16 %v56
  %v260 = vunpack.c.l.b16 %v57
  %v261 = vunpack.c.h.b16 %v57
  %v262 = vunpack.c.l.b16 %v58
  %v263 = vunpack.c.h.b16 %v58
  %v264 = vunpack.c.l.b16 %v59
  %v265 = vunpack.c.l.b16 %v60
  %v266 = vunpack.c.h.b16 %v60
  %v267 = vunpack.c.l.b16 %v61
  %v268 = vunpack.c.h.b16 %v61
  %v269 = vunpack.c.l.b16 %v62
  %v270 = vpack.c.b16 %v195, %v190
  %v271 = vpack.c.b16 %v196, %v191
  %v272 = vpack.c.b16 %v197, %v192
  %v273 = vpack.c.b16 %v198, %v193
  %v274 = vpack.c.b16 %v199, %v194
  %v275 = vpack.c.b16 %v205, %v200
  %v276 = vpack.c.b16 %v206, %v201
  %v277 = vpack.c.b16 %v207, %v202
  %v278 = vpack.c.b16 %v208, %v203
  %v279 = vpack.c.b16 %v209, %v204
  %v280 = vpack.c.b16 %v215, %v210
  %v281 = vpack.c.b16 %v216, %v211
  %v282 = vpack.c.b16 %v217, %v212
  %v283 = vpack.c.b16 %v218, %v213
  %v284 = vpack.c.b16 %v219, %v214
  %v285 = vpack.c.b16 %v225, %v220
  %v286 = vpack.c.b16 %v226, %v221
  %v287 = vpack.c.b16 %v227, %v222
  %v288 = vpack.c.b16 %v228, %v223
  %v289 = vpack.c.b16 %v229, %v224
  %v290 = vpack.c.b16 %v235, %v230
  %v291 = vpack.c.b16 %v236, %v231
  %v292 = vpack.c.b16 %v237, %v232
  %v293 = vpack.c.b16 %v238, %v233
  %v294 = vpack.c.b16 %v239, %v234
  %v295 = vpack.c.b16 %v245, %v240
  %v296 = vpack.c.b16 %v246, %v241
  %v297 = vpack.c.b16 %v247, %v242
  %v298 = vpack.c.b16 %v248, %v243
  %v299 = vpack.c.b16 %v249, %v244
  %v300 = vpack.c.b16 %v255, %v250
  %v301 = vpack.c.b16 %v256, %v251
  %v302 = vpack.c.b16 %v257, %v252
  %v303 = vpack.c.b16 %v258, %v253
  %v304 = vpack.c.b16 %v259, %v254
  %v305 = vpack.c.b16 %v265, %v260
  %v306 = vpack.c.b16 %v266, %v261
  %v307 = vpack.c.b16 %v267, %v262
  %v308 = vpack.c.b16 %v268, %v263
  %v309 = vpack.c.b16 %v269, %v264
  %v414 = vunpack.c.l.b16 %v63
  %v415 = vunpack.c.l.b16 %v64
  %v416 = vunpack.c.l.b16 %v65
  %v417 = vunpack.c.l.b16 %v66
  %v418 = vunpack.c.l.b16 %v67
  %v419 = vunpack.c.l.b16 %v68
  %v420 = vunpack.c.l.b16 %v69
  %v421 = vunpack.c.l.b16 %v70
  %v422 = vunpack.c.l.b16 %v71
  %v423 = vunpack.c.l.b16 %v72
  %v424 = vunpack.c.l.b16 %v73
  %v425 = vunpack.c.l.b16 %v74
  %v426 = vunpack.c.l.b16 %v75
  %v427 = vunpack.c.l.b16 %v76
  %v428 = vunpack.c.l.b16 %v77
  %v429 = vunpack.c.l.b16 %v78
  %v430 = vunpack.c.l.b16 %v79
  %v431 = vunpack.c.l.b16 %v80
  %v432 = vunpack.c.l.b16 %v81
  %v433 = vunpack.c.l.b16 %v82
  %v434 = vunpack.c.l.b16 %v83
  %v435 = vunpack.c.l.b16 %v84
  %v436 = vunpack.c.l.b16 %v85
  %v437 = vunpack.c.l.b16 %v86
  %v438 = vunpack.c.l.b16 %v87
  %v439 = vunpack.c.l.b16 %v88
  %v440 = vunpack.c.l.b16 %v89
  %v441 = vunpack.c.l.b16 %v90
  %v442 = vunpack.c.l.b16 %v91
  %v443 = vunpack.c.l.b16 %v92
  %v444 = vunpack.c.l.b16 %v93
  %v445 = vunpack.c.l.b16 %v94
  %v446 = vunpack.c.l.b16 %v95
  %v447 = vunpack.c.l.b16 %v96
  %v448 = vunpack.c.l.b16 %v97
  %v449 = vunpack.c.l.b16 %v98
  %v450 = vunpack.c.l.b16 %v99
  %v451 = vunpack.c.l.b16 %v100
  %v452 = vunpack.c.l.b16 %v101
  %v453 = vunpack.c.l.b16 %v102
  %v454 = vunpack.c.l.b16 %v103
  %v455 = vunpack.c.l.b16 %v104
  %v456 = vunpack.c.l.b16 %v105
  %v457 = vunpack.c.l.b16 %v106
  %v458 = vunpack.c.l.b16 %v107
  %v459 = vunpack.c.l.b16 %v108
  %v460 = vunpack.c.l.b16 %v109
  %v461 = vunpack.c.l.b16 %v110
  %v462 = vunpack.c.l.b16 %v111
  %v463 = vunpack.c.l.b16 %v112
  %v464 = vunpack.c.l.b16 %v113
  %v465 = vunpack.c.l.b16 %v114
  %v466 = vunpack.c.l.b16 %v115
  %v467 = vunpack.c.l.b16 %v116
  %v468 = vunpack.c.l.b16 %v117
  %v469 = vunpack.c.l.b16 %v118
  %v470 = vunpack.c.l.b16 %v119
  %v471 = vunpack.c.l.b16 %v120
  %v472 = vunpack.c.l.b16 %v121
  %v473 = vunpack.c.l.b16 %v122
  %v474 = vunpack.c.l.b16 %v123
  %v475 = vunpack.c.l.b16 %v124
  %v476 = vunpack.c.l.b16 %v125
  %v477 = vunpack.c.l.b16 %v126
  %v478 = vunpack.c.l.b16 %v127
  %v479 = vunpack.c.l.b16 %v128
  %v480 = vunpack.c.l.b16 %v129
  %v481 = vunpack.c.l.b16 %v130
  %v482 = vunpack.c.l.b16 %v131
  %v483 = vunpack.c.l.b16 %v132
  %v484 = vunpack.c.l.b16 %v133
  %v485 = vunpack.c.l.b16 %v134
  %v486 = vpack.c.b16 %v415, %v414
  %v487 = vpack.c.b16 %v417, %v416
  %v488 = vpack.c.b16 %v419, %v418
  %v489 = vpack.c.b16 %v421, %v420
  %v490 = vpack.c.b16 %v423, %v422
  %v491 = vpack.c.b16 %v425, %v424
  %v492 = vpack.c.b16 %v427, %v426
  %v493 = vpack.c.b16 %v429, %v428
  %v494 = vpack.c.b16 %v431, %v430
  %v495 = vpack.c.b16 %v433, %v432
  %v496 = vpack.c.b16 %v435, %v434
  %v497 = vpack.c.b16 %v437, %v436
  %v498 = vpack.c.b16 %v439, %v438
  %v499 = vpack.c.b16 %v441, %v440
  %v500 = vpack.c.b16 %v443, %v442
  %v501 = vpack.c.b16 %v445, %v444
  %v502 = vpack.c.b16 %v447, %v446
  %v503 = vpack.c.b16 %v449, %v448
  %v504 = vpack.c.b16 %v451, %v450
  %v505 = vpack.c.b16 %v453, %v452
  %v506 = vpack.c.b16 %v455, %v454
  %v507 = vpack.c.b16 %v457, %v456
  %v508 = vpack.c.b16 %v459, %v458
  %v509 = vpack.c.b16 %v461, %v460
  %v510 = vpack.c.b16 %v463, %v462
  %v511 = vpack.c.b16 %v465, %v464
  %v512 = vpack.c.b16 %v467, %v466
  %v513 = vpack.c.b16 %v469, %v468
  %v514 = vpack.c.b16 %v471, %v470
  %v515 = vpack.c.b16 %v473, %v472
  %v516 = vpack.c.b16 %v475, %v474
  %v517 = vpack.c.b16 %v477, %v476
  %v518 = vpack.c.b16 %v479, %v478
  %v519 = vpack.c.b16 %v481, %v480
  %v520 = vpack.c.b16 %v483, %v482
  %v521 = vpack.c.b16 %v485, %v484
  %vm558 = vcmask 523264
  %v560 = vsel %vm558, %v274, 0
  %v563 = vsel %vm558, %v279, 0
  %v566 = vsel %vm558, %v284, 0
  %v569 = vsel %vm558, %v289, 0
  %v572 = vsel %vm558, %v294, 0
  %v575 = vsel %vm558, %v299, 0
  %v578 = vsel %vm558, %v304, 0
  %v581 = vsel %vm558, %v309, 0
  %583 = vmatprep.subr.bf16.mxu0 0
  %584 = vmatpush1.bf16.msra.mxu0 %v486
  %585 = vmatprep.subr.bf16.mxu0 0
  %586 = vmatpush1.bf16.msra.mxu0 %v487
  %587 = vmatprep.subr.bf16.mxu0 0
  %588 = vmatpush1.bf16.msra.mxu0 %v488
  %589 = vmatprep.subr.bf16.mxu0 0
  %590 = vmatpush1.bf16.msra.mxu0 %v489
  %591 = vmatprep.subr.bf16.mxu0 0
  %592 = vmatpush1.bf16.msra.mxu0 %v490
  %593 = vmatprep.subr.bf16.mxu0 0
  %594 = vmatpush1.bf16.msra.mxu0 %v491
  %595 = vmatprep.subr.bf16.mxu0 0
  %596 = vmatpush1.bf16.msra.mxu0 %v492
  %597 = vmatprep.subr.bf16.mxu0 0
  %598 = vmatpush1.bf16.msra.mxu0 %v493
  %599 = vmatprep.subr.bf16.mxu0 0
  %600 = vmatpush1.bf16.msra.mxu0 %v494
  %601 = vmatprep.subr.bf16.mxu0 0
  %602 = vmatpush1.bf16.msra.mxu0 %v495
  %603 = vmatprep.subr.bf16.mxu0 0
  %604 = vmatpush1.bf16.msra.mxu0 %v496
  %605 = vmatprep.subr.bf16.mxu0 0
  %606 = vmatpush1.bf16.msra.mxu0 %v497
  %607 = vmatprep.subr.bf16.mxu0 0
  %608 = vmatpush1.bf16.msra.mxu0 %v498
  %609 = vmatprep.subr.bf16.mxu0 0
  %610 = vmatpush1.bf16.msra.mxu0 %v499
  %611 = vmatprep.subr.bf16.mxu0 0
  %612 = vmatpush1.bf16.msra.mxu0 %v500
  %613 = vmatprep.subr.bf16.mxu0 0
  %614 = vmatpush1.bf16.msra.mxu0 %v501
  %615 = vmatprep.mubr.bf16.mxu0 %v271
  %616 = vmatmul.mubr.bf16.gmra.mrb[0].mxu0 %v270
  %v617 = vpop.f32.mrb[0].mxu0
  %v618 = vadd.f32 %v140, %v617
  %v619 = vpop.f32.mrb[0].mxu0
  %v620 = vpop.f32.mrb[0].mxu0
  %v621 = vadd.f32 %v140, %v620
  %v622 = vpop.f32.mrb[0].mxu0
  %623 = vmatprep.mubr.bf16.mxu0 %v276
  %624 = vmatmul.mubr.bf16.gmra.mrb[0].mxu0 %v275
  %v625 = vpop.f32.mrb[0].mxu0
  %v626 = vadd.f32 %v140, %v625
  %v627 = vpop.f32.mrb[0].mxu0
  %v628 = vpop.f32.mrb[0].mxu0
  %v629 = vadd.f32 %v140, %v628
  %v630 = vpop.f32.mrb[0].mxu0
  %631 = vmatprep.mubr.bf16.mxu0 %v281
  %632 = vmatmul.mubr.bf16.gmra.mrb[0].mxu0 %v280
  %v633 = vpop.f32.mrb[0].mxu0
  %v634 = vadd.f32 %v140, %v633
  %v635 = vpop.f32.mrb[0].mxu0
  %v636 = vpop.f32.mrb[0].mxu0
  %v637 = vadd.f32 %v140, %v636
  %v638 = vpop.f32.mrb[0].mxu0
  %639 = vmatprep.mubr.bf16.mxu0 %v286
  %640 = vmatmul.mubr.bf16.gmra.mrb[0].mxu0 %v285
  %v641 = vpop.f32.mrb[0].mxu0
  %v642 = vadd.f32 %v140, %v641
  %v643 = vpop.f32.mrb[0].mxu0
  %v644 = vpop.f32.mrb[0].mxu0
  %v645 = vadd.f32 %v140, %v644
  %v646 = vpop.f32.mrb[0].mxu0
  %647 = vmatprep.mubr.bf16.mxu0 %v291
  %648 = vmatmul.mubr.bf16.gmra.mrb[0].mxu0 %v290
  %v649 = vpop.f32.mrb[0].mxu0
  %v650 = vadd.f32 %v140, %v649
  %v651 = vpop.f32.mrb[0].mxu0
  %v652 = vpop.f32.mrb[0].mxu0
  %v653 = vadd.f32 %v140, %v652
  %v654 = vpop.f32.mrb[0].mxu0
  %655 = vmatprep.mubr.bf16.mxu0 %v296
  %656 = vmatmul.mubr.bf16.gmra.mrb[0].mxu0 %v295
  %v657 = vpop.f32.mrb[0].mxu0
  %v658 = vadd.f32 %v140, %v657
  %v659 = vpop.f32.mrb[0].mxu0
  %v660 = vpop.f32.mrb[0].mxu0
  %v661 = vadd.f32 %v140, %v660
  %v662 = vpop.f32.mrb[0].mxu0
  %663 = vmatprep.mubr.bf16.mxu0 %v301
  %664 = vmatmul.mubr.bf16.gmra.mrb[0].mxu0 %v300
  %v665 = vpop.f32.mrb[0].mxu0
  %v666 = vadd.f32 %v140, %v665
  %v667 = vpop.f32.mrb[0].mxu0
  %v668 = vpop.f32.mrb[0].mxu0
  %v669 = vadd.f32 %v140, %v668
  %v670 = vpop.f32.mrb[0].mxu0
  %671 = vmatprep.mubr.bf16.mxu0 %v306
  %672 = vmatmul.mubr.bf16.gmra.mrb[0].mxu0 %v305
  %v673 = vpop.f32.mrb[0].mxu0
  %v674 = vadd.f32 %v140, %v673
  %v675 = vpop.f32.mrb[0].mxu0
  %v676 = vpop.f32.mrb[0].mxu0
  %v677 = vadd.f32 %v140, %v676
  %v678 = vpop.f32.mrb[0].mxu0
  %679 = vdwg.mxu0
  %680 = vmatprep.subr.bf16.mxu0 0
  %681 = vmatpush1.bf16.msra.mxu0 %v502
  %682 = vmatprep.subr.bf16.mxu0 0
  %683 = vmatpush1.bf16.msra.mxu0 %v503
  %684 = vmatprep.subr.bf16.mxu0 0
  %685 = vmatpush1.bf16.msra.mxu0 %v504
  %686 = vmatprep.subr.bf16.mxu0 0
  %687 = vmatpush1.bf16.msra.mxu0 %v505
  %688 = vmatprep.subr.bf16.mxu0 0
  %689 = vmatpush1.bf16.msra.mxu0 %v506
  %690 = vmatprep.subr.bf16.mxu0 0
  %691 = vmatpush1.bf16.msra.mxu0 %v507
  %692 = vmatprep.subr.bf16.mxu0 0
  %693 = vmatpush1.bf16.msra.mxu0 %v508
  %694 = vmatprep.subr.bf16.mxu0 0
  %695 = vmatpush1.bf16.msra.mxu0 %v509
  %696 = vmatprep.subr.bf16.mxu0 0
  %697 = vmatpush1.bf16.msra.mxu0 %v510
  %698 = vmatprep.subr.bf16.mxu0 0
  %699 = vmatpush1.bf16.msra.mxu0 %v511
  %700 = vmatprep.subr.bf16.mxu0 0
  %701 = vmatpush1.bf16.msra.mxu0 %v512
  %702 = vmatprep.subr.bf16.mxu0 0
  %703 = vmatpush1.bf16.msra.mxu0 %v513
  %704 = vmatprep.subr.bf16.mxu0 0
  %705 = vmatpush1.bf16.msra.mxu0 %v514
  %706 = vmatprep.subr.bf16.mxu0 0
  %707 = vmatpush1.bf16.msra.mxu0 %v515
  %708 = vmatprep.subr.bf16.mxu0 0
  %709 = vmatpush1.bf16.msra.mxu0 %v516
  %710 = vmatprep.subr.bf16.mxu0 0
  %711 = vmatpush1.bf16.msra.mxu0 %v517
  %712 = vmatprep.mubr.bf16.mxu0 %v273
  %713 = vmatmul.mubr.bf16.gmra.mrb[0].mxu0 %v272
  %v714 = vpop.f32.mrb[0].mxu0
  %v715 = vadd.f32 %v618, %v714
  %v716 = vpop.f32.mrb[0].mxu0
  %v717 = vpop.f32.mrb[0].mxu0
  %v718 = vadd.f32 %v621, %v717
  %v719 = vpop.f32.mrb[0].mxu0
  %720 = vmatprep.mubr.bf16.mxu0 %v278
  %721 = vmatmul.mubr.bf16.gmra.mrb[0].mxu0 %v277
  %v722 = vpop.f32.mrb[0].mxu0
  %v723 = vadd.f32 %v626, %v722
  %v724 = vpop.f32.mrb[0].mxu0
  %v725 = vpop.f32.mrb[0].mxu0
  %v726 = vadd.f32 %v629, %v725
  %v727 = vpop.f32.mrb[0].mxu0
  %728 = vmatprep.mubr.bf16.mxu0 %v283
  %729 = vmatmul.mubr.bf16.gmra.mrb[0].mxu0 %v282
  %v730 = vpop.f32.mrb[0].mxu0
  %v731 = vadd.f32 %v634, %v730
  %v732 = vpop.f32.mrb[0].mxu0
  %v733 = vpop.f32.mrb[0].mxu0
  %v734 = vadd.f32 %v637, %v733
  %v735 = vpop.f32.mrb[0].mxu0
  %736 = vmatprep.mubr.bf16.mxu0 %v288
  %737 = vmatmul.mubr.bf16.gmra.mrb[0].mxu0 %v287
  %v738 = vpop.f32.mrb[0].mxu0
  %v739 = vadd.f32 %v642, %v738
  %v740 = vpop.f32.mrb[0].mxu0
  %v741 = vpop.f32.mrb[0].mxu0
  %v742 = vadd.f32 %v645, %v741
  %v743 = vpop.f32.mrb[0].mxu0
  %744 = vmatprep.mubr.bf16.mxu0 %v293
  %745 = vmatmul.mubr.bf16.gmra.mrb[0].mxu0 %v292
  %v746 = vpop.f32.mrb[0].mxu0
  %v747 = vadd.f32 %v650, %v746
  %v748 = vpop.f32.mrb[0].mxu0
  %v749 = vpop.f32.mrb[0].mxu0
  %v750 = vadd.f32 %v653, %v749
  %v751 = vpop.f32.mrb[0].mxu0
  %752 = vmatprep.mubr.bf16.mxu0 %v298
  %753 = vmatmul.mubr.bf16.gmra.mrb[0].mxu0 %v297
  %v754 = vpop.f32.mrb[0].mxu0
  %v755 = vadd.f32 %v658, %v754
  %v756 = vpop.f32.mrb[0].mxu0
  %v757 = vpop.f32.mrb[0].mxu0
  %v758 = vadd.f32 %v661, %v757
  %v759 = vpop.f32.mrb[0].mxu0
  %760 = vmatprep.mubr.bf16.mxu0 %v303
  %761 = vmatmul.mubr.bf16.gmra.mrb[0].mxu0 %v302
  %v762 = vpop.f32.mrb[0].mxu0
  %v763 = vadd.f32 %v666, %v762
  %v764 = vpop.f32.mrb[0].mxu0
  %v765 = vpop.f32.mrb[0].mxu0
  %v766 = vadd.f32 %v669, %v765
  %v767 = vpop.f32.mrb[0].mxu0
  %768 = vmatprep.mubr.bf16.mxu0 %v308
  %769 = vmatmul.mubr.bf16.gmra.mrb[0].mxu0 %v307
  %v770 = vpop.f32.mrb[0].mxu0
  %v771 = vadd.f32 %v674, %v770
  %v772 = vpop.f32.mrb[0].mxu0
  %v773 = vpop.f32.mrb[0].mxu0
  %v774 = vadd.f32 %v677, %v773
  %v775 = vpop.f32.mrb[0].mxu0
  %776 = vdwg.mxu0
  %777 = vmatprep.subr.bf16.mxu0 0
  %778 = vmatpush1.bf16.msra.mxu0 %v518
  %779 = vmatprep.subr.bf16.mxu0 0
  %780 = vmatpush1.bf16.msra.mxu0 %v519
  %781 = vmatprep.subr.bf16.mxu0 0
  %782 = vmatpush1.bf16.msra.mxu0 %v520
  %783 = vmatprep.subr.bf16.mxu0 0
  %784 = vmatpush1.bf16.msra.mxu0 %v521
  %785 = vmatprep.subr.bf16.mxu0 0
  %786 = vmatpush1.bf16.msra.mxu0 0
  %787 = vmatprep.subr.bf16.mxu0 0
  %788 = vmatpush1.bf16.msra.mxu0 0
  %789 = vmatprep.subr.bf16.mxu0 0
  %790 = vmatpush1.bf16.msra.mxu0 0
  %791 = vmatprep.subr.bf16.mxu0 0
  %792 = vmatpush1.bf16.msra.mxu0 0
  %793 = vmatprep.subr.bf16.mxu0 0
  %794 = vmatpush1.bf16.msra.mxu0 0
  %795 = vmatprep.subr.bf16.mxu0 0
  %796 = vmatpush1.bf16.msra.mxu0 0
  %797 = vmatprep.subr.bf16.mxu0 0
  %798 = vmatpush1.bf16.msra.mxu0 0
  %799 = vmatprep.subr.bf16.mxu0 0
  %800 = vmatpush1.bf16.msra.mxu0 0
  %801 = vmatprep.subr.bf16.mxu0 0
  %802 = vmatpush1.bf16.msra.mxu0 0
  %803 = vmatprep.subr.bf16.mxu0 0
  %804 = vmatpush1.bf16.msra.mxu0 0
  %805 = vmatprep.subr.bf16.mxu0 0
  %806 = vmatpush1.bf16.msra.mxu0 0
  %807 = vmatprep.subr.bf16.mxu0 0
  %808 = vmatpush1.bf16.msra.mxu0 0
  %809 = vmatprep.mubr.bf16.mxu0 0
  %810 = vmatmul.mubr.bf16.gmra.mrb[0].mxu0 %v560
  %v811 = vpop.f32.mrb[0].mxu0
  %v812 = vadd.f32 %v715, %v811
  %v813 = vpop.f32.mrb[0].mxu0
  %v814 = vpop.f32.mrb[0].mxu0
  %v815 = vadd.f32 %v718, %v814
  %v816 = vpop.f32.mrb[0].mxu0
  %817 = vmatprep.mubr.bf16.mxu0 0
  %818 = vmatmul.mubr.bf16.gmra.mrb[0].mxu0 %v563
  %v819 = vpop.f32.mrb[0].mxu0
  %v820 = vadd.f32 %v723, %v819
  %v821 = vpop.f32.mrb[0].mxu0
  %v822 = vpop.f32.mrb[0].mxu0
  %v823 = vadd.f32 %v726, %v822
  %v824 = vpop.f32.mrb[0].mxu0
  %825 = vmatprep.mubr.bf16.mxu0 0
  %826 = vmatmul.mubr.bf16.gmra.mrb[0].mxu0 %v566
  %v827 = vpop.f32.mrb[0].mxu0
  %v828 = vadd.f32 %v731, %v827
  %v829 = vpop.f32.mrb[0].mxu0
  %v830 = vpop.f32.mrb[0].mxu0
  %v831 = vadd.f32 %v734, %v830
  %v832 = vpop.f32.mrb[0].mxu0
  %833 = vmatprep.mubr.bf16.mxu0 0
  %834 = vmatmul.mubr.bf16.gmra.mrb[0].mxu0 %v569
  %v835 = vpop.f32.mrb[0].mxu0
  %v836 = vadd.f32 %v739, %v835
  %v837 = vpop.f32.mrb[0].mxu0
  %v838 = vpop.f32.mrb[0].mxu0
  %v839 = vadd.f32 %v742, %v838
  %v840 = vpop.f32.mrb[0].mxu0
  %841 = vmatprep.mubr.bf16.mxu0 0
  %842 = vmatmul.mubr.bf16.gmra.mrb[0].mxu0 %v572
  %v843 = vpop.f32.mrb[0].mxu0
  %v844 = vadd.f32 %v747, %v843
  %v845 = vpop.f32.mrb[0].mxu0
  %v846 = vpop.f32.mrb[0].mxu0
  %v847 = vadd.f32 %v750, %v846
  %v848 = vpop.f32.mrb[0].mxu0
  %849 = vmatprep.mubr.bf16.mxu0 0
  %850 = vmatmul.mubr.bf16.gmra.mrb[0].mxu0 %v575
  %v851 = vpop.f32.mrb[0].mxu0
  %v852 = vadd.f32 %v755, %v851
  %v853 = vpop.f32.mrb[0].mxu0
  %v854 = vpop.f32.mrb[0].mxu0
  %v855 = vadd.f32 %v758, %v854
  %v856 = vpop.f32.mrb[0].mxu0
  %857 = vmatprep.mubr.bf16.mxu0 0
  %858 = vmatmul.mubr.bf16.gmra.mrb[0].mxu0 %v578
  %v859 = vpop.f32.mrb[0].mxu0
  %v860 = vadd.f32 %v763, %v859
  %v861 = vpop.f32.mrb[0].mxu0
  %v862 = vpop.f32.mrb[0].mxu0
  %v863 = vadd.f32 %v766, %v862
  %v864 = vpop.f32.mrb[0].mxu0
  %865 = vmatprep.mubr.bf16.mxu0 0
  %866 = vmatmul.mubr.bf16.gmra.mrb[0].mxu0 %v581
  %v867 = vpop.f32.mrb[0].mxu0
  %v868 = vadd.f32 %v771, %v867
  %v869 = vpop.f32.mrb[0].mxu0
  %v870 = vpop.f32.mrb[0].mxu0
  %v871 = vadd.f32 %v774, %v870
  %v872 = vpop.f32.mrb[0].mxu0
  %873 = vdwg.mxu0
  %v874 = vmax.f32 %v812, 0.0
  %v875 = vmax.f32 %v815, 0.0
  %v876 = vmax.f32 %v820, 0.0
  %v877 = vmax.f32 %v823, 0.0
  %v878 = vmax.f32 %v828, 0.0
  %v879 = vmax.f32 %v831, 0.0
  %v880 = vmax.f32 %v836, 0.0
  %v881 = vmax.f32 %v839, 0.0
  %v882 = vmax.f32 %v844, 0.0
  %v883 = vmax.f32 %v847, 0.0
  %v884 = vmax.f32 %v852, 0.0
  %v885 = vmax.f32 %v855, 0.0
  %v886 = vmax.f32 %v860, 0.0
  %v887 = vmax.f32 %v863, 0.0
  %v888 = vmax.f32 %v868, 0.0
  %v889 = vmax.f32 %v871, 0.0
  %890 = vst.msk [vmem:[%s3] sm:$0xff] %vm558, %v874
  %891 = vst.msk [vmem:[%s3 + $0x8] sm:$0xff] %vm558, %v875
  %892 = vst.msk [vmem:[%s3 + $0x10] sm:$0xff] %vm558, %v876
  %893 = vst.msk [vmem:[%s3 + $0x18] sm:$0xff] %vm558, %v877
  %894 = vst.msk [vmem:[%s3 + $0x20] sm:$0xff] %vm558, %v878
  %895 = vst.msk [vmem:[%s3 + $0x28] sm:$0xff] %vm558, %v879
  %896 = vst.msk [vmem:[%s3 + $0x30] sm:$0xff] %vm558, %v880
  %897 = vst.msk [vmem:[%s3 + $0x38] sm:$0xff] %vm558, %v881
  %898 = vst.msk [vmem:[%s3 + $0x40] sm:$0xff] %vm558, %v882
  %899 = vst.msk [vmem:[%s3 + $0x48] sm:$0xff] %vm558, %v883
  %900 = vst.msk [vmem:[%s3 + $0x50] sm:$0xff] %vm558, %v884
  %901 = vst.msk [vmem:[%s3 + $0x58] sm:$0xff] %vm558, %v885
  %902 = vst.msk [vmem:[%s3 + $0x60] sm:$0xff] %vm558, %v886
  %903 = vst.msk [vmem:[%s3 + $0x68] sm:$0xff] %vm558, %v887
  %904 = vst.msk [vmem:[%s3 + $0x70] sm:$0xff] %vm558, %v888
  %905 = vst.msk [vmem:[%s3 + $0x78] sm:$0xff] %vm558, %v889
  // Predicated region
  $region14: #{fcn_small_forward.18} parent=0 // pred_check
    _
  $region15: #{fcn_small_forward.18} parent=0 // pred_check_branch
    %907 = sbr.rel (0) target = $region17
  $region16: #{fcn_small_forward.18} parent=0 // pred_region
    _
  $region17: #{fcn_small_forward.18} parent=0 // pred_fallthru
    _
  // Predicated region
  $region18: #{fcn_small_forward.18} parent=0 // pred_check
    _
  $region19: #{fcn_small_forward.18} parent=0 // pred_check_branch
    %909 = sbr.rel (0) target = $region21
  $region20: #{fcn_small_forward.18} parent=0 // pred_region
    _
  $region21: #{fcn_small_forward.18} parent=0 // pred_fallthru
    _

// kernel: fcn_small_forward.19
$region0: #{fcn_small_forward.19}
  #allocation0 [shape = 'u32[]', space=smem, size = 0x4, offset = 0x4, fixed_abs, tag = 'smem constant byte address 0x4 - core index']
  #allocation1 [shape = 'u32[144,128]{1,0:T(1,128)}', space=vmem, size = 0x12000, scoped, tag = 'internal scratch']
  %s0 = inlined_call_operand.vmem [shape: bf16[128,576], index: 0, kind: input, shape index: {}]
  %s1 = inlined_call_operand.vmem [shape: bf16[576,64], index: 1, kind: input, shape index: {}]
  %s2 = inlined_call_operand.vmem [shape: f32[1,64], index: 2, kind: input, shape index: {}]
  %s3 = inlined_call_operand.vmem [shape: f32[128,64], index: 3, kind: input, shape index: {}]
  %s4 = inlined_call_operand.vmem [shape: f32[128,64], index: 4, kind: output, shape index: {}]
  %s5 = sld [smem:[#allocation0]]
  $region26: #{fcn_small_forward.19} parent=0
    _
  %s7 = ssub.s32 1, %s5
  %s8 = scalar_select 0, %s7, %s5
  // Predicated region
  $region2: #{fcn_small_forward.19} parent=0 // pred_check
    _
  $region3: #{fcn_small_forward.19} parent=0 // pred_check_branch
    %10 = sbr.rel (0) target = $region5
  $region4: #{fcn_small_forward.19} parent=0 // pred_region
    _
  $region5: #{fcn_small_forward.19} parent=0 // pred_fallthru
    _
  // Predicated region
  $region6: #{fcn_small_forward.19} parent=0 // pred_check
    _
  $region7: #{fcn_small_forward.19} parent=0 // pred_check_branch
    %12 = sbr.rel (0) target = $region9
  $region8: #{fcn_small_forward.19} parent=0 // pred_region
    _
  $region9: #{fcn_small_forward.19} parent=0 // pred_fallthru
    _
  // Predicated region
  $region10: #{fcn_small_forward.19} parent=0 // pred_check
    _
  $region11: #{fcn_small_forward.19} parent=0 // pred_check_branch
    %14 = sbr.rel (0) target = $region13
  $region12: #{fcn_small_forward.19} parent=0 // pred_region
    _
  $region13: #{fcn_small_forward.19} parent=0 // pred_fallthru
    _
  // Predicated region
  $region14: #{fcn_small_forward.19} parent=0 // pred_check
    _
  $region15: #{fcn_small_forward.19} parent=0 // pred_check_branch
    %16 = sbr.rel (0) target = $region17
  $region16: #{fcn_small_forward.19} parent=0 // pred_region
    _
  $region17: #{fcn_small_forward.19} parent=0 // pred_fallthru
    _
  %v18 = vld [vmem:[%s0] sm:$0xff]
  %v19 = vld [vmem:[%s0 + $0x8] sm:$0xff]
  %v20 = vld [vmem:[%s0 + $0x10] sm:$0xf]
  %v21 = vld [vmem:[%s0 + $0x14] sm:$0xff]
  %v22 = vld [vmem:[%s0 + $0x1c] sm:$0xff]
  %v23 = vld [vmem:[%s0 + $0x24] sm:$0xf]
  %v24 = vld [vmem:[%s0 + $0x28] sm:$0xff]
  %v25 = vld [vmem:[%s0 + $0x30] sm:$0xff]
  %v26 = vld [vmem:[%s0 + $0x38] sm:$0xf]
  %v27 = vld [vmem:[%s0 + $0x3c] sm:$0xff]
  %v28 = vld [vmem:[%s0 + $0x44] sm:$0xff]
  %v29 = vld [vmem:[%s0 + $0x4c] sm:$0xf]
  %v30 = vld [vmem:[%s0 + $0x50] sm:$0xff]
  %v31 = vld [vmem:[%s0 + $0x58] sm:$0xff]
  %v32 = vld [vmem:[%s0 + $0x60] sm:$0xf]
  %v33 = vld [vmem:[%s0 + $0x64] sm:$0xff]
  %v34 = vld [vmem:[%s0 + $0x6c] sm:$0xff]
  %v35 = vld [vmem:[%s0 + $0x74] sm:$0xf]
  %v36 = vld [vmem:[%s0 + $0x78] sm:$0xff]
  %v37 = vld [vmem:[%s0 + $0x80] sm:$0xff]
  %v38 = vld [vmem:[%s0 + $0x88] sm:$0xf]
  %v39 = vld [vmem:[%s0 + $0x8c] sm:$0xff]
  %v40 = vld [vmem:[%s0 + $0x94] sm:$0xff]
  %v41 = vld [vmem:[%s0 + $0x9c] sm:$0xf]
  %v42 = vld [vmem:[%s0 + $0xa0] sm:$0xff]
  %v43 = vld [vmem:[%s0 + $0xa8] sm:$0xff]
  %v44 = vld [vmem:[%s0 + $0xb0] sm:$0xf]
  %v45 = vld [vmem:[%s0 + $0xb4] sm:$0xff]
  %v46 = vld [vmem:[%s0 + $0xbc] sm:$0xff]
  %v47 = vld [vmem:[%s0 + $0xc4] sm:$0xf]
  %v48 = vld [vmem:[%s0 + $0xc8] sm:$0xff]
  %v49 = vld [vmem:[%s0 + $0xd0] sm:$0xff]
  %v50 = vld [vmem:[%s0 + $0xd8] sm:$0xf]
  %v51 = vld [vmem:[%s0 + $0xdc] sm:$0xff]
  %v52 = vld [vmem:[%s0 + $0xe4] sm:$0xff]
  %v53 = vld [vmem:[%s0 + $0xec] sm:$0xf]
  %v54 = vld [vmem:[%s0 + $0xf0] sm:$0xff]
  %v55 = vld [vmem:[%s0 + $0xf8] sm:$0xff]
  %v56 = vld [vmem:[%s0 + $0x100] sm:$0xf]
  %v57 = vld [vmem:[%s0 + $0x104] sm:$0xff]
  %v58 = vld [vmem:[%s0 + $0x10c] sm:$0xff]
  %v59 = vld [vmem:[%s0 + $0x114] sm:$0xf]
  %v60 = vld [vmem:[%s0 + $0x118] sm:$0xff]
  %v61 = vld [vmem:[%s0 + $0x120] sm:$0xff]
  %v62 = vld [vmem:[%s0 + $0x128] sm:$0xf]
  %v63 = vld [vmem:[%s0 + $0x12c] sm:$0xff]
  %v64 = vld [vmem:[%s0 + $0x134] sm:$0xff]
  %v65 = vld [vmem:[%s0 + $0x13c] sm:$0xf]
  %v66 = vld [vmem:[%s1] sm:$0xf]
  %v67 = vld [vmem:[%s1 + $0x4] sm:$0xf]
  %v68 = vld [vmem:[%s1 + $0x8] sm:$0xf]
  %v69 = vld [vmem:[%s1 + $0xc] sm:$0xf]
  %v70 = vld [vmem:[%s1 + $0x10] sm:$0xf]
  %v71 = vld [vmem:[%s1 + $0x14] sm:$0xf]
  %v72 = vld [vmem:[%s1 + $0x18] sm:$0xf]
  %v73 = vld [vmem:[%s1 + $0x1c] sm:$0xf]
  %v74 = vld [vmem:[%s1 + $0x20] sm:$0xf]
  %v75 = vld [vmem:[%s1 + $0x24] sm:$0xf]
  %v76 = vld [vmem:[%s1 + $0x28] sm:$0xf]
  %v77 = vld [vmem:[%s1 + $0x2c] sm:$0xf]
  %v78 = vld [vmem:[%s1 + $0x30] sm:$0xf]
  %v79 = vld [vmem:[%s1 + $0x34] sm:$0xf]
  %v80 = vld [vmem:[%s1 + $0x38] sm:$0xf]
  %v81 = vld [vmem:[%s1 + $0x3c] sm:$0xf]
  %v82 = vld [vmem:[%s1 + $0x40] sm:$0xf]
  %v83 = vld [vmem:[%s1 + $0x44] sm:$0xf]
  %v84 = vld [vmem:[%s1 + $0x48] sm:$0xf]
  %v85 = vld [vmem:[%s1 + $0x4c] sm:$0xf]
  %v86 = vld [vmem:[%s1 + $0x50] sm:$0xf]
  %v87 = vld [vmem:[%s1 + $0x54] sm:$0xf]
  %v88 = vld [vmem:[%s1 + $0x58] sm:$0xf]
  %v89 = vld [vmem:[%s1 + $0x5c] sm:$0xf]
  %v90 = vld [vmem:[%s1 + $0x60] sm:$0xf]
  %v91 = vld [vmem:[%s1 + $0x64] sm:$0xf]
  %v92 = vld [vmem:[%s1 + $0x68] sm:$0xf]
  %v93 = vld [vmem:[%s1 + $0x6c] sm:$0xf]
  %v94 = vld [vmem:[%s1 + $0x70] sm:$0xf]
  %v95 = vld [vmem:[%s1 + $0x74] sm:$0xf]
  %v96 = vld [vmem:[%s1 + $0x78] sm:$0xf]
  %v97 = vld [vmem:[%s1 + $0x7c] sm:$0xf]
  %v98 = vld [vmem:[%s1 + $0x80] sm:$0xf]
  %v99 = vld [vmem:[%s1 + $0x84] sm:$0xf]
  %v100 = vld [vmem:[%s1 + $0x88] sm:$0xf]
  %v101 = vld [vmem:[%s1 + $0x8c] sm:$0xf]
  %v102 = vld [vmem:[%s1 + $0x90] sm:$0xf]
  %v103 = vld [vmem:[%s1 + $0x94] sm:$0xf]
  %v104 = vld [vmem:[%s1 + $0x98] sm:$0xf]
  %v105 = vld [vmem:[%s1 + $0x9c] sm:$0xf]
  %v106 = vld [vmem:[%s1 + $0xa0] sm:$0xf]
  %v107 = vld [vmem:[%s1 + $0xa4] sm:$0xf]
  %v108 = vld [vmem:[%s1 + $0xa8] sm:$0xf]
  %v109 = vld [vmem:[%s1 + $0xac] sm:$0xf]
  %v110 = vld [vmem:[%s1 + $0xb0] sm:$0xf]
  %v111 = vld [vmem:[%s1 + $0xb4] sm:$0xf]
  %v112 = vld [vmem:[%s1 + $0xb8] sm:$0xf]
  %v113 = vld [vmem:[%s1 + $0xbc] sm:$0xf]
  %v114 = vld [vmem:[%s1 + $0xc0] sm:$0xf]
  %v115 = vld [vmem:[%s1 + $0xc4] sm:$0xf]
  %v116 = vld [vmem:[%s1 + $0xc8] sm:$0xf]
  %v117 = vld [vmem:[%s1 + $0xcc] sm:$0xf]
  %v118 = vld [vmem:[%s1 + $0xd0] sm:$0xf]
  %v119 = vld [vmem:[%s1 + $0xd4] sm:$0xf]
  %v120 = vld [vmem:[%s1 + $0xd8] sm:$0xf]
  %v121 = vld [vmem:[%s1 + $0xdc] sm:$0xf]
  %v122 = vld [vmem:[%s1 + $0xe0] sm:$0xf]
  %v123 = vld [vmem:[%s1 + $0xe4] sm:$0xf]
  %v124 = vld [vmem:[%s1 + $0xe8] sm:$0xf]
  %v125 = vld [vmem:[%s1 + $0xec] sm:$0xf]
  %v126 = vld [vmem:[%s1 + $0xf0] sm:$0xf]
  %v127 = vld [vmem:[%s1 + $0xf4] sm:$0xf]
  %v128 = vld [vmem:[%s1 + $0xf8] sm:$0xf]
  %v129 = vld [vmem:[%s1 + $0xfc] sm:$0xf]
  %v130 = vld [vmem:[%s1 + $0x100] sm:$0xf]
  %v131 = vld [vmem:[%s1 + $0x104] sm:$0xf]
  %v132 = vld [vmem:[%s1 + $0x108] sm:$0xf]
  %v133 = vld [vmem:[%s1 + $0x10c] sm:$0xf]
  %v134 = vld [vmem:[%s1 + $0x110] sm:$0xf]
  %v135 = vld [vmem:[%s1 + $0x114] sm:$0xf]
  %v136 = vld [vmem:[%s1 + $0x118] sm:$0xf]
  %v137 = vld [vmem:[%s1 + $0x11c] sm:$0xf]
  %v138 = vld [vmem:[%s2] sm:$0x1]
  %v140 = vlaneseq
  %v141 = vshrl.u32 %v140, 7
  %v142 = vsub.s32 0, %v141
  %v143 = vrot.slane %v138, %v142
  %v193 = vunpack.c.l.b16 %v18
  %v194 = vunpack.c.h.b16 %v18
  %v195 = vunpack.c.l.b16 %v19
  %v196 = vunpack.c.h.b16 %v19
  %v197 = vunpack.c.l.b16 %v20
  %v198 = vunpack.c.l.b16 %v21
  %v199 = vunpack.c.h.b16 %v21
  %v200 = vunpack.c.l.b16 %v22
  %v201 = vunpack.c.h.b16 %v22
  %v202 = vunpack.c.l.b16 %v23
  %v203 = vunpack.c.l.b16 %v24
  %v204 = vunpack.c.h.b16 %v24
  %v205 = vunpack.c.l.b16 %v25
  %v206 = vunpack.c.h.b16 %v25
  %v207 = vunpack.c.l.b16 %v26
  %v208 = vunpack.c.l.b16 %v27
  %v209 = vunpack.c.h.b16 %v27
  %v210 = vunpack.c.l.b16 %v28
  %v211 = vunpack.c.h.b16 %v28
  %v212 = vunpack.c.l.b16 %v29
  %v213 = vunpack.c.l.b16 %v30
  %v214 = vunpack.c.h.b16 %v30
  %v215 = vunpack.c.l.b16 %v31
  %v216 = vunpack.c.h.b16 %v31
  %v217 = vunpack.c.l.b16 %v32
  %v218 = vunpack.c.l.b16 %v33
  %v219 = vunpack.c.h.b16 %v33
  %v220 = vunpack.c.l.b16 %v34
  %v221 = vunpack.c.h.b16 %v34
  %v222 = vunpack.c.l.b16 %v35
  %v223 = vunpack.c.l.b16 %v36
  %v224 = vunpack.c.h.b16 %v36
  %v225 = vunpack.c.l.b16 %v37
  %v226 = vunpack.c.h.b16 %v37
  %v227 = vunpack.c.l.b16 %v38
  %v228 = vunpack.c.l.b16 %v39
  %v229 = vunpack.c.h.b16 %v39
  %v230 = vunpack.c.l.b16 %v40
  %v231 = vunpack.c.h.b16 %v40
  %v232 = vunpack.c.l.b16 %v41
  %v233 = vunpack.c.l.b16 %v42
  %v234 = vunpack.c.h.b16 %v42
  %v235 = vunpack.c.l.b16 %v43
  %v236 = vunpack.c.h.b16 %v43
  %v237 = vunpack.c.l.b16 %v44
  %v238 = vunpack.c.l.b16 %v45
  %v239 = vunpack.c.h.b16 %v45
  %v240 = vunpack.c.l.b16 %v46
  %v241 = vunpack.c.h.b16 %v46
  %v242 = vunpack.c.l.b16 %v47
  %v243 = vunpack.c.l.b16 %v48
  %v244 = vunpack.c.h.b16 %v48
  %v245 = vunpack.c.l.b16 %v49
  %v246 = vunpack.c.h.b16 %v49
  %v247 = vunpack.c.l.b16 %v50
  %v248 = vunpack.c.l.b16 %v51
  %v249 = vunpack.c.h.b16 %v51
  %v250 = vunpack.c.l.b16 %v52
  %v251 = vunpack.c.h.b16 %v52
  %v252 = vunpack.c.l.b16 %v53
  %v253 = vunpack.c.l.b16 %v54
  %v254 = vunpack.c.h.b16 %v54
  %v255 = vunpack.c.l.b16 %v55
  %v256 = vunpack.c.h.b16 %v55
  %v257 = vunpack.c.l.b16 %v56
  %v258 = vunpack.c.l.b16 %v57
  %v259 = vunpack.c.h.b16 %v57
  %v260 = vunpack.c.l.b16 %v58
  %v261 = vunpack.c.h.b16 %v58
  %v262 = vunpack.c.l.b16 %v59
  %v263 = vunpack.c.l.b16 %v60
  %v264 = vunpack.c.h.b16 %v60
  %v265 = vunpack.c.l.b16 %v61
  %v266 = vunpack.c.h.b16 %v61
  %v267 = vunpack.c.l.b16 %v62
  %v268 = vunpack.c.l.b16 %v63
  %v269 = vunpack.c.h.b16 %v63
  %v270 = vunpack.c.l.b16 %v64
  %v271 = vunpack.c.h.b16 %v64
  %v272 = vunpack.c.l.b16 %v65
  %v273 = vpack.c.b16 %v198, %v193
  %v274 = vpack.c.b16 %v199, %v194
  %v275 = vpack.c.b16 %v200, %v195
  %v276 = vpack.c.b16 %v201, %v196
  %v277 = vpack.c.b16 %v202, %v197
  %v278 = vpack.c.b16 %v208, %v203
  %v279 = vpack.c.b16 %v209, %v204
  %v280 = vpack.c.b16 %v210, %v205
  %v281 = vpack.c.b16 %v211, %v206
  %v282 = vpack.c.b16 %v212, %v207
  %v283 = vpack.c.b16 %v218, %v213
  %v284 = vpack.c.b16 %v219, %v214
  %v285 = vpack.c.b16 %v220, %v215
  %v286 = vpack.c.b16 %v221, %v216
  %v287 = vpack.c.b16 %v222, %v217
  %v288 = vpack.c.b16 %v228, %v223
  %v289 = vpack.c.b16 %v229, %v224
  %v290 = vpack.c.b16 %v230, %v225
  %v291 = vpack.c.b16 %v231, %v226
  %v292 = vpack.c.b16 %v232, %v227
  %v293 = vpack.c.b16 %v238, %v233
  %v294 = vpack.c.b16 %v239, %v234
  %v295 = vpack.c.b16 %v240, %v235
  %v296 = vpack.c.b16 %v241, %v236
  %v297 = vpack.c.b16 %v242, %v237
  %v298 = vpack.c.b16 %v248, %v243
  %v299 = vpack.c.b16 %v249, %v244
  %v300 = vpack.c.b16 %v250, %v245
  %v301 = vpack.c.b16 %v251, %v246
  %v302 = vpack.c.b16 %v252, %v247
  %v303 = vpack.c.b16 %v258, %v253
  %v304 = vpack.c.b16 %v259, %v254
  %v305 = vpack.c.b16 %v260, %v255
  %v306 = vpack.c.b16 %v261, %v256
  %v307 = vpack.c.b16 %v262, %v257
  %v308 = vpack.c.b16 %v268, %v263
  %v309 = vpack.c.b16 %v269, %v264
  %v310 = vpack.c.b16 %v270, %v265
  %v311 = vpack.c.b16 %v271, %v266
  %v312 = vpack.c.b16 %v272, %v267
  %v417 = vunpack.c.l.b16 %v66
  %v418 = vunpack.c.l.b16 %v67
  %v419 = vunpack.c.l.b16 %v68
  %v420 = vunpack.c.l.b16 %v69
  %v421 = vunpack.c.l.b16 %v70
  %v422 = vunpack.c.l.b16 %v71
  %v423 = vunpack.c.l.b16 %v72
  %v424 = vunpack.c.l.b16 %v73
  %v425 = vunpack.c.l.b16 %v74
  %v426 = vunpack.c.l.b16 %v75
  %v427 = vunpack.c.l.b16 %v76
  %v428 = vunpack.c.l.b16 %v77
  %v429 = vunpack.c.l.b16 %v78
  %v430 = vunpack.c.l.b16 %v79
  %v431 = vunpack.c.l.b16 %v80
  %v432 = vunpack.c.l.b16 %v81
  %v433 = vunpack.c.l.b16 %v82
  %v434 = vunpack.c.l.b16 %v83
  %v435 = vunpack.c.l.b16 %v84
  %v436 = vunpack.c.l.b16 %v85
  %v437 = vunpack.c.l.b16 %v86
  %v438 = vunpack.c.l.b16 %v87
  %v439 = vunpack.c.l.b16 %v88
  %v440 = vunpack.c.l.b16 %v89
  %v441 = vunpack.c.l.b16 %v90
  %v442 = vunpack.c.l.b16 %v91
  %v443 = vunpack.c.l.b16 %v92
  %v444 = vunpack.c.l.b16 %v93
  %v445 = vunpack.c.l.b16 %v94
  %v446 = vunpack.c.l.b16 %v95
  %v447 = vunpack.c.l.b16 %v96
  %v448 = vunpack.c.l.b16 %v97
  %v449 = vunpack.c.l.b16 %v98
  %v450 = vunpack.c.l.b16 %v99
  %v451 = vunpack.c.l.b16 %v100
  %v452 = vunpack.c.l.b16 %v101
  %v453 = vunpack.c.l.b16 %v102
  %v454 = vunpack.c.l.b16 %v103
  %v455 = vunpack.c.l.b16 %v104
  %v456 = vunpack.c.l.b16 %v105
  %v457 = vunpack.c.l.b16 %v106
  %v458 = vunpack.c.l.b16 %v107
  %v459 = vunpack.c.l.b16 %v108
  %v460 = vunpack.c.l.b16 %v109
  %v461 = vunpack.c.l.b16 %v110
  %v462 = vunpack.c.l.b16 %v111
  %v463 = vunpack.c.l.b16 %v112
  %v464 = vunpack.c.l.b16 %v113
  %v465 = vunpack.c.l.b16 %v114
  %v466 = vunpack.c.l.b16 %v115
  %v467 = vunpack.c.l.b16 %v116
  %v468 = vunpack.c.l.b16 %v117
  %v469 = vunpack.c.l.b16 %v118
  %v470 = vunpack.c.l.b16 %v119
  %v471 = vunpack.c.l.b16 %v120
  %v472 = vunpack.c.l.b16 %v121
  %v473 = vunpack.c.l.b16 %v122
  %v474 = vunpack.c.l.b16 %v123
  %v475 = vunpack.c.l.b16 %v124
  %v476 = vunpack.c.l.b16 %v125
  %v477 = vunpack.c.l.b16 %v126
  %v478 = vunpack.c.l.b16 %v127
  %v479 = vunpack.c.l.b16 %v128
  %v480 = vunpack.c.l.b16 %v129
  %v481 = vunpack.c.l.b16 %v130
  %v482 = vunpack.c.l.b16 %v131
  %v483 = vunpack.c.l.b16 %v132
  %v484 = vunpack.c.l.b16 %v133
  %v485 = vunpack.c.l.b16 %v134
  %v486 = vunpack.c.l.b16 %v135
  %v487 = vunpack.c.l.b16 %v136
  %v488 = vunpack.c.l.b16 %v137
  %v489 = vpack.c.b16 %v418, %v417
  %v490 = vpack.c.b16 %v420, %v419
  %v491 = vpack.c.b16 %v422, %v421
  %v492 = vpack.c.b16 %v424, %v423
  %v493 = vpack.c.b16 %v426, %v425
  %v494 = vpack.c.b16 %v428, %v427
  %v495 = vpack.c.b16 %v430, %v429
  %v496 = vpack.c.b16 %v432, %v431
  %v497 = vpack.c.b16 %v434, %v433
  %v498 = vpack.c.b16 %v436, %v435
  %v499 = vpack.c.b16 %v438, %v437
  %v500 = vpack.c.b16 %v440, %v439
  %v501 = vpack.c.b16 %v442, %v441
  %v502 = vpack.c.b16 %v444, %v443
  %v503 = vpack.c.b16 %v446, %v445
  %v504 = vpack.c.b16 %v448, %v447
  %v505 = vpack.c.b16 %v450, %v449
  %v506 = vpack.c.b16 %v452, %v451
  %v507 = vpack.c.b16 %v454, %v453
  %v508 = vpack.c.b16 %v456, %v455
  %v509 = vpack.c.b16 %v458, %v457
  %v510 = vpack.c.b16 %v460, %v459
  %v511 = vpack.c.b16 %v462, %v461
  %v512 = vpack.c.b16 %v464, %v463
  %v513 = vpack.c.b16 %v466, %v465
  %v514 = vpack.c.b16 %v468, %v467
  %v515 = vpack.c.b16 %v470, %v469
  %v516 = vpack.c.b16 %v472, %v471
  %v517 = vpack.c.b16 %v474, %v473
  %v518 = vpack.c.b16 %v476, %v475
  %v519 = vpack.c.b16 %v478, %v477
  %v520 = vpack.c.b16 %v480, %v479
  %v521 = vpack.c.b16 %v482, %v481
  %v522 = vpack.c.b16 %v484, %v483
  %v523 = vpack.c.b16 %v486, %v485
  %v524 = vpack.c.b16 %v488, %v487
  %vm561 = vcmask 523264
  %v563 = vsel %vm561, %v277, 0
  %v566 = vsel %vm561, %v282, 0
  %v569 = vsel %vm561, %v287, 0
  %v572 = vsel %vm561, %v292, 0
  %v575 = vsel %vm561, %v297, 0
  %v578 = vsel %vm561, %v302, 0
  %v581 = vsel %vm561, %v307, 0
  %v584 = vsel %vm561, %v312, 0
  %586 = vmatprep.subr.bf16.mxu0 0
  %587 = vmatpush1.bf16.msra.mxu0 %v489
  %588 = vmatprep.subr.bf16.mxu0 0
  %589 = vmatpush1.bf16.msra.mxu0 %v490
  %590 = vmatprep.subr.bf16.mxu0 0
  %591 = vmatpush1.bf16.msra.mxu0 %v491
  %592 = vmatprep.subr.bf16.mxu0 0
  %593 = vmatpush1.bf16.msra.mxu0 %v492
  %594 = vmatprep.subr.bf16.mxu0 0
  %595 = vmatpush1.bf16.msra.mxu0 %v493
  %596 = vmatprep.subr.bf16.mxu0 0
  %597 = vmatpush1.bf16.msra.mxu0 %v494
  %598 = vmatprep.subr.bf16.mxu0 0
  %599 = vmatpush1.bf16.msra.mxu0 %v495
  %600 = vmatprep.subr.bf16.mxu0 0
  %601 = vmatpush1.bf16.msra.mxu0 %v496
  %602 = vmatprep.subr.bf16.mxu0 0
  %603 = vmatpush1.bf16.msra.mxu0 %v497
  %604 = vmatprep.subr.bf16.mxu0 0
  %605 = vmatpush1.bf16.msra.mxu0 %v498
  %606 = vmatprep.subr.bf16.mxu0 0
  %607 = vmatpush1.bf16.msra.mxu0 %v499
  %608 = vmatprep.subr.bf16.mxu0 0
  %609 = vmatpush1.bf16.msra.mxu0 %v500
  %610 = vmatprep.subr.bf16.mxu0 0
  %611 = vmatpush1.bf16.msra.mxu0 %v501
  %612 = vmatprep.subr.bf16.mxu0 0
  %613 = vmatpush1.bf16.msra.mxu0 %v502
  %614 = vmatprep.subr.bf16.mxu0 0
  %615 = vmatpush1.bf16.msra.mxu0 %v503
  %616 = vmatprep.subr.bf16.mxu0 0
  %617 = vmatpush1.bf16.msra.mxu0 %v504
  %618 = vmatprep.mubr.bf16.mxu0 %v274
  %619 = vmatmul.mubr.bf16.gmra.mrb[0].mxu0 %v273
  %v620 = vpop.f32.mrb[0].mxu0
  %v621 = vadd.f32 %v143, %v620
  %v622 = vpop.f32.mrb[0].mxu0
  %v623 = vpop.f32.mrb[0].mxu0
  %v624 = vadd.f32 %v143, %v623
  %v625 = vpop.f32.mrb[0].mxu0
  %626 = vmatprep.mubr.bf16.mxu0 %v279
  %627 = vmatmul.mubr.bf16.gmra.mrb[0].mxu0 %v278
  %v628 = vpop.f32.mrb[0].mxu0
  %v629 = vadd.f32 %v143, %v628
  %v630 = vpop.f32.mrb[0].mxu0
  %v631 = vpop.f32.mrb[0].mxu0
  %v632 = vadd.f32 %v143, %v631
  %v633 = vpop.f32.mrb[0].mxu0
  %634 = vmatprep.mubr.bf16.mxu0 %v284
  %635 = vmatmul.mubr.bf16.gmra.mrb[0].mxu0 %v283
  %v636 = vpop.f32.mrb[0].mxu0
  %v637 = vadd.f32 %v143, %v636
  %v638 = vpop.f32.mrb[0].mxu0
  %v639 = vpop.f32.mrb[0].mxu0
  %v640 = vadd.f32 %v143, %v639
  %v641 = vpop.f32.mrb[0].mxu0
  %642 = vmatprep.mubr.bf16.mxu0 %v289
  %643 = vmatmul.mubr.bf16.gmra.mrb[0].mxu0 %v288
  %v644 = vpop.f32.mrb[0].mxu0
  %v645 = vadd.f32 %v143, %v644
  %v646 = vpop.f32.mrb[0].mxu0
  %v647 = vpop.f32.mrb[0].mxu0
  %v648 = vadd.f32 %v143, %v647
  %v649 = vpop.f32.mrb[0].mxu0
  %650 = vmatprep.mubr.bf16.mxu0 %v294
  %651 = vmatmul.mubr.bf16.gmra.mrb[0].mxu0 %v293
  %v652 = vpop.f32.mrb[0].mxu0
  %v653 = vadd.f32 %v143, %v652
  %v654 = vpop.f32.mrb[0].mxu0
  %v655 = vpop.f32.mrb[0].mxu0
  %v656 = vadd.f32 %v143, %v655
  %v657 = vpop.f32.mrb[0].mxu0
  %658 = vmatprep.mubr.bf16.mxu0 %v299
  %659 = vmatmul.mubr.bf16.gmra.mrb[0].mxu0 %v298
  %v660 = vpop.f32.mrb[0].mxu0
  %v661 = vadd.f32 %v143, %v660
  %v662 = vpop.f32.mrb[0].mxu0
  %v663 = vpop.f32.mrb[0].mxu0
  %v664 = vadd.f32 %v143, %v663
  %v665 = vpop.f32.mrb[0].mxu0
  %666 = vmatprep.mubr.bf16.mxu0 %v304
  %667 = vmatmul.mubr.bf16.gmra.mrb[0].mxu0 %v303
  %v668 = vpop.f32.mrb[0].mxu0
  %v669 = vadd.f32 %v143, %v668
  %v670 = vpop.f32.mrb[0].mxu0
  %v671 = vpop.f32.mrb[0].mxu0
  %v672 = vadd.f32 %v143, %v671
  %v673 = vpop.f32.mrb[0].mxu0
  %674 = vmatprep.mubr.bf16.mxu0 %v309
  %675 = vmatmul.mubr.bf16.gmra.mrb[0].mxu0 %v308
  %v676 = vpop.f32.mrb[0].mxu0
  %v677 = vadd.f32 %v143, %v676
  %v678 = vpop.f32.mrb[0].mxu0
  %v679 = vpop.f32.mrb[0].mxu0
  %v680 = vadd.f32 %v143, %v679
  %v681 = vpop.f32.mrb[0].mxu0
  %682 = vdwg.mxu0
  %683 = vmatprep.subr.bf16.mxu0 0
  %684 = vmatpush1.bf16.msra.mxu0 %v505
  %685 = vmatprep.subr.bf16.mxu0 0
  %686 = vmatpush1.bf16.msra.mxu0 %v506
  %687 = vmatprep.subr.bf16.mxu0 0
  %688 = vmatpush1.bf16.msra.mxu0 %v507
  %689 = vmatprep.subr.bf16.mxu0 0
  %690 = vmatpush1.bf16.msra.mxu0 %v508
  %691 = vmatprep.subr.bf16.mxu0 0
  %692 = vmatpush1.bf16.msra.mxu0 %v509
  %693 = vmatprep.subr.bf16.mxu0 0
  %694 = vmatpush1.bf16.msra.mxu0 %v510
  %695 = vmatprep.subr.bf16.mxu0 0
  %696 = vmatpush1.bf16.msra.mxu0 %v511
  %697 = vmatprep.subr.bf16.mxu0 0
  %698 = vmatpush1.bf16.msra.mxu0 %v512
  %699 = vmatprep.subr.bf16.mxu0 0
  %700 = vmatpush1.bf16.msra.mxu0 %v513
  %701 = vmatprep.subr.bf16.mxu0 0
  %702 = vmatpush1.bf16.msra.mxu0 %v514
  %703 = vmatprep.subr.bf16.mxu0 0
  %704 = vmatpush1.bf16.msra.mxu0 %v515
  %705 = vmatprep.subr.bf16.mxu0 0
  %706 = vmatpush1.bf16.msra.mxu0 %v516
  %707 = vmatprep.subr.bf16.mxu0 0
  %708 = vmatpush1.bf16.msra.mxu0 %v517
  %709 = vmatprep.subr.bf16.mxu0 0
  %710 = vmatpush1.bf16.msra.mxu0 %v518
  %711 = vmatprep.subr.bf16.mxu0 0
  %712 = vmatpush1.bf16.msra.mxu0 %v519
  %713 = vmatprep.subr.bf16.mxu0 0
  %714 = vmatpush1.bf16.msra.mxu0 %v520
  %715 = vmatprep.mubr.bf16.mxu0 %v276
  %716 = vmatmul.mubr.bf16.gmra.mrb[0].mxu0 %v275
  %v717 = vpop.f32.mrb[0].mxu0
  %v718 = vadd.f32 %v621, %v717
  %v719 = vpop.f32.mrb[0].mxu0
  %v720 = vpop.f32.mrb[0].mxu0
  %v721 = vadd.f32 %v624, %v720
  %v722 = vpop.f32.mrb[0].mxu0
  %723 = vmatprep.mubr.bf16.mxu0 %v281
  %724 = vmatmul.mubr.bf16.gmra.mrb[0].mxu0 %v280
  %v725 = vpop.f32.mrb[0].mxu0
  %v726 = vadd.f32 %v629, %v725
  %v727 = vpop.f32.mrb[0].mxu0
  %v728 = vpop.f32.mrb[0].mxu0
  %v729 = vadd.f32 %v632, %v728
  %v730 = vpop.f32.mrb[0].mxu0
  %731 = vmatprep.mubr.bf16.mxu0 %v286
  %732 = vmatmul.mubr.bf16.gmra.mrb[0].mxu0 %v285
  %v733 = vpop.f32.mrb[0].mxu0
  %v734 = vadd.f32 %v637, %v733
  %v735 = vpop.f32.mrb[0].mxu0
  %v736 = vpop.f32.mrb[0].mxu0
  %v737 = vadd.f32 %v640, %v736
  %v738 = vpop.f32.mrb[0].mxu0
  %739 = vmatprep.mubr.bf16.mxu0 %v291
  %740 = vmatmul.mubr.bf16.gmra.mrb[0].mxu0 %v290
  %v741 = vpop.f32.mrb[0].mxu0
  %v742 = vadd.f32 %v645, %v741
  %v743 = vpop.f32.mrb[0].mxu0
  %v744 = vpop.f32.mrb[0].mxu0
  %v745 = vadd.f32 %v648, %v744
  %v746 = vpop.f32.mrb[0].mxu0
  %747 = vmatprep.mubr.bf16.mxu0 %v296
  %748 = vmatmul.mubr.bf16.gmra.mrb[0].mxu0 %v295
  %v749 = vpop.f32.mrb[0].mxu0
  %v750 = vadd.f32 %v653, %v749
  %v751 = vpop.f32.mrb[0].mxu0
  %v752 = vpop.f32.mrb[0].mxu0
  %v753 = vadd.f32 %v656, %v752
  %v754 = vpop.f32.mrb[0].mxu0
  %755 = vmatprep.mubr.bf16.mxu0 %v301
  %756 = vmatmul.mubr.bf16.gmra.mrb[0].mxu0 %v300
  %v757 = vpop.f32.mrb[0].mxu0
  %v758 = vadd.f32 %v661, %v757
  %v759 = vpop.f32.mrb[0].mxu0
  %v760 = vpop.f32.mrb[0].mxu0
  %v761 = vadd.f32 %v664, %v760
  %v762 = vpop.f32.mrb[0].mxu0
  %763 = vmatprep.mubr.bf16.mxu0 %v306
  %764 = vmatmul.mubr.bf16.gmra.mrb[0].mxu0 %v305
  %v765 = vpop.f32.mrb[0].mxu0
  %v766 = vadd.f32 %v669, %v765
  %v767 = vpop.f32.mrb[0].mxu0
  %v768 = vpop.f32.mrb[0].mxu0
  %v769 = vadd.f32 %v672, %v768
  %v770 = vpop.f32.mrb[0].mxu0
  %771 = vmatprep.mubr.bf16.mxu0 %v311
  %772 = vmatmul.mubr.bf16.gmra.mrb[0].mxu0 %v310
  %v773 = vpop.f32.mrb[0].mxu0
  %v774 = vadd.f32 %v677, %v773
  %v775 = vpop.f32.mrb[0].mxu0
  %v776 = vpop.f32.mrb[0].mxu0
  %v777 = vadd.f32 %v680, %v776
  %v778 = vpop.f32.mrb[0].mxu0
  %779 = vdwg.mxu0
  %780 = vmatprep.subr.bf16.mxu0 0
  %781 = vmatpush1.bf16.msra.mxu0 %v521
  %782 = vmatprep.subr.bf16.mxu0 0
  %783 = vmatpush1.bf16.msra.mxu0 %v522
  %784 = vmatprep.subr.bf16.mxu0 0
  %785 = vmatpush1.bf16.msra.mxu0 %v523
  %786 = vmatprep.subr.bf16.mxu0 0
  %787 = vmatpush1.bf16.msra.mxu0 %v524
  %788 = vmatprep.subr.bf16.mxu0 0
  %789 = vmatpush1.bf16.msra.mxu0 0
  %790 = vmatprep.subr.bf16.mxu0 0
  %791 = vmatpush1.bf16.msra.mxu0 0
  %792 = vmatprep.subr.bf16.mxu0 0
  %793 = vmatpush1.bf16.msra.mxu0 0
  %794 = vmatprep.subr.bf16.mxu0 0
  %795 = vmatpush1.bf16.msra.mxu0 0
  %796 = vmatprep.subr.bf16.mxu0 0
  %797 = vmatpush1.bf16.msra.mxu0 0
  %798 = vmatprep.subr.bf16.mxu0 0
  %799 = vmatpush1.bf16.msra.mxu0 0
  %800 = vmatprep.subr.bf16.mxu0 0
  %801 = vmatpush1.bf16.msra.mxu0 0
  %802 = vmatprep.subr.bf16.mxu0 0
  %803 = vmatpush1.bf16.msra.mxu0 0
  %804 = vmatprep.subr.bf16.mxu0 0
  %805 = vmatpush1.bf16.msra.mxu0 0
  %806 = vmatprep.subr.bf16.mxu0 0
  %807 = vmatpush1.bf16.msra.mxu0 0
  %808 = vmatprep.subr.bf16.mxu0 0
  %809 = vmatpush1.bf16.msra.mxu0 0
  %810 = vmatprep.subr.bf16.mxu0 0
  %811 = vmatpush1.bf16.msra.mxu0 0
  %812 = vmatprep.mubr.bf16.mxu0 0
  %813 = vmatmul.mubr.bf16.gmra.mrb[0].mxu0 %v563
  %v814 = vpop.f32.mrb[0].mxu0
  %v815 = vadd.f32 %v718, %v814
  %v816 = vpop.f32.mrb[0].mxu0
  %v817 = vpop.f32.mrb[0].mxu0
  %v818 = vadd.f32 %v721, %v817
  %v819 = vpop.f32.mrb[0].mxu0
  %820 = vmatprep.mubr.bf16.mxu0 0
  %821 = vmatmul.mubr.bf16.gmra.mrb[0].mxu0 %v566
  %v822 = vpop.f32.mrb[0].mxu0
  %v823 = vadd.f32 %v726, %v822
  %v824 = vpop.f32.mrb[0].mxu0
  %v825 = vpop.f32.mrb[0].mxu0
  %v826 = vadd.f32 %v729, %v825
  %v827 = vpop.f32.mrb[0].mxu0
  %828 = vmatprep.mubr.bf16.mxu0 0
  %829 = vmatmul.mubr.bf16.gmra.mrb[0].mxu0 %v569
  %v830 = vpop.f32.mrb[0].mxu0
  %v831 = vadd.f32 %v734, %v830
  %v832 = vpop.f32.mrb[0].mxu0
  %v833 = vpop.f32.mrb[0].mxu0
  %v834 = vadd.f32 %v737, %v833
  %v835 = vpop.f32.mrb[0].mxu0
  %836 = vmatprep.mubr.bf16.mxu0 0
  %837 = vmatmul.mubr.bf16.gmra.mrb[0].mxu0 %v572
  %v838 = vpop.f32.mrb[0].mxu0
  %v839 = vadd.f32 %v742, %v838
  %v840 = vpop.f32.mrb[0].mxu0
  %v841 = vpop.f32.mrb[0].mxu0
  %v842 = vadd.f32 %v745, %v841
  %v843 = vpop.f32.mrb[0].mxu0
  %844 = vmatprep.mubr.bf16.mxu0 0
  %845 = vmatmul.mubr.bf16.gmra.mrb[0].mxu0 %v575
  %v846 = vpop.f32.mrb[0].mxu0
  %v847 = vadd.f32 %v750, %v846
  %v848 = vpop.f32.mrb[0].mxu0
  %v849 = vpop.f32.mrb[0].mxu0
  %v850 = vadd.f32 %v753, %v849
  %v851 = vpop.f32.mrb[0].mxu0
  %852 = vmatprep.mubr.bf16.mxu0 0
  %853 = vmatmul.mubr.bf16.gmra.mrb[0].mxu0 %v578
  %v854 = vpop.f32.mrb[0].mxu0
  %v855 = vadd.f32 %v758, %v854
  %v856 = vpop.f32.mrb[0].mxu0
  %v857 = vpop.f32.mrb[0].mxu0
  %v858 = vadd.f32 %v761, %v857
  %v859 = vpop.f32.mrb[0].mxu0
  %860 = vmatprep.mubr.bf16.mxu0 0
  %861 = vmatmul.mubr.bf16.gmra.mrb[0].mxu0 %v581
  %v862 = vpop.f32.mrb[0].mxu0
  %v863 = vadd.f32 %v766, %v862
  %v864 = vpop.f32.mrb[0].mxu0
  %v865 = vpop.f32.mrb[0].mxu0
  %v866 = vadd.f32 %v769, %v865
  %v867 = vpop.f32.mrb[0].mxu0
  %868 = vmatprep.mubr.bf16.mxu0 0
  %869 = vmatmul.mubr.bf16.gmra.mrb[0].mxu0 %v584
  %v870 = vpop.f32.mrb[0].mxu0
  %v871 = vadd.f32 %v774, %v870
  %v872 = vpop.f32.mrb[0].mxu0
  %v873 = vpop.f32.mrb[0].mxu0
  %v874 = vadd.f32 %v777, %v873
  %v875 = vpop.f32.mrb[0].mxu0
  %876 = vdwg.mxu0
  %v877 = vld [vmem:[%s3] sm:$0xff]
  %v878 = vld [vmem:[%s3 + $0x8] sm:$0xff]
  %v879 = vld [vmem:[%s3 + $0x10] sm:$0xff]
  %v880 = vld [vmem:[%s3 + $0x18] sm:$0xff]
  %v881 = vld [vmem:[%s3 + $0x20] sm:$0xff]
  %v882 = vld [vmem:[%s3 + $0x28] sm:$0xff]
  %v883 = vld [vmem:[%s3 + $0x30] sm:$0xff]
  %v884 = vld [vmem:[%s3 + $0x38] sm:$0xff]
  %v885 = vld [vmem:[%s3 + $0x40] sm:$0xff]
  %v886 = vld [vmem:[%s3 + $0x48] sm:$0xff]
  %v887 = vld [vmem:[%s3 + $0x50] sm:$0xff]
  %v888 = vld [vmem:[%s3 + $0x58] sm:$0xff]
  %v889 = vld [vmem:[%s3 + $0x60] sm:$0xff]
  %v890 = vld [vmem:[%s3 + $0x68] sm:$0xff]
  %v891 = vld [vmem:[%s3 + $0x70] sm:$0xff]
  %v892 = vld [vmem:[%s3 + $0x78] sm:$0xff]
  %v893 = vadd.f32 %v815, %v877
  %v894 = vadd.f32 %v818, %v878
  %v895 = vadd.f32 %v823, %v879
  %v896 = vadd.f32 %v826, %v880
  %v897 = vadd.f32 %v831, %v881
  %v898 = vadd.f32 %v834, %v882
  %v899 = vadd.f32 %v839, %v883
  %v900 = vadd.f32 %v842, %v884
  %v901 = vadd.f32 %v847, %v885
  %v902 = vadd.f32 %v850, %v886
  %v903 = vadd.f32 %v855, %v887
  %v904 = vadd.f32 %v858, %v888
  %v905 = vadd.f32 %v863, %v889
  %v906 = vadd.f32 %v866, %v890
  %v907 = vadd.f32 %v871, %v891
  %v908 = vadd.f32 %v874, %v892
  %v909 = vmax.f32 %v893, 0.0
  %v910 = vmax.f32 %v894, 0.0
  %v911 = vmax.f32 %v895, 0.0
  %v912 = vmax.f32 %v896, 0.0
  %v913 = vmax.f32 %v897, 0.0
  %v914 = vmax.f32 %v898, 0.0
  %v915 = vmax.f32 %v899, 0.0
  %v916 = vmax.f32 %v900, 0.0
  %v917 = vmax.f32 %v901, 0.0
  %v918 = vmax.f32 %v902, 0.0
  %v919 = vmax.f32 %v903, 0.0
  %v920 = vmax.f32 %v904, 0.0
  %v921 = vmax.f32 %v905, 0.0
  %v922 = vmax.f32 %v906, 0.0
  %v923 = vmax.f32 %v907, 0.0
  %v924 = vmax.f32 %v908, 0.0
  %925 = vst.msk [vmem:[%s4] sm:$0xff] %vm561, %v909
  %926 = vst.msk [vmem:[%s4 + $0x8] sm:$0xff] %vm561, %v910
  %927 = vst.msk [vmem:[%s4 + $0x10] sm:$0xff] %vm561, %v911
  %928 = vst.msk [vmem:[%s4 + $0x18] sm:$0xff] %vm561, %v912
  %929 = vst.msk [vmem:[%s4 + $0x20] sm:$0xff] %vm561, %v913
  %930 = vst.msk [vmem:[%s4 + $0x28] sm:$0xff] %vm561, %v914
  %931 = vst.msk [vmem:[%s4 + $0x30] sm:$0xff] %vm561, %v915
  %932 = vst.msk [vmem:[%s4 + $0x38] sm:$0xff] %vm561, %v916
  %933 = vst.msk [vmem:[%s4 + $0x40] sm:$0xff] %vm561, %v917
  %934 = vst.msk [vmem:[%s4 + $0x48] sm:$0xff] %vm561, %v918
  %935 = vst.msk [vmem:[%s4 + $0x50] sm:$0xff] %vm561, %v919
  %936 = vst.msk [vmem:[%s4 + $0x58] sm:$0xff] %vm561, %v920
  %937 = vst.msk [vmem:[%s4 + $0x60] sm:$0xff] %vm561, %v921
  %938 = vst.msk [vmem:[%s4 + $0x68] sm:$0xff] %vm561, %v922
  %939 = vst.msk [vmem:[%s4 + $0x70] sm:$0xff] %vm561, %v923
  %940 = vst.msk [vmem:[%s4 + $0x78] sm:$0xff] %vm561, %v924
  // Predicated region
  $region18: #{fcn_small_forward.19} parent=0 // pred_check
    _
  $region19: #{fcn_small_forward.19} parent=0 // pred_check_branch
    %942 = sbr.rel (0) target = $region21
  $region20: #{fcn_small_forward.19} parent=0 // pred_region
    _
  $region21: #{fcn_small_forward.19} parent=0 // pred_fallthru
    _
  // Predicated region
  $region22: #{fcn_small_forward.19} parent=0 // pred_check
    _
  $region23: #{fcn_small_forward.19} parent=0 // pred_check_branch
    %944 = sbr.rel (0) target = $region25
  $region24: #{fcn_small_forward.19} parent=0 // pred_region
    _
  $region25: #{fcn_small_forward.19} parent=0 // pred_fallthru
    _

// kernel: fcn_small_forward.25
$region0: #{fcn_small_forward.25}
  #allocation0 [shape = 'u32[]', space=smem, size = 0x4, offset = 0x4, fixed_abs, tag = 'smem constant byte address 0x4 - core index']
  #allocation1 [shape = 'u32[144,128]{1,0:T(1,128)}', space=vmem, size = 0x12000, scoped, tag = 'internal scratch']
  %s0 = inlined_call_operand.vmem [shape: bf16[32,576], index: 0, kind: input, shape index: {}]
  %s1 = inlined_call_operand.vmem [shape: bf16[576,128], index: 1, kind: input, shape index: {}]
  %s2 = inlined_call_operand.vmem [shape: f32[1,128], index: 2, kind: input, shape index: {}]
  %s3 = inlined_call_operand.vmem [shape: f32[32,128], index: 3, kind: output, shape index: {}]
  %s4 = sld [smem:[#allocation0]]
  $region22: #{fcn_small_forward.25} parent=0
    _
  %s6 = ssub.s32 1, %s4
  %s7 = scalar_select 0, %s6, %s4
  // Predicated region
  $region2: #{fcn_small_forward.25} parent=0 // pred_check
    _
  $region3: #{fcn_small_forward.25} parent=0 // pred_check_branch
    %9 = sbr.rel (0) target = $region5
  $region4: #{fcn_small_forward.25} parent=0 // pred_region
    _
  $region5: #{fcn_small_forward.25} parent=0 // pred_fallthru
    _
  // Predicated region
  $region6: #{fcn_small_forward.25} parent=0 // pred_check
    _
  $region7: #{fcn_small_forward.25} parent=0 // pred_check_branch
    %11 = sbr.rel (0) target = $region9
  $region8: #{fcn_small_forward.25} parent=0 // pred_region
    _
  $region9: #{fcn_small_forward.25} parent=0 // pred_fallthru
    _
  // Predicated region
  $region10: #{fcn_small_forward.25} parent=0 // pred_check
    _
  $region11: #{fcn_small_forward.25} parent=0 // pred_check_branch
    %13 = sbr.rel (0) target = $region13
  $region12: #{fcn_small_forward.25} parent=0 // pred_region
    _
  $region13: #{fcn_small_forward.25} parent=0 // pred_fallthru
    _
  %v15 = vld [vmem:[%s0] sm:$0xff]
  %v16 = vld [vmem:[%s0 + $0x8] sm:$0xff]
  %v17 = vld [vmem:[%s0 + $0x10] sm:$0xf]
  %v18 = vld [vmem:[%s0 + $0x14] sm:$0xff]
  %v19 = vld [vmem:[%s0 + $0x1c] sm:$0xff]
  %v20 = vld [vmem:[%s0 + $0x24] sm:$0xf]
  %v21 = vld [vmem:[%s0 + $0x28] sm:$0xff]
  %v22 = vld [vmem:[%s0 + $0x30] sm:$0xff]
  %v23 = vld [vmem:[%s0 + $0x38] sm:$0xf]
  %v24 = vld [vmem:[%s0 + $0x3c] sm:$0xff]
  %v25 = vld [vmem:[%s0 + $0x44] sm:$0xff]
  %v26 = vld [vmem:[%s0 + $0x4c] sm:$0xf]
  %v27 = vld [vmem:[%s1] sm:$0xf]
  %v28 = vld [vmem:[%s1 + $0x4] sm:$0xf]
  %v29 = vld [vmem:[%s1 + $0x8] sm:$0xf]
  %v30 = vld [vmem:[%s1 + $0xc] sm:$0xf]
  %v31 = vld [vmem:[%s1 + $0x10] sm:$0xf]
  %v32 = vld [vmem:[%s1 + $0x14] sm:$0xf]
  %v33 = vld [vmem:[%s1 + $0x18] sm:$0xf]
  %v34 = vld [vmem:[%s1 + $0x1c] sm:$0xf]
  %v35 = vld [vmem:[%s1 + $0x20] sm:$0xf]
  %v36 = vld [vmem:[%s1 + $0x24] sm:$0xf]
  %v37 = vld [vmem:[%s1 + $0x28] sm:$0xf]
  %v38 = vld [vmem:[%s1 + $0x2c] sm:$0xf]
  %v39 = vld [vmem:[%s1 + $0x30] sm:$0xf]
  %v40 = vld [vmem:[%s1 + $0x34] sm:$0xf]
  %v41 = vld [vmem:[%s1 + $0x38] sm:$0xf]
  %v42 = vld [vmem:[%s1 + $0x3c] sm:$0xf]
  %v43 = vld [vmem:[%s1 + $0x40] sm:$0xf]
  %v44 = vld [vmem:[%s1 + $0x44] sm:$0xf]
  %v45 = vld [vmem:[%s1 + $0x48] sm:$0xf]
  %v46 = vld [vmem:[%s1 + $0x4c] sm:$0xf]
  %v47 = vld [vmem:[%s1 + $0x50] sm:$0xf]
  %v48 = vld [vmem:[%s1 + $0x54] sm:$0xf]
  %v49 = vld [vmem:[%s1 + $0x58] sm:$0xf]
  %v50 = vld [vmem:[%s1 + $0x5c] sm:$0xf]
  %v51 = vld [vmem:[%s1 + $0x60] sm:$0xf]
  %v52 = vld [vmem:[%s1 + $0x64] sm:$0xf]
  %v53 = vld [vmem:[%s1 + $0x68] sm:$0xf]
  %v54 = vld [vmem:[%s1 + $0x6c] sm:$0xf]
  %v55 = vld [vmem:[%s1 + $0x70] sm:$0xf]
  %v56 = vld [vmem:[%s1 + $0x74] sm:$0xf]
  %v57 = vld [vmem:[%s1 + $0x78] sm:$0xf]
  %v58 = vld [vmem:[%s1 + $0x7c] sm:$0xf]
  %v59 = vld [vmem:[%s1 + $0x80] sm:$0xf]
  %v60 = vld [vmem:[%s1 + $0x84] sm:$0xf]
  %v61 = vld [vmem:[%s1 + $0x88] sm:$0xf]
  %v62 = vld [vmem:[%s1 + $0x8c] sm:$0xf]
  %v63 = vld [vmem:[%s1 + $0x90] sm:$0xf]
  %v64 = vld [vmem:[%s1 + $0x94] sm:$0xf]
  %v65 = vld [vmem:[%s1 + $0x98] sm:$0xf]
  %v66 = vld [vmem:[%s1 + $0x9c] sm:$0xf]
  %v67 = vld [vmem:[%s1 + $0xa0] sm:$0xf]
  %v68 = vld [vmem:[%s1 + $0xa4] sm:$0xf]
  %v69 = vld [vmem:[%s1 + $0xa8] sm:$0xf]
  %v70 = vld [vmem:[%s1 + $0xac] sm:$0xf]
  %v71 = vld [vmem:[%s1 + $0xb0] sm:$0xf]
  %v72 = vld [vmem:[%s1 + $0xb4] sm:$0xf]
  %v73 = vld [vmem:[%s1 + $0xb8] sm:$0xf]
  %v74 = vld [vmem:[%s1 + $0xbc] sm:$0xf]
  %v75 = vld [vmem:[%s1 + $0xc0] sm:$0xf]
  %v76 = vld [vmem:[%s1 + $0xc4] sm:$0xf]
  %v77 = vld [vmem:[%s1 + $0xc8] sm:$0xf]
  %v78 = vld [vmem:[%s1 + $0xcc] sm:$0xf]
  %v79 = vld [vmem:[%s1 + $0xd0] sm:$0xf]
  %v80 = vld [vmem:[%s1 + $0xd4] sm:$0xf]
  %v81 = vld [vmem:[%s1 + $0xd8] sm:$0xf]
  %v82 = vld [vmem:[%s1 + $0xdc] sm:$0xf]
  %v83 = vld [vmem:[%s1 + $0xe0] sm:$0xf]
  %v84 = vld [vmem:[%s1 + $0xe4] sm:$0xf]
  %v85 = vld [vmem:[%s1 + $0xe8] sm:$0xf]
  %v86 = vld [vmem:[%s1 + $0xec] sm:$0xf]
  %v87 = vld [vmem:[%s1 + $0xf0] sm:$0xf]
  %v88 = vld [vmem:[%s1 + $0xf4] sm:$0xf]
  %v89 = vld [vmem:[%s1 + $0xf8] sm:$0xf]
  %v90 = vld [vmem:[%s1 + $0xfc] sm:$0xf]
  %v91 = vld [vmem:[%s1 + $0x100] sm:$0xf]
  %v92 = vld [vmem:[%s1 + $0x104] sm:$0xf]
  %v93 = vld [vmem:[%s1 + $0x108] sm:$0xf]
  %v94 = vld [vmem:[%s1 + $0x10c] sm:$0xf]
  %v95 = vld [vmem:[%s1 + $0x110] sm:$0xf]
  %v96 = vld [vmem:[%s1 + $0x114] sm:$0xf]
  %v97 = vld [vmem:[%s1 + $0x118] sm:$0xf]
  %v98 = vld [vmem:[%s1 + $0x11c] sm:$0xf]
  %v99 = vld [vmem:[%s2] sm:$0x1]
  %v101 = vlaneseq
  %v102 = vshrl.u32 %v101, 7
  %v103 = vsub.s32 0, %v102
  %v104 = vrot.slane %v99, %v103
  %v118 = vunpack.c.l.b16 %v15
  %v119 = vunpack.c.h.b16 %v15
  %v120 = vunpack.c.l.b16 %v16
  %v121 = vunpack.c.h.b16 %v16
  %v122 = vunpack.c.l.b16 %v17
  %v123 = vunpack.c.l.b16 %v18
  %v124 = vunpack.c.h.b16 %v18
  %v125 = vunpack.c.l.b16 %v19
  %v126 = vunpack.c.h.b16 %v19
  %v127 = vunpack.c.l.b16 %v20
  %v128 = vunpack.c.l.b16 %v21
  %v129 = vunpack.c.h.b16 %v21
  %v130 = vunpack.c.l.b16 %v22
  %v131 = vunpack.c.h.b16 %v22
  %v132 = vunpack.c.l.b16 %v23
  %v133 = vunpack.c.l.b16 %v24
  %v134 = vunpack.c.h.b16 %v24
  %v135 = vunpack.c.l.b16 %v25
  %v136 = vunpack.c.h.b16 %v25
  %v137 = vunpack.c.l.b16 %v26
  %v138 = vpack.c.b16 %v123, %v118
  %v139 = vpack.c.b16 %v124, %v119
  %v140 = vpack.c.b16 %v125, %v120
  %v141 = vpack.c.b16 %v126, %v121
  %v142 = vpack.c.b16 %v127, %v122
  %v143 = vpack.c.b16 %v133, %v128
  %v144 = vpack.c.b16 %v134, %v129
  %v145 = vpack.c.b16 %v135, %v130
  %v146 = vpack.c.b16 %v136, %v131
  %v147 = vpack.c.b16 %v137, %v132
  %v228 = vunpack.c.l.b16 %v27
  %v229 = vunpack.c.l.b16 %v28
  %v230 = vunpack.c.l.b16 %v29
  %v231 = vunpack.c.l.b16 %v30
  %v232 = vunpack.c.l.b16 %v31
  %v233 = vunpack.c.l.b16 %v32
  %v234 = vunpack.c.l.b16 %v33
  %v235 = vunpack.c.l.b16 %v34
  %v236 = vunpack.c.l.b16 %v35
  %v237 = vunpack.c.l.b16 %v36
  %v238 = vunpack.c.l.b16 %v37
  %v239 = vunpack.c.l.b16 %v38
  %v240 = vunpack.c.l.b16 %v39
  %v241 = vunpack.c.l.b16 %v40
  %v242 = vunpack.c.l.b16 %v41
  %v243 = vunpack.c.l.b16 %v42
  %v244 = vunpack.c.l.b16 %v43
  %v245 = vunpack.c.l.b16 %v44
  %v246 = vunpack.c.l.b16 %v45
  %v247 = vunpack.c.l.b16 %v46
  %v248 = vunpack.c.l.b16 %v47
  %v249 = vunpack.c.l.b16 %v48
  %v250 = vunpack.c.l.b16 %v49
  %v251 = vunpack.c.l.b16 %v50
  %v252 = vunpack.c.l.b16 %v51
  %v253 = vunpack.c.l.b16 %v52
  %v254 = vunpack.c.l.b16 %v53
  %v255 = vunpack.c.l.b16 %v54
  %v256 = vunpack.c.l.b16 %v55
  %v257 = vunpack.c.l.b16 %v56
  %v258 = vunpack.c.l.b16 %v57
  %v259 = vunpack.c.l.b16 %v58
  %v260 = vunpack.c.l.b16 %v59
  %v261 = vunpack.c.l.b16 %v60
  %v262 = vunpack.c.l.b16 %v61
  %v263 = vunpack.c.l.b16 %v62
  %v264 = vunpack.c.l.b16 %v63
  %v265 = vunpack.c.l.b16 %v64
  %v266 = vunpack.c.l.b16 %v65
  %v267 = vunpack.c.l.b16 %v66
  %v268 = vunpack.c.l.b16 %v67
  %v269 = vunpack.c.l.b16 %v68
  %v270 = vunpack.c.l.b16 %v69
  %v271 = vunpack.c.l.b16 %v70
  %v272 = vunpack.c.l.b16 %v71
  %v273 = vunpack.c.l.b16 %v72
  %v274 = vunpack.c.l.b16 %v73
  %v275 = vunpack.c.l.b16 %v74
  %v276 = vunpack.c.l.b16 %v75
  %v277 = vunpack.c.l.b16 %v76
  %v278 = vunpack.c.l.b16 %v77
  %v279 = vunpack.c.l.b16 %v78
  %v280 = vunpack.c.l.b16 %v79
  %v281 = vunpack.c.l.b16 %v80
  %v282 = vunpack.c.l.b16 %v81
  %v283 = vunpack.c.l.b16 %v82
  %v284 = vunpack.c.l.b16 %v83
  %v285 = vunpack.c.l.b16 %v84
  %v286 = vunpack.c.l.b16 %v85
  %v287 = vunpack.c.l.b16 %v86
  %v288 = vunpack.c.l.b16 %v87
  %v289 = vunpack.c.l.b16 %v88
  %v290 = vunpack.c.l.b16 %v89
  %v291 = vunpack.c.l.b16 %v90
  %v292 = vunpack.c.l.b16 %v91
  %v293 = vunpack.c.l.b16 %v92
  %v294 = vunpack.c.l.b16 %v93
  %v295 = vunpack.c.l.b16 %v94
  %v296 = vunpack.c.l.b16 %v95
  %v297 = vunpack.c.l.b16 %v96
  %v298 = vunpack.c.l.b16 %v97
  %v299 = vunpack.c.l.b16 %v98
  %v300 = vpack.c.b16 %v229, %v228
  %v301 = vpack.c.b16 %v231, %v230
  %v302 = vpack.c.b16 %v233, %v232
  %v303 = vpack.c.b16 %v235, %v234
  %v304 = vpack.c.b16 %v237, %v236
  %v305 = vpack.c.b16 %v239, %v238
  %v306 = vpack.c.b16 %v241, %v240
  %v307 = vpack.c.b16 %v243, %v242
  %v308 = vpack.c.b16 %v245, %v244
  %v309 = vpack.c.b16 %v247, %v246
  %v310 = vpack.c.b16 %v249, %v248
  %v311 = vpack.c.b16 %v251, %v250
  %v312 = vpack.c.b16 %v253, %v252
  %v313 = vpack.c.b16 %v255, %v254
  %v314 = vpack.c.b16 %v257, %v256
  %v315 = vpack.c.b16 %v259, %v258
  %v316 = vpack.c.b16 %v261, %v260
  %v317 = vpack.c.b16 %v263, %v262
  %v318 = vpack.c.b16 %v265, %v264
  %v319 = vpack.c.b16 %v267, %v266
  %v320 = vpack.c.b16 %v269, %v268
  %v321 = vpack.c.b16 %v271, %v270
  %v322 = vpack.c.b16 %v273, %v272
  %v323 = vpack.c.b16 %v275, %v274
  %v324 = vpack.c.b16 %v277, %v276
  %v325 = vpack.c.b16 %v279, %v278
  %v326 = vpack.c.b16 %v281, %v280
  %v327 = vpack.c.b16 %v283, %v282
  %v328 = vpack.c.b16 %v285, %v284
  %v329 = vpack.c.b16 %v287, %v286
  %v330 = vpack.c.b16 %v289, %v288
  %v331 = vpack.c.b16 %v291, %v290
  %v332 = vpack.c.b16 %v293, %v292
  %v333 = vpack.c.b16 %v295, %v294
  %v334 = vpack.c.b16 %v297, %v296
  %v335 = vpack.c.b16 %v299, %v298
  %vm372 = vcmask 523264
  %v374 = vsel %vm372, %v142, 0
  %v377 = vsel %vm372, %v147, 0
  %379 = vmatprep.subr.bf16.mxu0 0
  %380 = vmatpush1.bf16.msra.mxu0 %v300
  %381 = vmatprep.subr.bf16.mxu0 0
  %382 = vmatpush1.bf16.msra.mxu0 %v301
  %383 = vmatprep.subr.bf16.mxu0 0
  %384 = vmatpush1.bf16.msra.mxu0 %v302
  %385 = vmatprep.subr.bf16.mxu0 0
  %386 = vmatpush1.bf16.msra.mxu0 %v303
  %387 = vmatprep.subr.bf16.mxu0 0
  %388 = vmatpush1.bf16.msra.mxu0 %v304
  %389 = vmatprep.subr.bf16.mxu0 0
  %390 = vmatpush1.bf16.msra.mxu0 %v305
  %391 = vmatprep.subr.bf16.mxu0 0
  %392 = vmatpush1.bf16.msra.mxu0 %v306
  %393 = vmatprep.subr.bf16.mxu0 0
  %394 = vmatpush1.bf16.msra.mxu0 %v307
  %395 = vmatprep.subr.bf16.mxu0 0
  %396 = vmatpush1.bf16.msra.mxu0 %v308
  %397 = vmatprep.subr.bf16.mxu0 0
  %398 = vmatpush1.bf16.msra.mxu0 %v309
  %399 = vmatprep.subr.bf16.mxu0 0
  %400 = vmatpush1.bf16.msra.mxu0 %v310
  %401 = vmatprep.subr.bf16.mxu0 0
  %402 = vmatpush1.bf16.msra.mxu0 %v311
  %403 = vmatprep.subr.bf16.mxu0 0
  %404 = vmatpush1.bf16.msra.mxu0 %v312
  %405 = vmatprep.subr.bf16.mxu0 0
  %406 = vmatpush1.bf16.msra.mxu0 %v313
  %407 = vmatprep.subr.bf16.mxu0 0
  %408 = vmatpush1.bf16.msra.mxu0 %v314
  %409 = vmatprep.subr.bf16.mxu0 0
  %410 = vmatpush1.bf16.msra.mxu0 %v315
  %411 = vmatprep.mubr.bf16.mxu0 %v139
  %412 = vmatmul.mubr.bf16.gmra.mrb[0].mxu0 %v138
  %v413 = vpop.f32.mrb[0].mxu0
  %v414 = vadd.f32 %v104, %v413
  %v415 = vpop.f32.mrb[0].mxu0
  %v416 = vpop.f32.mrb[0].mxu0
  %v417 = vadd.f32 %v104, %v416
  %v418 = vpop.f32.mrb[0].mxu0
  %419 = vmatprep.mubr.bf16.mxu0 %v144
  %420 = vmatmul.mubr.bf16.gmra.mrb[0].mxu0 %v143
  %v421 = vpop.f32.mrb[0].mxu0
  %v422 = vadd.f32 %v104, %v421
  %v423 = vpop.f32.mrb[0].mxu0
  %v424 = vpop.f32.mrb[0].mxu0
  %v425 = vadd.f32 %v104, %v424
  %v426 = vpop.f32.mrb[0].mxu0
  %427 = vdwg.mxu0
  %428 = vmatprep.subr.bf16.mxu0 0
  %429 = vmatpush1.bf16.msra.mxu0 %v316
  %430 = vmatprep.subr.bf16.mxu0 0
  %431 = vmatpush1.bf16.msra.mxu0 %v317
  %432 = vmatprep.subr.bf16.mxu0 0
  %433 = vmatpush1.bf16.msra.mxu0 %v318
  %434 = vmatprep.subr.bf16.mxu0 0
  %435 = vmatpush1.bf16.msra.mxu0 %v319
  %436 = vmatprep.subr.bf16.mxu0 0
  %437 = vmatpush1.bf16.msra.mxu0 %v320
  %438 = vmatprep.subr.bf16.mxu0 0
  %439 = vmatpush1.bf16.msra.mxu0 %v321
  %440 = vmatprep.subr.bf16.mxu0 0
  %441 = vmatpush1.bf16.msra.mxu0 %v322
  %442 = vmatprep.subr.bf16.mxu0 0
  %443 = vmatpush1.bf16.msra.mxu0 %v323
  %444 = vmatprep.subr.bf16.mxu0 0
  %445 = vmatpush1.bf16.msra.mxu0 %v324
  %446 = vmatprep.subr.bf16.mxu0 0
  %447 = vmatpush1.bf16.msra.mxu0 %v325
  %448 = vmatprep.subr.bf16.mxu0 0
  %449 = vmatpush1.bf16.msra.mxu0 %v326
  %450 = vmatprep.subr.bf16.mxu0 0
  %451 = vmatpush1.bf16.msra.mxu0 %v327
  %452 = vmatprep.subr.bf16.mxu0 0
  %453 = vmatpush1.bf16.msra.mxu0 %v328
  %454 = vmatprep.subr.bf16.mxu0 0
  %455 = vmatpush1.bf16.msra.mxu0 %v329
  %456 = vmatprep.subr.bf16.mxu0 0
  %457 = vmatpush1.bf16.msra.mxu0 %v330
  %458 = vmatprep.subr.bf16.mxu0 0
  %459 = vmatpush1.bf16.msra.mxu0 %v331
  %460 = vmatprep.mubr.bf16.mxu0 %v141
  %461 = vmatmul.mubr.bf16.gmra.mrb[0].mxu0 %v140
  %v462 = vpop.f32.mrb[0].mxu0
  %v463 = vadd.f32 %v414, %v462
  %v464 = vpop.f32.mrb[0].mxu0
  %v465 = vpop.f32.mrb[0].mxu0
  %v466 = vadd.f32 %v417, %v465
  %v467 = vpop.f32.mrb[0].mxu0
  %468 = vmatprep.mubr.bf16.mxu0 %v146
  %469 = vmatmul.mubr.bf16.gmra.mrb[0].mxu0 %v145
  %v470 = vpop.f32.mrb[0].mxu0
  %v471 = vadd.f32 %v422, %v470
  %v472 = vpop.f32.mrb[0].mxu0
  %v473 = vpop.f32.mrb[0].mxu0
  %v474 = vadd.f32 %v425, %v473
  %v475 = vpop.f32.mrb[0].mxu0
  %476 = vdwg.mxu0
  %477 = vmatprep.subr.bf16.mxu0 0
  %478 = vmatpush1.bf16.msra.mxu0 %v332
  %479 = vmatprep.subr.bf16.mxu0 0
  %480 = vmatpush1.bf16.msra.mxu0 %v333
  %481 = vmatprep.subr.bf16.mxu0 0
  %482 = vmatpush1.bf16.msra.mxu0 %v334
  %483 = vmatprep.subr.bf16.mxu0 0
  %484 = vmatpush1.bf16.msra.mxu0 %v335
  %485 = vmatprep.subr.bf16.mxu0 0
  %486 = vmatpush1.bf16.msra.mxu0 0
  %487 = vmatprep.subr.bf16.mxu0 0
  %488 = vmatpush1.bf16.msra.mxu0 0
  %489 = vmatprep.subr.bf16.mxu0 0
  %490 = vmatpush1.bf16.msra.mxu0 0
  %491 = vmatprep.subr.bf16.mxu0 0
  %492 = vmatpush1.bf16.msra.mxu0 0
  %493 = vmatprep.subr.bf16.mxu0 0
  %494 = vmatpush1.bf16.msra.mxu0 0
  %495 = vmatprep.subr.bf16.mxu0 0
  %496 = vmatpush1.bf16.msra.mxu0 0
  %497 = vmatprep.subr.bf16.mxu0 0
  %498 = vmatpush1.bf16.msra.mxu0 0
  %499 = vmatprep.subr.bf16.mxu0 0
  %500 = vmatpush1.bf16.msra.mxu0 0
  %501 = vmatprep.subr.bf16.mxu0 0
  %502 = vmatpush1.bf16.msra.mxu0 0
  %503 = vmatprep.subr.bf16.mxu0 0
  %504 = vmatpush1.bf16.msra.mxu0 0
  %505 = vmatprep.subr.bf16.mxu0 0
  %506 = vmatpush1.bf16.msra.mxu0 0
  %507 = vmatprep.subr.bf16.mxu0 0
  %508 = vmatpush1.bf16.msra.mxu0 0
  %509 = vmatprep.mubr.bf16.mxu0 0
  %510 = vmatmul.mubr.bf16.gmra.mrb[0].mxu0 %v374
  %v511 = vpop.f32.mrb[0].mxu0
  %v512 = vadd.f32 %v463, %v511
  %v513 = vpop.f32.mrb[0].mxu0
  %v514 = vpop.f32.mrb[0].mxu0
  %v515 = vadd.f32 %v466, %v514
  %v516 = vpop.f32.mrb[0].mxu0
  %517 = vmatprep.mubr.bf16.mxu0 0
  %518 = vmatmul.mubr.bf16.gmra.mrb[0].mxu0 %v377
  %v519 = vpop.f32.mrb[0].mxu0
  %v520 = vadd.f32 %v471, %v519
  %v521 = vpop.f32.mrb[0].mxu0
  %v522 = vpop.f32.mrb[0].mxu0
  %v523 = vadd.f32 %v474, %v522
  %v524 = vpop.f32.mrb[0].mxu0
  %525 = vdwg.mxu0
  %v526 = vmax.f32 %v512, 0.0
  %v527 = vmax.f32 %v515, 0.0
  %v528 = vmax.f32 %v520, 0.0
  %v529 = vmax.f32 %v523, 0.0
  %530 = vst [vmem:[%s3] sm:$0xff] %v526
  %531 = vst [vmem:[%s3 + $0x8] sm:$0xff] %v527
  %532 = vst [vmem:[%s3 + $0x10] sm:$0xff] %v528
  %533 = vst [vmem:[%s3 + $0x18] sm:$0xff] %v529
  // Predicated region
  $region14: #{fcn_small_forward.25} parent=0 // pred_check
    _
  $region15: #{fcn_small_forward.25} parent=0 // pred_check_branch
    %535 = sbr.rel (0) target = $region17
  $region16: #{fcn_small_forward.25} parent=0 // pred_region
    _
  $region17: #{fcn_small_forward.25} parent=0 // pred_fallthru
    _
  // Predicated region
  $region18: #{fcn_small_forward.25} parent=0 // pred_check
    _
  $region19: #{fcn_small_forward.25} parent=0 // pred_check_branch
    %537 = sbr.rel (0) target = $region21
  $region20: #{fcn_small_forward.25} parent=0 // pred_region
    _
  $region21: #{fcn_small_forward.25} parent=0 // pred_fallthru
    _

// kernel: fcn_small_forward.24
$region0: #{fcn_small_forward.24}
  #allocation0 [shape = 'u32[]', space=smem, size = 0x4, offset = 0x4, fixed_abs, tag = 'smem constant byte address 0x4 - core index']
  #allocation1 [shape = 'u32[144,128]{1,0:T(1,128)}', space=vmem, size = 0x12000, scoped, tag = 'internal scratch']
  %s0 = inlined_call_operand.vmem [shape: bf16[32,64], index: 0, kind: input, shape index: {}]
  %s1 = inlined_call_operand.vmem [shape: bf16[64,128], index: 1, kind: input, shape index: {}]
  %s2 = inlined_call_operand.vmem [shape: f32[1,128], index: 2, kind: input, shape index: {}]
  %s3 = inlined_call_operand.vmem [shape: f32[32,128], index: 3, kind: output, shape index: {}]
  %s4 = sld [smem:[#allocation0]]
  $region22: #{fcn_small_forward.24} parent=0
    _
  %s6 = ssub.s32 1, %s4
  %s7 = scalar_select 0, %s6, %s4
  // Predicated region
  $region2: #{fcn_small_forward.24} parent=0 // pred_check
    _
  $region3: #{fcn_small_forward.24} parent=0 // pred_check_branch
    %9 = sbr.rel (0) target = $region5
  $region4: #{fcn_small_forward.24} parent=0 // pred_region
    _
  $region5: #{fcn_small_forward.24} parent=0 // pred_fallthru
    _
  // Predicated region
  $region6: #{fcn_small_forward.24} parent=0 // pred_check
    _
  $region7: #{fcn_small_forward.24} parent=0 // pred_check_branch
    %11 = sbr.rel (0) target = $region9
  $region8: #{fcn_small_forward.24} parent=0 // pred_region
    _
  $region9: #{fcn_small_forward.24} parent=0 // pred_fallthru
    _
  // Predicated region
  $region10: #{fcn_small_forward.24} parent=0 // pred_check
    _
  $region11: #{fcn_small_forward.24} parent=0 // pred_check_branch
    %13 = sbr.rel (0) target = $region13
  $region12: #{fcn_small_forward.24} parent=0 // pred_region
    _
  $region13: #{fcn_small_forward.24} parent=0 // pred_fallthru
    _
  %v15 = vld [vmem:[%s0] sm:$0xf]
  %v16 = vld [vmem:[%s0 + $0x4] sm:$0xf]
  %v17 = vld [vmem:[%s0 + $0x8] sm:$0xf]
  %v18 = vld [vmem:[%s0 + $0xc] sm:$0xf]
  %v19 = vld [vmem:[%s1] sm:$0xf]
  %v20 = vld [vmem:[%s1 + $0x4] sm:$0xf]
  %v21 = vld [vmem:[%s1 + $0x8] sm:$0xf]
  %v22 = vld [vmem:[%s1 + $0xc] sm:$0xf]
  %v23 = vld [vmem:[%s1 + $0x10] sm:$0xf]
  %v24 = vld [vmem:[%s1 + $0x14] sm:$0xf]
  %v25 = vld [vmem:[%s1 + $0x18] sm:$0xf]
  %v26 = vld [vmem:[%s1 + $0x1c] sm:$0xf]
  %v27 = vld [vmem:[%s2] sm:$0x1]
  %v29 = vlaneseq
  %v30 = vshrl.u32 %v29, 7
  %v31 = vsub.s32 0, %v30
  %v32 = vrot.slane %v27, %v31
  %v38 = vunpack.c.l.b16 %v15
  %v39 = vunpack.c.l.b16 %v16
  %v40 = vunpack.c.l.b16 %v17
  %v41 = vunpack.c.l.b16 %v18
  %v42 = vpack.c.b16 %v39, %v38
  %v43 = vpack.c.b16 %v41, %v40
  %v52 = vunpack.c.l.b16 %v19
  %v53 = vunpack.c.l.b16 %v20
  %v54 = vunpack.c.l.b16 %v21
  %v55 = vunpack.c.l.b16 %v22
  %v56 = vunpack.c.l.b16 %v23
  %v57 = vunpack.c.l.b16 %v24
  %v58 = vunpack.c.l.b16 %v25
  %v59 = vunpack.c.l.b16 %v26
  %v60 = vpack.c.b16 %v53, %v52
  %v61 = vpack.c.b16 %v55, %v54
  %v62 = vpack.c.b16 %v57, %v56
  %v63 = vpack.c.b16 %v59, %v58
  %vm68 = vcmask 523264
  %v70 = vsel %vm68, %v42, 0
  %v73 = vsel %vm68, %v43, 0
  %75 = vmatprep.subr.bf16.mxu0 0
  %76 = vmatpush1.bf16.msra.mxu0 %v60
  %77 = vmatprep.subr.bf16.mxu0 0
  %78 = vmatpush1.bf16.msra.mxu0 %v61
  %79 = vmatprep.subr.bf16.mxu0 0
  %80 = vmatpush1.bf16.msra.mxu0 %v62
  %81 = vmatprep.subr.bf16.mxu0 0
  %82 = vmatpush1.bf16.msra.mxu0 %v63
  %83 = vmatprep.subr.bf16.mxu0 0
  %84 = vmatpush1.bf16.msra.mxu0 0
  %85 = vmatprep.subr.bf16.mxu0 0
  %86 = vmatpush1.bf16.msra.mxu0 0
  %87 = vmatprep.subr.bf16.mxu0 0
  %88 = vmatpush1.bf16.msra.mxu0 0
  %89 = vmatprep.subr.bf16.mxu0 0
  %90 = vmatpush1.bf16.msra.mxu0 0
  %91 = vmatprep.subr.bf16.mxu0 0
  %92 = vmatpush1.bf16.msra.mxu0 0
  %93 = vmatprep.subr.bf16.mxu0 0
  %94 = vmatpush1.bf16.msra.mxu0 0
  %95 = vmatprep.subr.bf16.mxu0 0
  %96 = vmatpush1.bf16.msra.mxu0 0
  %97 = vmatprep.subr.bf16.mxu0 0
  %98 = vmatpush1.bf16.msra.mxu0 0
  %99 = vmatprep.subr.bf16.mxu0 0
  %100 = vmatpush1.bf16.msra.mxu0 0
  %101 = vmatprep.subr.bf16.mxu0 0
  %102 = vmatpush1.bf16.msra.mxu0 0
  %103 = vmatprep.subr.bf16.mxu0 0
  %104 = vmatpush1.bf16.msra.mxu0 0
  %105 = vmatprep.subr.bf16.mxu0 0
  %106 = vmatpush1.bf16.msra.mxu0 0
  %107 = vmatprep.mubr.bf16.mxu0 0
  %108 = vmatmul.mubr.bf16.gmra.mrb[0].mxu0 %v70
  %v109 = vpop.f32.mrb[0].mxu0
  %v110 = vadd.f32 %v32, %v109
  %v111 = vpop.f32.mrb[0].mxu0
  %v112 = vpop.f32.mrb[0].mxu0
  %v113 = vadd.f32 %v32, %v112
  %v114 = vpop.f32.mrb[0].mxu0
  %115 = vmatprep.mubr.bf16.mxu0 0
  %116 = vmatmul.mubr.bf16.gmra.mrb[0].mxu0 %v73
  %v117 = vpop.f32.mrb[0].mxu0
  %v118 = vadd.f32 %v32, %v117
  %v119 = vpop.f32.mrb[0].mxu0
  %v120 = vpop.f32.mrb[0].mxu0
  %v121 = vadd.f32 %v32, %v120
  %v122 = vpop.f32.mrb[0].mxu0
  %123 = vdwg.mxu0
  %124 = vst [vmem:[%s3] sm:$0xff] %v110
  %125 = vst [vmem:[%s3 + $0x8] sm:$0xff] %v113
  %126 = vst [vmem:[%s3 + $0x10] sm:$0xff] %v118
  %127 = vst [vmem:[%s3 + $0x18] sm:$0xff] %v121
  // Predicated region
  $region14: #{fcn_small_forward.24} parent=0 // pred_check
    _
  $region15: #{fcn_small_forward.24} parent=0 // pred_check_branch
    %129 = sbr.rel (0) target = $region17
  $region16: #{fcn_small_forward.24} parent=0 // pred_region
    _
  $region17: #{fcn_small_forward.24} parent=0 // pred_fallthru
    _
  // Predicated region
  $region18: #{fcn_small_forward.24} parent=0 // pred_check
    _
  $region19: #{fcn_small_forward.24} parent=0 // pred_check_branch
    %131 = sbr.rel (0) target = $region21
  $region20: #{fcn_small_forward.24} parent=0 // pred_region
    _
  $region21: #{fcn_small_forward.24} parent=0 // pred_fallthru
    _

// kernel: fcn_small_forward.26
$region0: #{fcn_small_forward.26}
  #allocation0 [shape = 'u32[]', space=smem, size = 0x4, offset = 0x4, fixed_abs, tag = 'smem constant byte address 0x4 - core index']
  #allocation1 [shape = 'u32[144,128]{1,0:T(1,128)}', space=vmem, size = 0x12000, scoped, tag = 'internal scratch']
  %s0 = inlined_call_operand.vmem [shape: bf16[32,1152], index: 0, kind: input, shape index: {}]
  %s1 = inlined_call_operand.vmem [shape: bf16[1152,128], index: 1, kind: input, shape index: {}]
  %s2 = inlined_call_operand.vmem [shape: f32[1,128], index: 2, kind: input, shape index: {}]
  %s3 = inlined_call_operand.vmem [shape: f32[32,128], index: 3, kind: input, shape index: {}]
  %s4 = inlined_call_operand.vmem [shape: f32[32,128], index: 4, kind: output, shape index: {}]
  %s5 = sld [smem:[#allocation0]]
  $region26: #{fcn_small_forward.26} parent=0
    _
  %s7 = ssub.s32 1, %s5
  %s8 = scalar_select 0, %s7, %s5
  // Predicated region
  $region2: #{fcn_small_forward.26} parent=0 // pred_check
    _
  $region3: #{fcn_small_forward.26} parent=0 // pred_check_branch
    %10 = sbr.rel (0) target = $region5
  $region4: #{fcn_small_forward.26} parent=0 // pred_region
    _
  $region5: #{fcn_small_forward.26} parent=0 // pred_fallthru
    _
  // Predicated region
  $region6: #{fcn_small_forward.26} parent=0 // pred_check
    _
  $region7: #{fcn_small_forward.26} parent=0 // pred_check_branch
    %12 = sbr.rel (0) target = $region9
  $region8: #{fcn_small_forward.26} parent=0 // pred_region
    _
  $region9: #{fcn_small_forward.26} parent=0 // pred_fallthru
    _
  // Predicated region
  $region10: #{fcn_small_forward.26} parent=0 // pred_check
    _
  $region11: #{fcn_small_forward.26} parent=0 // pred_check_branch
    %14 = sbr.rel (0) target = $region13
  $region12: #{fcn_small_forward.26} parent=0 // pred_region
    _
  $region13: #{fcn_small_forward.26} parent=0 // pred_fallthru
    _
  // Predicated region
  $region14: #{fcn_small_forward.26} parent=0 // pred_check
    _
  $region15: #{fcn_small_forward.26} parent=0 // pred_check_branch
    %16 = sbr.rel (0) target = $region17
  $region16: #{fcn_small_forward.26} parent=0 // pred_region
    _
  $region17: #{fcn_small_forward.26} parent=0 // pred_fallthru
    _
  %v18 = vld [vmem:[%s0] sm:$0xff]
  %v19 = vld [vmem:[%s0 + $0x8] sm:$0xff]
  %v20 = vld [vmem:[%s0 + $0x10] sm:$0xff]
  %v21 = vld [vmem:[%s0 + $0x18] sm:$0xff]
  %v22 = vld [vmem:[%s0 + $0x20] sm:$0xf]
  %v23 = vld [vmem:[%s0 + $0x24] sm:$0xff]
  %v24 = vld [vmem:[%s0 + $0x2c] sm:$0xff]
  %v25 = vld [vmem:[%s0 + $0x34] sm:$0xff]
  %v26 = vld [vmem:[%s0 + $0x3c] sm:$0xff]
  %v27 = vld [vmem:[%s0 + $0x44] sm:$0xf]
  %v28 = vld [vmem:[%s0 + $0x48] sm:$0xff]
  %v29 = vld [vmem:[%s0 + $0x50] sm:$0xff]
  %v30 = vld [vmem:[%s0 + $0x58] sm:$0xff]
  %v31 = vld [vmem:[%s0 + $0x60] sm:$0xff]
  %v32 = vld [vmem:[%s0 + $0x68] sm:$0xf]
  %v33 = vld [vmem:[%s0 + $0x6c] sm:$0xff]
  %v34 = vld [vmem:[%s0 + $0x74] sm:$0xff]
  %v35 = vld [vmem:[%s0 + $0x7c] sm:$0xff]
  %v36 = vld [vmem:[%s0 + $0x84] sm:$0xff]
  %v37 = vld [vmem:[%s0 + $0x8c] sm:$0xf]
  %v38 = vld [vmem:[%s1] sm:$0xf]
  %v39 = vld [vmem:[%s1 + $0x4] sm:$0xf]
  %v40 = vld [vmem:[%s1 + $0x8] sm:$0xf]
  %v41 = vld [vmem:[%s1 + $0xc] sm:$0xf]
  %v42 = vld [vmem:[%s1 + $0x10] sm:$0xf]
  %v43 = vld [vmem:[%s1 + $0x14] sm:$0xf]
  %v44 = vld [vmem:[%s1 + $0x18] sm:$0xf]
  %v45 = vld [vmem:[%s1 + $0x1c] sm:$0xf]
  %v46 = vld [vmem:[%s1 + $0x20] sm:$0xf]
  %v47 = vld [vmem:[%s1 + $0x24] sm:$0xf]
  %v48 = vld [vmem:[%s1 + $0x28] sm:$0xf]
  %v49 = vld [vmem:[%s1 + $0x2c] sm:$0xf]
  %v50 = vld [vmem:[%s1 + $0x30] sm:$0xf]
  %v51 = vld [vmem:[%s1 + $0x34] sm:$0xf]
  %v52 = vld [vmem:[%s1 + $0x38] sm:$0xf]
  %v53 = vld [vmem:[%s1 + $0x3c] sm:$0xf]
  %v54 = vld [vmem:[%s1 + $0x40] sm:$0xf]
  %v55 = vld [vmem:[%s1 + $0x44] sm:$0xf]
  %v56 = vld [vmem:[%s1 + $0x48] sm:$0xf]
  %v57 = vld [vmem:[%s1 + $0x4c] sm:$0xf]
  %v58 = vld [vmem:[%s1 + $0x50] sm:$0xf]
  %v59 = vld [vmem:[%s1 + $0x54] sm:$0xf]
  %v60 = vld [vmem:[%s1 + $0x58] sm:$0xf]
  %v61 = vld [vmem:[%s1 + $0x5c] sm:$0xf]
  %v62 = vld [vmem:[%s1 + $0x60] sm:$0xf]
  %v63 = vld [vmem:[%s1 + $0x64] sm:$0xf]
  %v64 = vld [vmem:[%s1 + $0x68] sm:$0xf]
  %v65 = vld [vmem:[%s1 + $0x6c] sm:$0xf]
  %v66 = vld [vmem:[%s1 + $0x70] sm:$0xf]
  %v67 = vld [vmem:[%s1 + $0x74] sm:$0xf]
  %v68 = vld [vmem:[%s1 + $0x78] sm:$0xf]
  %v69 = vld [vmem:[%s1 + $0x7c] sm:$0xf]
  %v70 = vld [vmem:[%s1 + $0x80] sm:$0xf]
  %v71 = vld [vmem:[%s1 + $0x84] sm:$0xf]
  %v72 = vld [vmem:[%s1 + $0x88] sm:$0xf]
  %v73 = vld [vmem:[%s1 + $0x8c] sm:$0xf]
  %v74 = vld [vmem:[%s1 + $0x90] sm:$0xf]
  %v75 = vld [vmem:[%s1 + $0x94] sm:$0xf]
  %v76 = vld [vmem:[%s1 + $0x98] sm:$0xf]
  %v77 = vld [vmem:[%s1 + $0x9c] sm:$0xf]
  %v78 = vld [vmem:[%s1 + $0xa0] sm:$0xf]
  %v79 = vld [vmem:[%s1 + $0xa4] sm:$0xf]
  %v80 = vld [vmem:[%s1 + $0xa8] sm:$0xf]
  %v81 = vld [vmem:[%s1 + $0xac] sm:$0xf]
  %v82 = vld [vmem:[%s1 + $0xb0] sm:$0xf]
  %v83 = vld [vmem:[%s1 + $0xb4] sm:$0xf]
  %v84 = vld [vmem:[%s1 + $0xb8] sm:$0xf]
  %v85 = vld [vmem:[%s1 + $0xbc] sm:$0xf]
  %v86 = vld [vmem:[%s1 + $0xc0] sm:$0xf]
  %v87 = vld [vmem:[%s1 + $0xc4] sm:$0xf]
  %v88 = vld [vmem:[%s1 + $0xc8] sm:$0xf]
  %v89 = vld [vmem:[%s1 + $0xcc] sm:$0xf]
  %v90 = vld [vmem:[%s1 + $0xd0] sm:$0xf]
  %v91 = vld [vmem:[%s1 + $0xd4] sm:$0xf]
  %v92 = vld [vmem:[%s1 + $0xd8] sm:$0xf]
  %v93 = vld [vmem:[%s1 + $0xdc] sm:$0xf]
  %v94 = vld [vmem:[%s1 + $0xe0] sm:$0xf]
  %v95 = vld [vmem:[%s1 + $0xe4] sm:$0xf]
  %v96 = vld [vmem:[%s1 + $0xe8] sm:$0xf]
  %v97 = vld [vmem:[%s1 + $0xec] sm:$0xf]
  %v98 = vld [vmem:[%s1 + $0xf0] sm:$0xf]
  %v99 = vld [vmem:[%s1 + $0xf4] sm:$0xf]
  %v100 = vld [vmem:[%s1 + $0xf8] sm:$0xf]
  %v101 = vld [vmem:[%s1 + $0xfc] sm:$0xf]
  %v102 = vld [vmem:[%s1 + $0x100] sm:$0xf]
  %v103 = vld [vmem:[%s1 + $0x104] sm:$0xf]
  %v104 = vld [vmem:[%s1 + $0x108] sm:$0xf]
  %v105 = vld [vmem:[%s1 + $0x10c] sm:$0xf]
  %v106 = vld [vmem:[%s1 + $0x110] sm:$0xf]
  %v107 = vld [vmem:[%s1 + $0x114] sm:$0xf]
  %v108 = vld [vmem:[%s1 + $0x118] sm:$0xf]
  %v109 = vld [vmem:[%s1 + $0x11c] sm:$0xf]
  %v110 = vld [vmem:[%s1 + $0x120] sm:$0xf]
  %v111 = vld [vmem:[%s1 + $0x124] sm:$0xf]
  %v112 = vld [vmem:[%s1 + $0x128] sm:$0xf]
  %v113 = vld [vmem:[%s1 + $0x12c] sm:$0xf]
  %v114 = vld [vmem:[%s1 + $0x130] sm:$0xf]
  %v115 = vld [vmem:[%s1 + $0x134] sm:$0xf]
  %v116 = vld [vmem:[%s1 + $0x138] sm:$0xf]
  %v117 = vld [vmem:[%s1 + $0x13c] sm:$0xf]
  %v118 = vld [vmem:[%s1 + $0x140] sm:$0xf]
  %v119 = vld [vmem:[%s1 + $0x144] sm:$0xf]
  %v120 = vld [vmem:[%s1 + $0x148] sm:$0xf]
  %v121 = vld [vmem:[%s1 + $0x14c] sm:$0xf]
  %v122 = vld [vmem:[%s1 + $0x150] sm:$0xf]
  %v123 = vld [vmem:[%s1 + $0x154] sm:$0xf]
  %v124 = vld [vmem:[%s1 + $0x158] sm:$0xf]
  %v125 = vld [vmem:[%s1 + $0x15c] sm:$0xf]
  %v126 = vld [vmem:[%s1 + $0x160] sm:$0xf]
  %v127 = vld [vmem:[%s1 + $0x164] sm:$0xf]
  %v128 = vld [vmem:[%s1 + $0x168] sm:$0xf]
  %v129 = vld [vmem:[%s1 + $0x16c] sm:$0xf]
  %v130 = vld [vmem:[%s1 + $0x170] sm:$0xf]
  %v131 = vld [vmem:[%s1 + $0x174] sm:$0xf]
  %v132 = vld [vmem:[%s1 + $0x178] sm:$0xf]
  %v133 = vld [vmem:[%s1 + $0x17c] sm:$0xf]
  %v134 = vld [vmem:[%s1 + $0x180] sm:$0xf]
  %v135 = vld [vmem:[%s1 + $0x184] sm:$0xf]
  %v136 = vld [vmem:[%s1 + $0x188] sm:$0xf]
  %v137 = vld [vmem:[%s1 + $0x18c] sm:$0xf]
  %v138 = vld [vmem:[%s1 + $0x190] sm:$0xf]
  %v139 = vld [vmem:[%s1 + $0x194] sm:$0xf]
  %v140 = vld [vmem:[%s1 + $0x198] sm:$0xf]
  %v141 = vld [vmem:[%s1 + $0x19c] sm:$0xf]
  %v142 = vld [vmem:[%s1 + $0x1a0] sm:$0xf]
  %v143 = vld [vmem:[%s1 + $0x1a4] sm:$0xf]
  %v144 = vld [vmem:[%s1 + $0x1a8] sm:$0xf]
  %v145 = vld [vmem:[%s1 + $0x1ac] sm:$0xf]
  %v146 = vld [vmem:[%s1 + $0x1b0] sm:$0xf]
  %v147 = vld [vmem:[%s1 + $0x1b4] sm:$0xf]
  %v148 = vld [vmem:[%s1 + $0x1b8] sm:$0xf]
  %v149 = vld [vmem:[%s1 + $0x1bc] sm:$0xf]
  %v150 = vld [vmem:[%s1 + $0x1c0] sm:$0xf]
  %v151 = vld [vmem:[%s1 + $0x1c4] sm:$0xf]
  %v152 = vld [vmem:[%s1 + $0x1c8] sm:$0xf]
  %v153 = vld [vmem:[%s1 + $0x1cc] sm:$0xf]
  %v154 = vld [vmem:[%s1 + $0x1d0] sm:$0xf]
  %v155 = vld [vmem:[%s1 + $0x1d4] sm:$0xf]
  %v156 = vld [vmem:[%s1 + $0x1d8] sm:$0xf]
  %v157 = vld [vmem:[%s1 + $0x1dc] sm:$0xf]
  %v158 = vld [vmem:[%s1 + $0x1e0] sm:$0xf]
  %v159 = vld [vmem:[%s1 + $0x1e4] sm:$0xf]
  %v160 = vld [vmem:[%s1 + $0x1e8] sm:$0xf]
  %v161 = vld [vmem:[%s1 + $0x1ec] sm:$0xf]
  %v162 = vld [vmem:[%s1 + $0x1f0] sm:$0xf]
  %v163 = vld [vmem:[%s1 + $0x1f4] sm:$0xf]
  %v164 = vld [vmem:[%s1 + $0x1f8] sm:$0xf]
  %v165 = vld [vmem:[%s1 + $0x1fc] sm:$0xf]
  %v166 = vld [vmem:[%s1 + $0x200] sm:$0xf]
  %v167 = vld [vmem:[%s1 + $0x204] sm:$0xf]
  %v168 = vld [vmem:[%s1 + $0x208] sm:$0xf]
  %v169 = vld [vmem:[%s1 + $0x20c] sm:$0xf]
  %v170 = vld [vmem:[%s1 + $0x210] sm:$0xf]
  %v171 = vld [vmem:[%s1 + $0x214] sm:$0xf]
  %v172 = vld [vmem:[%s1 + $0x218] sm:$0xf]
  %v173 = vld [vmem:[%s1 + $0x21c] sm:$0xf]
  %v174 = vld [vmem:[%s1 + $0x220] sm:$0xf]
  %v175 = vld [vmem:[%s1 + $0x224] sm:$0xf]
  %v176 = vld [vmem:[%s1 + $0x228] sm:$0xf]
  %v177 = vld [vmem:[%s1 + $0x22c] sm:$0xf]
  %v178 = vld [vmem:[%s1 + $0x230] sm:$0xf]
  %v179 = vld [vmem:[%s1 + $0x234] sm:$0xf]
  %v180 = vld [vmem:[%s1 + $0x238] sm:$0xf]
  %v181 = vld [vmem:[%s1 + $0x23c] sm:$0xf]
  %v182 = vld [vmem:[%s2] sm:$0x1]
  %v184 = vlaneseq
  %v185 = vshrl.u32 %v184, 7
  %v186 = vsub.s32 0, %v185
  %v187 = vrot.slane %v182, %v186
  %v209 = vunpack.c.l.b16 %v18
  %v210 = vunpack.c.h.b16 %v18
  %v211 = vunpack.c.l.b16 %v19
  %v212 = vunpack.c.h.b16 %v19
  %v213 = vunpack.c.l.b16 %v20
  %v214 = vunpack.c.h.b16 %v20
  %v215 = vunpack.c.l.b16 %v21
  %v216 = vunpack.c.h.b16 %v21
  %v217 = vunpack.c.l.b16 %v22
  %v218 = vunpack.c.l.b16 %v23
  %v219 = vunpack.c.h.b16 %v23
  %v220 = vunpack.c.l.b16 %v24
  %v221 = vunpack.c.h.b16 %v24
  %v222 = vunpack.c.l.b16 %v25
  %v223 = vunpack.c.h.b16 %v25
  %v224 = vunpack.c.l.b16 %v26
  %v225 = vunpack.c.h.b16 %v26
  %v226 = vunpack.c.l.b16 %v27
  %v227 = vunpack.c.l.b16 %v28
  %v228 = vunpack.c.h.b16 %v28
  %v229 = vunpack.c.l.b16 %v29
  %v230 = vunpack.c.h.b16 %v29
  %v231 = vunpack.c.l.b16 %v30
  %v232 = vunpack.c.h.b16 %v30
  %v233 = vunpack.c.l.b16 %v31
  %v234 = vunpack.c.h.b16 %v31
  %v235 = vunpack.c.l.b16 %v32
  %v236 = vunpack.c.l.b16 %v33
  %v237 = vunpack.c.h.b16 %v33
  %v238 = vunpack.c.l.b16 %v34
  %v239 = vunpack.c.h.b16 %v34
  %v240 = vunpack.c.l.b16 %v35
  %v241 = vunpack.c.h.b16 %v35
  %v242 = vunpack.c.l.b16 %v36
  %v243 = vunpack.c.h.b16 %v36
  %v244 = vunpack.c.l.b16 %v37
  %v245 = vpack.c.b16 %v218, %v209
  %v246 = vpack.c.b16 %v219, %v210
  %v247 = vpack.c.b16 %v220, %v211
  %v248 = vpack.c.b16 %v221, %v212
  %v249 = vpack.c.b16 %v222, %v213
  %v250 = vpack.c.b16 %v223, %v214
  %v251 = vpack.c.b16 %v224, %v215
  %v252 = vpack.c.b16 %v225, %v216
  %v253 = vpack.c.b16 %v226, %v217
  %v254 = vpack.c.b16 %v236, %v227
  %v255 = vpack.c.b16 %v237, %v228
  %v256 = vpack.c.b16 %v238, %v229
  %v257 = vpack.c.b16 %v239, %v230
  %v258 = vpack.c.b16 %v240, %v231
  %v259 = vpack.c.b16 %v241, %v232
  %v260 = vpack.c.b16 %v242, %v233
  %v261 = vpack.c.b16 %v243, %v234
  %v262 = vpack.c.b16 %v244, %v235
  %v425 = vunpack.c.l.b16 %v38
  %v426 = vunpack.c.l.b16 %v39
  %v427 = vunpack.c.l.b16 %v40
  %v428 = vunpack.c.l.b16 %v41
  %v429 = vunpack.c.l.b16 %v42
  %v430 = vunpack.c.l.b16 %v43
  %v431 = vunpack.c.l.b16 %v44
  %v432 = vunpack.c.l.b16 %v45
  %v433 = vunpack.c.l.b16 %v46
  %v434 = vunpack.c.l.b16 %v47
  %v435 = vunpack.c.l.b16 %v48
  %v436 = vunpack.c.l.b16 %v49
  %v437 = vunpack.c.l.b16 %v50
  %v438 = vunpack.c.l.b16 %v51
  %v439 = vunpack.c.l.b16 %v52
  %v440 = vunpack.c.l.b16 %v53
  %v441 = vunpack.c.l.b16 %v54
  %v442 = vunpack.c.l.b16 %v55
  %v443 = vunpack.c.l.b16 %v56
  %v444 = vunpack.c.l.b16 %v57
  %v445 = vunpack.c.l.b16 %v58
  %v446 = vunpack.c.l.b16 %v59
  %v447 = vunpack.c.l.b16 %v60
  %v448 = vunpack.c.l.b16 %v61
  %v449 = vunpack.c.l.b16 %v62
  %v450 = vunpack.c.l.b16 %v63
  %v451 = vunpack.c.l.b16 %v64
  %v452 = vunpack.c.l.b16 %v65
  %v453 = vunpack.c.l.b16 %v66
  %v454 = vunpack.c.l.b16 %v67
  %v455 = vunpack.c.l.b16 %v68
  %v456 = vunpack.c.l.b16 %v69
  %v457 = vunpack.c.l.b16 %v70
  %v458 = vunpack.c.l.b16 %v71
  %v459 = vunpack.c.l.b16 %v72
  %v460 = vunpack.c.l.b16 %v73
  %v461 = vunpack.c.l.b16 %v74
  %v462 = vunpack.c.l.b16 %v75
  %v463 = vunpack.c.l.b16 %v76
  %v464 = vunpack.c.l.b16 %v77
  %v465 = vunpack.c.l.b16 %v78
  %v466 = vunpack.c.l.b16 %v79
  %v467 = vunpack.c.l.b16 %v80
  %v468 = vunpack.c.l.b16 %v81
  %v469 = vunpack.c.l.b16 %v82
  %v470 = vunpack.c.l.b16 %v83
  %v471 = vunpack.c.l.b16 %v84
  %v472 = vunpack.c.l.b16 %v85
  %v473 = vunpack.c.l.b16 %v86
  %v474 = vunpack.c.l.b16 %v87
  %v475 = vunpack.c.l.b16 %v88
  %v476 = vunpack.c.l.b16 %v89
  %v477 = vunpack.c.l.b16 %v90
  %v478 = vunpack.c.l.b16 %v91
  %v479 = vunpack.c.l.b16 %v92
  %v480 = vunpack.c.l.b16 %v93
  %v481 = vunpack.c.l.b16 %v94
  %v482 = vunpack.c.l.b16 %v95
  %v483 = vunpack.c.l.b16 %v96
  %v484 = vunpack.c.l.b16 %v97
  %v485 = vunpack.c.l.b16 %v98
  %v486 = vunpack.c.l.b16 %v99
  %v487 = vunpack.c.l.b16 %v100
  %v488 = vunpack.c.l.b16 %v101
  %v489 = vunpack.c.l.b16 %v102
  %v490 = vunpack.c.l.b16 %v103
  %v491 = vunpack.c.l.b16 %v104
  %v492 = vunpack.c.l.b16 %v105
  %v493 = vunpack.c.l.b16 %v106
  %v494 = vunpack.c.l.b16 %v107
  %v495 = vunpack.c.l.b16 %v108
  %v496 = vunpack.c.l.b16 %v109
  %v497 = vunpack.c.l.b16 %v110
  %v498 = vunpack.c.l.b16 %v111
  %v499 = vunpack.c.l.b16 %v112
  %v500 = vunpack.c.l.b16 %v113
  %v501 = vunpack.c.l.b16 %v114
  %v502 = vunpack.c.l.b16 %v115
  %v503 = vunpack.c.l.b16 %v116
  %v504 = vunpack.c.l.b16 %v117
  %v505 = vunpack.c.l.b16 %v118
  %v506 = vunpack.c.l.b16 %v119
  %v507 = vunpack.c.l.b16 %v120
  %v508 = vunpack.c.l.b16 %v121
  %v509 = vunpack.c.l.b16 %v122
  %v510 = vunpack.c.l.b16 %v123
  %v511 = vunpack.c.l.b16 %v124
  %v512 = vunpack.c.l.b16 %v125
  %v513 = vunpack.c.l.b16 %v126
  %v514 = vunpack.c.l.b16 %v127
  %v515 = vunpack.c.l.b16 %v128
  %v516 = vunpack.c.l.b16 %v129
  %v517 = vunpack.c.l.b16 %v130
  %v518 = vunpack.c.l.b16 %v131
  %v519 = vunpack.c.l.b16 %v132
  %v520 = vunpack.c.l.b16 %v133
  %v521 = vunpack.c.l.b16 %v134
  %v522 = vunpack.c.l.b16 %v135
  %v523 = vunpack.c.l.b16 %v136
  %v524 = vunpack.c.l.b16 %v137
  %v525 = vunpack.c.l.b16 %v138
  %v526 = vunpack.c.l.b16 %v139
  %v527 = vunpack.c.l.b16 %v140
  %v528 = vunpack.c.l.b16 %v141
  %v529 = vunpack.c.l.b16 %v142
  %v530 = vunpack.c.l.b16 %v143
  %v531 = vunpack.c.l.b16 %v144
  %v532 = vunpack.c.l.b16 %v145
  %v533 = vunpack.c.l.b16 %v146
  %v534 = vunpack.c.l.b16 %v147
  %v535 = vunpack.c.l.b16 %v148
  %v536 = vunpack.c.l.b16 %v149
  %v537 = vunpack.c.l.b16 %v150
  %v538 = vunpack.c.l.b16 %v151
  %v539 = vunpack.c.l.b16 %v152
  %v540 = vunpack.c.l.b16 %v153
  %v541 = vunpack.c.l.b16 %v154
  %v542 = vunpack.c.l.b16 %v155
  %v543 = vunpack.c.l.b16 %v156
  %v544 = vunpack.c.l.b16 %v157
  %v545 = vunpack.c.l.b16 %v158
  %v546 = vunpack.c.l.b16 %v159
  %v547 = vunpack.c.l.b16 %v160
  %v548 = vunpack.c.l.b16 %v161
  %v549 = vunpack.c.l.b16 %v162
  %v550 = vunpack.c.l.b16 %v163
  %v551 = vunpack.c.l.b16 %v164
  %v552 = vunpack.c.l.b16 %v165
  %v553 = vunpack.c.l.b16 %v166
  %v554 = vunpack.c.l.b16 %v167
  %v555 = vunpack.c.l.b16 %v168
  %v556 = vunpack.c.l.b16 %v169
  %v557 = vunpack.c.l.b16 %v170
  %v558 = vunpack.c.l.b16 %v171
  %v559 = vunpack.c.l.b16 %v172
  %v560 = vunpack.c.l.b16 %v173
  %v561 = vunpack.c.l.b16 %v174
  %v562 = vunpack.c.l.b16 %v175
  %v563 = vunpack.c.l.b16 %v176
  %v564 = vunpack.c.l.b16 %v177
  %v565 = vunpack.c.l.b16 %v178
  %v566 = vunpack.c.l.b16 %v179
  %v567 = vunpack.c.l.b16 %v180
  %v568 = vunpack.c.l.b16 %v181
  %v569 = vpack.c.b16 %v426, %v425
  %v570 = vpack.c.b16 %v428, %v427
  %v571 = vpack.c.b16 %v430, %v429
  %v572 = vpack.c.b16 %v432, %v431
  %v573 = vpack.c.b16 %v434, %v433
  %v574 = vpack.c.b16 %v436, %v435
  %v575 = vpack.c.b16 %v438, %v437
  %v576 = vpack.c.b16 %v440, %v439
  %v577 = vpack.c.b16 %v442, %v441
  %v578 = vpack.c.b16 %v444, %v443
  %v579 = vpack.c.b16 %v446, %v445
  %v580 = vpack.c.b16 %v448, %v447
  %v581 = vpack.c.b16 %v450, %v449
  %v582 = vpack.c.b16 %v452, %v451
  %v583 = vpack.c.b16 %v454, %v453
  %v584 = vpack.c.b16 %v456, %v455
  %v585 = vpack.c.b16 %v458, %v457
  %v586 = vpack.c.b16 %v460, %v459
  %v587 = vpack.c.b16 %v462, %v461
  %v588 = vpack.c.b16 %v464, %v463
  %v589 = vpack.c.b16 %v466, %v465
  %v590 = vpack.c.b16 %v468, %v467
  %v591 = vpack.c.b16 %v470, %v469
  %v592 = vpack.c.b16 %v472, %v471
  %v593 = vpack.c.b16 %v474, %v473
  %v594 = vpack.c.b16 %v476, %v475
  %v595 = vpack.c.b16 %v478, %v477
  %v596 = vpack.c.b16 %v480, %v479
  %v597 = vpack.c.b16 %v482, %v481
  %v598 = vpack.c.b16 %v484, %v483
  %v599 = vpack.c.b16 %v486, %v485
  %v600 = vpack.c.b16 %v488, %v487
  %v601 = vpack.c.b16 %v490, %v489
  %v602 = vpack.c.b16 %v492, %v491
  %v603 = vpack.c.b16 %v494, %v493
  %v604 = vpack.c.b16 %v496, %v495
  %v605 = vpack.c.b16 %v498, %v497
  %v606 = vpack.c.b16 %v500, %v499
  %v607 = vpack.c.b16 %v502, %v501
  %v608 = vpack.c.b16 %v504, %v503
  %v609 = vpack.c.b16 %v506, %v505
  %v610 = vpack.c.b16 %v508, %v507
  %v611 = vpack.c.b16 %v510, %v509
  %v612 = vpack.c.b16 %v512, %v511
  %v613 = vpack.c.b16 %v514, %v513
  %v614 = vpack.c.b16 %v516, %v515
  %v615 = vpack.c.b16 %v518, %v517
  %v616 = vpack.c.b16 %v520, %v519
  %v617 = vpack.c.b16 %v522, %v521
  %v618 = vpack.c.b16 %v524, %v523
  %v619 = vpack.c.b16 %v526, %v525
  %v620 = vpack.c.b16 %v528, %v527
  %v621 = vpack.c.b16 %v530, %v529
  %v622 = vpack.c.b16 %v532, %v531
  %v623 = vpack.c.b16 %v534, %v533
  %v624 = vpack.c.b16 %v536, %v535
  %v625 = vpack.c.b16 %v538, %v537
  %v626 = vpack.c.b16 %v540, %v539
  %v627 = vpack.c.b16 %v542, %v541
  %v628 = vpack.c.b16 %v544, %v543
  %v629 = vpack.c.b16 %v546, %v545
  %v630 = vpack.c.b16 %v548, %v547
  %v631 = vpack.c.b16 %v550, %v549
  %v632 = vpack.c.b16 %v552, %v551
  %v633 = vpack.c.b16 %v554, %v553
  %v634 = vpack.c.b16 %v556, %v555
  %v635 = vpack.c.b16 %v558, %v557
  %v636 = vpack.c.b16 %v560, %v559
  %v637 = vpack.c.b16 %v562, %v561
  %v638 = vpack.c.b16 %v564, %v563
  %v639 = vpack.c.b16 %v566, %v565
  %v640 = vpack.c.b16 %v568, %v567
  %713 = vmatprep.subr.bf16.mxu0 0
  %714 = vmatpush1.bf16.msra.mxu0 %v569
  %715 = vmatprep.subr.bf16.mxu0 0
  %716 = vmatpush1.bf16.msra.mxu0 %v570
  %717 = vmatprep.subr.bf16.mxu0 0
  %718 = vmatpush1.bf16.msra.mxu0 %v571
  %719 = vmatprep.subr.bf16.mxu0 0
  %720 = vmatpush1.bf16.msra.mxu0 %v572
  %721 = vmatprep.subr.bf16.mxu0 0
  %722 = vmatpush1.bf16.msra.mxu0 %v573
  %723 = vmatprep.subr.bf16.mxu0 0
  %724 = vmatpush1.bf16.msra.mxu0 %v574
  %725 = vmatprep.subr.bf16.mxu0 0
  %726 = vmatpush1.bf16.msra.mxu0 %v575
  %727 = vmatprep.subr.bf16.mxu0 0
  %728 = vmatpush1.bf16.msra.mxu0 %v576
  %729 = vmatprep.subr.bf16.mxu0 0
  %730 = vmatpush1.bf16.msra.mxu0 %v577
  %731 = vmatprep.subr.bf16.mxu0 0
  %732 = vmatpush1.bf16.msra.mxu0 %v578
  %733 = vmatprep.subr.bf16.mxu0 0
  %734 = vmatpush1.bf16.msra.mxu0 %v579
  %735 = vmatprep.subr.bf16.mxu0 0
  %736 = vmatpush1.bf16.msra.mxu0 %v580
  %737 = vmatprep.subr.bf16.mxu0 0
  %738 = vmatpush1.bf16.msra.mxu0 %v581
  %739 = vmatprep.subr.bf16.mxu0 0
  %740 = vmatpush1.bf16.msra.mxu0 %v582
  %741 = vmatprep.subr.bf16.mxu0 0
  %742 = vmatpush1.bf16.msra.mxu0 %v583
  %743 = vmatprep.subr.bf16.mxu0 0
  %744 = vmatpush1.bf16.msra.mxu0 %v584
  %745 = vmatprep.mubr.bf16.mxu0 %v246
  %746 = vmatmul.mubr.bf16.gmra.mrb[0].mxu0 %v245
  %v747 = vpop.f32.mrb[0].mxu0
  %v748 = vadd.f32 %v187, %v747
  %v749 = vpop.f32.mrb[0].mxu0
  %v750 = vpop.f32.mrb[0].mxu0
  %v751 = vadd.f32 %v187, %v750
  %v752 = vpop.f32.mrb[0].mxu0
  %753 = vmatprep.mubr.bf16.mxu0 %v255
  %754 = vmatmul.mubr.bf16.gmra.mrb[0].mxu0 %v254
  %v755 = vpop.f32.mrb[0].mxu0
  %v756 = vadd.f32 %v187, %v755
  %v757 = vpop.f32.mrb[0].mxu0
  %v758 = vpop.f32.mrb[0].mxu0
  %v759 = vadd.f32 %v187, %v758
  %v760 = vpop.f32.mrb[0].mxu0
  %761 = vdwg.mxu0
  %762 = vmatprep.subr.bf16.mxu0 0
  %763 = vmatpush1.bf16.msra.mxu0 %v585
  %764 = vmatprep.subr.bf16.mxu0 0
  %765 = vmatpush1.bf16.msra.mxu0 %v586
  %766 = vmatprep.subr.bf16.mxu0 0
  %767 = vmatpush1.bf16.msra.mxu0 %v587
  %768 = vmatprep.subr.bf16.mxu0 0
  %769 = vmatpush1.bf16.msra.mxu0 %v588
  %770 = vmatprep.subr.bf16.mxu0 0
  %771 = vmatpush1.bf16.msra.mxu0 %v589
  %772 = vmatprep.subr.bf16.mxu0 0
  %773 = vmatpush1.bf16.msra.mxu0 %v590
  %774 = vmatprep.subr.bf16.mxu0 0
  %775 = vmatpush1.bf16.msra.mxu0 %v591
  %776 = vmatprep.subr.bf16.mxu0 0
  %777 = vmatpush1.bf16.msra.mxu0 %v592
  %778 = vmatprep.subr.bf16.mxu0 0
  %779 = vmatpush1.bf16.msra.mxu0 %v593
  %780 = vmatprep.subr.bf16.mxu0 0
  %781 = vmatpush1.bf16.msra.mxu0 %v594
  %782 = vmatprep.subr.bf16.mxu0 0
  %783 = vmatpush1.bf16.msra.mxu0 %v595
  %784 = vmatprep.subr.bf16.mxu0 0
  %785 = vmatpush1.bf16.msra.mxu0 %v596
  %786 = vmatprep.subr.bf16.mxu0 0
  %787 = vmatpush1.bf16.msra.mxu0 %v597
  %788 = vmatprep.subr.bf16.mxu0 0
  %789 = vmatpush1.bf16.msra.mxu0 %v598
  %790 = vmatprep.subr.bf16.mxu0 0
  %791 = vmatpush1.bf16.msra.mxu0 %v599
  %792 = vmatprep.subr.bf16.mxu0 0
  %793 = vmatpush1.bf16.msra.mxu0 %v600
  %794 = vmatprep.mubr.bf16.mxu0 %v248
  %795 = vmatmul.mubr.bf16.gmra.mrb[0].mxu0 %v247
  %v796 = vpop.f32.mrb[0].mxu0
  %v797 = vadd.f32 %v748, %v796
  %v798 = vpop.f32.mrb[0].mxu0
  %v799 = vpop.f32.mrb[0].mxu0
  %v800 = vadd.f32 %v751, %v799
  %v801 = vpop.f32.mrb[0].mxu0
  %802 = vmatprep.mubr.bf16.mxu0 %v257
  %803 = vmatmul.mubr.bf16.gmra.mrb[0].mxu0 %v256
  %v804 = vpop.f32.mrb[0].mxu0
  %v805 = vadd.f32 %v756, %v804
  %v806 = vpop.f32.mrb[0].mxu0
  %v807 = vpop.f32.mrb[0].mxu0
  %v808 = vadd.f32 %v759, %v807
  %v809 = vpop.f32.mrb[0].mxu0
  %810 = vdwg.mxu0
  %811 = vmatprep.subr.bf16.mxu0 0
  %812 = vmatpush1.bf16.msra.mxu0 %v601
  %813 = vmatprep.subr.bf16.mxu0 0
  %814 = vmatpush1.bf16.msra.mxu0 %v602
  %815 = vmatprep.subr.bf16.mxu0 0
  %816 = vmatpush1.bf16.msra.mxu0 %v603
  %817 = vmatprep.subr.bf16.mxu0 0
  %818 = vmatpush1.bf16.msra.mxu0 %v604
  %819 = vmatprep.subr.bf16.mxu0 0
  %820 = vmatpush1.bf16.msra.mxu0 %v605
  %821 = vmatprep.subr.bf16.mxu0 0
  %822 = vmatpush1.bf16.msra.mxu0 %v606
  %823 = vmatprep.subr.bf16.mxu0 0
  %824 = vmatpush1.bf16.msra.mxu0 %v607
  %825 = vmatprep.subr.bf16.mxu0 0
  %826 = vmatpush1.bf16.msra.mxu0 %v608
  %827 = vmatprep.subr.bf16.mxu0 0
  %828 = vmatpush1.bf16.msra.mxu0 %v609
  %829 = vmatprep.subr.bf16.mxu0 0
  %830 = vmatpush1.bf16.msra.mxu0 %v610
  %831 = vmatprep.subr.bf16.mxu0 0
  %832 = vmatpush1.bf16.msra.mxu0 %v611
  %833 = vmatprep.subr.bf16.mxu0 0
  %834 = vmatpush1.bf16.msra.mxu0 %v612
  %835 = vmatprep.subr.bf16.mxu0 0
  %836 = vmatpush1.bf16.msra.mxu0 %v613
  %837 = vmatprep.subr.bf16.mxu0 0
  %838 = vmatpush1.bf16.msra.mxu0 %v614
  %839 = vmatprep.subr.bf16.mxu0 0
  %840 = vmatpush1.bf16.msra.mxu0 %v615
  %841 = vmatprep.subr.bf16.mxu0 0
  %842 = vmatpush1.bf16.msra.mxu0 %v616
  %843 = vmatprep.mubr.bf16.mxu0 %v250
  %844 = vmatmul.mubr.bf16.gmra.mrb[0].mxu0 %v249
  %v845 = vpop.f32.mrb[0].mxu0
  %v846 = vadd.f32 %v797, %v845
  %v847 = vpop.f32.mrb[0].mxu0
  %v848 = vpop.f32.mrb[0].mxu0
  %v849 = vadd.f32 %v800, %v848
  %v850 = vpop.f32.mrb[0].mxu0
  %851 = vmatprep.mubr.bf16.mxu0 %v259
  %852 = vmatmul.mubr.bf16.gmra.mrb[0].mxu0 %v258
  %v853 = vpop.f32.mrb[0].mxu0
  %v854 = vadd.f32 %v805, %v853
  %v855 = vpop.f32.mrb[0].mxu0
  %v856 = vpop.f32.mrb[0].mxu0
  %v857 = vadd.f32 %v808, %v856
  %v858 = vpop.f32.mrb[0].mxu0
  %859 = vdwg.mxu0
  %860 = vmatprep.subr.bf16.mxu0 0
  %861 = vmatpush1.bf16.msra.mxu0 %v617
  %862 = vmatprep.subr.bf16.mxu0 0
  %863 = vmatpush1.bf16.msra.mxu0 %v618
  %864 = vmatprep.subr.bf16.mxu0 0
  %865 = vmatpush1.bf16.msra.mxu0 %v619
  %866 = vmatprep.subr.bf16.mxu0 0
  %867 = vmatpush1.bf16.msra.mxu0 %v620
  %868 = vmatprep.subr.bf16.mxu0 0
  %869 = vmatpush1.bf16.msra.mxu0 %v621
  %870 = vmatprep.subr.bf16.mxu0 0
  %871 = vmatpush1.bf16.msra.mxu0 %v622
  %872 = vmatprep.subr.bf16.mxu0 0
  %873 = vmatpush1.bf16.msra.mxu0 %v623
  %874 = vmatprep.subr.bf16.mxu0 0
  %875 = vmatpush1.bf16.msra.mxu0 %v624
  %876 = vmatprep.subr.bf16.mxu0 0
  %877 = vmatpush1.bf16.msra.mxu0 %v625
  %878 = vmatprep.subr.bf16.mxu0 0
  %879 = vmatpush1.bf16.msra.mxu0 %v626
  %880 = vmatprep.subr.bf16.mxu0 0
  %881 = vmatpush1.bf16.msra.mxu0 %v627
  %882 = vmatprep.subr.bf16.mxu0 0
  %883 = vmatpush1.bf16.msra.mxu0 %v628
  %884 = vmatprep.subr.bf16.mxu0 0
  %885 = vmatpush1.bf16.msra.mxu0 %v629
  %886 = vmatprep.subr.bf16.mxu0 0
  %887 = vmatpush1.bf16.msra.mxu0 %v630
  %888 = vmatprep.subr.bf16.mxu0 0
  %889 = vmatpush1.bf16.msra.mxu0 %v631
  %890 = vmatprep.subr.bf16.mxu0 0
  %891 = vmatpush1.bf16.msra.mxu0 %v632
  %892 = vmatprep.mubr.bf16.mxu0 %v252
  %893 = vmatmul.mubr.bf16.gmra.mrb[0].mxu0 %v251
  %v894 = vpop.f32.mrb[0].mxu0
  %v895 = vadd.f32 %v846, %v894
  %v896 = vpop.f32.mrb[0].mxu0
  %v897 = vpop.f32.mrb[0].mxu0
  %v898 = vadd.f32 %v849, %v897
  %v899 = vpop.f32.mrb[0].mxu0
  %900 = vmatprep.mubr.bf16.mxu0 %v261
  %901 = vmatmul.mubr.bf16.gmra.mrb[0].mxu0 %v260
  %v902 = vpop.f32.mrb[0].mxu0
  %v903 = vadd.f32 %v854, %v902
  %v904 = vpop.f32.mrb[0].mxu0
  %v905 = vpop.f32.mrb[0].mxu0
  %v906 = vadd.f32 %v857, %v905
  %v907 = vpop.f32.mrb[0].mxu0
  %908 = vdwg.mxu0
  %909 = vmatprep.subr.bf16.mxu0 0
  %910 = vmatpush1.bf16.msra.mxu0 %v633
  %911 = vmatprep.subr.bf16.mxu0 0
  %912 = vmatpush1.bf16.msra.mxu0 %v634
  %913 = vmatprep.subr.bf16.mxu0 0
  %914 = vmatpush1.bf16.msra.mxu0 %v635
  %915 = vmatprep.subr.bf16.mxu0 0
  %916 = vmatpush1.bf16.msra.mxu0 %v636
  %917 = vmatprep.subr.bf16.mxu0 0
  %918 = vmatpush1.bf16.msra.mxu0 %v637
  %919 = vmatprep.subr.bf16.mxu0 0
  %920 = vmatpush1.bf16.msra.mxu0 %v638
  %921 = vmatprep.subr.bf16.mxu0 0
  %922 = vmatpush1.bf16.msra.mxu0 %v639
  %923 = vmatprep.subr.bf16.mxu0 0
  %924 = vmatpush1.bf16.msra.mxu0 %v640
  %925 = vmatprep.subr.bf16.mxu0 0
  %926 = vmatpush1.bf16.msra.mxu0 0
  %927 = vmatprep.subr.bf16.mxu0 0
  %928 = vmatpush1.bf16.msra.mxu0 0
  %929 = vmatprep.subr.bf16.mxu0 0
  %930 = vmatpush1.bf16.msra.mxu0 0
  %931 = vmatprep.subr.bf16.mxu0 0
  %932 = vmatpush1.bf16.msra.mxu0 0
  %933 = vmatprep.subr.bf16.mxu0 0
  %934 = vmatpush1.bf16.msra.mxu0 0
  %935 = vmatprep.subr.bf16.mxu0 0
  %936 = vmatpush1.bf16.msra.mxu0 0
  %937 = vmatprep.subr.bf16.mxu0 0
  %938 = vmatpush1.bf16.msra.mxu0 0
  %939 = vmatprep.subr.bf16.mxu0 0
  %940 = vmatpush1.bf16.msra.mxu0 0
  %941 = vmatprep.mubr.bf16.mxu0 0
  %942 = vmatmul.mubr.bf16.gmra.mrb[0].mxu0 %v253
  %v943 = vpop.f32.mrb[0].mxu0
  %v944 = vadd.f32 %v895, %v943
  %v945 = vpop.f32.mrb[0].mxu0
  %v946 = vpop.f32.mrb[0].mxu0
  %v947 = vadd.f32 %v898, %v946
  %v948 = vpop.f32.mrb[0].mxu0
  %949 = vmatprep.mubr.bf16.mxu0 0
  %950 = vmatmul.mubr.bf16.gmra.mrb[0].mxu0 %v262
  %v951 = vpop.f32.mrb[0].mxu0
  %v952 = vadd.f32 %v903, %v951
  %v953 = vpop.f32.mrb[0].mxu0
  %v954 = vpop.f32.mrb[0].mxu0
  %v955 = vadd.f32 %v906, %v954
  %v956 = vpop.f32.mrb[0].mxu0
  %957 = vdwg.mxu0
  %v958 = vld [vmem:[%s3] sm:$0xff]
  %v959 = vld [vmem:[%s3 + $0x8] sm:$0xff]
  %v960 = vld [vmem:[%s3 + $0x10] sm:$0xff]
  %v961 = vld [vmem:[%s3 + $0x18] sm:$0xff]
  %v962 = vadd.f32 %v944, %v958
  %v963 = vadd.f32 %v947, %v959
  %v964 = vadd.f32 %v952, %v960
  %v965 = vadd.f32 %v955, %v961
  %v966 = vmax.f32 %v962, 0.0
  %v967 = vmax.f32 %v963, 0.0
  %v968 = vmax.f32 %v964, 0.0
  %v969 = vmax.f32 %v965, 0.0
  %970 = vst [vmem:[%s4] sm:$0xff] %v966
  %971 = vst [vmem:[%s4 + $0x8] sm:$0xff] %v967
  %972 = vst [vmem:[%s4 + $0x10] sm:$0xff] %v968
  %973 = vst [vmem:[%s4 + $0x18] sm:$0xff] %v969
  // Predicated region
  $region18: #{fcn_small_forward.26} parent=0 // pred_check
    _
  $region19: #{fcn_small_forward.26} parent=0 // pred_check_branch
    %975 = sbr.rel (0) target = $region21
  $region20: #{fcn_small_forward.26} parent=0 // pred_region
    _
  $region21: #{fcn_small_forward.26} parent=0 // pred_fallthru
    _
  // Predicated region
  $region22: #{fcn_small_forward.26} parent=0 // pred_check
    _
  $region23: #{fcn_small_forward.26} parent=0 // pred_check_branch
    %977 = sbr.rel (0) target = $region25
  $region24: #{fcn_small_forward.26} parent=0 // pred_region
    _
  $region25: #{fcn_small_forward.26} parent=0 // pred_fallthru
    _

// kernel: fcn_small_forward.27
$region0: #{fcn_small_forward.27}
  #allocation0 [shape = 'u32[]', space=smem, size = 0x4, offset = 0x4, fixed_abs, tag = 'smem constant byte address 0x4 - core index']
  #allocation1 [shape = 'u32[144,128]{1,0:T(1,128)}', space=vmem, size = 0x12000, scoped, tag = 'internal scratch']
  %s0 = inlined_call_operand.vmem [shape: bf16[32,1152], index: 0, kind: input, shape index: {}]
  %s1 = inlined_call_operand.vmem [shape: bf16[1152,128], index: 1, kind: input, shape index: {}]
  %s2 = inlined_call_operand.vmem [shape: f32[1,128], index: 2, kind: input, shape index: {}]
  %s3 = inlined_call_operand.vmem [shape: f32[32,128], index: 3, kind: output, shape index: {}]
  %s4 = sld [smem:[#allocation0]]
  $region22: #{fcn_small_forward.27} parent=0
    _
  %s6 = ssub.s32 1, %s4
  %s7 = scalar_select 0, %s6, %s4
  // Predicated region
  $region2: #{fcn_small_forward.27} parent=0 // pred_check
    _
  $region3: #{fcn_small_forward.27} parent=0 // pred_check_branch
    %9 = sbr.rel (0) target = $region5
  $region4: #{fcn_small_forward.27} parent=0 // pred_region
    _
  $region5: #{fcn_small_forward.27} parent=0 // pred_fallthru
    _
  // Predicated region
  $region6: #{fcn_small_forward.27} parent=0 // pred_check
    _
  $region7: #{fcn_small_forward.27} parent=0 // pred_check_branch
    %11 = sbr.rel (0) target = $region9
  $region8: #{fcn_small_forward.27} parent=0 // pred_region
    _
  $region9: #{fcn_small_forward.27} parent=0 // pred_fallthru
    _
  // Predicated region
  $region10: #{fcn_small_forward.27} parent=0 // pred_check
    _
  $region11: #{fcn_small_forward.27} parent=0 // pred_check_branch
    %13 = sbr.rel (0) target = $region13
  $region12: #{fcn_small_forward.27} parent=0 // pred_region
    _
  $region13: #{fcn_small_forward.27} parent=0 // pred_fallthru
    _
  %v15 = vld [vmem:[%s0] sm:$0xff]
  %v16 = vld [vmem:[%s0 + $0x8] sm:$0xff]
  %v17 = vld [vmem:[%s0 + $0x10] sm:$0xff]
  %v18 = vld [vmem:[%s0 + $0x18] sm:$0xff]
  %v19 = vld [vmem:[%s0 + $0x20] sm:$0xf]
  %v20 = vld [vmem:[%s0 + $0x24] sm:$0xff]
  %v21 = vld [vmem:[%s0 + $0x2c] sm:$0xff]
  %v22 = vld [vmem:[%s0 + $0x34] sm:$0xff]
  %v23 = vld [vmem:[%s0 + $0x3c] sm:$0xff]
  %v24 = vld [vmem:[%s0 + $0x44] sm:$0xf]
  %v25 = vld [vmem:[%s0 + $0x48] sm:$0xff]
  %v26 = vld [vmem:[%s0 + $0x50] sm:$0xff]
  %v27 = vld [vmem:[%s0 + $0x58] sm:$0xff]
  %v28 = vld [vmem:[%s0 + $0x60] sm:$0xff]
  %v29 = vld [vmem:[%s0 + $0x68] sm:$0xf]
  %v30 = vld [vmem:[%s0 + $0x6c] sm:$0xff]
  %v31 = vld [vmem:[%s0 + $0x74] sm:$0xff]
  %v32 = vld [vmem:[%s0 + $0x7c] sm:$0xff]
  %v33 = vld [vmem:[%s0 + $0x84] sm:$0xff]
  %v34 = vld [vmem:[%s0 + $0x8c] sm:$0xf]
  %v35 = vld [vmem:[%s1] sm:$0xf]
  %v36 = vld [vmem:[%s1 + $0x4] sm:$0xf]
  %v37 = vld [vmem:[%s1 + $0x8] sm:$0xf]
  %v38 = vld [vmem:[%s1 + $0xc] sm:$0xf]
  %v39 = vld [vmem:[%s1 + $0x10] sm:$0xf]
  %v40 = vld [vmem:[%s1 + $0x14] sm:$0xf]
  %v41 = vld [vmem:[%s1 + $0x18] sm:$0xf]
  %v42 = vld [vmem:[%s1 + $0x1c] sm:$0xf]
  %v43 = vld [vmem:[%s1 + $0x20] sm:$0xf]
  %v44 = vld [vmem:[%s1 + $0x24] sm:$0xf]
  %v45 = vld [vmem:[%s1 + $0x28] sm:$0xf]
  %v46 = vld [vmem:[%s1 + $0x2c] sm:$0xf]
  %v47 = vld [vmem:[%s1 + $0x30] sm:$0xf]
  %v48 = vld [vmem:[%s1 + $0x34] sm:$0xf]
  %v49 = vld [vmem:[%s1 + $0x38] sm:$0xf]
  %v50 = vld [vmem:[%s1 + $0x3c] sm:$0xf]
  %v51 = vld [vmem:[%s1 + $0x40] sm:$0xf]
  %v52 = vld [vmem:[%s1 + $0x44] sm:$0xf]
  %v53 = vld [vmem:[%s1 + $0x48] sm:$0xf]
  %v54 = vld [vmem:[%s1 + $0x4c] sm:$0xf]
  %v55 = vld [vmem:[%s1 + $0x50] sm:$0xf]
  %v56 = vld [vmem:[%s1 + $0x54] sm:$0xf]
  %v57 = vld [vmem:[%s1 + $0x58] sm:$0xf]
  %v58 = vld [vmem:[%s1 + $0x5c] sm:$0xf]
  %v59 = vld [vmem:[%s1 + $0x60] sm:$0xf]
  %v60 = vld [vmem:[%s1 + $0x64] sm:$0xf]
  %v61 = vld [vmem:[%s1 + $0x68] sm:$0xf]
  %v62 = vld [vmem:[%s1 + $0x6c] sm:$0xf]
  %v63 = vld [vmem:[%s1 + $0x70] sm:$0xf]
  %v64 = vld [vmem:[%s1 + $0x74] sm:$0xf]
  %v65 = vld [vmem:[%s1 + $0x78] sm:$0xf]
  %v66 = vld [vmem:[%s1 + $0x7c] sm:$0xf]
  %v67 = vld [vmem:[%s1 + $0x80] sm:$0xf]
  %v68 = vld [vmem:[%s1 + $0x84] sm:$0xf]
  %v69 = vld [vmem:[%s1 + $0x88] sm:$0xf]
  %v70 = vld [vmem:[%s1 + $0x8c] sm:$0xf]
  %v71 = vld [vmem:[%s1 + $0x90] sm:$0xf]
  %v72 = vld [vmem:[%s1 + $0x94] sm:$0xf]
  %v73 = vld [vmem:[%s1 + $0x98] sm:$0xf]
  %v74 = vld [vmem:[%s1 + $0x9c] sm:$0xf]
  %v75 = vld [vmem:[%s1 + $0xa0] sm:$0xf]
  %v76 = vld [vmem:[%s1 + $0xa4] sm:$0xf]
  %v77 = vld [vmem:[%s1 + $0xa8] sm:$0xf]
  %v78 = vld [vmem:[%s1 + $0xac] sm:$0xf]
  %v79 = vld [vmem:[%s1 + $0xb0] sm:$0xf]
  %v80 = vld [vmem:[%s1 + $0xb4] sm:$0xf]
  %v81 = vld [vmem:[%s1 + $0xb8] sm:$0xf]
  %v82 = vld [vmem:[%s1 + $0xbc] sm:$0xf]
  %v83 = vld [vmem:[%s1 + $0xc0] sm:$0xf]
  %v84 = vld [vmem:[%s1 + $0xc4] sm:$0xf]
  %v85 = vld [vmem:[%s1 + $0xc8] sm:$0xf]
  %v86 = vld [vmem:[%s1 + $0xcc] sm:$0xf]
  %v87 = vld [vmem:[%s1 + $0xd0] sm:$0xf]
  %v88 = vld [vmem:[%s1 + $0xd4] sm:$0xf]
  %v89 = vld [vmem:[%s1 + $0xd8] sm:$0xf]
  %v90 = vld [vmem:[%s1 + $0xdc] sm:$0xf]
  %v91 = vld [vmem:[%s1 + $0xe0] sm:$0xf]
  %v92 = vld [vmem:[%s1 + $0xe4] sm:$0xf]
  %v93 = vld [vmem:[%s1 + $0xe8] sm:$0xf]
  %v94 = vld [vmem:[%s1 + $0xec] sm:$0xf]
  %v95 = vld [vmem:[%s1 + $0xf0] sm:$0xf]
  %v96 = vld [vmem:[%s1 + $0xf4] sm:$0xf]
  %v97 = vld [vmem:[%s1 + $0xf8] sm:$0xf]
  %v98 = vld [vmem:[%s1 + $0xfc] sm:$0xf]
  %v99 = vld [vmem:[%s1 + $0x100] sm:$0xf]
  %v100 = vld [vmem:[%s1 + $0x104] sm:$0xf]
  %v101 = vld [vmem:[%s1 + $0x108] sm:$0xf]
  %v102 = vld [vmem:[%s1 + $0x10c] sm:$0xf]
  %v103 = vld [vmem:[%s1 + $0x110] sm:$0xf]
  %v104 = vld [vmem:[%s1 + $0x114] sm:$0xf]
  %v105 = vld [vmem:[%s1 + $0x118] sm:$0xf]
  %v106 = vld [vmem:[%s1 + $0x11c] sm:$0xf]
  %v107 = vld [vmem:[%s1 + $0x120] sm:$0xf]
  %v108 = vld [vmem:[%s1 + $0x124] sm:$0xf]
  %v109 = vld [vmem:[%s1 + $0x128] sm:$0xf]
  %v110 = vld [vmem:[%s1 + $0x12c] sm:$0xf]
  %v111 = vld [vmem:[%s1 + $0x130] sm:$0xf]
  %v112 = vld [vmem:[%s1 + $0x134] sm:$0xf]
  %v113 = vld [vmem:[%s1 + $0x138] sm:$0xf]
  %v114 = vld [vmem:[%s1 + $0x13c] sm:$0xf]
  %v115 = vld [vmem:[%s1 + $0x140] sm:$0xf]
  %v116 = vld [vmem:[%s1 + $0x144] sm:$0xf]
  %v117 = vld [vmem:[%s1 + $0x148] sm:$0xf]
  %v118 = vld [vmem:[%s1 + $0x14c] sm:$0xf]
  %v119 = vld [vmem:[%s1 + $0x150] sm:$0xf]
  %v120 = vld [vmem:[%s1 + $0x154] sm:$0xf]
  %v121 = vld [vmem:[%s1 + $0x158] sm:$0xf]
  %v122 = vld [vmem:[%s1 + $0x15c] sm:$0xf]
  %v123 = vld [vmem:[%s1 + $0x160] sm:$0xf]
  %v124 = vld [vmem:[%s1 + $0x164] sm:$0xf]
  %v125 = vld [vmem:[%s1 + $0x168] sm:$0xf]
  %v126 = vld [vmem:[%s1 + $0x16c] sm:$0xf]
  %v127 = vld [vmem:[%s1 + $0x170] sm:$0xf]
  %v128 = vld [vmem:[%s1 + $0x174] sm:$0xf]
  %v129 = vld [vmem:[%s1 + $0x178] sm:$0xf]
  %v130 = vld [vmem:[%s1 + $0x17c] sm:$0xf]
  %v131 = vld [vmem:[%s1 + $0x180] sm:$0xf]
  %v132 = vld [vmem:[%s1 + $0x184] sm:$0xf]
  %v133 = vld [vmem:[%s1 + $0x188] sm:$0xf]
  %v134 = vld [vmem:[%s1 + $0x18c] sm:$0xf]
  %v135 = vld [vmem:[%s1 + $0x190] sm:$0xf]
  %v136 = vld [vmem:[%s1 + $0x194] sm:$0xf]
  %v137 = vld [vmem:[%s1 + $0x198] sm:$0xf]
  %v138 = vld [vmem:[%s1 + $0x19c] sm:$0xf]
  %v139 = vld [vmem:[%s1 + $0x1a0] sm:$0xf]
  %v140 = vld [vmem:[%s1 + $0x1a4] sm:$0xf]
  %v141 = vld [vmem:[%s1 + $0x1a8] sm:$0xf]
  %v142 = vld [vmem:[%s1 + $0x1ac] sm:$0xf]
  %v143 = vld [vmem:[%s1 + $0x1b0] sm:$0xf]
  %v144 = vld [vmem:[%s1 + $0x1b4] sm:$0xf]
  %v145 = vld [vmem:[%s1 + $0x1b8] sm:$0xf]
  %v146 = vld [vmem:[%s1 + $0x1bc] sm:$0xf]
  %v147 = vld [vmem:[%s1 + $0x1c0] sm:$0xf]
  %v148 = vld [vmem:[%s1 + $0x1c4] sm:$0xf]
  %v149 = vld [vmem:[%s1 + $0x1c8] sm:$0xf]
  %v150 = vld [vmem:[%s1 + $0x1cc] sm:$0xf]
  %v151 = vld [vmem:[%s1 + $0x1d0] sm:$0xf]
  %v152 = vld [vmem:[%s1 + $0x1d4] sm:$0xf]
  %v153 = vld [vmem:[%s1 + $0x1d8] sm:$0xf]
  %v154 = vld [vmem:[%s1 + $0x1dc] sm:$0xf]
  %v155 = vld [vmem:[%s1 + $0x1e0] sm:$0xf]
  %v156 = vld [vmem:[%s1 + $0x1e4] sm:$0xf]
  %v157 = vld [vmem:[%s1 + $0x1e8] sm:$0xf]
  %v158 = vld [vmem:[%s1 + $0x1ec] sm:$0xf]
  %v159 = vld [vmem:[%s1 + $0x1f0] sm:$0xf]
  %v160 = vld [vmem:[%s1 + $0x1f4] sm:$0xf]
  %v161 = vld [vmem:[%s1 + $0x1f8] sm:$0xf]
  %v162 = vld [vmem:[%s1 + $0x1fc] sm:$0xf]
  %v163 = vld [vmem:[%s1 + $0x200] sm:$0xf]
  %v164 = vld [vmem:[%s1 + $0x204] sm:$0xf]
  %v165 = vld [vmem:[%s1 + $0x208] sm:$0xf]
  %v166 = vld [vmem:[%s1 + $0x20c] sm:$0xf]
  %v167 = vld [vmem:[%s1 + $0x210] sm:$0xf]
  %v168 = vld [vmem:[%s1 + $0x214] sm:$0xf]
  %v169 = vld [vmem:[%s1 + $0x218] sm:$0xf]
  %v170 = vld [vmem:[%s1 + $0x21c] sm:$0xf]
  %v171 = vld [vmem:[%s1 + $0x220] sm:$0xf]
  %v172 = vld [vmem:[%s1 + $0x224] sm:$0xf]
  %v173 = vld [vmem:[%s1 + $0x228] sm:$0xf]
  %v174 = vld [vmem:[%s1 + $0x22c] sm:$0xf]
  %v175 = vld [vmem:[%s1 + $0x230] sm:$0xf]
  %v176 = vld [vmem:[%s1 + $0x234] sm:$0xf]
  %v177 = vld [vmem:[%s1 + $0x238] sm:$0xf]
  %v178 = vld [vmem:[%s1 + $0x23c] sm:$0xf]
  %v179 = vld [vmem:[%s2] sm:$0x1]
  %v181 = vlaneseq
  %v182 = vshrl.u32 %v181, 7
  %v183 = vsub.s32 0, %v182
  %v184 = vrot.slane %v179, %v183
  %v206 = vunpack.c.l.b16 %v15
  %v207 = vunpack.c.h.b16 %v15
  %v208 = vunpack.c.l.b16 %v16
  %v209 = vunpack.c.h.b16 %v16
  %v210 = vunpack.c.l.b16 %v17
  %v211 = vunpack.c.h.b16 %v17
  %v212 = vunpack.c.l.b16 %v18
  %v213 = vunpack.c.h.b16 %v18
  %v214 = vunpack.c.l.b16 %v19
  %v215 = vunpack.c.l.b16 %v20
  %v216 = vunpack.c.h.b16 %v20
  %v217 = vunpack.c.l.b16 %v21
  %v218 = vunpack.c.h.b16 %v21
  %v219 = vunpack.c.l.b16 %v22
  %v220 = vunpack.c.h.b16 %v22
  %v221 = vunpack.c.l.b16 %v23
  %v222 = vunpack.c.h.b16 %v23
  %v223 = vunpack.c.l.b16 %v24
  %v224 = vunpack.c.l.b16 %v25
  %v225 = vunpack.c.h.b16 %v25
  %v226 = vunpack.c.l.b16 %v26
  %v227 = vunpack.c.h.b16 %v26
  %v228 = vunpack.c.l.b16 %v27
  %v229 = vunpack.c.h.b16 %v27
  %v230 = vunpack.c.l.b16 %v28
  %v231 = vunpack.c.h.b16 %v28
  %v232 = vunpack.c.l.b16 %v29
  %v233 = vunpack.c.l.b16 %v30
  %v234 = vunpack.c.h.b16 %v30
  %v235 = vunpack.c.l.b16 %v31
  %v236 = vunpack.c.h.b16 %v31
  %v237 = vunpack.c.l.b16 %v32
  %v238 = vunpack.c.h.b16 %v32
  %v239 = vunpack.c.l.b16 %v33
  %v240 = vunpack.c.h.b16 %v33
  %v241 = vunpack.c.l.b16 %v34
  %v242 = vpack.c.b16 %v215, %v206
  %v243 = vpack.c.b16 %v216, %v207
  %v244 = vpack.c.b16 %v217, %v208
  %v245 = vpack.c.b16 %v218, %v209
  %v246 = vpack.c.b16 %v219, %v210
  %v247 = vpack.c.b16 %v220, %v211
  %v248 = vpack.c.b16 %v221, %v212
  %v249 = vpack.c.b16 %v222, %v213
  %v250 = vpack.c.b16 %v223, %v214
  %v251 = vpack.c.b16 %v233, %v224
  %v252 = vpack.c.b16 %v234, %v225
  %v253 = vpack.c.b16 %v235, %v226
  %v254 = vpack.c.b16 %v236, %v227
  %v255 = vpack.c.b16 %v237, %v228
  %v256 = vpack.c.b16 %v238, %v229
  %v257 = vpack.c.b16 %v239, %v230
  %v258 = vpack.c.b16 %v240, %v231
  %v259 = vpack.c.b16 %v241, %v232
  %v422 = vunpack.c.l.b16 %v35
  %v423 = vunpack.c.l.b16 %v36
  %v424 = vunpack.c.l.b16 %v37
  %v425 = vunpack.c.l.b16 %v38
  %v426 = vunpack.c.l.b16 %v39
  %v427 = vunpack.c.l.b16 %v40
  %v428 = vunpack.c.l.b16 %v41
  %v429 = vunpack.c.l.b16 %v42
  %v430 = vunpack.c.l.b16 %v43
  %v431 = vunpack.c.l.b16 %v44
  %v432 = vunpack.c.l.b16 %v45
  %v433 = vunpack.c.l.b16 %v46
  %v434 = vunpack.c.l.b16 %v47
  %v435 = vunpack.c.l.b16 %v48
  %v436 = vunpack.c.l.b16 %v49
  %v437 = vunpack.c.l.b16 %v50
  %v438 = vunpack.c.l.b16 %v51
  %v439 = vunpack.c.l.b16 %v52
  %v440 = vunpack.c.l.b16 %v53
  %v441 = vunpack.c.l.b16 %v54
  %v442 = vunpack.c.l.b16 %v55
  %v443 = vunpack.c.l.b16 %v56
  %v444 = vunpack.c.l.b16 %v57
  %v445 = vunpack.c.l.b16 %v58
  %v446 = vunpack.c.l.b16 %v59
  %v447 = vunpack.c.l.b16 %v60
  %v448 = vunpack.c.l.b16 %v61
  %v449 = vunpack.c.l.b16 %v62
  %v450 = vunpack.c.l.b16 %v63
  %v451 = vunpack.c.l.b16 %v64
  %v452 = vunpack.c.l.b16 %v65
  %v453 = vunpack.c.l.b16 %v66
  %v454 = vunpack.c.l.b16 %v67
  %v455 = vunpack.c.l.b16 %v68
  %v456 = vunpack.c.l.b16 %v69
  %v457 = vunpack.c.l.b16 %v70
  %v458 = vunpack.c.l.b16 %v71
  %v459 = vunpack.c.l.b16 %v72
  %v460 = vunpack.c.l.b16 %v73
  %v461 = vunpack.c.l.b16 %v74
  %v462 = vunpack.c.l.b16 %v75
  %v463 = vunpack.c.l.b16 %v76
  %v464 = vunpack.c.l.b16 %v77
  %v465 = vunpack.c.l.b16 %v78
  %v466 = vunpack.c.l.b16 %v79
  %v467 = vunpack.c.l.b16 %v80
  %v468 = vunpack.c.l.b16 %v81
  %v469 = vunpack.c.l.b16 %v82
  %v470 = vunpack.c.l.b16 %v83
  %v471 = vunpack.c.l.b16 %v84
  %v472 = vunpack.c.l.b16 %v85
  %v473 = vunpack.c.l.b16 %v86
  %v474 = vunpack.c.l.b16 %v87
  %v475 = vunpack.c.l.b16 %v88
  %v476 = vunpack.c.l.b16 %v89
  %v477 = vunpack.c.l.b16 %v90
  %v478 = vunpack.c.l.b16 %v91
  %v479 = vunpack.c.l.b16 %v92
  %v480 = vunpack.c.l.b16 %v93
  %v481 = vunpack.c.l.b16 %v94
  %v482 = vunpack.c.l.b16 %v95
  %v483 = vunpack.c.l.b16 %v96
  %v484 = vunpack.c.l.b16 %v97
  %v485 = vunpack.c.l.b16 %v98
  %v486 = vunpack.c.l.b16 %v99
  %v487 = vunpack.c.l.b16 %v100
  %v488 = vunpack.c.l.b16 %v101
  %v489 = vunpack.c.l.b16 %v102
  %v490 = vunpack.c.l.b16 %v103
  %v491 = vunpack.c.l.b16 %v104
  %v492 = vunpack.c.l.b16 %v105
  %v493 = vunpack.c.l.b16 %v106
  %v494 = vunpack.c.l.b16 %v107
  %v495 = vunpack.c.l.b16 %v108
  %v496 = vunpack.c.l.b16 %v109
  %v497 = vunpack.c.l.b16 %v110
  %v498 = vunpack.c.l.b16 %v111
  %v499 = vunpack.c.l.b16 %v112
  %v500 = vunpack.c.l.b16 %v113
  %v501 = vunpack.c.l.b16 %v114
  %v502 = vunpack.c.l.b16 %v115
  %v503 = vunpack.c.l.b16 %v116
  %v504 = vunpack.c.l.b16 %v117
  %v505 = vunpack.c.l.b16 %v118
  %v506 = vunpack.c.l.b16 %v119
  %v507 = vunpack.c.l.b16 %v120
  %v508 = vunpack.c.l.b16 %v121
  %v509 = vunpack.c.l.b16 %v122
  %v510 = vunpack.c.l.b16 %v123
  %v511 = vunpack.c.l.b16 %v124
  %v512 = vunpack.c.l.b16 %v125
  %v513 = vunpack.c.l.b16 %v126
  %v514 = vunpack.c.l.b16 %v127
  %v515 = vunpack.c.l.b16 %v128
  %v516 = vunpack.c.l.b16 %v129
  %v517 = vunpack.c.l.b16 %v130
  %v518 = vunpack.c.l.b16 %v131
  %v519 = vunpack.c.l.b16 %v132
  %v520 = vunpack.c.l.b16 %v133
  %v521 = vunpack.c.l.b16 %v134
  %v522 = vunpack.c.l.b16 %v135
  %v523 = vunpack.c.l.b16 %v136
  %v524 = vunpack.c.l.b16 %v137
  %v525 = vunpack.c.l.b16 %v138
  %v526 = vunpack.c.l.b16 %v139
  %v527 = vunpack.c.l.b16 %v140
  %v528 = vunpack.c.l.b16 %v141
  %v529 = vunpack.c.l.b16 %v142
  %v530 = vunpack.c.l.b16 %v143
  %v531 = vunpack.c.l.b16 %v144
  %v532 = vunpack.c.l.b16 %v145
  %v533 = vunpack.c.l.b16 %v146
  %v534 = vunpack.c.l.b16 %v147
  %v535 = vunpack.c.l.b16 %v148
  %v536 = vunpack.c.l.b16 %v149
  %v537 = vunpack.c.l.b16 %v150
  %v538 = vunpack.c.l.b16 %v151
  %v539 = vunpack.c.l.b16 %v152
  %v540 = vunpack.c.l.b16 %v153
  %v541 = vunpack.c.l.b16 %v154
  %v542 = vunpack.c.l.b16 %v155
  %v543 = vunpack.c.l.b16 %v156
  %v544 = vunpack.c.l.b16 %v157
  %v545 = vunpack.c.l.b16 %v158
  %v546 = vunpack.c.l.b16 %v159
  %v547 = vunpack.c.l.b16 %v160
  %v548 = vunpack.c.l.b16 %v161
  %v549 = vunpack.c.l.b16 %v162
  %v550 = vunpack.c.l.b16 %v163
  %v551 = vunpack.c.l.b16 %v164
  %v552 = vunpack.c.l.b16 %v165
  %v553 = vunpack.c.l.b16 %v166
  %v554 = vunpack.c.l.b16 %v167
  %v555 = vunpack.c.l.b16 %v168
  %v556 = vunpack.c.l.b16 %v169
  %v557 = vunpack.c.l.b16 %v170
  %v558 = vunpack.c.l.b16 %v171
  %v559 = vunpack.c.l.b16 %v172
  %v560 = vunpack.c.l.b16 %v173
  %v561 = vunpack.c.l.b16 %v174
  %v562 = vunpack.c.l.b16 %v175
  %v563 = vunpack.c.l.b16 %v176
  %v564 = vunpack.c.l.b16 %v177
  %v565 = vunpack.c.l.b16 %v178
  %v566 = vpack.c.b16 %v423, %v422
  %v567 = vpack.c.b16 %v425, %v424
  %v568 = vpack.c.b16 %v427, %v426
  %v569 = vpack.c.b16 %v429, %v428
  %v570 = vpack.c.b16 %v431, %v430
  %v571 = vpack.c.b16 %v433, %v432
  %v572 = vpack.c.b16 %v435, %v434
  %v573 = vpack.c.b16 %v437, %v436
  %v574 = vpack.c.b16 %v439, %v438
  %v575 = vpack.c.b16 %v441, %v440
  %v576 = vpack.c.b16 %v443, %v442
  %v577 = vpack.c.b16 %v445, %v444
  %v578 = vpack.c.b16 %v447, %v446
  %v579 = vpack.c.b16 %v449, %v448
  %v580 = vpack.c.b16 %v451, %v450
  %v581 = vpack.c.b16 %v453, %v452
  %v582 = vpack.c.b16 %v455, %v454
  %v583 = vpack.c.b16 %v457, %v456
  %v584 = vpack.c.b16 %v459, %v458
  %v585 = vpack.c.b16 %v461, %v460
  %v586 = vpack.c.b16 %v463, %v462
  %v587 = vpack.c.b16 %v465, %v464
  %v588 = vpack.c.b16 %v467, %v466
  %v589 = vpack.c.b16 %v469, %v468
  %v590 = vpack.c.b16 %v471, %v470
  %v591 = vpack.c.b16 %v473, %v472
  %v592 = vpack.c.b16 %v475, %v474
  %v593 = vpack.c.b16 %v477, %v476
  %v594 = vpack.c.b16 %v479, %v478
  %v595 = vpack.c.b16 %v481, %v480
  %v596 = vpack.c.b16 %v483, %v482
  %v597 = vpack.c.b16 %v485, %v484
  %v598 = vpack.c.b16 %v487, %v486
  %v599 = vpack.c.b16 %v489, %v488
  %v600 = vpack.c.b16 %v491, %v490
  %v601 = vpack.c.b16 %v493, %v492
  %v602 = vpack.c.b16 %v495, %v494
  %v603 = vpack.c.b16 %v497, %v496
  %v604 = vpack.c.b16 %v499, %v498
  %v605 = vpack.c.b16 %v501, %v500
  %v606 = vpack.c.b16 %v503, %v502
  %v607 = vpack.c.b16 %v505, %v504
  %v608 = vpack.c.b16 %v507, %v506
  %v609 = vpack.c.b16 %v509, %v508
  %v610 = vpack.c.b16 %v511, %v510
  %v611 = vpack.c.b16 %v513, %v512
  %v612 = vpack.c.b16 %v515, %v514
  %v613 = vpack.c.b16 %v517, %v516
  %v614 = vpack.c.b16 %v519, %v518
  %v615 = vpack.c.b16 %v521, %v520
  %v616 = vpack.c.b16 %v523, %v522
  %v617 = vpack.c.b16 %v525, %v524
  %v618 = vpack.c.b16 %v527, %v526
  %v619 = vpack.c.b16 %v529, %v528
  %v620 = vpack.c.b16 %v531, %v530
  %v621 = vpack.c.b16 %v533, %v532
  %v622 = vpack.c.b16 %v535, %v534
  %v623 = vpack.c.b16 %v537, %v536
  %v624 = vpack.c.b16 %v539, %v538
  %v625 = vpack.c.b16 %v541, %v540
  %v626 = vpack.c.b16 %v543, %v542
  %v627 = vpack.c.b16 %v545, %v544
  %v628 = vpack.c.b16 %v547, %v546
  %v629 = vpack.c.b16 %v549, %v548
  %v630 = vpack.c.b16 %v551, %v550
  %v631 = vpack.c.b16 %v553, %v552
  %v632 = vpack.c.b16 %v555, %v554
  %v633 = vpack.c.b16 %v557, %v556
  %v634 = vpack.c.b16 %v559, %v558
  %v635 = vpack.c.b16 %v561, %v560
  %v636 = vpack.c.b16 %v563, %v562
  %v637 = vpack.c.b16 %v565, %v564
  %710 = vmatprep.subr.bf16.mxu0 0
  %711 = vmatpush1.bf16.msra.mxu0 %v566
  %712 = vmatprep.subr.bf16.mxu0 0
  %713 = vmatpush1.bf16.msra.mxu0 %v567
  %714 = vmatprep.subr.bf16.mxu0 0
  %715 = vmatpush1.bf16.msra.mxu0 %v568
  %716 = vmatprep.subr.bf16.mxu0 0
  %717 = vmatpush1.bf16.msra.mxu0 %v569
  %718 = vmatprep.subr.bf16.mxu0 0
  %719 = vmatpush1.bf16.msra.mxu0 %v570
  %720 = vmatprep.subr.bf16.mxu0 0
  %721 = vmatpush1.bf16.msra.mxu0 %v571
  %722 = vmatprep.subr.bf16.mxu0 0
  %723 = vmatpush1.bf16.msra.mxu0 %v572
  %724 = vmatprep.subr.bf16.mxu0 0
  %725 = vmatpush1.bf16.msra.mxu0 %v573
  %726 = vmatprep.subr.bf16.mxu0 0
  %727 = vmatpush1.bf16.msra.mxu0 %v574
  %728 = vmatprep.subr.bf16.mxu0 0
  %729 = vmatpush1.bf16.msra.mxu0 %v575
  %730 = vmatprep.subr.bf16.mxu0 0
  %731 = vmatpush1.bf16.msra.mxu0 %v576
  %732 = vmatprep.subr.bf16.mxu0 0
  %733 = vmatpush1.bf16.msra.mxu0 %v577
  %734 = vmatprep.subr.bf16.mxu0 0
  %735 = vmatpush1.bf16.msra.mxu0 %v578
  %736 = vmatprep.subr.bf16.mxu0 0
  %737 = vmatpush1.bf16.msra.mxu0 %v579
  %738 = vmatprep.subr.bf16.mxu0 0
  %739 = vmatpush1.bf16.msra.mxu0 %v580
  %740 = vmatprep.subr.bf16.mxu0 0
  %741 = vmatpush1.bf16.msra.mxu0 %v581
  %742 = vmatprep.mubr.bf16.mxu0 %v243
  %743 = vmatmul.mubr.bf16.gmra.mrb[0].mxu0 %v242
  %v744 = vpop.f32.mrb[0].mxu0
  %v745 = vadd.f32 %v184, %v744
  %v746 = vpop.f32.mrb[0].mxu0
  %v747 = vpop.f32.mrb[0].mxu0
  %v748 = vadd.f32 %v184, %v747
  %v749 = vpop.f32.mrb[0].mxu0
  %750 = vmatprep.mubr.bf16.mxu0 %v252
  %751 = vmatmul.mubr.bf16.gmra.mrb[0].mxu0 %v251
  %v752 = vpop.f32.mrb[0].mxu0
  %v753 = vadd.f32 %v184, %v752
  %v754 = vpop.f32.mrb[0].mxu0
  %v755 = vpop.f32.mrb[0].mxu0
  %v756 = vadd.f32 %v184, %v755
  %v757 = vpop.f32.mrb[0].mxu0
  %758 = vdwg.mxu0
  %759 = vmatprep.subr.bf16.mxu0 0
  %760 = vmatpush1.bf16.msra.mxu0 %v582
  %761 = vmatprep.subr.bf16.mxu0 0
  %762 = vmatpush1.bf16.msra.mxu0 %v583
  %763 = vmatprep.subr.bf16.mxu0 0
  %764 = vmatpush1.bf16.msra.mxu0 %v584
  %765 = vmatprep.subr.bf16.mxu0 0
  %766 = vmatpush1.bf16.msra.mxu0 %v585
  %767 = vmatprep.subr.bf16.mxu0 0
  %768 = vmatpush1.bf16.msra.mxu0 %v586
  %769 = vmatprep.subr.bf16.mxu0 0
  %770 = vmatpush1.bf16.msra.mxu0 %v587
  %771 = vmatprep.subr.bf16.mxu0 0
  %772 = vmatpush1.bf16.msra.mxu0 %v588
  %773 = vmatprep.subr.bf16.mxu0 0
  %774 = vmatpush1.bf16.msra.mxu0 %v589
  %775 = vmatprep.subr.bf16.mxu0 0
  %776 = vmatpush1.bf16.msra.mxu0 %v590
  %777 = vmatprep.subr.bf16.mxu0 0
  %778 = vmatpush1.bf16.msra.mxu0 %v591
  %779 = vmatprep.subr.bf16.mxu0 0
  %780 = vmatpush1.bf16.msra.mxu0 %v592
  %781 = vmatprep.subr.bf16.mxu0 0
  %782 = vmatpush1.bf16.msra.mxu0 %v593
  %783 = vmatprep.subr.bf16.mxu0 0
  %784 = vmatpush1.bf16.msra.mxu0 %v594
  %785 = vmatprep.subr.bf16.mxu0 0
  %786 = vmatpush1.bf16.msra.mxu0 %v595
  %787 = vmatprep.subr.bf16.mxu0 0
  %788 = vmatpush1.bf16.msra.mxu0 %v596
  %789 = vmatprep.subr.bf16.mxu0 0
  %790 = vmatpush1.bf16.msra.mxu0 %v597
  %791 = vmatprep.mubr.bf16.mxu0 %v245
  %792 = vmatmul.mubr.bf16.gmra.mrb[0].mxu0 %v244
  %v793 = vpop.f32.mrb[0].mxu0
  %v794 = vadd.f32 %v745, %v793
  %v795 = vpop.f32.mrb[0].mxu0
  %v796 = vpop.f32.mrb[0].mxu0
  %v797 = vadd.f32 %v748, %v796
  %v798 = vpop.f32.mrb[0].mxu0
  %799 = vmatprep.mubr.bf16.mxu0 %v254
  %800 = vmatmul.mubr.bf16.gmra.mrb[0].mxu0 %v253
  %v801 = vpop.f32.mrb[0].mxu0
  %v802 = vadd.f32 %v753, %v801
  %v803 = vpop.f32.mrb[0].mxu0
  %v804 = vpop.f32.mrb[0].mxu0
  %v805 = vadd.f32 %v756, %v804
  %v806 = vpop.f32.mrb[0].mxu0
  %807 = vdwg.mxu0
  %808 = vmatprep.subr.bf16.mxu0 0
  %809 = vmatpush1.bf16.msra.mxu0 %v598
  %810 = vmatprep.subr.bf16.mxu0 0
  %811 = vmatpush1.bf16.msra.mxu0 %v599
  %812 = vmatprep.subr.bf16.mxu0 0
  %813 = vmatpush1.bf16.msra.mxu0 %v600
  %814 = vmatprep.subr.bf16.mxu0 0
  %815 = vmatpush1.bf16.msra.mxu0 %v601
  %816 = vmatprep.subr.bf16.mxu0 0
  %817 = vmatpush1.bf16.msra.mxu0 %v602
  %818 = vmatprep.subr.bf16.mxu0 0
  %819 = vmatpush1.bf16.msra.mxu0 %v603
  %820 = vmatprep.subr.bf16.mxu0 0
  %821 = vmatpush1.bf16.msra.mxu0 %v604
  %822 = vmatprep.subr.bf16.mxu0 0
  %823 = vmatpush1.bf16.msra.mxu0 %v605
  %824 = vmatprep.subr.bf16.mxu0 0
  %825 = vmatpush1.bf16.msra.mxu0 %v606
  %826 = vmatprep.subr.bf16.mxu0 0
  %827 = vmatpush1.bf16.msra.mxu0 %v607
  %828 = vmatprep.subr.bf16.mxu0 0
  %829 = vmatpush1.bf16.msra.mxu0 %v608
  %830 = vmatprep.subr.bf16.mxu0 0
  %831 = vmatpush1.bf16.msra.mxu0 %v609
  %832 = vmatprep.subr.bf16.mxu0 0
  %833 = vmatpush1.bf16.msra.mxu0 %v610
  %834 = vmatprep.subr.bf16.mxu0 0
  %835 = vmatpush1.bf16.msra.mxu0 %v611
  %836 = vmatprep.subr.bf16.mxu0 0
  %837 = vmatpush1.bf16.msra.mxu0 %v612
  %838 = vmatprep.subr.bf16.mxu0 0
  %839 = vmatpush1.bf16.msra.mxu0 %v613
  %840 = vmatprep.mubr.bf16.mxu0 %v247
  %841 = vmatmul.mubr.bf16.gmra.mrb[0].mxu0 %v246
  %v842 = vpop.f32.mrb[0].mxu0
  %v843 = vadd.f32 %v794, %v842
  %v844 = vpop.f32.mrb[0].mxu0
  %v845 = vpop.f32.mrb[0].mxu0
  %v846 = vadd.f32 %v797, %v845
  %v847 = vpop.f32.mrb[0].mxu0
  %848 = vmatprep.mubr.bf16.mxu0 %v256
  %849 = vmatmul.mubr.bf16.gmra.mrb[0].mxu0 %v255
  %v850 = vpop.f32.mrb[0].mxu0
  %v851 = vadd.f32 %v802, %v850
  %v852 = vpop.f32.mrb[0].mxu0
  %v853 = vpop.f32.mrb[0].mxu0
  %v854 = vadd.f32 %v805, %v853
  %v855 = vpop.f32.mrb[0].mxu0
  %856 = vdwg.mxu0
  %857 = vmatprep.subr.bf16.mxu0 0
  %858 = vmatpush1.bf16.msra.mxu0 %v614
  %859 = vmatprep.subr.bf16.mxu0 0
  %860 = vmatpush1.bf16.msra.mxu0 %v615
  %861 = vmatprep.subr.bf16.mxu0 0
  %862 = vmatpush1.bf16.msra.mxu0 %v616
  %863 = vmatprep.subr.bf16.mxu0 0
  %864 = vmatpush1.bf16.msra.mxu0 %v617
  %865 = vmatprep.subr.bf16.mxu0 0
  %866 = vmatpush1.bf16.msra.mxu0 %v618
  %867 = vmatprep.subr.bf16.mxu0 0
  %868 = vmatpush1.bf16.msra.mxu0 %v619
  %869 = vmatprep.subr.bf16.mxu0 0
  %870 = vmatpush1.bf16.msra.mxu0 %v620
  %871 = vmatprep.subr.bf16.mxu0 0
  %872 = vmatpush1.bf16.msra.mxu0 %v621
  %873 = vmatprep.subr.bf16.mxu0 0
  %874 = vmatpush1.bf16.msra.mxu0 %v622
  %875 = vmatprep.subr.bf16.mxu0 0
  %876 = vmatpush1.bf16.msra.mxu0 %v623
  %877 = vmatprep.subr.bf16.mxu0 0
  %878 = vmatpush1.bf16.msra.mxu0 %v624
  %879 = vmatprep.subr.bf16.mxu0 0
  %880 = vmatpush1.bf16.msra.mxu0 %v625
  %881 = vmatprep.subr.bf16.mxu0 0
  %882 = vmatpush1.bf16.msra.mxu0 %v626
  %883 = vmatprep.subr.bf16.mxu0 0
  %884 = vmatpush1.bf16.msra.mxu0 %v627
  %885 = vmatprep.subr.bf16.mxu0 0
  %886 = vmatpush1.bf16.msra.mxu0 %v628
  %887 = vmatprep.subr.bf16.mxu0 0
  %888 = vmatpush1.bf16.msra.mxu0 %v629
  %889 = vmatprep.mubr.bf16.mxu0 %v249
  %890 = vmatmul.mubr.bf16.gmra.mrb[0].mxu0 %v248
  %v891 = vpop.f32.mrb[0].mxu0
  %v892 = vadd.f32 %v843, %v891
  %v893 = vpop.f32.mrb[0].mxu0
  %v894 = vpop.f32.mrb[0].mxu0
  %v895 = vadd.f32 %v846, %v894
  %v896 = vpop.f32.mrb[0].mxu0
  %897 = vmatprep.mubr.bf16.mxu0 %v258
  %898 = vmatmul.mubr.bf16.gmra.mrb[0].mxu0 %v257
  %v899 = vpop.f32.mrb[0].mxu0
  %v900 = vadd.f32 %v851, %v899
  %v901 = vpop.f32.mrb[0].mxu0
  %v902 = vpop.f32.mrb[0].mxu0
  %v903 = vadd.f32 %v854, %v902
  %v904 = vpop.f32.mrb[0].mxu0
  %905 = vdwg.mxu0
  %906 = vmatprep.subr.bf16.mxu0 0
  %907 = vmatpush1.bf16.msra.mxu0 %v630
  %908 = vmatprep.subr.bf16.mxu0 0
  %909 = vmatpush1.bf16.msra.mxu0 %v631
  %910 = vmatprep.subr.bf16.mxu0 0
  %911 = vmatpush1.bf16.msra.mxu0 %v632
  %912 = vmatprep.subr.bf16.mxu0 0
  %913 = vmatpush1.bf16.msra.mxu0 %v633
  %914 = vmatprep.subr.bf16.mxu0 0
  %915 = vmatpush1.bf16.msra.mxu0 %v634
  %916 = vmatprep.subr.bf16.mxu0 0
  %917 = vmatpush1.bf16.msra.mxu0 %v635
  %918 = vmatprep.subr.bf16.mxu0 0
  %919 = vmatpush1.bf16.msra.mxu0 %v636
  %920 = vmatprep.subr.bf16.mxu0 0
  %921 = vmatpush1.bf16.msra.mxu0 %v637
  %922 = vmatprep.subr.bf16.mxu0 0
  %923 = vmatpush1.bf16.msra.mxu0 0
  %924 = vmatprep.subr.bf16.mxu0 0
  %925 = vmatpush1.bf16.msra.mxu0 0
  %926 = vmatprep.subr.bf16.mxu0 0
  %927 = vmatpush1.bf16.msra.mxu0 0
  %928 = vmatprep.subr.bf16.mxu0 0
  %929 = vmatpush1.bf16.msra.mxu0 0
  %930 = vmatprep.subr.bf16.mxu0 0
  %931 = vmatpush1.bf16.msra.mxu0 0
  %932 = vmatprep.subr.bf16.mxu0 0
  %933 = vmatpush1.bf16.msra.mxu0 0
  %934 = vmatprep.subr.bf16.mxu0 0
  %935 = vmatpush1.bf16.msra.mxu0 0
  %936 = vmatprep.subr.bf16.mxu0 0
  %937 = vmatpush1.bf16.msra.mxu0 0
  %938 = vmatprep.mubr.bf16.mxu0 0
  %939 = vmatmul.mubr.bf16.gmra.mrb[0].mxu0 %v250
  %v940 = vpop.f32.mrb[0].mxu0
  %v941 = vadd.f32 %v892, %v940
  %v942 = vpop.f32.mrb[0].mxu0
  %v943 = vpop.f32.mrb[0].mxu0
  %v944 = vadd.f32 %v895, %v943
  %v945 = vpop.f32.mrb[0].mxu0
  %946 = vmatprep.mubr.bf16.mxu0 0
  %947 = vmatmul.mubr.bf16.gmra.mrb[0].mxu0 %v259
  %v948 = vpop.f32.mrb[0].mxu0
  %v949 = vadd.f32 %v900, %v948
  %v950 = vpop.f32.mrb[0].mxu0
  %v951 = vpop.f32.mrb[0].mxu0
  %v952 = vadd.f32 %v903, %v951
  %v953 = vpop.f32.mrb[0].mxu0
  %954 = vdwg.mxu0
  %v955 = vmax.f32 %v941, 0.0
  %v956 = vmax.f32 %v944, 0.0
  %v957 = vmax.f32 %v949, 0.0
  %v958 = vmax.f32 %v952, 0.0
  %959 = vst [vmem:[%s3] sm:$0xff] %v955
  %960 = vst [vmem:[%s3 + $0x8] sm:$0xff] %v956
  %961 = vst [vmem:[%s3 + $0x10] sm:$0xff] %v957
  %962 = vst [vmem:[%s3 + $0x18] sm:$0xff] %v958
  // Predicated region
  $region14: #{fcn_small_forward.27} parent=0 // pred_check
    _
  $region15: #{fcn_small_forward.27} parent=0 // pred_check_branch
    %964 = sbr.rel (0) target = $region17
  $region16: #{fcn_small_forward.27} parent=0 // pred_region
    _
  $region17: #{fcn_small_forward.27} parent=0 // pred_fallthru
    _
  // Predicated region
  $region18: #{fcn_small_forward.27} parent=0 // pred_check
    _
  $region19: #{fcn_small_forward.27} parent=0 // pred_check_branch
    %966 = sbr.rel (0) target = $region21
  $region20: #{fcn_small_forward.27} parent=0 // pred_region
    _
  $region21: #{fcn_small_forward.27} parent=0 // pred_fallthru
    _

// kernel: fcn_small_forward.29
$region0: #{fcn_small_forward.29}
  #allocation0 [shape = 'u32[]', space=smem, size = 0x4, offset = 0x4, fixed_abs, tag = 'smem constant byte address 0x4 - core index']
  #allocation1 [shape = 'u32[144,128]{1,0:T(1,128)}', space=vmem, size = 0x12000, scoped, tag = 'internal scratch']
  %s0 = inlined_call_operand.vmem [shape: bf16[32,4], index: 0, kind: input, shape index: {}]
  %s1 = inlined_call_operand.vmem [shape: bf16[4,1024], index: 1, kind: input, shape index: {}]
  %s2 = inlined_call_operand.vmem [shape: f32[32,1024], index: 2, kind: output, shape index: {}]
  %s3 = sld [smem:[#allocation0]]
  $region18: #{fcn_small_forward.29} parent=0
    _
  %s5 = ssub.s32 1, %s3
  %s6 = scalar_select 0, %s5, %s3
  // Predicated region
  $region2: #{fcn_small_forward.29} parent=0 // pred_check
    _
  $region3: #{fcn_small_forward.29} parent=0 // pred_check_branch
    %8 = sbr.rel (0) target = $region5
  $region4: #{fcn_small_forward.29} parent=0 // pred_region
    _
  $region5: #{fcn_small_forward.29} parent=0 // pred_fallthru
    _
  // Predicated region
  $region6: #{fcn_small_forward.29} parent=0 // pred_check
    _
  $region7: #{fcn_small_forward.29} parent=0 // pred_check_branch
    %10 = sbr.rel (0) target = $region9
  $region8: #{fcn_small_forward.29} parent=0 // pred_region
    _
  $region9: #{fcn_small_forward.29} parent=0 // pred_fallthru
    _
  %v12 = vld [vmem:[%s0] sm:$0xf]
  %v13 = vld [vmem:[%s0 + $0x4] sm:$0xf]
  %v14 = vld [vmem:[%s0 + $0x8] sm:$0xf]
  %v15 = vld [vmem:[%s0 + $0xc] sm:$0xf]
  %v16 = vld [vmem:[%s1] sm:$0xff]
  %v17 = vld [vmem:[%s1 + $0x8] sm:$0xff]
  %v22 = vunpack.c.l.b16 %v12
  %v23 = vunpack.c.l.b16 %v13
  %v24 = vunpack.c.l.b16 %v14
  %v25 = vunpack.c.l.b16 %v15
  %v26 = vpack.c.b16 %v23, %v22
  %v27 = vpack.c.b16 %v25, %v24
  %v30 = vcombine.high %v16, %v16
  %v32 = vunpack.c.l.s4 1983009808
  %v33 = vunpack.c.0.s8 %v32
  %v34 = vlaneseq
  %v35 = vshrl.u32 %v34, 7
  %v36 = vsub.s32 %v33, %v35
  %v37 = vrot.slane %v16, %v36
  %v39 = vunpack.c.l.s4 1983009808
  %v40 = vunpack.c.0.s8 %v39
  %v41 = vlaneseq
  %v42 = vshrl.u32 %v41, 7
  %v43 = vsub.s32 %v40, %v42
  %v44 = vrot.slane %v30, %v43
  %v45 = vcombine.high %v37, %v37
  %v46 = vcombine.high %v44, %v44
  %v47 = vcombine.high %v17, %v17
  %v49 = vunpack.c.l.s4 1983009808
  %v50 = vunpack.c.0.s8 %v49
  %v51 = vlaneseq
  %v52 = vshrl.u32 %v51, 7
  %v53 = vsub.s32 %v50, %v52
  %v54 = vrot.slane %v17, %v53
  %v56 = vunpack.c.l.s4 1983009808
  %v57 = vunpack.c.0.s8 %v56
  %v58 = vlaneseq
  %v59 = vshrl.u32 %v58, 7
  %v60 = vsub.s32 %v57, %v59
  %v61 = vrot.slane %v47, %v60
  %v62 = vcombine.high %v54, %v54
  %v63 = vcombine.high %v61, %v61
  %vm64 = vcmask 31744
  %v66 = vsel %vm64, %v26, 0
  %v69 = vsel %vm64, %v27, 0
  %vm71 = vcmask 1041408
  %v73 = vsel %vm71, %v37, 0
  %v76 = vsel %vm71, %v45, 0
  %v79 = vsel %vm71, %v44, 0
  %v82 = vsel %vm71, %v46, 0
  %v85 = vsel %vm71, %v54, 0
  %v88 = vsel %vm71, %v62, 0
  %v91 = vsel %vm71, %v61, 0
  %v94 = vsel %vm71, %v63, 0
  %96 = vmatprep.subr.bf16.mxu0 %v76
  %97 = vmatpush1.bf16.msra.mxu0 %v73
  %98 = vmatprep.subr.bf16.mxu0 0
  %99 = vmatpush1.bf16.msra.mxu0 0
  %100 = vmatprep.subr.bf16.mxu0 0
  %101 = vmatpush1.bf16.msra.mxu0 0
  %102 = vmatprep.subr.bf16.mxu0 0
  %103 = vmatpush1.bf16.msra.mxu0 0
  %104 = vmatprep.subr.bf16.mxu0 0
  %105 = vmatpush1.bf16.msra.mxu0 0
  %106 = vmatprep.subr.bf16.mxu0 0
  %107 = vmatpush1.bf16.msra.mxu0 0
  %108 = vmatprep.subr.bf16.mxu0 0
  %109 = vmatpush1.bf16.msra.mxu0 0
  %110 = vmatprep.subr.bf16.mxu0 0
  %111 = vmatpush1.bf16.msra.mxu0 0
  %112 = vmatprep.subr.bf16.mxu0 0
  %113 = vmatpush1.bf16.msra.mxu0 0
  %114 = vmatprep.subr.bf16.mxu0 0
  %115 = vmatpush1.bf16.msra.mxu0 0
  %116 = vmatprep.subr.bf16.mxu0 0
  %117 = vmatpush1.bf16.msra.mxu0 0
  %118 = vmatprep.subr.bf16.mxu0 0
  %119 = vmatpush1.bf16.msra.mxu0 0
  %120 = vmatprep.subr.bf16.mxu0 0
  %121 = vmatpush1.bf16.msra.mxu0 0
  %122 = vmatprep.subr.bf16.mxu0 0
  %123 = vmatpush1.bf16.msra.mxu0 0
  %124 = vmatprep.subr.bf16.mxu0 0
  %125 = vmatpush1.bf16.msra.mxu0 0
  %126 = vmatprep.subr.bf16.mxu0 0
  %127 = vmatpush1.bf16.msra.mxu0 0
  %128 = vmatprep.mubr.bf16.mxu0 0
  %129 = vmatmul.mubr.bf16.gmra.mrb[0].mxu0 %v66
  %v130 = vpop.f32.mrb[0].mxu0
  %v131 = vadd.f32 0.0, %v130
  %v132 = vpop.f32.mrb[0].mxu0
  %v133 = vadd.f32 0.0, %v132
  %v134 = vpop.f32.mrb[0].mxu0
  %v135 = vadd.f32 0.0, %v134
  %v136 = vpop.f32.mrb[0].mxu0
  %v137 = vadd.f32 0.0, %v136
  %138 = vmatprep.mubr.bf16.mxu0 0
  %139 = vmatmul.mubr.bf16.gmra.mrb[0].mxu0 %v69
  %v140 = vpop.f32.mrb[0].mxu0
  %v141 = vadd.f32 0.0, %v140
  %v142 = vpop.f32.mrb[0].mxu0
  %v143 = vadd.f32 0.0, %v142
  %v144 = vpop.f32.mrb[0].mxu0
  %v145 = vadd.f32 0.0, %v144
  %v146 = vpop.f32.mrb[0].mxu0
  %v147 = vadd.f32 0.0, %v146
  %148 = vdwg.mxu0
  %149 = vmatprep.subr.bf16.mxu0 %v82
  %150 = vmatpush1.bf16.msra.mxu0 %v79
  %151 = vmatprep.subr.bf16.mxu0 0
  %152 = vmatpush1.bf16.msra.mxu0 0
  %153 = vmatprep.subr.bf16.mxu0 0
  %154 = vmatpush1.bf16.msra.mxu0 0
  %155 = vmatprep.subr.bf16.mxu0 0
  %156 = vmatpush1.bf16.msra.mxu0 0
  %157 = vmatprep.subr.bf16.mxu0 0
  %158 = vmatpush1.bf16.msra.mxu0 0
  %159 = vmatprep.subr.bf16.mxu0 0
  %160 = vmatpush1.bf16.msra.mxu0 0
  %161 = vmatprep.subr.bf16.mxu0 0
  %162 = vmatpush1.bf16.msra.mxu0 0
  %163 = vmatprep.subr.bf16.mxu0 0
  %164 = vmatpush1.bf16.msra.mxu0 0
  %165 = vmatprep.subr.bf16.mxu0 0
  %166 = vmatpush1.bf16.msra.mxu0 0
  %167 = vmatprep.subr.bf16.mxu0 0
  %168 = vmatpush1.bf16.msra.mxu0 0
  %169 = vmatprep.subr.bf16.mxu0 0
  %170 = vmatpush1.bf16.msra.mxu0 0
  %171 = vmatprep.subr.bf16.mxu0 0
  %172 = vmatpush1.bf16.msra.mxu0 0
  %173 = vmatprep.subr.bf16.mxu0 0
  %174 = vmatpush1.bf16.msra.mxu0 0
  %175 = vmatprep.subr.bf16.mxu0 0
  %176 = vmatpush1.bf16.msra.mxu0 0
  %177 = vmatprep.subr.bf16.mxu0 0
  %178 = vmatpush1.bf16.msra.mxu0 0
  %179 = vmatprep.subr.bf16.mxu0 0
  %180 = vmatpush1.bf16.msra.mxu0 0
  %181 = vmatprep.mubr.bf16.mxu0 0
  %182 = vmatmul.mubr.bf16.gmra.mrb[0].mxu0 %v66
  %v183 = vpop.f32.mrb[0].mxu0
  %v184 = vadd.f32 0.0, %v183
  %v185 = vpop.f32.mrb[0].mxu0
  %v186 = vadd.f32 0.0, %v185
  %v187 = vpop.f32.mrb[0].mxu0
  %v188 = vadd.f32 0.0, %v187
  %v189 = vpop.f32.mrb[0].mxu0
  %v190 = vadd.f32 0.0, %v189
  %191 = vmatprep.mubr.bf16.mxu0 0
  %192 = vmatmul.mubr.bf16.gmra.mrb[0].mxu0 %v69
  %v193 = vpop.f32.mrb[0].mxu0
  %v194 = vadd.f32 0.0, %v193
  %v195 = vpop.f32.mrb[0].mxu0
  %v196 = vadd.f32 0.0, %v195
  %v197 = vpop.f32.mrb[0].mxu0
  %v198 = vadd.f32 0.0, %v197
  %v199 = vpop.f32.mrb[0].mxu0
  %v200 = vadd.f32 0.0, %v199
  %201 = vdwg.mxu0
  %202 = vmatprep.subr.bf16.mxu0 %v88
  %203 = vmatpush1.bf16.msra.mxu0 %v85
  %204 = vmatprep.subr.bf16.mxu0 0
  %205 = vmatpush1.bf16.msra.mxu0 0
  %206 = vmatprep.subr.bf16.mxu0 0
  %207 = vmatpush1.bf16.msra.mxu0 0
  %208 = vmatprep.subr.bf16.mxu0 0
  %209 = vmatpush1.bf16.msra.mxu0 0
  %210 = vmatprep.subr.bf16.mxu0 0
  %211 = vmatpush1.bf16.msra.mxu0 0
  %212 = vmatprep.subr.bf16.mxu0 0
  %213 = vmatpush1.bf16.msra.mxu0 0
  %214 = vmatprep.subr.bf16.mxu0 0
  %215 = vmatpush1.bf16.msra.mxu0 0
  %216 = vmatprep.subr.bf16.mxu0 0
  %217 = vmatpush1.bf16.msra.mxu0 0
  %218 = vmatprep.subr.bf16.mxu0 0
  %219 = vmatpush1.bf16.msra.mxu0 0
  %220 = vmatprep.subr.bf16.mxu0 0
  %221 = vmatpush1.bf16.msra.mxu0 0
  %222 = vmatprep.subr.bf16.mxu0 0
  %223 = vmatpush1.bf16.msra.mxu0 0
  %224 = vmatprep.subr.bf16.mxu0 0
  %225 = vmatpush1.bf16.msra.mxu0 0
  %226 = vmatprep.subr.bf16.mxu0 0
  %227 = vmatpush1.bf16.msra.mxu0 0
  %228 = vmatprep.subr.bf16.mxu0 0
  %229 = vmatpush1.bf16.msra.mxu0 0
  %230 = vmatprep.subr.bf16.mxu0 0
  %231 = vmatpush1.bf16.msra.mxu0 0
  %232 = vmatprep.subr.bf16.mxu0 0
  %233 = vmatpush1.bf16.msra.mxu0 0
  %234 = vmatprep.mubr.bf16.mxu0 0
  %235 = vmatmul.mubr.bf16.gmra.mrb[0].mxu0 %v66
  %v236 = vpop.f32.mrb[0].mxu0
  %v237 = vadd.f32 0.0, %v236
  %v238 = vpop.f32.mrb[0].mxu0
  %v239 = vadd.f32 0.0, %v238
  %v240 = vpop.f32.mrb[0].mxu0
  %v241 = vadd.f32 0.0, %v240
  %v242 = vpop.f32.mrb[0].mxu0
  %v243 = vadd.f32 0.0, %v242
  %244 = vmatprep.mubr.bf16.mxu0 0
  %245 = vmatmul.mubr.bf16.gmra.mrb[0].mxu0 %v69
  %v246 = vpop.f32.mrb[0].mxu0
  %v247 = vadd.f32 0.0, %v246
  %v248 = vpop.f32.mrb[0].mxu0
  %v249 = vadd.f32 0.0, %v248
  %v250 = vpop.f32.mrb[0].mxu0
  %v251 = vadd.f32 0.0, %v250
  %v252 = vpop.f32.mrb[0].mxu0
  %v253 = vadd.f32 0.0, %v252
  %254 = vdwg.mxu0
  %255 = vmatprep.subr.bf16.mxu0 %v94
  %256 = vmatpush1.bf16.msra.mxu0 %v91
  %257 = vmatprep.subr.bf16.mxu0 0
  %258 = vmatpush1.bf16.msra.mxu0 0
  %259 = vmatprep.subr.bf16.mxu0 0
  %260 = vmatpush1.bf16.msra.mxu0 0
  %261 = vmatprep.subr.bf16.mxu0 0
  %262 = vmatpush1.bf16.msra.mxu0 0
  %263 = vmatprep.subr.bf16.mxu0 0
  %264 = vmatpush1.bf16.msra.mxu0 0
  %265 = vmatprep.subr.bf16.mxu0 0
  %266 = vmatpush1.bf16.msra.mxu0 0
  %267 = vmatprep.subr.bf16.mxu0 0
  %268 = vmatpush1.bf16.msra.mxu0 0
  %269 = vmatprep.subr.bf16.mxu0 0
  %270 = vmatpush1.bf16.msra.mxu0 0
  %271 = vmatprep.subr.bf16.mxu0 0
  %272 = vmatpush1.bf16.msra.mxu0 0
  %273 = vmatprep.subr.bf16.mxu0 0
  %274 = vmatpush1.bf16.msra.mxu0 0
  %275 = vmatprep.subr.bf16.mxu0 0
  %276 = vmatpush1.bf16.msra.mxu0 0
  %277 = vmatprep.subr.bf16.mxu0 0
  %278 = vmatpush1.bf16.msra.mxu0 0
  %279 = vmatprep.subr.bf16.mxu0 0
  %280 = vmatpush1.bf16.msra.mxu0 0
  %281 = vmatprep.subr.bf16.mxu0 0
  %282 = vmatpush1.bf16.msra.mxu0 0
  %283 = vmatprep.subr.bf16.mxu0 0
  %284 = vmatpush1.bf16.msra.mxu0 0
  %285 = vmatprep.subr.bf16.mxu0 0
  %286 = vmatpush1.bf16.msra.mxu0 0
  %287 = vmatprep.mubr.bf16.mxu0 0
  %288 = vmatmul.mubr.bf16.gmra.mrb[0].mxu0 %v66
  %v289 = vpop.f32.mrb[0].mxu0
  %v290 = vadd.f32 0.0, %v289
  %v291 = vpop.f32.mrb[0].mxu0
  %v292 = vadd.f32 0.0, %v291
  %v293 = vpop.f32.mrb[0].mxu0
  %v294 = vadd.f32 0.0, %v293
  %v295 = vpop.f32.mrb[0].mxu0
  %v296 = vadd.f32 0.0, %v295
  %297 = vmatprep.mubr.bf16.mxu0 0
  %298 = vmatmul.mubr.bf16.gmra.mrb[0].mxu0 %v69
  %v299 = vpop.f32.mrb[0].mxu0
  %v300 = vadd.f32 0.0, %v299
  %v301 = vpop.f32.mrb[0].mxu0
  %v302 = vadd.f32 0.0, %v301
  %v303 = vpop.f32.mrb[0].mxu0
  %v304 = vadd.f32 0.0, %v303
  %v305 = vpop.f32.mrb[0].mxu0
  %v306 = vadd.f32 0.0, %v305
  %307 = vdwg.mxu0
  %308 = vst [vmem:[%s2] sm:$0xff] %v131
  %309 = vst [vmem:[%s2 + $0x8] sm:$0xff] %v133
  %310 = vst [vmem:[%s2 + $0x10] sm:$0xff] %v184
  %311 = vst [vmem:[%s2 + $0x18] sm:$0xff] %v186
  %312 = vst [vmem:[%s2 + $0x20] sm:$0xff] %v237
  %313 = vst [vmem:[%s2 + $0x28] sm:$0xff] %v239
  %314 = vst [vmem:[%s2 + $0x30] sm:$0xff] %v290
  %315 = vst [vmem:[%s2 + $0x38] sm:$0xff] %v292
  %316 = vst [vmem:[%s2 + $0x40] sm:$0xff] %v135
  %317 = vst [vmem:[%s2 + $0x48] sm:$0xff] %v137
  %318 = vst [vmem:[%s2 + $0x50] sm:$0xff] %v188
  %319 = vst [vmem:[%s2 + $0x58] sm:$0xff] %v190
  %320 = vst [vmem:[%s2 + $0x60] sm:$0xff] %v241
  %321 = vst [vmem:[%s2 + $0x68] sm:$0xff] %v243
  %322 = vst [vmem:[%s2 + $0x70] sm:$0xff] %v294
  %323 = vst [vmem:[%s2 + $0x78] sm:$0xff] %v296
  %324 = vst [vmem:[%s2 + $0x80] sm:$0xff] %v141
  %325 = vst [vmem:[%s2 + $0x88] sm:$0xff] %v143
  %326 = vst [vmem:[%s2 + $0x90] sm:$0xff] %v194
  %327 = vst [vmem:[%s2 + $0x98] sm:$0xff] %v196
  %328 = vst [vmem:[%s2 + $0xa0] sm:$0xff] %v247
  %329 = vst [vmem:[%s2 + $0xa8] sm:$0xff] %v249
  %330 = vst [vmem:[%s2 + $0xb0] sm:$0xff] %v300
  %331 = vst [vmem:[%s2 + $0xb8] sm:$0xff] %v302
  %332 = vst [vmem:[%s2 + $0xc0] sm:$0xff] %v145
  %333 = vst [vmem:[%s2 + $0xc8] sm:$0xff] %v147
  %334 = vst [vmem:[%s2 + $0xd0] sm:$0xff] %v198
  %335 = vst [vmem:[%s2 + $0xd8] sm:$0xff] %v200
  %336 = vst [vmem:[%s2 + $0xe0] sm:$0xff] %v251
  %337 = vst [vmem:[%s2 + $0xe8] sm:$0xff] %v253
  %338 = vst [vmem:[%s2 + $0xf0] sm:$0xff] %v304
  %339 = vst [vmem:[%s2 + $0xf8] sm:$0xff] %v306
  // Predicated region
  $region10: #{fcn_small_forward.29} parent=0 // pred_check
    _
  $region11: #{fcn_small_forward.29} parent=0 // pred_check_branch
    %341 = sbr.rel (0) target = $region13
  $region12: #{fcn_small_forward.29} parent=0 // pred_region
    _
  $region13: #{fcn_small_forward.29} parent=0 // pred_fallthru
    _
  // Predicated region
  $region14: #{fcn_small_forward.29} parent=0 // pred_check
    _
  $region15: #{fcn_small_forward.29} parent=0 // pred_check_branch
    %343 = sbr.rel (0) target = $region17
  $region16: #{fcn_small_forward.29} parent=0 // pred_region
    _
  $region17: #{fcn_small_forward.29} parent=0 // pred_fallthru
    _

// kernel: fcn_small_forward.30
$region0: #{fcn_small_forward.30}
  #allocation0 [shape = 'u32[]', space=smem, size = 0x4, offset = 0x4, fixed_abs, tag = 'smem constant byte address 0x4 - core index']
  #allocation1 [shape = 'u32[144,128]{1,0:T(1,128)}', space=vmem, size = 0x12000, scoped, tag = 'internal scratch']
  %s0 = inlined_call_operand.vmem [shape: bf16[32,4], index: 0, kind: input, shape index: {}]
  %s1 = inlined_call_operand.vmem [shape: bf16[4,8192], index: 1, kind: input, shape index: {}]
  %s2 = inlined_call_operand.vmem [shape: f32[32,8192], index: 2, kind: output, shape index: {}]
  %s3 = sld [smem:[#allocation0]]
  $region18: #{fcn_small_forward.30} parent=0
    _
  %s5 = ssub.s32 1, %s3
  %s6 = scalar_select 0, %s5, %s3
  // Predicated region
  $region2: #{fcn_small_forward.30} parent=0 // pred_check
    _
  $region3: #{fcn_small_forward.30} parent=0 // pred_check_branch
    %8 = sbr.rel (0) target = $region5
  $region4: #{fcn_small_forward.30} parent=0 // pred_region
    _
  $region5: #{fcn_small_forward.30} parent=0 // pred_fallthru
    _
  // Predicated region
  $region6: #{fcn_small_forward.30} parent=0 // pred_check
    _
  $region7: #{fcn_small_forward.30} parent=0 // pred_check_branch
    %10 = sbr.rel (0) target = $region9
  $region8: #{fcn_small_forward.30} parent=0 // pred_region
    _
  $region9: #{fcn_small_forward.30} parent=0 // pred_fallthru
    _
  %v12 = vld [vmem:[%s0] sm:$0xf]
  %v13 = vld [vmem:[%s0 + $0x4] sm:$0xf]
  %v14 = vld [vmem:[%s0 + $0x8] sm:$0xf]
  %v15 = vld [vmem:[%s0 + $0xc] sm:$0xf]
  %v16 = vld [vmem:[%s1] sm:$0xff]
  %v17 = vld [vmem:[%s1 + $0x8] sm:$0xff]
  %v18 = vld [vmem:[%s1 + $0x10] sm:$0xff]
  %v19 = vld [vmem:[%s1 + $0x18] sm:$0xff]
  %v20 = vld [vmem:[%s1 + $0x20] sm:$0xff]
  %v21 = vld [vmem:[%s1 + $0x28] sm:$0xff]
  %v22 = vld [vmem:[%s1 + $0x30] sm:$0xff]
  %v23 = vld [vmem:[%s1 + $0x38] sm:$0xff]
  %v24 = vld [vmem:[%s1 + $0x40] sm:$0xff]
  %v25 = vld [vmem:[%s1 + $0x48] sm:$0xff]
  %v26 = vld [vmem:[%s1 + $0x50] sm:$0xff]
  %v27 = vld [vmem:[%s1 + $0x58] sm:$0xff]
  %v28 = vld [vmem:[%s1 + $0x60] sm:$0xff]
  %v29 = vld [vmem:[%s1 + $0x68] sm:$0xff]
  %v30 = vld [vmem:[%s1 + $0x70] sm:$0xff]
  %v31 = vld [vmem:[%s1 + $0x78] sm:$0xff]
  %v36 = vunpack.c.l.b16 %v12
  %v37 = vunpack.c.l.b16 %v13
  %v38 = vunpack.c.l.b16 %v14
  %v39 = vunpack.c.l.b16 %v15
  %v40 = vpack.c.b16 %v37, %v36
  %v41 = vpack.c.b16 %v39, %v38
  %v58 = vcombine.high %v16, %v16
  %v60 = vunpack.c.l.s4 1983009808
  %v61 = vunpack.c.0.s8 %v60
  %v62 = vlaneseq
  %v63 = vshrl.u32 %v62, 7
  %v64 = vsub.s32 %v61, %v63
  %v65 = vrot.slane %v16, %v64
  %v67 = vunpack.c.l.s4 1983009808
  %v68 = vunpack.c.0.s8 %v67
  %v69 = vlaneseq
  %v70 = vshrl.u32 %v69, 7
  %v71 = vsub.s32 %v68, %v70
  %v72 = vrot.slane %v58, %v71
  %v73 = vcombine.high %v65, %v65
  %v74 = vcombine.high %v72, %v72
  %v75 = vcombine.high %v17, %v17
  %v77 = vunpack.c.l.s4 1983009808
  %v78 = vunpack.c.0.s8 %v77
  %v79 = vlaneseq
  %v80 = vshrl.u32 %v79, 7
  %v81 = vsub.s32 %v78, %v80
  %v82 = vrot.slane %v17, %v81
  %v84 = vunpack.c.l.s4 1983009808
  %v85 = vunpack.c.0.s8 %v84
  %v86 = vlaneseq
  %v87 = vshrl.u32 %v86, 7
  %v88 = vsub.s32 %v85, %v87
  %v89 = vrot.slane %v75, %v88
  %v90 = vcombine.high %v82, %v82
  %v91 = vcombine.high %v89, %v89
  %v92 = vcombine.high %v18, %v18
  %v94 = vunpack.c.l.s4 1983009808
  %v95 = vunpack.c.0.s8 %v94
  %v96 = vlaneseq
  %v97 = vshrl.u32 %v96, 7
  %v98 = vsub.s32 %v95, %v97
  %v99 = vrot.slane %v18, %v98
  %v101 = vunpack.c.l.s4 1983009808
  %v102 = vunpack.c.0.s8 %v101
  %v103 = vlaneseq
  %v104 = vshrl.u32 %v103, 7
  %v105 = vsub.s32 %v102, %v104
  %v106 = vrot.slane %v92, %v105
  %v107 = vcombine.high %v99, %v99
  %v108 = vcombine.high %v106, %v106
  %v109 = vcombine.high %v19, %v19
  %v111 = vunpack.c.l.s4 1983009808
  %v112 = vunpack.c.0.s8 %v111
  %v113 = vlaneseq
  %v114 = vshrl.u32 %v113, 7
  %v115 = vsub.s32 %v112, %v114
  %v116 = vrot.slane %v19, %v115
  %v118 = vunpack.c.l.s4 1983009808
  %v119 = vunpack.c.0.s8 %v118
  %v120 = vlaneseq
  %v121 = vshrl.u32 %v120, 7
  %v122 = vsub.s32 %v119, %v121
  %v123 = vrot.slane %v109, %v122
  %v124 = vcombine.high %v116, %v116
  %v125 = vcombine.high %v123, %v123
  %v126 = vcombine.high %v20, %v20
  %v128 = vunpack.c.l.s4 1983009808
  %v129 = vunpack.c.0.s8 %v128
  %v130 = vlaneseq
  %v131 = vshrl.u32 %v130, 7
  %v132 = vsub.s32 %v129, %v131
  %v133 = vrot.slane %v20, %v132
  %v135 = vunpack.c.l.s4 1983009808
  %v136 = vunpack.c.0.s8 %v135
  %v137 = vlaneseq
  %v138 = vshrl.u32 %v137, 7
  %v139 = vsub.s32 %v136, %v138
  %v140 = vrot.slane %v126, %v139
  %v141 = vcombine.high %v133, %v133
  %v142 = vcombine.high %v140, %v140
  %v143 = vcombine.high %v21, %v21
  %v145 = vunpack.c.l.s4 1983009808
  %v146 = vunpack.c.0.s8 %v145
  %v147 = vlaneseq
  %v148 = vshrl.u32 %v147, 7
  %v149 = vsub.s32 %v146, %v148
  %v150 = vrot.slane %v21, %v149
  %v152 = vunpack.c.l.s4 1983009808
  %v153 = vunpack.c.0.s8 %v152
  %v154 = vlaneseq
  %v155 = vshrl.u32 %v154, 7
  %v156 = vsub.s32 %v153, %v155
  %v157 = vrot.slane %v143, %v156
  %v158 = vcombine.high %v150, %v150
  %v159 = vcombine.high %v157, %v157
  %v160 = vcombine.high %v22, %v22
  %v162 = vunpack.c.l.s4 1983009808
  %v163 = vunpack.c.0.s8 %v162
  %v164 = vlaneseq
  %v165 = vshrl.u32 %v164, 7
  %v166 = vsub.s32 %v163, %v165
  %v167 = vrot.slane %v22, %v166
  %v169 = vunpack.c.l.s4 1983009808
  %v170 = vunpack.c.0.s8 %v169
  %v171 = vlaneseq
  %v172 = vshrl.u32 %v171, 7
  %v173 = vsub.s32 %v170, %v172
  %v174 = vrot.slane %v160, %v173
  %v175 = vcombine.high %v167, %v167
  %v176 = vcombine.high %v174, %v174
  %v177 = vcombine.high %v23, %v23
  %v179 = vunpack.c.l.s4 1983009808
  %v180 = vunpack.c.0.s8 %v179
  %v181 = vlaneseq
  %v182 = vshrl.u32 %v181, 7
  %v183 = vsub.s32 %v180, %v182
  %v184 = vrot.slane %v23, %v183
  %v186 = vunpack.c.l.s4 1983009808
  %v187 = vunpack.c.0.s8 %v186
  %v188 = vlaneseq
  %v189 = vshrl.u32 %v188, 7
  %v190 = vsub.s32 %v187, %v189
  %v191 = vrot.slane %v177, %v190
  %v192 = vcombine.high %v184, %v184
  %v193 = vcombine.high %v191, %v191
  %v194 = vcombine.high %v24, %v24
  %v196 = vunpack.c.l.s4 1983009808
  %v197 = vunpack.c.0.s8 %v196
  %v198 = vlaneseq
  %v199 = vshrl.u32 %v198, 7
  %v200 = vsub.s32 %v197, %v199
  %v201 = vrot.slane %v24, %v200
  %v203 = vunpack.c.l.s4 1983009808
  %v204 = vunpack.c.0.s8 %v203
  %v205 = vlaneseq
  %v206 = vshrl.u32 %v205, 7
  %v207 = vsub.s32 %v204, %v206
  %v208 = vrot.slane %v194, %v207
  %v209 = vcombine.high %v201, %v201
  %v210 = vcombine.high %v208, %v208
  %v211 = vcombine.high %v25, %v25
  %v213 = vunpack.c.l.s4 1983009808
  %v214 = vunpack.c.0.s8 %v213
  %v215 = vlaneseq
  %v216 = vshrl.u32 %v215, 7
  %v217 = vsub.s32 %v214, %v216
  %v218 = vrot.slane %v25, %v217
  %v220 = vunpack.c.l.s4 1983009808
  %v221 = vunpack.c.0.s8 %v220
  %v222 = vlaneseq
  %v223 = vshrl.u32 %v222, 7
  %v224 = vsub.s32 %v221, %v223
  %v225 = vrot.slane %v211, %v224
  %v226 = vcombine.high %v218, %v218
  %v227 = vcombine.high %v225, %v225
  %v228 = vcombine.high %v26, %v26
  %v230 = vunpack.c.l.s4 1983009808
  %v231 = vunpack.c.0.s8 %v230
  %v232 = vlaneseq
  %v233 = vshrl.u32 %v232, 7
  %v234 = vsub.s32 %v231, %v233
  %v235 = vrot.slane %v26, %v234
  %v237 = vunpack.c.l.s4 1983009808
  %v238 = vunpack.c.0.s8 %v237
  %v239 = vlaneseq
  %v240 = vshrl.u32 %v239, 7
  %v241 = vsub.s32 %v238, %v240
  %v242 = vrot.slane %v228, %v241
  %v243 = vcombine.high %v235, %v235
  %v244 = vcombine.high %v242, %v242
  %v245 = vcombine.high %v27, %v27
  %v247 = vunpack.c.l.s4 1983009808
  %v248 = vunpack.c.0.s8 %v247
  %v249 = vlaneseq
  %v250 = vshrl.u32 %v249, 7
  %v251 = vsub.s32 %v248, %v250
  %v252 = vrot.slane %v27, %v251
  %v254 = vunpack.c.l.s4 1983009808
  %v255 = vunpack.c.0.s8 %v254
  %v256 = vlaneseq
  %v257 = vshrl.u32 %v256, 7
  %v258 = vsub.s32 %v255, %v257
  %v259 = vrot.slane %v245, %v258
  %v260 = vcombine.high %v252, %v252
  %v261 = vcombine.high %v259, %v259
  %v262 = vcombine.high %v28, %v28
  %v264 = vunpack.c.l.s4 1983009808
  %v265 = vunpack.c.0.s8 %v264
  %v266 = vlaneseq
  %v267 = vshrl.u32 %v266, 7
  %v268 = vsub.s32 %v265, %v267
  %v269 = vrot.slane %v28, %v268
  %v271 = vunpack.c.l.s4 1983009808
  %v272 = vunpack.c.0.s8 %v271
  %v273 = vlaneseq
  %v274 = vshrl.u32 %v273, 7
  %v275 = vsub.s32 %v272, %v274
  %v276 = vrot.slane %v262, %v275
  %v277 = vcombine.high %v269, %v269
  %v278 = vcombine.high %v276, %v276
  %v279 = vcombine.high %v29, %v29
  %v281 = vunpack.c.l.s4 1983009808
  %v282 = vunpack.c.0.s8 %v281
  %v283 = vlaneseq
  %v284 = vshrl.u32 %v283, 7
  %v285 = vsub.s32 %v282, %v284
  %v286 = vrot.slane %v29, %v285
  %v288 = vunpack.c.l.s4 1983009808
  %v289 = vunpack.c.0.s8 %v288
  %v290 = vlaneseq
  %v291 = vshrl.u32 %v290, 7
  %v292 = vsub.s32 %v289, %v291
  %v293 = vrot.slane %v279, %v292
  %v294 = vcombine.high %v286, %v286
  %v295 = vcombine.high %v293, %v293
  %v296 = vcombine.high %v30, %v30
  %v298 = vunpack.c.l.s4 1983009808
  %v299 = vunpack.c.0.s8 %v298
  %v300 = vlaneseq
  %v301 = vshrl.u32 %v300, 7
  %v302 = vsub.s32 %v299, %v301
  %v303 = vrot.slane %v30, %v302
  %v305 = vunpack.c.l.s4 1983009808
  %v306 = vunpack.c.0.s8 %v305
  %v307 = vlaneseq
  %v308 = vshrl.u32 %v307, 7
  %v309 = vsub.s32 %v306, %v308
  %v310 = vrot.slane %v296, %v309
  %v311 = vcombine.high %v303, %v303
  %v312 = vcombine.high %v310, %v310
  %v313 = vcombine.high %v31, %v31
  %v315 = vunpack.c.l.s4 1983009808
  %v316 = vunpack.c.0.s8 %v315
  %v317 = vlaneseq
  %v318 = vshrl.u32 %v317, 7
  %v319 = vsub.s32 %v316, %v318
  %v320 = vrot.slane %v31, %v319
  %v322 = vunpack.c.l.s4 1983009808
  %v323 = vunpack.c.0.s8 %v322
  %v324 = vlaneseq
  %v325 = vshrl.u32 %v324, 7
  %v326 = vsub.s32 %v323, %v325
  %v327 = vrot.slane %v313, %v326
  %v328 = vcombine.high %v320, %v320
  %v329 = vcombine.high %v327, %v327
  %vm330 = vcmask 31744
  %v332 = vsel %vm330, %v40, 0
  %v335 = vsel %vm330, %v41, 0
  %vm337 = vcmask 1041408
  %v339 = vsel %vm337, %v65, 0
  %v342 = vsel %vm337, %v73, 0
  %v345 = vsel %vm337, %v72, 0
  %v348 = vsel %vm337, %v74, 0
  %v351 = vsel %vm337, %v82, 0
  %v354 = vsel %vm337, %v90, 0
  %v357 = vsel %vm337, %v89, 0
  %v360 = vsel %vm337, %v91, 0
  %v363 = vsel %vm337, %v99, 0
  %v366 = vsel %vm337, %v107, 0
  %v369 = vsel %vm337, %v106, 0
  %v372 = vsel %vm337, %v108, 0
  %v375 = vsel %vm337, %v116, 0
  %v378 = vsel %vm337, %v124, 0
  %v381 = vsel %vm337, %v123, 0
  %v384 = vsel %vm337, %v125, 0
  %v387 = vsel %vm337, %v133, 0
  %v390 = vsel %vm337, %v141, 0
  %v393 = vsel %vm337, %v140, 0
  %v396 = vsel %vm337, %v142, 0
  %v399 = vsel %vm337, %v150, 0
  %v402 = vsel %vm337, %v158, 0
  %v405 = vsel %vm337, %v157, 0
  %v408 = vsel %vm337, %v159, 0
  %v411 = vsel %vm337, %v167, 0
  %v414 = vsel %vm337, %v175, 0
  %v417 = vsel %vm337, %v174, 0
  %v420 = vsel %vm337, %v176, 0
  %v423 = vsel %vm337, %v184, 0
  %v426 = vsel %vm337, %v192, 0
  %v429 = vsel %vm337, %v191, 0
  %v432 = vsel %vm337, %v193, 0
  %v435 = vsel %vm337, %v201, 0
  %v438 = vsel %vm337, %v209, 0
  %v441 = vsel %vm337, %v208, 0
  %v444 = vsel %vm337, %v210, 0
  %v447 = vsel %vm337, %v218, 0
  %v450 = vsel %vm337, %v226, 0
  %v453 = vsel %vm337, %v225, 0
  %v456 = vsel %vm337, %v227, 0
  %v459 = vsel %vm337, %v235, 0
  %v462 = vsel %vm337, %v243, 0
  %v465 = vsel %vm337, %v242, 0
  %v468 = vsel %vm337, %v244, 0
  %v471 = vsel %vm337, %v252, 0
  %v474 = vsel %vm337, %v260, 0
  %v477 = vsel %vm337, %v259, 0
  %v480 = vsel %vm337, %v261, 0
  %v483 = vsel %vm337, %v269, 0
  %v486 = vsel %vm337, %v277, 0
  %v489 = vsel %vm337, %v276, 0
  %v492 = vsel %vm337, %v278, 0
  %v495 = vsel %vm337, %v286, 0
  %v498 = vsel %vm337, %v294, 0
  %v501 = vsel %vm337, %v293, 0
  %v504 = vsel %vm337, %v295, 0
  %v507 = vsel %vm337, %v303, 0
  %v510 = vsel %vm337, %v311, 0
  %v513 = vsel %vm337, %v310, 0
  %v516 = vsel %vm337, %v312, 0
  %v519 = vsel %vm337, %v320, 0
  %v522 = vsel %vm337, %v328, 0
  %v525 = vsel %vm337, %v327, 0
  %v528 = vsel %vm337, %v329, 0
  %530 = vmatprep.subr.bf16.mxu0 %v342
  %531 = vmatpush1.bf16.msra.mxu0 %v339
  %532 = vmatprep.subr.bf16.mxu0 0
  %533 = vmatpush1.bf16.msra.mxu0 0
  %534 = vmatprep.subr.bf16.mxu0 0
  %535 = vmatpush1.bf16.msra.mxu0 0
  %536 = vmatprep.subr.bf16.mxu0 0
  %537 = vmatpush1.bf16.msra.mxu0 0
  %538 = vmatprep.subr.bf16.mxu0 0
  %539 = vmatpush1.bf16.msra.mxu0 0
  %540 = vmatprep.subr.bf16.mxu0 0
  %541 = vmatpush1.bf16.msra.mxu0 0
  %542 = vmatprep.subr.bf16.mxu0 0
  %543 = vmatpush1.bf16.msra.mxu0 0
  %544 = vmatprep.subr.bf16.mxu0 0
  %545 = vmatpush1.bf16.msra.mxu0 0
  %546 = vmatprep.subr.bf16.mxu0 0
  %547 = vmatpush1.bf16.msra.mxu0 0
  %548 = vmatprep.subr.bf16.mxu0 0
  %549 = vmatpush1.bf16.msra.mxu0 0
  %550 = vmatprep.subr.bf16.mxu0 0
  %551 = vmatpush1.bf16.msra.mxu0 0
  %552 = vmatprep.subr.bf16.mxu0 0
  %553 = vmatpush1.bf16.msra.mxu0 0
  %554 = vmatprep.subr.bf16.mxu0 0
  %555 = vmatpush1.bf16.msra.mxu0 0
  %556 = vmatprep.subr.bf16.mxu0 0
  %557 = vmatpush1.bf16.msra.mxu0 0
  %558 = vmatprep.subr.bf16.mxu0 0
  %559 = vmatpush1.bf16.msra.mxu0 0
  %560 = vmatprep.subr.bf16.mxu0 0
  %561 = vmatpush1.bf16.msra.mxu0 0
  %562 = vmatprep.mubr.bf16.mxu0 0
  %563 = vmatmul.mubr.bf16.gmra.mrb[0].mxu0 %v332
  %v564 = vpop.f32.mrb[0].mxu0
  %v565 = vadd.f32 0.0, %v564
  %v566 = vpop.f32.mrb[0].mxu0
  %v567 = vadd.f32 0.0, %v566
  %v568 = vpop.f32.mrb[0].mxu0
  %v569 = vadd.f32 0.0, %v568
  %v570 = vpop.f32.mrb[0].mxu0
  %v571 = vadd.f32 0.0, %v570
  %572 = vmatprep.mubr.bf16.mxu0 0
  %573 = vmatmul.mubr.bf16.gmra.mrb[0].mxu0 %v335
  %v574 = vpop.f32.mrb[0].mxu0
  %v575 = vadd.f32 0.0, %v574
  %v576 = vpop.f32.mrb[0].mxu0
  %v577 = vadd.f32 0.0, %v576
  %v578 = vpop.f32.mrb[0].mxu0
  %v579 = vadd.f32 0.0, %v578
  %v580 = vpop.f32.mrb[0].mxu0
  %v581 = vadd.f32 0.0, %v580
  %582 = vdwg.mxu0
  %583 = vmatprep.subr.bf16.mxu0 %v348
  %584 = vmatpush1.bf16.msra.mxu0 %v345
  %585 = vmatprep.subr.bf16.mxu0 0
  %586 = vmatpush1.bf16.msra.mxu0 0
  %587 = vmatprep.subr.bf16.mxu0 0
  %588 = vmatpush1.bf16.msra.mxu0 0
  %589 = vmatprep.subr.bf16.mxu0 0
  %590 = vmatpush1.bf16.msra.mxu0 0
  %591 = vmatprep.subr.bf16.mxu0 0
  %592 = vmatpush1.bf16.msra.mxu0 0
  %593 = vmatprep.subr.bf16.mxu0 0
  %594 = vmatpush1.bf16.msra.mxu0 0
  %595 = vmatprep.subr.bf16.mxu0 0
  %596 = vmatpush1.bf16.msra.mxu0 0
  %597 = vmatprep.subr.bf16.mxu0 0
  %598 = vmatpush1.bf16.msra.mxu0 0
  %599 = vmatprep.subr.bf16.mxu0 0
  %600 = vmatpush1.bf16.msra.mxu0 0
  %601 = vmatprep.subr.bf16.mxu0 0
  %602 = vmatpush1.bf16.msra.mxu0 0
  %603 = vmatprep.subr.bf16.mxu0 0
  %604 = vmatpush1.bf16.msra.mxu0 0
  %605 = vmatprep.subr.bf16.mxu0 0
  %606 = vmatpush1.bf16.msra.mxu0 0
  %607 = vmatprep.subr.bf16.mxu0 0
  %608 = vmatpush1.bf16.msra.mxu0 0
  %609 = vmatprep.subr.bf16.mxu0 0
  %610 = vmatpush1.bf16.msra.mxu0 0
  %611 = vmatprep.subr.bf16.mxu0 0
  %612 = vmatpush1.bf16.msra.mxu0 0
  %613 = vmatprep.subr.bf16.mxu0 0
  %614 = vmatpush1.bf16.msra.mxu0 0
  %615 = vmatprep.mubr.bf16.mxu0 0
  %616 = vmatmul.mubr.bf16.gmra.mrb[0].mxu0 %v332
  %v617 = vpop.f32.mrb[0].mxu0
  %v618 = vadd.f32 0.0, %v617
  %v619 = vpop.f32.mrb[0].mxu0
  %v620 = vadd.f32 0.0, %v619
  %v621 = vpop.f32.mrb[0].mxu0
  %v622 = vadd.f32 0.0, %v621
  %v623 = vpop.f32.mrb[0].mxu0
  %v624 = vadd.f32 0.0, %v623
  %625 = vmatprep.mubr.bf16.mxu0 0
  %626 = vmatmul.mubr.bf16.gmra.mrb[0].mxu0 %v335
  %v627 = vpop.f32.mrb[0].mxu0
  %v628 = vadd.f32 0.0, %v627
  %v629 = vpop.f32.mrb[0].mxu0
  %v630 = vadd.f32 0.0, %v629
  %v631 = vpop.f32.mrb[0].mxu0
  %v632 = vadd.f32 0.0, %v631
  %v633 = vpop.f32.mrb[0].mxu0
  %v634 = vadd.f32 0.0, %v633
  %635 = vdwg.mxu0
  %636 = vmatprep.subr.bf16.mxu0 %v354
  %637 = vmatpush1.bf16.msra.mxu0 %v351
  %638 = vmatprep.subr.bf16.mxu0 0
  %639 = vmatpush1.bf16.msra.mxu0 0
  %640 = vmatprep.subr.bf16.mxu0 0
  %641 = vmatpush1.bf16.msra.mxu0 0
  %642 = vmatprep.subr.bf16.mxu0 0
  %643 = vmatpush1.bf16.msra.mxu0 0
  %644 = vmatprep.subr.bf16.mxu0 0
  %645 = vmatpush1.bf16.msra.mxu0 0
  %646 = vmatprep.subr.bf16.mxu0 0
  %647 = vmatpush1.bf16.msra.mxu0 0
  %648 = vmatprep.subr.bf16.mxu0 0
  %649 = vmatpush1.bf16.msra.mxu0 0
  %650 = vmatprep.subr.bf16.mxu0 0
  %651 = vmatpush1.bf16.msra.mxu0 0
  %652 = vmatprep.subr.bf16.mxu0 0
  %653 = vmatpush1.bf16.msra.mxu0 0
  %654 = vmatprep.subr.bf16.mxu0 0
  %655 = vmatpush1.bf16.msra.mxu0 0
  %656 = vmatprep.subr.bf16.mxu0 0
  %657 = vmatpush1.bf16.msra.mxu0 0
  %658 = vmatprep.subr.bf16.mxu0 0
  %659 = vmatpush1.bf16.msra.mxu0 0
  %660 = vmatprep.subr.bf16.mxu0 0
  %661 = vmatpush1.bf16.msra.mxu0 0
  %662 = vmatprep.subr.bf16.mxu0 0
  %663 = vmatpush1.bf16.msra.mxu0 0
  %664 = vmatprep.subr.bf16.mxu0 0
  %665 = vmatpush1.bf16.msra.mxu0 0
  %666 = vmatprep.subr.bf16.mxu0 0
  %667 = vmatpush1.bf16.msra.mxu0 0
  %668 = vmatprep.mubr.bf16.mxu0 0
  %669 = vmatmul.mubr.bf16.gmra.mrb[0].mxu0 %v332
  %v670 = vpop.f32.mrb[0].mxu0
  %v671 = vadd.f32 0.0, %v670
  %v672 = vpop.f32.mrb[0].mxu0
  %v673 = vadd.f32 0.0, %v672
  %v674 = vpop.f32.mrb[0].mxu0
  %v675 = vadd.f32 0.0, %v674
  %v676 = vpop.f32.mrb[0].mxu0
  %v677 = vadd.f32 0.0, %v676
  %678 = vmatprep.mubr.bf16.mxu0 0
  %679 = vmatmul.mubr.bf16.gmra.mrb[0].mxu0 %v335
  %v680 = vpop.f32.mrb[0].mxu0
  %v681 = vadd.f32 0.0, %v680
  %v682 = vpop.f32.mrb[0].mxu0
  %v683 = vadd.f32 0.0, %v682
  %v684 = vpop.f32.mrb[0].mxu0
  %v685 = vadd.f32 0.0, %v684
  %v686 = vpop.f32.mrb[0].mxu0
  %v687 = vadd.f32 0.0, %v686
  %688 = vdwg.mxu0
  %689 = vmatprep.subr.bf16.mxu0 %v360
  %690 = vmatpush1.bf16.msra.mxu0 %v357
  %691 = vmatprep.subr.bf16.mxu0 0
  %692 = vmatpush1.bf16.msra.mxu0 0
  %693 = vmatprep.subr.bf16.mxu0 0
  %694 = vmatpush1.bf16.msra.mxu0 0
  %695 = vmatprep.subr.bf16.mxu0 0
  %696 = vmatpush1.bf16.msra.mxu0 0
  %697 = vmatprep.subr.bf16.mxu0 0
  %698 = vmatpush1.bf16.msra.mxu0 0
  %699 = vmatprep.subr.bf16.mxu0 0
  %700 = vmatpush1.bf16.msra.mxu0 0
  %701 = vmatprep.subr.bf16.mxu0 0
  %702 = vmatpush1.bf16.msra.mxu0 0
  %703 = vmatprep.subr.bf16.mxu0 0
  %704 = vmatpush1.bf16.msra.mxu0 0
  %705 = vmatprep.subr.bf16.mxu0 0
  %706 = vmatpush1.bf16.msra.mxu0 0
  %707 = vmatprep.subr.bf16.mxu0 0
  %708 = vmatpush1.bf16.msra.mxu0 0
  %709 = vmatprep.subr.bf16.mxu0 0
  %710 = vmatpush1.bf16.msra.mxu0 0
  %711 = vmatprep.subr.bf16.mxu0 0
  %712 = vmatpush1.bf16.msra.mxu0 0
  %713 = vmatprep.subr.bf16.mxu0 0
  %714 = vmatpush1.bf16.msra.mxu0 0
  %715 = vmatprep.subr.bf16.mxu0 0
  %716 = vmatpush1.bf16.msra.mxu0 0
  %717 = vmatprep.subr.bf16.mxu0 0
  %718 = vmatpush1.bf16.msra.mxu0 0
  %719 = vmatprep.subr.bf16.mxu0 0
  %720 = vmatpush1.bf16.msra.mxu0 0
  %721 = vmatprep.mubr.bf16.mxu0 0
  %722 = vmatmul.mubr.bf16.gmra.mrb[0].mxu0 %v332
  %v723 = vpop.f32.mrb[0].mxu0
  %v724 = vadd.f32 0.0, %v723
  %v725 = vpop.f32.mrb[0].mxu0
  %v726 = vadd.f32 0.0, %v725
  %v727 = vpop.f32.mrb[0].mxu0
  %v728 = vadd.f32 0.0, %v727
  %v729 = vpop.f32.mrb[0].mxu0
  %v730 = vadd.f32 0.0, %v729
  %731 = vmatprep.mubr.bf16.mxu0 0
  %732 = vmatmul.mubr.bf16.gmra.mrb[0].mxu0 %v335
  %v733 = vpop.f32.mrb[0].mxu0
  %v734 = vadd.f32 0.0, %v733
  %v735 = vpop.f32.mrb[0].mxu0
  %v736 = vadd.f32 0.0, %v735
  %v737 = vpop.f32.mrb[0].mxu0
  %v738 = vadd.f32 0.0, %v737
  %v739 = vpop.f32.mrb[0].mxu0
  %v740 = vadd.f32 0.0, %v739
  %741 = vdwg.mxu0
  %742 = vmatprep.subr.bf16.mxu0 %v366
  %743 = vmatpush1.bf16.msra.mxu0 %v363
  %744 = vmatprep.subr.bf16.mxu0 0
  %745 = vmatpush1.bf16.msra.mxu0 0
  %746 = vmatprep.subr.bf16.mxu0 0
  %747 = vmatpush1.bf16.msra.mxu0 0
  %748 = vmatprep.subr.bf16.mxu0 0
  %749 = vmatpush1.bf16.msra.mxu0 0
  %750 = vmatprep.subr.bf16.mxu0 0
  %751 = vmatpush1.bf16.msra.mxu0 0
  %752 = vmatprep.subr.bf16.mxu0 0
  %753 = vmatpush1.bf16.msra.mxu0 0
  %754 = vmatprep.subr.bf16.mxu0 0
  %755 = vmatpush1.bf16.msra.mxu0 0
  %756 = vmatprep.subr.bf16.mxu0 0
  %757 = vmatpush1.bf16.msra.mxu0 0
  %758 = vmatprep.subr.bf16.mxu0 0
  %759 = vmatpush1.bf16.msra.mxu0 0
  %760 = vmatprep.subr.bf16.mxu0 0
  %761 = vmatpush1.bf16.msra.mxu0 0
  %762 = vmatprep.subr.bf16.mxu0 0
  %763 = vmatpush1.bf16.msra.mxu0 0
  %764 = vmatprep.subr.bf16.mxu0 0
  %765 = vmatpush1.bf16.msra.mxu0 0
  %766 = vmatprep.subr.bf16.mxu0 0
  %767 = vmatpush1.bf16.msra.mxu0 0
  %768 = vmatprep.subr.bf16.mxu0 0
  %769 = vmatpush1.bf16.msra.mxu0 0
  %770 = vmatprep.subr.bf16.mxu0 0
  %771 = vmatpush1.bf16.msra.mxu0 0
  %772 = vmatprep.subr.bf16.mxu0 0
  %773 = vmatpush1.bf16.msra.mxu0 0
  %774 = vmatprep.mubr.bf16.mxu0 0
  %775 = vmatmul.mubr.bf16.gmra.mrb[0].mxu0 %v332
  %v776 = vpop.f32.mrb[0].mxu0
  %v777 = vadd.f32 0.0, %v776
  %v778 = vpop.f32.mrb[0].mxu0
  %v779 = vadd.f32 0.0, %v778
  %v780 = vpop.f32.mrb[0].mxu0
  %v781 = vadd.f32 0.0, %v780
  %v782 = vpop.f32.mrb[0].mxu0
  %v783 = vadd.f32 0.0, %v782
  %784 = vmatprep.mubr.bf16.mxu0 0
  %785 = vmatmul.mubr.bf16.gmra.mrb[0].mxu0 %v335
  %v786 = vpop.f32.mrb[0].mxu0
  %v787 = vadd.f32 0.0, %v786
  %v788 = vpop.f32.mrb[0].mxu0
  %v789 = vadd.f32 0.0, %v788
  %v790 = vpop.f32.mrb[0].mxu0
  %v791 = vadd.f32 0.0, %v790
  %v792 = vpop.f32.mrb[0].mxu0
  %v793 = vadd.f32 0.0, %v792
  %794 = vdwg.mxu0
  %795 = vmatprep.subr.bf16.mxu0 %v372
  %796 = vmatpush1.bf16.msra.mxu0 %v369
  %797 = vmatprep.subr.bf16.mxu0 0
  %798 = vmatpush1.bf16.msra.mxu0 0
  %799 = vmatprep.subr.bf16.mxu0 0
  %800 = vmatpush1.bf16.msra.mxu0 0
  %801 = vmatprep.subr.bf16.mxu0 0
  %802 = vmatpush1.bf16.msra.mxu0 0
  %803 = vmatprep.subr.bf16.mxu0 0
  %804 = vmatpush1.bf16.msra.mxu0 0
  %805 = vmatprep.subr.bf16.mxu0 0
  %806 = vmatpush1.bf16.msra.mxu0 0
  %807 = vmatprep.subr.bf16.mxu0 0
  %808 = vmatpush1.bf16.msra.mxu0 0
  %809 = vmatprep.subr.bf16.mxu0 0
  %810 = vmatpush1.bf16.msra.mxu0 0
  %811 = vmatprep.subr.bf16.mxu0 0
  %812 = vmatpush1.bf16.msra.mxu0 0
  %813 = vmatprep.subr.bf16.mxu0 0
  %814 = vmatpush1.bf16.msra.mxu0 0
  %815 = vmatprep.subr.bf16.mxu0 0
  %816 = vmatpush1.bf16.msra.mxu0 0
  %817 = vmatprep.subr.bf16.mxu0 0
  %818 = vmatpush1.bf16.msra.mxu0 0
  %819 = vmatprep.subr.bf16.mxu0 0
  %820 = vmatpush1.bf16.msra.mxu0 0
  %821 = vmatprep.subr.bf16.mxu0 0
  %822 = vmatpush1.bf16.msra.mxu0 0
  %823 = vmatprep.subr.bf16.mxu0 0
  %824 = vmatpush1.bf16.msra.mxu0 0
  %825 = vmatprep.subr.bf16.mxu0 0
  %826 = vmatpush1.bf16.msra.mxu0 0
  %827 = vmatprep.mubr.bf16.mxu0 0
  %828 = vmatmul.mubr.bf16.gmra.mrb[0].mxu0 %v332
  %v829 = vpop.f32.mrb[0].mxu0
  %v830 = vadd.f32 0.0, %v829
  %v831 = vpop.f32.mrb[0].mxu0
  %v832 = vadd.f32 0.0, %v831
  %v833 = vpop.f32.mrb[0].mxu0
  %v834 = vadd.f32 0.0, %v833
  %v835 = vpop.f32.mrb[0].mxu0
  %v836 = vadd.f32 0.0, %v835
  %837 = vmatprep.mubr.bf16.mxu0 0
  %838 = vmatmul.mubr.bf16.gmra.mrb[0].mxu0 %v335
  %v839 = vpop.f32.mrb[0].mxu0
  %v840 = vadd.f32 0.0, %v839
  %v841 = vpop.f32.mrb[0].mxu0
  %v842 = vadd.f32 0.0, %v841
  %v843 = vpop.f32.mrb[0].mxu0
  %v844 = vadd.f32 0.0, %v843
  %v845 = vpop.f32.mrb[0].mxu0
  %v846 = vadd.f32 0.0, %v845
  %847 = vdwg.mxu0
  %848 = vmatprep.subr.bf16.mxu0 %v378
  %849 = vmatpush1.bf16.msra.mxu0 %v375
  %850 = vmatprep.subr.bf16.mxu0 0
  %851 = vmatpush1.bf16.msra.mxu0 0
  %852 = vmatprep.subr.bf16.mxu0 0
  %853 = vmatpush1.bf16.msra.mxu0 0
  %854 = vmatprep.subr.bf16.mxu0 0
  %855 = vmatpush1.bf16.msra.mxu0 0
  %856 = vmatprep.subr.bf16.mxu0 0
  %857 = vmatpush1.bf16.msra.mxu0 0
  %858 = vmatprep.subr.bf16.mxu0 0
  %859 = vmatpush1.bf16.msra.mxu0 0
  %860 = vmatprep.subr.bf16.mxu0 0
  %861 = vmatpush1.bf16.msra.mxu0 0
  %862 = vmatprep.subr.bf16.mxu0 0
  %863 = vmatpush1.bf16.msra.mxu0 0
  %864 = vmatprep.subr.bf16.mxu0 0
  %865 = vmatpush1.bf16.msra.mxu0 0
  %866 = vmatprep.subr.bf16.mxu0 0
  %867 = vmatpush1.bf16.msra.mxu0 0
  %868 = vmatprep.subr.bf16.mxu0 0
  %869 = vmatpush1.bf16.msra.mxu0 0
  %870 = vmatprep.subr.bf16.mxu0 0
  %871 = vmatpush1.bf16.msra.mxu0 0
  %872 = vmatprep.subr.bf16.mxu0 0
  %873 = vmatpush1.bf16.msra.mxu0 0
  %874 = vmatprep.subr.bf16.mxu0 0
  %875 = vmatpush1.bf16.msra.mxu0 0
  %876 = vmatprep.subr.bf16.mxu0 0
  %877 = vmatpush1.bf16.msra.mxu0 0
  %878 = vmatprep.subr.bf16.mxu0 0
  %879 = vmatpush1.bf16.msra.mxu0 0
  %880 = vmatprep.mubr.bf16.mxu0 0
  %881 = vmatmul.mubr.bf16.gmra.mrb[0].mxu0 %v332
  %v882 = vpop.f32.mrb[0].mxu0
  %v883 = vadd.f32 0.0, %v882
  %v884 = vpop.f32.mrb[0].mxu0
  %v885 = vadd.f32 0.0, %v884
  %v886 = vpop.f32.mrb[0].mxu0
  %v887 = vadd.f32 0.0, %v886
  %v888 = vpop.f32.mrb[0].mxu0
  %v889 = vadd.f32 0.0, %v888
  %890 = vmatprep.mubr.bf16.mxu0 0
  %891 = vmatmul.mubr.bf16.gmra.mrb[0].mxu0 %v335
  %v892 = vpop.f32.mrb[0].mxu0
  %v893 = vadd.f32 0.0, %v892
  %v894 = vpop.f32.mrb[0].mxu0
  %v895 = vadd.f32 0.0, %v894
  %v896 = vpop.f32.mrb[0].mxu0
  %v897 = vadd.f32 0.0, %v896
  %v898 = vpop.f32.mrb[0].mxu0
  %v899 = vadd.f32 0.0, %v898
  %900 = vdwg.mxu0
  %901 = vmatprep.subr.bf16.mxu0 %v384
  %902 = vmatpush1.bf16.msra.mxu0 %v381
  %903 = vmatprep.subr.bf16.mxu0 0
  %904 = vmatpush1.bf16.msra.mxu0 0
  %905 = vmatprep.subr.bf16.mxu0 0
  %906 = vmatpush1.bf16.msra.mxu0 0
  %907 = vmatprep.subr.bf16.mxu0 0
  %908 = vmatpush1.bf16.msra.mxu0 0
  %909 = vmatprep.subr.bf16.mxu0 0
  %910 = vmatpush1.bf16.msra.mxu0 0
  %911 = vmatprep.subr.bf16.mxu0 0
  %912 = vmatpush1.bf16.msra.mxu0 0
  %913 = vmatprep.subr.bf16.mxu0 0
  %914 = vmatpush1.bf16.msra.mxu0 0
  %915 = vmatprep.subr.bf16.mxu0 0
  %916 = vmatpush1.bf16.msra.mxu0 0
  %917 = vmatprep.subr.bf16.mxu0 0
  %918 = vmatpush1.bf16.msra.mxu0 0
  %919 = vmatprep.subr.bf16.mxu0 0
  %920 = vmatpush1.bf16.msra.mxu0 0
  %921 = vmatprep.subr.bf16.mxu0 0
  %922 = vmatpush1.bf16.msra.mxu0 0
  %923 = vmatprep.subr.bf16.mxu0 0
  %924 = vmatpush1.bf16.msra.mxu0 0
  %925 = vmatprep.subr.bf16.mxu0 0
  %926 = vmatpush1.bf16.msra.mxu0 0
  %927 = vmatprep.subr.bf16.mxu0 0
  %928 = vmatpush1.bf16.msra.mxu0 0
  %929 = vmatprep.subr.bf16.mxu0 0
  %930 = vmatpush1.bf16.msra.mxu0 0
  %931 = vmatprep.subr.bf16.mxu0 0
  %932 = vmatpush1.bf16.msra.mxu0 0
  %933 = vmatprep.mubr.bf16.mxu0 0
  %934 = vmatmul.mubr.bf16.gmra.mrb[0].mxu0 %v332
  %v935 = vpop.f32.mrb[0].mxu0
  %v936 = vadd.f32 0.0, %v935
  %v937 = vpop.f32.mrb[0].mxu0
  %v938 = vadd.f32 0.0, %v937
  %v939 = vpop.f32.mrb[0].mxu0
  %v940 = vadd.f32 0.0, %v939
  %v941 = vpop.f32.mrb[0].mxu0
  %v942 = vadd.f32 0.0, %v941
  %943 = vmatprep.mubr.bf16.mxu0 0
  %944 = vmatmul.mubr.bf16.gmra.mrb[0].mxu0 %v335
  %v945 = vpop.f32.mrb[0].mxu0
  %v946 = vadd.f32 0.0, %v945
  %v947 = vpop.f32.mrb[0].mxu0
  %v948 = vadd.f32 0.0, %v947
  %v949 = vpop.f32.mrb[0].mxu0
  %v950 = vadd.f32 0.0, %v949
  %v951 = vpop.f32.mrb[0].mxu0
  %v952 = vadd.f32 0.0, %v951
  %953 = vdwg.mxu0
  %954 = vmatprep.subr.bf16.mxu0 %v390
  %955 = vmatpush1.bf16.msra.mxu0 %v387
  %956 = vmatprep.subr.bf16.mxu0 0
  %957 = vmatpush1.bf16.msra.mxu0 0
  %958 = vmatprep.subr.bf16.mxu0 0
  %959 = vmatpush1.bf16.msra.mxu0 0
  %960 = vmatprep.subr.bf16.mxu0 0
  %961 = vmatpush1.bf16.msra.mxu0 0
  %962 = vmatprep.subr.bf16.mxu0 0
  %963 = vmatpush1.bf16.msra.mxu0 0
  %964 = vmatprep.subr.bf16.mxu0 0
  %965 = vmatpush1.bf16.msra.mxu0 0
  %966 = vmatprep.subr.bf16.mxu0 0
  %967 = vmatpush1.bf16.msra.mxu0 0
  %968 = vmatprep.subr.bf16.mxu0 0
  %969 = vmatpush1.bf16.msra.mxu0 0
  %970 = vmatprep.subr.bf16.mxu0 0
  %971 = vmatpush1.bf16.msra.mxu0 0
  %972 = vmatprep.subr.bf16.mxu0 0
  %973 = vmatpush1.bf16.msra.mxu0 0
  %974 = vmatprep.subr.bf16.mxu0 0
  %975 = vmatpush1.bf16.msra.mxu0 0
  %976 = vmatprep.subr.bf16.mxu0 0
  %977 = vmatpush1.bf16.msra.mxu0 0
  %978 = vmatprep.subr.bf16.mxu0 0
  %979 = vmatpush1.bf16.msra.mxu0 0
  %980 = vmatprep.subr.bf16.mxu0 0
  %981 = vmatpush1.bf16.msra.mxu0 0
  %982 = vmatprep.subr.bf16.mxu0 0
  %983 = vmatpush1.bf16.msra.mxu0 0
  %984 = vmatprep.subr.bf16.mxu0 0
  %985 = vmatpush1.bf16.msra.mxu0 0
  %986 = vmatprep.mubr.bf16.mxu0 0
  %987 = vmatmul.mubr.bf16.gmra.mrb[0].mxu0 %v332
  %v988 = vpop.f32.mrb[0].mxu0
  %v989 = vadd.f32 0.0, %v988
  %v990 = vpop.f32.mrb[0].mxu0
  %v991 = vadd.f32 0.0, %v990
  %v992 = vpop.f32.mrb[0].mxu0
  %v993 = vadd.f32 0.0, %v992
  %v994 = vpop.f32.mrb[0].mxu0
  %v995 = vadd.f32 0.0, %v994
  %996 = vmatprep.mubr.bf16.mxu0 0
  %997 = vmatmul.mubr.bf16.gmra.mrb[0].mxu0 %v335
  %v998 = vpop.f32.mrb[0].mxu0
  %v999 = vadd.f32 0.0, %v998
  %v1000 = vpop.f32.mrb[0].mxu0
  %v1001 = vadd.f32 0.0, %v1000
  %v1002 = vpop.f32.mrb[0].mxu0
  %v1003 = vadd.f32 0.0, %v1002
  %v1004 = vpop.f32.mrb[0].mxu0
  %v1005 = vadd.f32 0.0, %v1004
  %1006 = vdwg.mxu0
  %1007 = vmatprep.subr.bf16.mxu0 %v396
  %1008 = vmatpush1.bf16.msra.mxu0 %v393
  %1009 = vmatprep.subr.bf16.mxu0 0
  %1010 = vmatpush1.bf16.msra.mxu0 0
  %1011 = vmatprep.subr.bf16.mxu0 0
  %1012 = vmatpush1.bf16.msra.mxu0 0
  %1013 = vmatprep.subr.bf16.mxu0 0
  %1014 = vmatpush1.bf16.msra.mxu0 0
  %1015 = vmatprep.subr.bf16.mxu0 0
  %1016 = vmatpush1.bf16.msra.mxu0 0
  %1017 = vmatprep.subr.bf16.mxu0 0
  %1018 = vmatpush1.bf16.msra.mxu0 0
  %1019 = vmatprep.subr.bf16.mxu0 0
  %1020 = vmatpush1.bf16.msra.mxu0 0
  %1021 = vmatprep.subr.bf16.mxu0 0
  %1022 = vmatpush1.bf16.msra.mxu0 0
  %1023 = vmatprep.subr.bf16.mxu0 0
  %1024 = vmatpush1.bf16.msra.mxu0 0
  %1025 = vmatprep.subr.bf16.mxu0 0
  %1026 = vmatpush1.bf16.msra.mxu0 0
  %1027 = vmatprep.subr.bf16.mxu0 0
  %1028 = vmatpush1.bf16.msra.mxu0 0
  %1029 = vmatprep.subr.bf16.mxu0 0
  %1030 = vmatpush1.bf16.msra.mxu0 0
  %1031 = vmatprep.subr.bf16.mxu0 0
  %1032 = vmatpush1.bf16.msra.mxu0 0
  %1033 = vmatprep.subr.bf16.mxu0 0
  %1034 = vmatpush1.bf16.msra.mxu0 0
  %1035 = vmatprep.subr.bf16.mxu0 0
  %1036 = vmatpush1.bf16.msra.mxu0 0
  %1037 = vmatprep.subr.bf16.mxu0 0
  %1038 = vmatpush1.bf16.msra.mxu0 0
  %1039 = vmatprep.mubr.bf16.mxu0 0
  %1040 = vmatmul.mubr.bf16.gmra.mrb[0].mxu0 %v332
  %v1041 = vpop.f32.mrb[0].mxu0
  %v1042 = vadd.f32 0.0, %v1041
  %v1043 = vpop.f32.mrb[0].mxu0
  %v1044 = vadd.f32 0.0, %v1043
  %v1045 = vpop.f32.mrb[0].mxu0
  %v1046 = vadd.f32 0.0, %v1045
  %v1047 = vpop.f32.mrb[0].mxu0
  %v1048 = vadd.f32 0.0, %v1047
  %1049 = vmatprep.mubr.bf16.mxu0 0
  %1050 = vmatmul.mubr.bf16.gmra.mrb[0].mxu0 %v335
  %v1051 = vpop.f32.mrb[0].mxu0
  %v1052 = vadd.f32 0.0, %v1051
  %v1053 = vpop.f32.mrb[0].mxu0
  %v1054 = vadd.f32 0.0, %v1053
  %v1055 = vpop.f32.mrb[0].mxu0
  %v1056 = vadd.f32 0.0, %v1055
  %v1057 = vpop.f32.mrb[0].mxu0
  %v1058 = vadd.f32 0.0, %v1057
  %1059 = vdwg.mxu0
  %1060 = vmatprep.subr.bf16.mxu0 %v402
  %1061 = vmatpush1.bf16.msra.mxu0 %v399
  %1062 = vmatprep.subr.bf16.mxu0 0
  %1063 = vmatpush1.bf16.msra.mxu0 0
  %1064 = vmatprep.subr.bf16.mxu0 0
  %1065 = vmatpush1.bf16.msra.mxu0 0
  %1066 = vmatprep.subr.bf16.mxu0 0
  %1067 = vmatpush1.bf16.msra.mxu0 0
  %1068 = vmatprep.subr.bf16.mxu0 0
  %1069 = vmatpush1.bf16.msra.mxu0 0
  %1070 = vmatprep.subr.bf16.mxu0 0
  %1071 = vmatpush1.bf16.msra.mxu0 0
  %1072 = vmatprep.subr.bf16.mxu0 0
  %1073 = vmatpush1.bf16.msra.mxu0 0
  %1074 = vmatprep.subr.bf16.mxu0 0
  %1075 = vmatpush1.bf16.msra.mxu0 0
  %1076 = vmatprep.subr.bf16.mxu0 0
  %1077 = vmatpush1.bf16.msra.mxu0 0
  %1078 = vmatprep.subr.bf16.mxu0 0
  %1079 = vmatpush1.bf16.msra.mxu0 0
  %1080 = vmatprep.subr.bf16.mxu0 0
  %1081 = vmatpush1.bf16.msra.mxu0 0
  %1082 = vmatprep.subr.bf16.mxu0 0
  %1083 = vmatpush1.bf16.msra.mxu0 0
  %1084 = vmatprep.subr.bf16.mxu0 0
  %1085 = vmatpush1.bf16.msra.mxu0 0
  %1086 = vmatprep.subr.bf16.mxu0 0
  %1087 = vmatpush1.bf16.msra.mxu0 0
  %1088 = vmatprep.subr.bf16.mxu0 0
  %1089 = vmatpush1.bf16.msra.mxu0 0
  %1090 = vmatprep.subr.bf16.mxu0 0
  %1091 = vmatpush1.bf16.msra.mxu0 0
  %1092 = vmatprep.mubr.bf16.mxu0 0
  %1093 = vmatmul.mubr.bf16.gmra.mrb[0].mxu0 %v332
  %v1094 = vpop.f32.mrb[0].mxu0
  %v1095 = vadd.f32 0.0, %v1094
  %v1096 = vpop.f32.mrb[0].mxu0
  %v1097 = vadd.f32 0.0, %v1096
  %v1098 = vpop.f32.mrb[0].mxu0
  %v1099 = vadd.f32 0.0, %v1098
  %v1100 = vpop.f32.mrb[0].mxu0
  %v1101 = vadd.f32 0.0, %v1100
  %1102 = vmatprep.mubr.bf16.mxu0 0
  %1103 = vmatmul.mubr.bf16.gmra.mrb[0].mxu0 %v335
  %v1104 = vpop.f32.mrb[0].mxu0
  %v1105 = vadd.f32 0.0, %v1104
  %v1106 = vpop.f32.mrb[0].mxu0
  %v1107 = vadd.f32 0.0, %v1106
  %v1108 = vpop.f32.mrb[0].mxu0
  %v1109 = vadd.f32 0.0, %v1108
  %v1110 = vpop.f32.mrb[0].mxu0
  %v1111 = vadd.f32 0.0, %v1110
  %1112 = vdwg.mxu0
  %1113 = vmatprep.subr.bf16.mxu0 %v408
  %1114 = vmatpush1.bf16.msra.mxu0 %v405
  %1115 = vmatprep.subr.bf16.mxu0 0
  %1116 = vmatpush1.bf16.msra.mxu0 0
  %1117 = vmatprep.subr.bf16.mxu0 0
  %1118 = vmatpush1.bf16.msra.mxu0 0
  %1119 = vmatprep.subr.bf16.mxu0 0
  %1120 = vmatpush1.bf16.msra.mxu0 0
  %1121 = vmatprep.subr.bf16.mxu0 0
  %1122 = vmatpush1.bf16.msra.mxu0 0
  %1123 = vmatprep.subr.bf16.mxu0 0
  %1124 = vmatpush1.bf16.msra.mxu0 0
  %1125 = vmatprep.subr.bf16.mxu0 0
  %1126 = vmatpush1.bf16.msra.mxu0 0
  %1127 = vmatprep.subr.bf16.mxu0 0
  %1128 = vmatpush1.bf16.msra.mxu0 0
  %1129 = vmatprep.subr.bf16.mxu0 0
  %1130 = vmatpush1.bf16.msra.mxu0 0
  %1131 = vmatprep.subr.bf16.mxu0 0
  %1132 = vmatpush1.bf16.msra.mxu0 0
  %1133 = vmatprep.subr.bf16.mxu0 0
  %1134 = vmatpush1.bf16.msra.mxu0 0
  %1135 = vmatprep.subr.bf16.mxu0 0
  %1136 = vmatpush1.bf16.msra.mxu0 0
  %1137 = vmatprep.subr.bf16.mxu0 0
  %1138 = vmatpush1.bf16.msra.mxu0 0
  %1139 = vmatprep.subr.bf16.mxu0 0
  %1140 = vmatpush1.bf16.msra.mxu0 0
  %1141 = vmatprep.subr.bf16.mxu0 0
  %1142 = vmatpush1.bf16.msra.mxu0 0
  %1143 = vmatprep.subr.bf16.mxu0 0
  %1144 = vmatpush1.bf16.msra.mxu0 0
  %1145 = vmatprep.mubr.bf16.mxu0 0
  %1146 = vmatmul.mubr.bf16.gmra.mrb[0].mxu0 %v332
  %v1147 = vpop.f32.mrb[0].mxu0
  %v1148 = vadd.f32 0.0, %v1147
  %v1149 = vpop.f32.mrb[0].mxu0
  %v1150 = vadd.f32 0.0, %v1149
  %v1151 = vpop.f32.mrb[0].mxu0
  %v1152 = vadd.f32 0.0, %v1151
  %v1153 = vpop.f32.mrb[0].mxu0
  %v1154 = vadd.f32 0.0, %v1153
  %1155 = vmatprep.mubr.bf16.mxu0 0
  %1156 = vmatmul.mubr.bf16.gmra.mrb[0].mxu0 %v335
  %v1157 = vpop.f32.mrb[0].mxu0
  %v1158 = vadd.f32 0.0, %v1157
  %v1159 = vpop.f32.mrb[0].mxu0
  %v1160 = vadd.f32 0.0, %v1159
  %v1161 = vpop.f32.mrb[0].mxu0
  %v1162 = vadd.f32 0.0, %v1161
  %v1163 = vpop.f32.mrb[0].mxu0
  %v1164 = vadd.f32 0.0, %v1163
  %1165 = vdwg.mxu0
  %1166 = vmatprep.subr.bf16.mxu0 %v414
  %1167 = vmatpush1.bf16.msra.mxu0 %v411
  %1168 = vmatprep.subr.bf16.mxu0 0
  %1169 = vmatpush1.bf16.msra.mxu0 0
  %1170 = vmatprep.subr.bf16.mxu0 0
  %1171 = vmatpush1.bf16.msra.mxu0 0
  %1172 = vmatprep.subr.bf16.mxu0 0
  %1173 = vmatpush1.bf16.msra.mxu0 0
  %1174 = vmatprep.subr.bf16.mxu0 0
  %1175 = vmatpush1.bf16.msra.mxu0 0
  %1176 = vmatprep.subr.bf16.mxu0 0
  %1177 = vmatpush1.bf16.msra.mxu0 0
  %1178 = vmatprep.subr.bf16.mxu0 0
  %1179 = vmatpush1.bf16.msra.mxu0 0
  %1180 = vmatprep.subr.bf16.mxu0 0
  %1181 = vmatpush1.bf16.msra.mxu0 0
  %1182 = vmatprep.subr.bf16.mxu0 0
  %1183 = vmatpush1.bf16.msra.mxu0 0
  %1184 = vmatprep.subr.bf16.mxu0 0
  %1185 = vmatpush1.bf16.msra.mxu0 0
  %1186 = vmatprep.subr.bf16.mxu0 0
  %1187 = vmatpush1.bf16.msra.mxu0 0
  %1188 = vmatprep.subr.bf16.mxu0 0
  %1189 = vmatpush1.bf16.msra.mxu0 0
  %1190 = vmatprep.subr.bf16.mxu0 0
  %1191 = vmatpush1.bf16.msra.mxu0 0
  %1192 = vmatprep.subr.bf16.mxu0 0
  %1193 = vmatpush1.bf16.msra.mxu0 0
  %1194 = vmatprep.subr.bf16.mxu0 0
  %1195 = vmatpush1.bf16.msra.mxu0 0
  %1196 = vmatprep.subr.bf16.mxu0 0
  %1197 = vmatpush1.bf16.msra.mxu0 0
  %1198 = vmatprep.mubr.bf16.mxu0 0
  %1199 = vmatmul.mubr.bf16.gmra.mrb[0].mxu0 %v332
  %v1200 = vpop.f32.mrb[0].mxu0
  %v1201 = vadd.f32 0.0, %v1200
  %v1202 = vpop.f32.mrb[0].mxu0
  %v1203 = vadd.f32 0.0, %v1202
  %v1204 = vpop.f32.mrb[0].mxu0
  %v1205 = vadd.f32 0.0, %v1204
  %v1206 = vpop.f32.mrb[0].mxu0
  %v1207 = vadd.f32 0.0, %v1206
  %1208 = vmatprep.mubr.bf16.mxu0 0
  %1209 = vmatmul.mubr.bf16.gmra.mrb[0].mxu0 %v335
  %v1210 = vpop.f32.mrb[0].mxu0
  %v1211 = vadd.f32 0.0, %v1210
  %v1212 = vpop.f32.mrb[0].mxu0
  %v1213 = vadd.f32 0.0, %v1212
  %v1214 = vpop.f32.mrb[0].mxu0
  %v1215 = vadd.f32 0.0, %v1214
  %v1216 = vpop.f32.mrb[0].mxu0
  %v1217 = vadd.f32 0.0, %v1216
  %1218 = vdwg.mxu0
  %1219 = vmatprep.subr.bf16.mxu0 %v420
  %1220 = vmatpush1.bf16.msra.mxu0 %v417
  %1221 = vmatprep.subr.bf16.mxu0 0
  %1222 = vmatpush1.bf16.msra.mxu0 0
  %1223 = vmatprep.subr.bf16.mxu0 0
  %1224 = vmatpush1.bf16.msra.mxu0 0
  %1225 = vmatprep.subr.bf16.mxu0 0
  %1226 = vmatpush1.bf16.msra.mxu0 0
  %1227 = vmatprep.subr.bf16.mxu0 0
  %1228 = vmatpush1.bf16.msra.mxu0 0
  %1229 = vmatprep.subr.bf16.mxu0 0
  %1230 = vmatpush1.bf16.msra.mxu0 0
  %1231 = vmatprep.subr.bf16.mxu0 0
  %1232 = vmatpush1.bf16.msra.mxu0 0
  %1233 = vmatprep.subr.bf16.mxu0 0
  %1234 = vmatpush1.bf16.msra.mxu0 0
  %1235 = vmatprep.subr.bf16.mxu0 0
  %1236 = vmatpush1.bf16.msra.mxu0 0
  %1237 = vmatprep.subr.bf16.mxu0 0
  %1238 = vmatpush1.bf16.msra.mxu0 0
  %1239 = vmatprep.subr.bf16.mxu0 0
  %1240 = vmatpush1.bf16.msra.mxu0 0
  %1241 = vmatprep.subr.bf16.mxu0 0
  %1242 = vmatpush1.bf16.msra.mxu0 0
  %1243 = vmatprep.subr.bf16.mxu0 0
  %1244 = vmatpush1.bf16.msra.mxu0 0
  %1245 = vmatprep.subr.bf16.mxu0 0
  %1246 = vmatpush1.bf16.msra.mxu0 0
  %1247 = vmatprep.subr.bf16.mxu0 0
  %1248 = vmatpush1.bf16.msra.mxu0 0
  %1249 = vmatprep.subr.bf16.mxu0 0
  %1250 = vmatpush1.bf16.msra.mxu0 0
  %1251 = vmatprep.mubr.bf16.mxu0 0
  %1252 = vmatmul.mubr.bf16.gmra.mrb[0].mxu0 %v332
  %v1253 = vpop.f32.mrb[0].mxu0
  %v1254 = vadd.f32 0.0, %v1253
  %v1255 = vpop.f32.mrb[0].mxu0
  %v1256 = vadd.f32 0.0, %v1255
  %v1257 = vpop.f32.mrb[0].mxu0
  %v1258 = vadd.f32 0.0, %v1257
  %v1259 = vpop.f32.mrb[0].mxu0
  %v1260 = vadd.f32 0.0, %v1259
  %1261 = vmatprep.mubr.bf16.mxu0 0
  %1262 = vmatmul.mubr.bf16.gmra.mrb[0].mxu0 %v335
  %v1263 = vpop.f32.mrb[0].mxu0
  %v1264 = vadd.f32 0.0, %v1263
  %v1265 = vpop.f32.mrb[0].mxu0
  %v1266 = vadd.f32 0.0, %v1265
  %v1267 = vpop.f32.mrb[0].mxu0
  %v1268 = vadd.f32 0.0, %v1267
  %v1269 = vpop.f32.mrb[0].mxu0
  %v1270 = vadd.f32 0.0, %v1269
  %1271 = vdwg.mxu0
  %1272 = vmatprep.subr.bf16.mxu0 %v426
  %1273 = vmatpush1.bf16.msra.mxu0 %v423
  %1274 = vmatprep.subr.bf16.mxu0 0
  %1275 = vmatpush1.bf16.msra.mxu0 0
  %1276 = vmatprep.subr.bf16.mxu0 0
  %1277 = vmatpush1.bf16.msra.mxu0 0
  %1278 = vmatprep.subr.bf16.mxu0 0
  %1279 = vmatpush1.bf16.msra.mxu0 0
  %1280 = vmatprep.subr.bf16.mxu0 0
  %1281 = vmatpush1.bf16.msra.mxu0 0
  %1282 = vmatprep.subr.bf16.mxu0 0
  %1283 = vmatpush1.bf16.msra.mxu0 0
  %1284 = vmatprep.subr.bf16.mxu0 0
  %1285 = vmatpush1.bf16.msra.mxu0 0
  %1286 = vmatprep.subr.bf16.mxu0 0
  %1287 = vmatpush1.bf16.msra.mxu0 0
  %1288 = vmatprep.subr.bf16.mxu0 0
  %1289 = vmatpush1.bf16.msra.mxu0 0
  %1290 = vmatprep.subr.bf16.mxu0 0
  %1291 = vmatpush1.bf16.msra.mxu0 0
  %1292 = vmatprep.subr.bf16.mxu0 0
  %1293 = vmatpush1.bf16.msra.mxu0 0
  %1294 = vmatprep.subr.bf16.mxu0 0
  %1295 = vmatpush1.bf16.msra.mxu0 0
  %1296 = vmatprep.subr.bf16.mxu0 0
  %1297 = vmatpush1.bf16.msra.mxu0 0
  %1298 = vmatprep.subr.bf16.mxu0 0
  %1299 = vmatpush1.bf16.msra.mxu0 0
  %1300 = vmatprep.subr.bf16.mxu0 0
  %1301 = vmatpush1.bf16.msra.mxu0 0
  %1302 = vmatprep.subr.bf16.mxu0 0
  %1303 = vmatpush1.bf16.msra.mxu0 0
  %1304 = vmatprep.mubr.bf16.mxu0 0
  %1305 = vmatmul.mubr.bf16.gmra.mrb[0].mxu0 %v332
  %v1306 = vpop.f32.mrb[0].mxu0
  %v1307 = vadd.f32 0.0, %v1306
  %v1308 = vpop.f32.mrb[0].mxu0
  %v1309 = vadd.f32 0.0, %v1308
  %v1310 = vpop.f32.mrb[0].mxu0
  %v1311 = vadd.f32 0.0, %v1310
  %v1312 = vpop.f32.mrb[0].mxu0
  %v1313 = vadd.f32 0.0, %v1312
  %1314 = vmatprep.mubr.bf16.mxu0 0
  %1315 = vmatmul.mubr.bf16.gmra.mrb[0].mxu0 %v335
  %v1316 = vpop.f32.mrb[0].mxu0
  %v1317 = vadd.f32 0.0, %v1316
  %v1318 = vpop.f32.mrb[0].mxu0
  %v1319 = vadd.f32 0.0, %v1318
  %v1320 = vpop.f32.mrb[0].mxu0
  %v1321 = vadd.f32 0.0, %v1320
  %v1322 = vpop.f32.mrb[0].mxu0
  %v1323 = vadd.f32 0.0, %v1322
  %1324 = vdwg.mxu0
  %1325 = vmatprep.subr.bf16.mxu0 %v432
  %1326 = vmatpush1.bf16.msra.mxu0 %v429
  %1327 = vmatprep.subr.bf16.mxu0 0
  %1328 = vmatpush1.bf16.msra.mxu0 0
  %1329 = vmatprep.subr.bf16.mxu0 0
  %1330 = vmatpush1.bf16.msra.mxu0 0
  %1331 = vmatprep.subr.bf16.mxu0 0
  %1332 = vmatpush1.bf16.msra.mxu0 0
  %1333 = vmatprep.subr.bf16.mxu0 0
  %1334 = vmatpush1.bf16.msra.mxu0 0
  %1335 = vmatprep.subr.bf16.mxu0 0
  %1336 = vmatpush1.bf16.msra.mxu0 0
  %1337 = vmatprep.subr.bf16.mxu0 0
  %1338 = vmatpush1.bf16.msra.mxu0 0
  %1339 = vmatprep.subr.bf16.mxu0 0
  %1340 = vmatpush1.bf16.msra.mxu0 0
  %1341 = vmatprep.subr.bf16.mxu0 0
  %1342 = vmatpush1.bf16.msra.mxu0 0
  %1343 = vmatprep.subr.bf16.mxu0 0
  %1344 = vmatpush1.bf16.msra.mxu0 0
  %1345 = vmatprep.subr.bf16.mxu0 0
  %1346 = vmatpush1.bf16.msra.mxu0 0
  %1347 = vmatprep.subr.bf16.mxu0 0
  %1348 = vmatpush1.bf16.msra.mxu0 0
  %1349 = vmatprep.subr.bf16.mxu0 0
  %1350 = vmatpush1.bf16.msra.mxu0 0
  %1351 = vmatprep.subr.bf16.mxu0 0
  %1352 = vmatpush1.bf16.msra.mxu0 0
  %1353 = vmatprep.subr.bf16.mxu0 0
  %1354 = vmatpush1.bf16.msra.mxu0 0
  %1355 = vmatprep.subr.bf16.mxu0 0
  %1356 = vmatpush1.bf16.msra.mxu0 0
  %1357 = vmatprep.mubr.bf16.mxu0 0
  %1358 = vmatmul.mubr.bf16.gmra.mrb[0].mxu0 %v332
  %v1359 = vpop.f32.mrb[0].mxu0
  %v1360 = vadd.f32 0.0, %v1359
  %v1361 = vpop.f32.mrb[0].mxu0
  %v1362 = vadd.f32 0.0, %v1361
  %v1363 = vpop.f32.mrb[0].mxu0
  %v1364 = vadd.f32 0.0, %v1363
  %v1365 = vpop.f32.mrb[0].mxu0
  %v1366 = vadd.f32 0.0, %v1365
  %1367 = vmatprep.mubr.bf16.mxu0 0
  %1368 = vmatmul.mubr.bf16.gmra.mrb[0].mxu0 %v335
  %v1369 = vpop.f32.mrb[0].mxu0
  %v1370 = vadd.f32 0.0, %v1369
  %v1371 = vpop.f32.mrb[0].mxu0
  %v1372 = vadd.f32 0.0, %v1371
  %v1373 = vpop.f32.mrb[0].mxu0
  %v1374 = vadd.f32 0.0, %v1373
  %v1375 = vpop.f32.mrb[0].mxu0
  %v1376 = vadd.f32 0.0, %v1375
  %1377 = vdwg.mxu0
  %1378 = vmatprep.subr.bf16.mxu0 %v438
  %1379 = vmatpush1.bf16.msra.mxu0 %v435
  %1380 = vmatprep.subr.bf16.mxu0 0
  %1381 = vmatpush1.bf16.msra.mxu0 0
  %1382 = vmatprep.subr.bf16.mxu0 0
  %1383 = vmatpush1.bf16.msra.mxu0 0
  %1384 = vmatprep.subr.bf16.mxu0 0
  %1385 = vmatpush1.bf16.msra.mxu0 0
  %1386 = vmatprep.subr.bf16.mxu0 0
  %1387 = vmatpush1.bf16.msra.mxu0 0
  %1388 = vmatprep.subr.bf16.mxu0 0
  %1389 = vmatpush1.bf16.msra.mxu0 0
  %1390 = vmatprep.subr.bf16.mxu0 0
  %1391 = vmatpush1.bf16.msra.mxu0 0
  %1392 = vmatprep.subr.bf16.mxu0 0
  %1393 = vmatpush1.bf16.msra.mxu0 0
  %1394 = vmatprep.subr.bf16.mxu0 0
  %1395 = vmatpush1.bf16.msra.mxu0 0
  %1396 = vmatprep.subr.bf16.mxu0 0
  %1397 = vmatpush1.bf16.msra.mxu0 0
  %1398 = vmatprep.subr.bf16.mxu0 0
  %1399 = vmatpush1.bf16.msra.mxu0 0
  %1400 = vmatprep.subr.bf16.mxu0 0
  %1401 = vmatpush1.bf16.msra.mxu0 0
  %1402 = vmatprep.subr.bf16.mxu0 0
  %1403 = vmatpush1.bf16.msra.mxu0 0
  %1404 = vmatprep.subr.bf16.mxu0 0
  %1405 = vmatpush1.bf16.msra.mxu0 0
  %1406 = vmatprep.subr.bf16.mxu0 0
  %1407 = vmatpush1.bf16.msra.mxu0 0
  %1408 = vmatprep.subr.bf16.mxu0 0
  %1409 = vmatpush1.bf16.msra.mxu0 0
  %1410 = vmatprep.mubr.bf16.mxu0 0
  %1411 = vmatmul.mubr.bf16.gmra.mrb[0].mxu0 %v332
  %v1412 = vpop.f32.mrb[0].mxu0
  %v1413 = vadd.f32 0.0, %v1412
  %v1414 = vpop.f32.mrb[0].mxu0
  %v1415 = vadd.f32 0.0, %v1414
  %v1416 = vpop.f32.mrb[0].mxu0
  %v1417 = vadd.f32 0.0, %v1416
  %v1418 = vpop.f32.mrb[0].mxu0
  %v1419 = vadd.f32 0.0, %v1418
  %1420 = vmatprep.mubr.bf16.mxu0 0
  %1421 = vmatmul.mubr.bf16.gmra.mrb[0].mxu0 %v335
  %v1422 = vpop.f32.mrb[0].mxu0
  %v1423 = vadd.f32 0.0, %v1422
  %v1424 = vpop.f32.mrb[0].mxu0
  %v1425 = vadd.f32 0.0, %v1424
  %v1426 = vpop.f32.mrb[0].mxu0
  %v1427 = vadd.f32 0.0, %v1426
  %v1428 = vpop.f32.mrb[0].mxu0
  %v1429 = vadd.f32 0.0, %v1428
  %1430 = vdwg.mxu0
  %1431 = vmatprep.subr.bf16.mxu0 %v444
  %1432 = vmatpush1.bf16.msra.mxu0 %v441
  %1433 = vmatprep.subr.bf16.mxu0 0
  %1434 = vmatpush1.bf16.msra.mxu0 0
  %1435 = vmatprep.subr.bf16.mxu0 0
  %1436 = vmatpush1.bf16.msra.mxu0 0
  %1437 = vmatprep.subr.bf16.mxu0 0
  %1438 = vmatpush1.bf16.msra.mxu0 0
  %1439 = vmatprep.subr.bf16.mxu0 0
  %1440 = vmatpush1.bf16.msra.mxu0 0
  %1441 = vmatprep.subr.bf16.mxu0 0
  %1442 = vmatpush1.bf16.msra.mxu0 0
  %1443 = vmatprep.subr.bf16.mxu0 0
  %1444 = vmatpush1.bf16.msra.mxu0 0
  %1445 = vmatprep.subr.bf16.mxu0 0
  %1446 = vmatpush1.bf16.msra.mxu0 0
  %1447 = vmatprep.subr.bf16.mxu0 0
  %1448 = vmatpush1.bf16.msra.mxu0 0
  %1449 = vmatprep.subr.bf16.mxu0 0
  %1450 = vmatpush1.bf16.msra.mxu0 0
  %1451 = vmatprep.subr.bf16.mxu0 0
  %1452 = vmatpush1.bf16.msra.mxu0 0
  %1453 = vmatprep.subr.bf16.mxu0 0
  %1454 = vmatpush1.bf16.msra.mxu0 0
  %1455 = vmatprep.subr.bf16.mxu0 0
  %1456 = vmatpush1.bf16.msra.mxu0 0
  %1457 = vmatprep.subr.bf16.mxu0 0
  %1458 = vmatpush1.bf16.msra.mxu0 0
  %1459 = vmatprep.subr.bf16.mxu0 0
  %1460 = vmatpush1.bf16.msra.mxu0 0
  %1461 = vmatprep.subr.bf16.mxu0 0
  %1462 = vmatpush1.bf16.msra.mxu0 0
  %1463 = vmatprep.mubr.bf16.mxu0 0
  %1464 = vmatmul.mubr.bf16.gmra.mrb[0].mxu0 %v332
  %v1465 = vpop.f32.mrb[0].mxu0
  %v1466 = vadd.f32 0.0, %v1465
  %v1467 = vpop.f32.mrb[0].mxu0
  %v1468 = vadd.f32 0.0, %v1467
  %v1469 = vpop.f32.mrb[0].mxu0
  %v1470 = vadd.f32 0.0, %v1469
  %v1471 = vpop.f32.mrb[0].mxu0
  %v1472 = vadd.f32 0.0, %v1471
  %1473 = vmatprep.mubr.bf16.mxu0 0
  %1474 = vmatmul.mubr.bf16.gmra.mrb[0].mxu0 %v335
  %v1475 = vpop.f32.mrb[0].mxu0
  %v1476 = vadd.f32 0.0, %v1475
  %v1477 = vpop.f32.mrb[0].mxu0
  %v1478 = vadd.f32 0.0, %v1477
  %v1479 = vpop.f32.mrb[0].mxu0
  %v1480 = vadd.f32 0.0, %v1479
  %v1481 = vpop.f32.mrb[0].mxu0
  %v1482 = vadd.f32 0.0, %v1481
  %1483 = vdwg.mxu0
  %1484 = vmatprep.subr.bf16.mxu0 %v450
  %1485 = vmatpush1.bf16.msra.mxu0 %v447
  %1486 = vmatprep.subr.bf16.mxu0 0
  %1487 = vmatpush1.bf16.msra.mxu0 0
  %1488 = vmatprep.subr.bf16.mxu0 0
  %1489 = vmatpush1.bf16.msra.mxu0 0
  %1490 = vmatprep.subr.bf16.mxu0 0
  %1491 = vmatpush1.bf16.msra.mxu0 0
  %1492 = vmatprep.subr.bf16.mxu0 0
  %1493 = vmatpush1.bf16.msra.mxu0 0
  %1494 = vmatprep.subr.bf16.mxu0 0
  %1495 = vmatpush1.bf16.msra.mxu0 0
  %1496 = vmatprep.subr.bf16.mxu0 0
  %1497 = vmatpush1.bf16.msra.mxu0 0
  %1498 = vmatprep.subr.bf16.mxu0 0
  %1499 = vmatpush1.bf16.msra.mxu0 0
  %1500 = vmatprep.subr.bf16.mxu0 0
  %1501 = vmatpush1.bf16.msra.mxu0 0
  %1502 = vmatprep.subr.bf16.mxu0 0
  %1503 = vmatpush1.bf16.msra.mxu0 0
  %1504 = vmatprep.subr.bf16.mxu0 0
  %1505 = vmatpush1.bf16.msra.mxu0 0
  %1506 = vmatprep.subr.bf16.mxu0 0
  %1507 = vmatpush1.bf16.msra.mxu0 0
  %1508 = vmatprep.subr.bf16.mxu0 0
  %1509 = vmatpush1.bf16.msra.mxu0 0
  %1510 = vmatprep.subr.bf16.mxu0 0
  %1511 = vmatpush1.bf16.msra.mxu0 0
  %1512 = vmatprep.subr.bf16.mxu0 0
  %1513 = vmatpush1.bf16.msra.mxu0 0
  %1514 = vmatprep.subr.bf16.mxu0 0
  %1515 = vmatpush1.bf16.msra.mxu0 0
  %1516 = vmatprep.mubr.bf16.mxu0 0
  %1517 = vmatmul.mubr.bf16.gmra.mrb[0].mxu0 %v332
  %v1518 = vpop.f32.mrb[0].mxu0
  %v1519 = vadd.f32 0.0, %v1518
  %v1520 = vpop.f32.mrb[0].mxu0
  %v1521 = vadd.f32 0.0, %v1520
  %v1522 = vpop.f32.mrb[0].mxu0
  %v1523 = vadd.f32 0.0, %v1522
  %v1524 = vpop.f32.mrb[0].mxu0
  %v1525 = vadd.f32 0.0, %v1524
  %1526 = vmatprep.mubr.bf16.mxu0 0
  %1527 = vmatmul.mubr.bf16.gmra.mrb[0].mxu0 %v335
  %v1528 = vpop.f32.mrb[0].mxu0
  %v1529 = vadd.f32 0.0, %v1528
  %v1530 = vpop.f32.mrb[0].mxu0
  %v1531 = vadd.f32 0.0, %v1530
  %v1532 = vpop.f32.mrb[0].mxu0
  %v1533 = vadd.f32 0.0, %v1532
  %v1534 = vpop.f32.mrb[0].mxu0
  %v1535 = vadd.f32 0.0, %v1534
  %1536 = vdwg.mxu0
  %1537 = vmatprep.subr.bf16.mxu0 %v456
  %1538 = vmatpush1.bf16.msra.mxu0 %v453
  %1539 = vmatprep.subr.bf16.mxu0 0
  %1540 = vmatpush1.bf16.msra.mxu0 0
  %1541 = vmatprep.subr.bf16.mxu0 0
  %1542 = vmatpush1.bf16.msra.mxu0 0
  %1543 = vmatprep.subr.bf16.mxu0 0
  %1544 = vmatpush1.bf16.msra.mxu0 0
  %1545 = vmatprep.subr.bf16.mxu0 0
  %1546 = vmatpush1.bf16.msra.mxu0 0
  %1547 = vmatprep.subr.bf16.mxu0 0
  %1548 = vmatpush1.bf16.msra.mxu0 0
  %1549 = vmatprep.subr.bf16.mxu0 0
  %1550 = vmatpush1.bf16.msra.mxu0 0
  %1551 = vmatprep.subr.bf16.mxu0 0
  %1552 = vmatpush1.bf16.msra.mxu0 0
  %1553 = vmatprep.subr.bf16.mxu0 0
  %1554 = vmatpush1.bf16.msra.mxu0 0
  %1555 = vmatprep.subr.bf16.mxu0 0
  %1556 = vmatpush1.bf16.msra.mxu0 0
  %1557 = vmatprep.subr.bf16.mxu0 0
  %1558 = vmatpush1.bf16.msra.mxu0 0
  %1559 = vmatprep.subr.bf16.mxu0 0
  %1560 = vmatpush1.bf16.msra.mxu0 0
  %1561 = vmatprep.subr.bf16.mxu0 0
  %1562 = vmatpush1.bf16.msra.mxu0 0
  %1563 = vmatprep.subr.bf16.mxu0 0
  %1564 = vmatpush1.bf16.msra.mxu0 0
  %1565 = vmatprep.subr.bf16.mxu0 0
  %1566 = vmatpush1.bf16.msra.mxu0 0
  %1567 = vmatprep.subr.bf16.mxu0 0
  %1568 = vmatpush1.bf16.msra.mxu0 0
  %1569 = vmatprep.mubr.bf16.mxu0 0
  %1570 = vmatmul.mubr.bf16.gmra.mrb[0].mxu0 %v332
  %v1571 = vpop.f32.mrb[0].mxu0
  %v1572 = vadd.f32 0.0, %v1571
  %v1573 = vpop.f32.mrb[0].mxu0
  %v1574 = vadd.f32 0.0, %v1573
  %v1575 = vpop.f32.mrb[0].mxu0
  %v1576 = vadd.f32 0.0, %v1575
  %v1577 = vpop.f32.mrb[0].mxu0
  %v1578 = vadd.f32 0.0, %v1577
  %1579 = vmatprep.mubr.bf16.mxu0 0
  %1580 = vmatmul.mubr.bf16.gmra.mrb[0].mxu0 %v335
  %v1581 = vpop.f32.mrb[0].mxu0
  %v1582 = vadd.f32 0.0, %v1581
  %v1583 = vpop.f32.mrb[0].mxu0
  %v1584 = vadd.f32 0.0, %v1583
  %v1585 = vpop.f32.mrb[0].mxu0
  %v1586 = vadd.f32 0.0, %v1585
  %v1587 = vpop.f32.mrb[0].mxu0
  %v1588 = vadd.f32 0.0, %v1587
  %1589 = vdwg.mxu0
  %1590 = vmatprep.subr.bf16.mxu0 %v462
  %1591 = vmatpush1.bf16.msra.mxu0 %v459
  %1592 = vmatprep.subr.bf16.mxu0 0
  %1593 = vmatpush1.bf16.msra.mxu0 0
  %1594 = vmatprep.subr.bf16.mxu0 0
  %1595 = vmatpush1.bf16.msra.mxu0 0
  %1596 = vmatprep.subr.bf16.mxu0 0
  %1597 = vmatpush1.bf16.msra.mxu0 0
  %1598 = vmatprep.subr.bf16.mxu0 0
  %1599 = vmatpush1.bf16.msra.mxu0 0
  %1600 = vmatprep.subr.bf16.mxu0 0
  %1601 = vmatpush1.bf16.msra.mxu0 0
  %1602 = vmatprep.subr.bf16.mxu0 0
  %1603 = vmatpush1.bf16.msra.mxu0 0
  %1604 = vmatprep.subr.bf16.mxu0 0
  %1605 = vmatpush1.bf16.msra.mxu0 0
  %1606 = vmatprep.subr.bf16.mxu0 0
  %1607 = vmatpush1.bf16.msra.mxu0 0
  %1608 = vmatprep.subr.bf16.mxu0 0
  %1609 = vmatpush1.bf16.msra.mxu0 0
  %1610 = vmatprep.subr.bf16.mxu0 0
  %1611 = vmatpush1.bf16.msra.mxu0 0
  %1612 = vmatprep.subr.bf16.mxu0 0
  %1613 = vmatpush1.bf16.msra.mxu0 0
  %1614 = vmatprep.subr.bf16.mxu0 0
  %1615 = vmatpush1.bf16.msra.mxu0 0
  %1616 = vmatprep.subr.bf16.mxu0 0
  %1617 = vmatpush1.bf16.msra.mxu0 0
  %1618 = vmatprep.subr.bf16.mxu0 0
  %1619 = vmatpush1.bf16.msra.mxu0 0
  %1620 = vmatprep.subr.bf16.mxu0 0
  %1621 = vmatpush1.bf16.msra.mxu0 0
  %1622 = vmatprep.mubr.bf16.mxu0 0
  %1623 = vmatmul.mubr.bf16.gmra.mrb[0].mxu0 %v332
  %v1624 = vpop.f32.mrb[0].mxu0
  %v1625 = vadd.f32 0.0, %v1624
  %v1626 = vpop.f32.mrb[0].mxu0
  %v1627 = vadd.f32 0.0, %v1626
  %v1628 = vpop.f32.mrb[0].mxu0
  %v1629 = vadd.f32 0.0, %v1628
  %v1630 = vpop.f32.mrb[0].mxu0
  %v1631 = vadd.f32 0.0, %v1630
  %1632 = vmatprep.mubr.bf16.mxu0 0
  %1633 = vmatmul.mubr.bf16.gmra.mrb[0].mxu0 %v335
  %v1634 = vpop.f32.mrb[0].mxu0
  %v1635 = vadd.f32 0.0, %v1634
  %v1636 = vpop.f32.mrb[0].mxu0
  %v1637 = vadd.f32 0.0, %v1636
  %v1638 = vpop.f32.mrb[0].mxu0
  %v1639 = vadd.f32 0.0, %v1638
  %v1640 = vpop.f32.mrb[0].mxu0
  %v1641 = vadd.f32 0.0, %v1640
  %1642 = vdwg.mxu0
  %1643 = vmatprep.subr.bf16.mxu0 %v468
  %1644 = vmatpush1.bf16.msra.mxu0 %v465
  %1645 = vmatprep.subr.bf16.mxu0 0
  %1646 = vmatpush1.bf16.msra.mxu0 0
  %1647 = vmatprep.subr.bf16.mxu0 0
  %1648 = vmatpush1.bf16.msra.mxu0 0
  %1649 = vmatprep.subr.bf16.mxu0 0
  %1650 = vmatpush1.bf16.msra.mxu0 0
  %1651 = vmatprep.subr.bf16.mxu0 0
  %1652 = vmatpush1.bf16.msra.mxu0 0
  %1653 = vmatprep.subr.bf16.mxu0 0
  %1654 = vmatpush1.bf16.msra.mxu0 0
  %1655 = vmatprep.subr.bf16.mxu0 0
  %1656 = vmatpush1.bf16.msra.mxu0 0
  %1657 = vmatprep.subr.bf16.mxu0 0
  %1658 = vmatpush1.bf16.msra.mxu0 0
  %1659 = vmatprep.subr.bf16.mxu0 0
  %1660 = vmatpush1.bf16.msra.mxu0 0
  %1661 = vmatprep.subr.bf16.mxu0 0
  %1662 = vmatpush1.bf16.msra.mxu0 0
  %1663 = vmatprep.subr.bf16.mxu0 0
  %1664 = vmatpush1.bf16.msra.mxu0 0
  %1665 = vmatprep.subr.bf16.mxu0 0
  %1666 = vmatpush1.bf16.msra.mxu0 0
  %1667 = vmatprep.subr.bf16.mxu0 0
  %1668 = vmatpush1.bf16.msra.mxu0 0
  %1669 = vmatprep.subr.bf16.mxu0 0
  %1670 = vmatpush1.bf16.msra.mxu0 0
  %1671 = vmatprep.subr.bf16.mxu0 0
  %1672 = vmatpush1.bf16.msra.mxu0 0
  %1673 = vmatprep.subr.bf16.mxu0 0
  %1674 = vmatpush1.bf16.msra.mxu0 0
  %1675 = vmatprep.mubr.bf16.mxu0 0
  %1676 = vmatmul.mubr.bf16.gmra.mrb[0].mxu0 %v332
  %v1677 = vpop.f32.mrb[0].mxu0
  %v1678 = vadd.f32 0.0, %v1677
  %v1679 = vpop.f32.mrb[0].mxu0
  %v1680 = vadd.f32 0.0, %v1679
  %v1681 = vpop.f32.mrb[0].mxu0
  %v1682 = vadd.f32 0.0, %v1681
  %v1683 = vpop.f32.mrb[0].mxu0
  %v1684 = vadd.f32 0.0, %v1683
  %1685 = vmatprep.mubr.bf16.mxu0 0
  %1686 = vmatmul.mubr.bf16.gmra.mrb[0].mxu0 %v335
  %v1687 = vpop.f32.mrb[0].mxu0
  %v1688 = vadd.f32 0.0, %v1687
  %v1689 = vpop.f32.mrb[0].mxu0
  %v1690 = vadd.f32 0.0, %v1689
  %v1691 = vpop.f32.mrb[0].mxu0
  %v1692 = vadd.f32 0.0, %v1691
  %v1693 = vpop.f32.mrb[0].mxu0
  %v1694 = vadd.f32 0.0, %v1693
  %1695 = vdwg.mxu0
  %1696 = vmatprep.subr.bf16.mxu0 %v474
  %1697 = vmatpush1.bf16.msra.mxu0 %v471
  %1698 = vmatprep.subr.bf16.mxu0 0
  %1699 = vmatpush1.bf16.msra.mxu0 0
  %1700 = vmatprep.subr.bf16.mxu0 0
  %1701 = vmatpush1.bf16.msra.mxu0 0
  %1702 = vmatprep.subr.bf16.mxu0 0
  %1703 = vmatpush1.bf16.msra.mxu0 0
  %1704 = vmatprep.subr.bf16.mxu0 0
  %1705 = vmatpush1.bf16.msra.mxu0 0
  %1706 = vmatprep.subr.bf16.mxu0 0
  %1707 = vmatpush1.bf16.msra.mxu0 0
  %1708 = vmatprep.subr.bf16.mxu0 0
  %1709 = vmatpush1.bf16.msra.mxu0 0
  %1710 = vmatprep.subr.bf16.mxu0 0
  %1711 = vmatpush1.bf16.msra.mxu0 0
  %1712 = vmatprep.subr.bf16.mxu0 0
  %1713 = vmatpush1.bf16.msra.mxu0 0
  %1714 = vmatprep.subr.bf16.mxu0 0
  %1715 = vmatpush1.bf16.msra.mxu0 0
  %1716 = vmatprep.subr.bf16.mxu0 0
  %1717 = vmatpush1.bf16.msra.mxu0 0
  %1718 = vmatprep.subr.bf16.mxu0 0
  %1719 = vmatpush1.bf16.msra.mxu0 0
  %1720 = vmatprep.subr.bf16.mxu0 0
  %1721 = vmatpush1.bf16.msra.mxu0 0
  %1722 = vmatprep.subr.bf16.mxu0 0
  %1723 = vmatpush1.bf16.msra.mxu0 0
  %1724 = vmatprep.subr.bf16.mxu0 0
  %1725 = vmatpush1.bf16.msra.mxu0 0
  %1726 = vmatprep.subr.bf16.mxu0 0
  %1727 = vmatpush1.bf16.msra.mxu0 0
  %1728 = vmatprep.mubr.bf16.mxu0 0
  %1729 = vmatmul.mubr.bf16.gmra.mrb[0].mxu0 %v332
  %v1730 = vpop.f32.mrb[0].mxu0
  %v1731 = vadd.f32 0.0, %v1730
  %v1732 = vpop.f32.mrb[0].mxu0
  %v1733 = vadd.f32 0.0, %v1732
  %v1734 = vpop.f32.mrb[0].mxu0
  %v1735 = vadd.f32 0.0, %v1734
  %v1736 = vpop.f32.mrb[0].mxu0
  %v1737 = vadd.f32 0.0, %v1736
  %1738 = vmatprep.mubr.bf16.mxu0 0
  %1739 = vmatmul.mubr.bf16.gmra.mrb[0].mxu0 %v335
  %v1740 = vpop.f32.mrb[0].mxu0
  %v1741 = vadd.f32 0.0, %v1740
  %v1742 = vpop.f32.mrb[0].mxu0
  %v1743 = vadd.f32 0.0, %v1742
  %v1744 = vpop.f32.mrb[0].mxu0
  %v1745 = vadd.f32 0.0, %v1744
  %v1746 = vpop.f32.mrb[0].mxu0
  %v1747 = vadd.f32 0.0, %v1746
  %1748 = vdwg.mxu0
  %1749 = vmatprep.subr.bf16.mxu0 %v480
  %1750 = vmatpush1.bf16.msra.mxu0 %v477
  %1751 = vmatprep.subr.bf16.mxu0 0
  %1752 = vmatpush1.bf16.msra.mxu0 0
  %1753 = vmatprep.subr.bf16.mxu0 0
  %1754 = vmatpush1.bf16.msra.mxu0 0
  %1755 = vmatprep.subr.bf16.mxu0 0
  %1756 = vmatpush1.bf16.msra.mxu0 0
  %1757 = vmatprep.subr.bf16.mxu0 0
  %1758 = vmatpush1.bf16.msra.mxu0 0
  %1759 = vmatprep.subr.bf16.mxu0 0
  %1760 = vmatpush1.bf16.msra.mxu0 0
  %1761 = vmatprep.subr.bf16.mxu0 0
  %1762 = vmatpush1.bf16.msra.mxu0 0
  %1763 = vmatprep.subr.bf16.mxu0 0
  %1764 = vmatpush1.bf16.msra.mxu0 0
  %1765 = vmatprep.subr.bf16.mxu0 0
  %1766 = vmatpush1.bf16.msra.mxu0 0
  %1767 = vmatprep.subr.bf16.mxu0 0
  %1768 = vmatpush1.bf16.msra.mxu0 0
  %1769 = vmatprep.subr.bf16.mxu0 0
  %1770 = vmatpush1.bf16.msra.mxu0 0
  %1771 = vmatprep.subr.bf16.mxu0 0
  %1772 = vmatpush1.bf16.msra.mxu0 0
  %1773 = vmatprep.subr.bf16.mxu0 0
  %1774 = vmatpush1.bf16.msra.mxu0 0
  %1775 = vmatprep.subr.bf16.mxu0 0
  %1776 = vmatpush1.bf16.msra.mxu0 0
  %1777 = vmatprep.subr.bf16.mxu0 0
  %1778 = vmatpush1.bf16.msra.mxu0 0
  %1779 = vmatprep.subr.bf16.mxu0 0
  %1780 = vmatpush1.bf16.msra.mxu0 0
  %1781 = vmatprep.mubr.bf16.mxu0 0
  %1782 = vmatmul.mubr.bf16.gmra.mrb[0].mxu0 %v332
  %v1783 = vpop.f32.mrb[0].mxu0
  %v1784 = vadd.f32 0.0, %v1783
  %v1785 = vpop.f32.mrb[0].mxu0
  %v1786 = vadd.f32 0.0, %v1785
  %v1787 = vpop.f32.mrb[0].mxu0
  %v1788 = vadd.f32 0.0, %v1787
  %v1789 = vpop.f32.mrb[0].mxu0
  %v1790 = vadd.f32 0.0, %v1789
  %1791 = vmatprep.mubr.bf16.mxu0 0
  %1792 = vmatmul.mubr.bf16.gmra.mrb[0].mxu0 %v335
  %v1793 = vpop.f32.mrb[0].mxu0
  %v1794 = vadd.f32 0.0, %v1793
  %v1795 = vpop.f32.mrb[0].mxu0
  %v1796 = vadd.f32 0.0, %v1795
  %v1797 = vpop.f32.mrb[0].mxu0
  %v1798 = vadd.f32 0.0, %v1797
  %v1799 = vpop.f32.mrb[0].mxu0
  %v1800 = vadd.f32 0.0, %v1799
  %1801 = vdwg.mxu0
  %1802 = vmatprep.subr.bf16.mxu0 %v486
  %1803 = vmatpush1.bf16.msra.mxu0 %v483
  %1804 = vmatprep.subr.bf16.mxu0 0
  %1805 = vmatpush1.bf16.msra.mxu0 0
  %1806 = vmatprep.subr.bf16.mxu0 0
  %1807 = vmatpush1.bf16.msra.mxu0 0
  %1808 = vmatprep.subr.bf16.mxu0 0
  %1809 = vmatpush1.bf16.msra.mxu0 0
  %1810 = vmatprep.subr.bf16.mxu0 0
  %1811 = vmatpush1.bf16.msra.mxu0 0
  %1812 = vmatprep.subr.bf16.mxu0 0
  %1813 = vmatpush1.bf16.msra.mxu0 0
  %1814 = vmatprep.subr.bf16.mxu0 0
  %1815 = vmatpush1.bf16.msra.mxu0 0
  %1816 = vmatprep.subr.bf16.mxu0 0
  %1817 = vmatpush1.bf16.msra.mxu0 0
  %1818 = vmatprep.subr.bf16.mxu0 0
  %1819 = vmatpush1.bf16.msra.mxu0 0
  %1820 = vmatprep.subr.bf16.mxu0 0
  %1821 = vmatpush1.bf16.msra.mxu0 0
  %1822 = vmatprep.subr.bf16.mxu0 0
  %1823 = vmatpush1.bf16.msra.mxu0 0
  %1824 = vmatprep.subr.bf16.mxu0 0
  %1825 = vmatpush1.bf16.msra.mxu0 0
  %1826 = vmatprep.subr.bf16.mxu0 0
  %1827 = vmatpush1.bf16.msra.mxu0 0
  %1828 = vmatprep.subr.bf16.mxu0 0
  %1829 = vmatpush1.bf16.msra.mxu0 0
  %1830 = vmatprep.subr.bf16.mxu0 0
  %1831 = vmatpush1.bf16.msra.mxu0 0
  %1832 = vmatprep.subr.bf16.mxu0 0
  %1833 = vmatpush1.bf16.msra.mxu0 0
  %1834 = vmatprep.mubr.bf16.mxu0 0
  %1835 = vmatmul.mubr.bf16.gmra.mrb[0].mxu0 %v332
  %v1836 = vpop.f32.mrb[0].mxu0
  %v1837 = vadd.f32 0.0, %v1836
  %v1838 = vpop.f32.mrb[0].mxu0
  %v1839 = vadd.f32 0.0, %v1838
  %v1840 = vpop.f32.mrb[0].mxu0
  %v1841 = vadd.f32 0.0, %v1840
  %v1842 = vpop.f32.mrb[0].mxu0
  %v1843 = vadd.f32 0.0, %v1842
  %1844 = vmatprep.mubr.bf16.mxu0 0
  %1845 = vmatmul.mubr.bf16.gmra.mrb[0].mxu0 %v335
  %v1846 = vpop.f32.mrb[0].mxu0
  %v1847 = vadd.f32 0.0, %v1846
  %v1848 = vpop.f32.mrb[0].mxu0
  %v1849 = vadd.f32 0.0, %v1848
  %v1850 = vpop.f32.mrb[0].mxu0
  %v1851 = vadd.f32 0.0, %v1850
  %v1852 = vpop.f32.mrb[0].mxu0
  %v1853 = vadd.f32 0.0, %v1852
  %1854 = vdwg.mxu0
  %1855 = vmatprep.subr.bf16.mxu0 %v492
  %1856 = vmatpush1.bf16.msra.mxu0 %v489
  %1857 = vmatprep.subr.bf16.mxu0 0
  %1858 = vmatpush1.bf16.msra.mxu0 0
  %1859 = vmatprep.subr.bf16.mxu0 0
  %1860 = vmatpush1.bf16.msra.mxu0 0
  %1861 = vmatprep.subr.bf16.mxu0 0
  %1862 = vmatpush1.bf16.msra.mxu0 0
  %1863 = vmatprep.subr.bf16.mxu0 0
  %1864 = vmatpush1.bf16.msra.mxu0 0
  %1865 = vmatprep.subr.bf16.mxu0 0
  %1866 = vmatpush1.bf16.msra.mxu0 0
  %1867 = vmatprep.subr.bf16.mxu0 0
  %1868 = vmatpush1.bf16.msra.mxu0 0
  %1869 = vmatprep.subr.bf16.mxu0 0
  %1870 = vmatpush1.bf16.msra.mxu0 0
  %1871 = vmatprep.subr.bf16.mxu0 0
  %1872 = vmatpush1.bf16.msra.mxu0 0
  %1873 = vmatprep.subr.bf16.mxu0 0
  %1874 = vmatpush1.bf16.msra.mxu0 0
  %1875 = vmatprep.subr.bf16.mxu0 0
  %1876 = vmatpush1.bf16.msra.mxu0 0
  %1877 = vmatprep.subr.bf16.mxu0 0
  %1878 = vmatpush1.bf16.msra.mxu0 0
  %1879 = vmatprep.subr.bf16.mxu0 0
  %1880 = vmatpush1.bf16.msra.mxu0 0
  %1881 = vmatprep.subr.bf16.mxu0 0
  %1882 = vmatpush1.bf16.msra.mxu0 0
  %1883 = vmatprep.subr.bf16.mxu0 0
  %1884 = vmatpush1.bf16.msra.mxu0 0
  %1885 = vmatprep.subr.bf16.mxu0 0
  %1886 = vmatpush1.bf16.msra.mxu0 0
  %1887 = vmatprep.mubr.bf16.mxu0 0
  %1888 = vmatmul.mubr.bf16.gmra.mrb[0].mxu0 %v332
  %v1889 = vpop.f32.mrb[0].mxu0
  %v1890 = vadd.f32 0.0, %v1889
  %v1891 = vpop.f32.mrb[0].mxu0
  %v1892 = vadd.f32 0.0, %v1891
  %v1893 = vpop.f32.mrb[0].mxu0
  %v1894 = vadd.f32 0.0, %v1893
  %v1895 = vpop.f32.mrb[0].mxu0
  %v1896 = vadd.f32 0.0, %v1895
  %1897 = vmatprep.mubr.bf16.mxu0 0
  %1898 = vmatmul.mubr.bf16.gmra.mrb[0].mxu0 %v335
  %v1899 = vpop.f32.mrb[0].mxu0
  %v1900 = vadd.f32 0.0, %v1899
  %v1901 = vpop.f32.mrb[0].mxu0
  %v1902 = vadd.f32 0.0, %v1901
  %v1903 = vpop.f32.mrb[0].mxu0
  %v1904 = vadd.f32 0.0, %v1903
  %v1905 = vpop.f32.mrb[0].mxu0
  %v1906 = vadd.f32 0.0, %v1905
  %1907 = vdwg.mxu0
  %1908 = vmatprep.subr.bf16.mxu0 %v498
  %1909 = vmatpush1.bf16.msra.mxu0 %v495
  %1910 = vmatprep.subr.bf16.mxu0 0
  %1911 = vmatpush1.bf16.msra.mxu0 0
  %1912 = vmatprep.subr.bf16.mxu0 0
  %1913 = vmatpush1.bf16.msra.mxu0 0
  %1914 = vmatprep.subr.bf16.mxu0 0
  %1915 = vmatpush1.bf16.msra.mxu0 0
  %1916 = vmatprep.subr.bf16.mxu0 0
  %1917 = vmatpush1.bf16.msra.mxu0 0
  %1918 = vmatprep.subr.bf16.mxu0 0
  %1919 = vmatpush1.bf16.msra.mxu0 0
  %1920 = vmatprep.subr.bf16.mxu0 0
  %1921 = vmatpush1.bf16.msra.mxu0 0
  %1922 = vmatprep.subr.bf16.mxu0 0
  %1923 = vmatpush1.bf16.msra.mxu0 0
  %1924 = vmatprep.subr.bf16.mxu0 0
  %1925 = vmatpush1.bf16.msra.mxu0 0
  %1926 = vmatprep.subr.bf16.mxu0 0
  %1927 = vmatpush1.bf16.msra.mxu0 0
  %1928 = vmatprep.subr.bf16.mxu0 0
  %1929 = vmatpush1.bf16.msra.mxu0 0
  %1930 = vmatprep.subr.bf16.mxu0 0
  %1931 = vmatpush1.bf16.msra.mxu0 0
  %1932 = vmatprep.subr.bf16.mxu0 0
  %1933 = vmatpush1.bf16.msra.mxu0 0
  %1934 = vmatprep.subr.bf16.mxu0 0
  %1935 = vmatpush1.bf16.msra.mxu0 0
  %1936 = vmatprep.subr.bf16.mxu0 0
  %1937 = vmatpush1.bf16.msra.mxu0 0
  %1938 = vmatprep.subr.bf16.mxu0 0
  %1939 = vmatpush1.bf16.msra.mxu0 0
  %1940 = vmatprep.mubr.bf16.mxu0 0
  %1941 = vmatmul.mubr.bf16.gmra.mrb[0].mxu0 %v332
  %v1942 = vpop.f32.mrb[0].mxu0
  %v1943 = vadd.f32 0.0, %v1942
  %v1944 = vpop.f32.mrb[0].mxu0
  %v1945 = vadd.f32 0.0, %v1944
  %v1946 = vpop.f32.mrb[0].mxu0
  %v1947 = vadd.f32 0.0, %v1946
  %v1948 = vpop.f32.mrb[0].mxu0
  %v1949 = vadd.f32 0.0, %v1948
  %1950 = vmatprep.mubr.bf16.mxu0 0
  %1951 = vmatmul.mubr.bf16.gmra.mrb[0].mxu0 %v335
  %v1952 = vpop.f32.mrb[0].mxu0
  %v1953 = vadd.f32 0.0, %v1952
  %v1954 = vpop.f32.mrb[0].mxu0
  %v1955 = vadd.f32 0.0, %v1954
  %v1956 = vpop.f32.mrb[0].mxu0
  %v1957 = vadd.f32 0.0, %v1956
  %v1958 = vpop.f32.mrb[0].mxu0
  %v1959 = vadd.f32 0.0, %v1958
  %1960 = vdwg.mxu0
  %1961 = vmatprep.subr.bf16.mxu0 %v504
  %1962 = vmatpush1.bf16.msra.mxu0 %v501
  %1963 = vmatprep.subr.bf16.mxu0 0
  %1964 = vmatpush1.bf16.msra.mxu0 0
  %1965 = vmatprep.subr.bf16.mxu0 0
  %1966 = vmatpush1.bf16.msra.mxu0 0
  %1967 = vmatprep.subr.bf16.mxu0 0
  %1968 = vmatpush1.bf16.msra.mxu0 0
  %1969 = vmatprep.subr.bf16.mxu0 0
  %1970 = vmatpush1.bf16.msra.mxu0 0
  %1971 = vmatprep.subr.bf16.mxu0 0
  %1972 = vmatpush1.bf16.msra.mxu0 0
  %1973 = vmatprep.subr.bf16.mxu0 0
  %1974 = vmatpush1.bf16.msra.mxu0 0
  %1975 = vmatprep.subr.bf16.mxu0 0
  %1976 = vmatpush1.bf16.msra.mxu0 0
  %1977 = vmatprep.subr.bf16.mxu0 0
  %1978 = vmatpush1.bf16.msra.mxu0 0
  %1979 = vmatprep.subr.bf16.mxu0 0
  %1980 = vmatpush1.bf16.msra.mxu0 0
  %1981 = vmatprep.subr.bf16.mxu0 0
  %1982 = vmatpush1.bf16.msra.mxu0 0
  %1983 = vmatprep.subr.bf16.mxu0 0
  %1984 = vmatpush1.bf16.msra.mxu0 0
  %1985 = vmatprep.subr.bf16.mxu0 0
  %1986 = vmatpush1.bf16.msra.mxu0 0
  %1987 = vmatprep.subr.bf16.mxu0 0
  %1988 = vmatpush1.bf16.msra.mxu0 0
  %1989 = vmatprep.subr.bf16.mxu0 0
  %1990 = vmatpush1.bf16.msra.mxu0 0
  %1991 = vmatprep.subr.bf16.mxu0 0
  %1992 = vmatpush1.bf16.msra.mxu0 0
  %1993 = vmatprep.mubr.bf16.mxu0 0
  %1994 = vmatmul.mubr.bf16.gmra.mrb[0].mxu0 %v332
  %v1995 = vpop.f32.mrb[0].mxu0
  %v1996 = vadd.f32 0.0, %v1995
  %v1997 = vpop.f32.mrb[0].mxu0
  %v1998 = vadd.f32 0.0, %v1997
  %v1999 = vpop.f32.mrb[0].mxu0
  %v2000 = vadd.f32 0.0, %v1999
  %v2001 = vpop.f32.mrb[0].mxu0
  %v2002 = vadd.f32 0.0, %v2001
  %2003 = vmatprep.mubr.bf16.mxu0 0
  %2004 = vmatmul.mubr.bf16.gmra.mrb[0].mxu0 %v335
  %v2005 = vpop.f32.mrb[0].mxu0
  %v2006 = vadd.f32 0.0, %v2005
  %v2007 = vpop.f32.mrb[0].mxu0
  %v2008 = vadd.f32 0.0, %v2007
  %v2009 = vpop.f32.mrb[0].mxu0
  %v2010 = vadd.f32 0.0, %v2009
  %v2011 = vpop.f32.mrb[0].mxu0
  %v2012 = vadd.f32 0.0, %v2011
  %2013 = vdwg.mxu0
  %2014 = vmatprep.subr.bf16.mxu0 %v510
  %2015 = vmatpush1.bf16.msra.mxu0 %v507
  %2016 = vmatprep.subr.bf16.mxu0 0
  %2017 = vmatpush1.bf16.msra.mxu0 0
  %2018 = vmatprep.subr.bf16.mxu0 0
  %2019 = vmatpush1.bf16.msra.mxu0 0
  %2020 = vmatprep.subr.bf16.mxu0 0
  %2021 = vmatpush1.bf16.msra.mxu0 0
  %2022 = vmatprep.subr.bf16.mxu0 0
  %2023 = vmatpush1.bf16.msra.mxu0 0
  %2024 = vmatprep.subr.bf16.mxu0 0
  %2025 = vmatpush1.bf16.msra.mxu0 0
  %2026 = vmatprep.subr.bf16.mxu0 0
  %2027 = vmatpush1.bf16.msra.mxu0 0
  %2028 = vmatprep.subr.bf16.mxu0 0
  %2029 = vmatpush1.bf16.msra.mxu0 0
  %2030 = vmatprep.subr.bf16.mxu0 0
  %2031 = vmatpush1.bf16.msra.mxu0 0
  %2032 = vmatprep.subr.bf16.mxu0 0
  %2033 = vmatpush1.bf16.msra.mxu0 0
  %2034 = vmatprep.subr.bf16.mxu0 0
  %2035 = vmatpush1.bf16.msra.mxu0 0
  %2036 = vmatprep.subr.bf16.mxu0 0
  %2037 = vmatpush1.bf16.msra.mxu0 0
  %2038 = vmatprep.subr.bf16.mxu0 0
  %2039 = vmatpush1.bf16.msra.mxu0 0
  %2040 = vmatprep.subr.bf16.mxu0 0
  %2041 = vmatpush1.bf16.msra.mxu0 0
  %2042 = vmatprep.subr.bf16.mxu0 0
  %2043 = vmatpush1.bf16.msra.mxu0 0
  %2044 = vmatprep.subr.bf16.mxu0 0
  %2045 = vmatpush1.bf16.msra.mxu0 0
  %2046 = vmatprep.mubr.bf16.mxu0 0
  %2047 = vmatmul.mubr.bf16.gmra.mrb[0].mxu0 %v332
  %v2048 = vpop.f32.mrb[0].mxu0
  %v2049 = vadd.f32 0.0, %v2048
  %v2050 = vpop.f32.mrb[0].mxu0
  %v2051 = vadd.f32 0.0, %v2050
  %v2052 = vpop.f32.mrb[0].mxu0
  %v2053 = vadd.f32 0.0, %v2052
  %v2054 = vpop.f32.mrb[0].mxu0
  %v2055 = vadd.f32 0.0, %v2054
  %2056 = vmatprep.mubr.bf16.mxu0 0
  %2057 = vmatmul.mubr.bf16.gmra.mrb[0].mxu0 %v335
  %v2058 = vpop.f32.mrb[0].mxu0
  %v2059 = vadd.f32 0.0, %v2058
  %v2060 = vpop.f32.mrb[0].mxu0
  %v2061 = vadd.f32 0.0, %v2060
  %v2062 = vpop.f32.mrb[0].mxu0
  %v2063 = vadd.f32 0.0, %v2062
  %v2064 = vpop.f32.mrb[0].mxu0
  %v2065 = vadd.f32 0.0, %v2064
  %2066 = vdwg.mxu0
  %2067 = vmatprep.subr.bf16.mxu0 %v516
  %2068 = vmatpush1.bf16.msra.mxu0 %v513
  %2069 = vmatprep.subr.bf16.mxu0 0
  %2070 = vmatpush1.bf16.msra.mxu0 0
  %2071 = vmatprep.subr.bf16.mxu0 0
  %2072 = vmatpush1.bf16.msra.mxu0 0
  %2073 = vmatprep.subr.bf16.mxu0 0
  %2074 = vmatpush1.bf16.msra.mxu0 0
  %2075 = vmatprep.subr.bf16.mxu0 0
  %2076 = vmatpush1.bf16.msra.mxu0 0
  %2077 = vmatprep.subr.bf16.mxu0 0
  %2078 = vmatpush1.bf16.msra.mxu0 0
  %2079 = vmatprep.subr.bf16.mxu0 0
  %2080 = vmatpush1.bf16.msra.mxu0 0
  %2081 = vmatprep.subr.bf16.mxu0 0
  %2082 = vmatpush1.bf16.msra.mxu0 0
  %2083 = vmatprep.subr.bf16.mxu0 0
  %2084 = vmatpush1.bf16.msra.mxu0 0
  %2085 = vmatprep.subr.bf16.mxu0 0
  %2086 = vmatpush1.bf16.msra.mxu0 0
  %2087 = vmatprep.subr.bf16.mxu0 0
  %2088 = vmatpush1.bf16.msra.mxu0 0
  %2089 = vmatprep.subr.bf16.mxu0 0
  %2090 = vmatpush1.bf16.msra.mxu0 0
  %2091 = vmatprep.subr.bf16.mxu0 0
  %2092 = vmatpush1.bf16.msra.mxu0 0
  %2093 = vmatprep.subr.bf16.mxu0 0
  %2094 = vmatpush1.bf16.msra.mxu0 0
  %2095 = vmatprep.subr.bf16.mxu0 0
  %2096 = vmatpush1.bf16.msra.mxu0 0
  %2097 = vmatprep.subr.bf16.mxu0 0
  %2098 = vmatpush1.bf16.msra.mxu0 0
  %2099 = vmatprep.mubr.bf16.mxu0 0
  %2100 = vmatmul.mubr.bf16.gmra.mrb[0].mxu0 %v332
  %v2101 = vpop.f32.mrb[0].mxu0
  %v2102 = vadd.f32 0.0, %v2101
  %v2103 = vpop.f32.mrb[0].mxu0
  %v2104 = vadd.f32 0.0, %v2103
  %v2105 = vpop.f32.mrb[0].mxu0
  %v2106 = vadd.f32 0.0, %v2105
  %v2107 = vpop.f32.mrb[0].mxu0
  %v2108 = vadd.f32 0.0, %v2107
  %2109 = vmatprep.mubr.bf16.mxu0 0
  %2110 = vmatmul.mubr.bf16.gmra.mrb[0].mxu0 %v335
  %v2111 = vpop.f32.mrb[0].mxu0
  %v2112 = vadd.f32 0.0, %v2111
  %v2113 = vpop.f32.mrb[0].mxu0
  %v2114 = vadd.f32 0.0, %v2113
  %v2115 = vpop.f32.mrb[0].mxu0
  %v2116 = vadd.f32 0.0, %v2115
  %v2117 = vpop.f32.mrb[0].mxu0
  %v2118 = vadd.f32 0.0, %v2117
  %2119 = vdwg.mxu0
  %2120 = vmatprep.subr.bf16.mxu0 %v522
  %2121 = vmatpush1.bf16.msra.mxu0 %v519
  %2122 = vmatprep.subr.bf16.mxu0 0
  %2123 = vmatpush1.bf16.msra.mxu0 0
  %2124 = vmatprep.subr.bf16.mxu0 0
  %2125 = vmatpush1.bf16.msra.mxu0 0
  %2126 = vmatprep.subr.bf16.mxu0 0
  %2127 = vmatpush1.bf16.msra.mxu0 0
  %2128 = vmatprep.subr.bf16.mxu0 0
  %2129 = vmatpush1.bf16.msra.mxu0 0
  %2130 = vmatprep.subr.bf16.mxu0 0
  %2131 = vmatpush1.bf16.msra.mxu0 0
  %2132 = vmatprep.subr.bf16.mxu0 0
  %2133 = vmatpush1.bf16.msra.mxu0 0
  %2134 = vmatprep.subr.bf16.mxu0 0
  %2135 = vmatpush1.bf16.msra.mxu0 0
  %2136 = vmatprep.subr.bf16.mxu0 0
  %2137 = vmatpush1.bf16.msra.mxu0 0
  %2138 = vmatprep.subr.bf16.mxu0 0
  %2139 = vmatpush1.bf16.msra.mxu0 0
  %2140 = vmatprep.subr.bf16.mxu0 0
  %2141 = vmatpush1.bf16.msra.mxu0 0
  %2142 = vmatprep.subr.bf16.mxu0 0
  %2143 = vmatpush1.bf16.msra.mxu0 0
  %2144 = vmatprep.subr.bf16.mxu0 0
  %2145 = vmatpush1.bf16.msra.mxu0 0
  %2146 = vmatprep.subr.bf16.mxu0 0
  %2147 = vmatpush1.bf16.msra.mxu0 0
  %2148 = vmatprep.subr.bf16.mxu0 0
  %2149 = vmatpush1.bf16.msra.mxu0 0
  %2150 = vmatprep.subr.bf16.mxu0 0
  %2151 = vmatpush1.bf16.msra.mxu0 0
  %2152 = vmatprep.mubr.bf16.mxu0 0
  %2153 = vmatmul.mubr.bf16.gmra.mrb[0].mxu0 %v332
  %v2154 = vpop.f32.mrb[0].mxu0
  %v2155 = vadd.f32 0.0, %v2154
  %v2156 = vpop.f32.mrb[0].mxu0
  %v2157 = vadd.f32 0.0, %v2156
  %v2158 = vpop.f32.mrb[0].mxu0
  %v2159 = vadd.f32 0.0, %v2158
  %v2160 = vpop.f32.mrb[0].mxu0
  %v2161 = vadd.f32 0.0, %v2160
  %2162 = vmatprep.mubr.bf16.mxu0 0
  %2163 = vmatmul.mubr.bf16.gmra.mrb[0].mxu0 %v335
  %v2164 = vpop.f32.mrb[0].mxu0
  %v2165 = vadd.f32 0.0, %v2164
  %v2166 = vpop.f32.mrb[0].mxu0
  %v2167 = vadd.f32 0.0, %v2166
  %v2168 = vpop.f32.mrb[0].mxu0
  %v2169 = vadd.f32 0.0, %v2168
  %v2170 = vpop.f32.mrb[0].mxu0
  %v2171 = vadd.f32 0.0, %v2170
  %2172 = vdwg.mxu0
  %2173 = vmatprep.subr.bf16.mxu0 %v528
  %2174 = vmatpush1.bf16.msra.mxu0 %v525
  %2175 = vmatprep.subr.bf16.mxu0 0
  %2176 = vmatpush1.bf16.msra.mxu0 0
  %2177 = vmatprep.subr.bf16.mxu0 0
  %2178 = vmatpush1.bf16.msra.mxu0 0
  %2179 = vmatprep.subr.bf16.mxu0 0
  %2180 = vmatpush1.bf16.msra.mxu0 0
  %2181 = vmatprep.subr.bf16.mxu0 0
  %2182 = vmatpush1.bf16.msra.mxu0 0
  %2183 = vmatprep.subr.bf16.mxu0 0
  %2184 = vmatpush1.bf16.msra.mxu0 0
  %2185 = vmatprep.subr.bf16.mxu0 0
  %2186 = vmatpush1.bf16.msra.mxu0 0
  %2187 = vmatprep.subr.bf16.mxu0 0
  %2188 = vmatpush1.bf16.msra.mxu0 0
  %2189 = vmatprep.subr.bf16.mxu0 0
  %2190 = vmatpush1.bf16.msra.mxu0 0
  %2191 = vmatprep.subr.bf16.mxu0 0
  %2192 = vmatpush1.bf16.msra.mxu0 0
  %2193 = vmatprep.subr.bf16.mxu0 0
  %2194 = vmatpush1.bf16.msra.mxu0 0
  %2195 = vmatprep.subr.bf16.mxu0 0
  %2196 = vmatpush1.bf16.msra.mxu0 0
  %2197 = vmatprep.subr.bf16.mxu0 0
  %2198 = vmatpush1.bf16.msra.mxu0 0
  %2199 = vmatprep.subr.bf16.mxu0 0
  %2200 = vmatpush1.bf16.msra.mxu0 0
  %2201 = vmatprep.subr.bf16.mxu0 0
  %2202 = vmatpush1.bf16.msra.mxu0 0
  %2203 = vmatprep.subr.bf16.mxu0 0
  %2204 = vmatpush1.bf16.msra.mxu0 0
  %2205 = vmatprep.mubr.bf16.mxu0 0
  %2206 = vmatmul.mubr.bf16.gmra.mrb[0].mxu0 %v332
  %v2207 = vpop.f32.mrb[0].mxu0
  %v2208 = vadd.f32 0.0, %v2207
  %v2209 = vpop.f32.mrb[0].mxu0
  %v2210 = vadd.f32 0.0, %v2209
  %v2211 = vpop.f32.mrb[0].mxu0
  %v2212 = vadd.f32 0.0, %v2211
  %v2213 = vpop.f32.mrb[0].mxu0
  %v2214 = vadd.f32 0.0, %v2213
  %2215 = vmatprep.mubr.bf16.mxu0 0
  %2216 = vmatmul.mubr.bf16.gmra.mrb[0].mxu0 %v335
  %v2217 = vpop.f32.mrb[0].mxu0
  %v2218 = vadd.f32 0.0, %v2217
  %v2219 = vpop.f32.mrb[0].mxu0
  %v2220 = vadd.f32 0.0, %v2219
  %v2221 = vpop.f32.mrb[0].mxu0
  %v2222 = vadd.f32 0.0, %v2221
  %v2223 = vpop.f32.mrb[0].mxu0
  %v2224 = vadd.f32 0.0, %v2223
  %2225 = vdwg.mxu0
  %2226 = vst [vmem:[%s2] sm:$0xff] %v565
  %2227 = vst [vmem:[%s2 + $0x8] sm:$0xff] %v567
  %2228 = vst [vmem:[%s2 + $0x10] sm:$0xff] %v618
  %2229 = vst [vmem:[%s2 + $0x18] sm:$0xff] %v620
  %2230 = vst [vmem:[%s2 + $0x20] sm:$0xff] %v671
  %2231 = vst [vmem:[%s2 + $0x28] sm:$0xff] %v673
  %2232 = vst [vmem:[%s2 + $0x30] sm:$0xff] %v724
  %2233 = vst [vmem:[%s2 + $0x38] sm:$0xff] %v726
  %2234 = vst [vmem:[%s2 + $0x40] sm:$0xff] %v777
  %2235 = vst [vmem:[%s2 + $0x48] sm:$0xff] %v779
  %2236 = vst [vmem:[%s2 + $0x50] sm:$0xff] %v830
  %2237 = vst [vmem:[%s2 + $0x58] sm:$0xff] %v832
  %2238 = vst [vmem:[%s2 + $0x60] sm:$0xff] %v883
  %2239 = vst [vmem:[%s2 + $0x68] sm:$0xff] %v885
  %2240 = vst [vmem:[%s2 + $0x70] sm:$0xff] %v936
  %2241 = vst [vmem:[%s2 + $0x78] sm:$0xff] %v938
  %2242 = vst [vmem:[%s2 + $0x80] sm:$0xff] %v989
  %2243 = vst [vmem:[%s2 + $0x88] sm:$0xff] %v991
  %2244 = vst [vmem:[%s2 + $0x90] sm:$0xff] %v1042
  %2245 = vst [vmem:[%s2 + $0x98] sm:$0xff] %v1044
  %2246 = vst [vmem:[%s2 + $0xa0] sm:$0xff] %v1095
  %2247 = vst [vmem:[%s2 + $0xa8] sm:$0xff] %v1097
  %2248 = vst [vmem:[%s2 + $0xb0] sm:$0xff] %v1148
  %2249 = vst [vmem:[%s2 + $0xb8] sm:$0xff] %v1150
  %2250 = vst [vmem:[%s2 + $0xc0] sm:$0xff] %v1201
  %2251 = vst [vmem:[%s2 + $0xc8] sm:$0xff] %v1203
  %2252 = vst [vmem:[%s2 + $0xd0] sm:$0xff] %v1254
  %2253 = vst [vmem:[%s2 + $0xd8] sm:$0xff] %v1256
  %2254 = vst [vmem:[%s2 + $0xe0] sm:$0xff] %v1307
  %2255 = vst [vmem:[%s2 + $0xe8] sm:$0xff] %v1309
  %2256 = vst [vmem:[%s2 + $0xf0] sm:$0xff] %v1360
  %2257 = vst [vmem:[%s2 + $0xf8] sm:$0xff] %v1362
  %2258 = vst [vmem:[%s2 + $0x100] sm:$0xff] %v1413
  %2259 = vst [vmem:[%s2 + $0x108] sm:$0xff] %v1415
  %2260 = vst [vmem:[%s2 + $0x110] sm:$0xff] %v1466
  %2261 = vst [vmem:[%s2 + $0x118] sm:$0xff] %v1468
  %2262 = vst [vmem:[%s2 + $0x120] sm:$0xff] %v1519
  %2263 = vst [vmem:[%s2 + $0x128] sm:$0xff] %v1521
  %2264 = vst [vmem:[%s2 + $0x130] sm:$0xff] %v1572
  %2265 = vst [vmem:[%s2 + $0x138] sm:$0xff] %v1574
  %2266 = vst [vmem:[%s2 + $0x140] sm:$0xff] %v1625
  %2267 = vst [vmem:[%s2 + $0x148] sm:$0xff] %v1627
  %2268 = vst [vmem:[%s2 + $0x150] sm:$0xff] %v1678
  %2269 = vst [vmem:[%s2 + $0x158] sm:$0xff] %v1680
  %2270 = vst [vmem:[%s2 + $0x160] sm:$0xff] %v1731
  %2271 = vst [vmem:[%s2 + $0x168] sm:$0xff] %v1733
  %2272 = vst [vmem:[%s2 + $0x170] sm:$0xff] %v1784
  %2273 = vst [vmem:[%s2 + $0x178] sm:$0xff] %v1786
  %2274 = vst [vmem:[%s2 + $0x180] sm:$0xff] %v1837
  %2275 = vst [vmem:[%s2 + $0x188] sm:$0xff] %v1839
  %2276 = vst [vmem:[%s2 + $0x190] sm:$0xff] %v1890
  %2277 = vst [vmem:[%s2 + $0x198] sm:$0xff] %v1892
  %2278 = vst [vmem:[%s2 + $0x1a0] sm:$0xff] %v1943
  %2279 = vst [vmem:[%s2 + $0x1a8] sm:$0xff] %v1945
  %2280 = vst [vmem:[%s2 + $0x1b0] sm:$0xff] %v1996
  %2281 = vst [vmem:[%s2 + $0x1b8] sm:$0xff] %v1998
  %2282 = vst [vmem:[%s2 + $0x1c0] sm:$0xff] %v2049
  %2283 = vst [vmem:[%s2 + $0x1c8] sm:$0xff] %v2051
  %2284 = vst [vmem:[%s2 + $0x1d0] sm:$0xff] %v2102
  %2285 = vst [vmem:[%s2 + $0x1d8] sm:$0xff] %v2104
  %2286 = vst [vmem:[%s2 + $0x1e0] sm:$0xff] %v2155
  %2287 = vst [vmem:[%s2 + $0x1e8] sm:$0xff] %v2157
  %2288 = vst [vmem:[%s2 + $0x1f0] sm:$0xff] %v2208
  %2289 = vst [vmem:[%s2 + $0x1f8] sm:$0xff] %v2210
  %2290 = vst [vmem:[%s2 + $0x200] sm:$0xff] %v569
  %2291 = vst [vmem:[%s2 + $0x208] sm:$0xff] %v571
  %2292 = vst [vmem:[%s2 + $0x210] sm:$0xff] %v622
  %2293 = vst [vmem:[%s2 + $0x218] sm:$0xff] %v624
  %2294 = vst [vmem:[%s2 + $0x220] sm:$0xff] %v675
  %2295 = vst [vmem:[%s2 + $0x228] sm:$0xff] %v677
  %2296 = vst [vmem:[%s2 + $0x230] sm:$0xff] %v728
  %2297 = vst [vmem:[%s2 + $0x238] sm:$0xff] %v730
  %2298 = vst [vmem:[%s2 + $0x240] sm:$0xff] %v781
  %2299 = vst [vmem:[%s2 + $0x248] sm:$0xff] %v783
  %2300 = vst [vmem:[%s2 + $0x250] sm:$0xff] %v834
  %2301 = vst [vmem:[%s2 + $0x258] sm:$0xff] %v836
  %2302 = vst [vmem:[%s2 + $0x260] sm:$0xff] %v887
  %2303 = vst [vmem:[%s2 + $0x268] sm:$0xff] %v889
  %2304 = vst [vmem:[%s2 + $0x270] sm:$0xff] %v940
  %2305 = vst [vmem:[%s2 + $0x278] sm:$0xff] %v942
  %2306 = vst [vmem:[%s2 + $0x280] sm:$0xff] %v993
  %2307 = vst [vmem:[%s2 + $0x288] sm:$0xff] %v995
  %2308 = vst [vmem:[%s2 + $0x290] sm:$0xff] %v1046
  %2309 = vst [vmem:[%s2 + $0x298] sm:$0xff] %v1048
  %2310 = vst [vmem:[%s2 + $0x2a0] sm:$0xff] %v1099
  %2311 = vst [vmem:[%s2 + $0x2a8] sm:$0xff] %v1101
  %2312 = vst [vmem:[%s2 + $0x2b0] sm:$0xff] %v1152
  %2313 = vst [vmem:[%s2 + $0x2b8] sm:$0xff] %v1154
  %2314 = vst [vmem:[%s2 + $0x2c0] sm:$0xff] %v1205
  %2315 = vst [vmem:[%s2 + $0x2c8] sm:$0xff] %v1207
  %2316 = vst [vmem:[%s2 + $0x2d0] sm:$0xff] %v1258
  %2317 = vst [vmem:[%s2 + $0x2d8] sm:$0xff] %v1260
  %2318 = vst [vmem:[%s2 + $0x2e0] sm:$0xff] %v1311
  %2319 = vst [vmem:[%s2 + $0x2e8] sm:$0xff] %v1313
  %2320 = vst [vmem:[%s2 + $0x2f0] sm:$0xff] %v1364
  %2321 = vst [vmem:[%s2 + $0x2f8] sm:$0xff] %v1366
  %2322 = vst [vmem:[%s2 + $0x300] sm:$0xff] %v1417
  %2323 = vst [vmem:[%s2 + $0x308] sm:$0xff] %v1419
  %2324 = vst [vmem:[%s2 + $0x310] sm:$0xff] %v1470
  %2325 = vst [vmem:[%s2 + $0x318] sm:$0xff] %v1472
  %2326 = vst [vmem:[%s2 + $0x320] sm:$0xff] %v1523
  %2327 = vst [vmem:[%s2 + $0x328] sm:$0xff] %v1525
  %2328 = vst [vmem:[%s2 + $0x330] sm:$0xff] %v1576
  %2329 = vst [vmem:[%s2 + $0x338] sm:$0xff] %v1578
  %2330 = vst [vmem:[%s2 + $0x340] sm:$0xff] %v1629
  %2331 = vst [vmem:[%s2 + $0x348] sm:$0xff] %v1631
  %2332 = vst [vmem:[%s2 + $0x350] sm:$0xff] %v1682
  %2333 = vst [vmem:[%s2 + $0x358] sm:$0xff] %v1684
  %2334 = vst [vmem:[%s2 + $0x360] sm:$0xff] %v1735
  %2335 = vst [vmem:[%s2 + $0x368] sm:$0xff] %v1737
  %2336 = vst [vmem:[%s2 + $0x370] sm:$0xff] %v1788
  %2337 = vst [vmem:[%s2 + $0x378] sm:$0xff] %v1790
  %2338 = vst [vmem:[%s2 + $0x380] sm:$0xff] %v1841
  %2339 = vst [vmem:[%s2 + $0x388] sm:$0xff] %v1843
  %2340 = vst [vmem:[%s2 + $0x390] sm:$0xff] %v1894
  %2341 = vst [vmem:[%s2 + $0x398] sm:$0xff] %v1896
  %2342 = vst [vmem:[%s2 + $0x3a0] sm:$0xff] %v1947
  %2343 = vst [vmem:[%s2 + $0x3a8] sm:$0xff] %v1949
  %2344 = vst [vmem:[%s2 + $0x3b0] sm:$0xff] %v2000
  %2345 = vst [vmem:[%s2 + $0x3b8] sm:$0xff] %v2002
  %2346 = vst [vmem:[%s2 + $0x3c0] sm:$0xff] %v2053
  %2347 = vst [vmem:[%s2 + $0x3c8] sm:$0xff] %v2055
  %2348 = vst [vmem:[%s2 + $0x3d0] sm:$0xff] %v2106
  %2349 = vst [vmem:[%s2 + $0x3d8] sm:$0xff] %v2108
  %2350 = vst [vmem:[%s2 + $0x3e0] sm:$0xff] %v2159
  %2351 = vst [vmem:[%s2 + $0x3e8] sm:$0xff] %v2161
  %2352 = vst [vmem:[%s2 + $0x3f0] sm:$0xff] %v2212
  %2353 = vst [vmem:[%s2 + $0x3f8] sm:$0xff] %v2214
  %2354 = vst [vmem:[%s2 + $0x400] sm:$0xff] %v575
  %2355 = vst [vmem:[%s2 + $0x408] sm:$0xff] %v577
  %2356 = vst [vmem:[%s2 + $0x410] sm:$0xff] %v628
  %2357 = vst [vmem:[%s2 + $0x418] sm:$0xff] %v630
  %2358 = vst [vmem:[%s2 + $0x420] sm:$0xff] %v681
  %2359 = vst [vmem:[%s2 + $0x428] sm:$0xff] %v683
  %2360 = vst [vmem:[%s2 + $0x430] sm:$0xff] %v734
  %2361 = vst [vmem:[%s2 + $0x438] sm:$0xff] %v736
  %2362 = vst [vmem:[%s2 + $0x440] sm:$0xff] %v787
  %2363 = vst [vmem:[%s2 + $0x448] sm:$0xff] %v789
  %2364 = vst [vmem:[%s2 + $0x450] sm:$0xff] %v840
  %2365 = vst [vmem:[%s2 + $0x458] sm:$0xff] %v842
  %2366 = vst [vmem:[%s2 + $0x460] sm:$0xff] %v893
  %2367 = vst [vmem:[%s2 + $0x468] sm:$0xff] %v895
  %2368 = vst [vmem:[%s2 + $0x470] sm:$0xff] %v946
  %2369 = vst [vmem:[%s2 + $0x478] sm:$0xff] %v948
  %2370 = vst [vmem:[%s2 + $0x480] sm:$0xff] %v999
  %2371 = vst [vmem:[%s2 + $0x488] sm:$0xff] %v1001
  %2372 = vst [vmem:[%s2 + $0x490] sm:$0xff] %v1052
  %2373 = vst [vmem:[%s2 + $0x498] sm:$0xff] %v1054
  %2374 = vst [vmem:[%s2 + $0x4a0] sm:$0xff] %v1105
  %2375 = vst [vmem:[%s2 + $0x4a8] sm:$0xff] %v1107
  %2376 = vst [vmem:[%s2 + $0x4b0] sm:$0xff] %v1158
  %2377 = vst [vmem:[%s2 + $0x4b8] sm:$0xff] %v1160
  %2378 = vst [vmem:[%s2 + $0x4c0] sm:$0xff] %v1211
  %2379 = vst [vmem:[%s2 + $0x4c8] sm:$0xff] %v1213
  %2380 = vst [vmem:[%s2 + $0x4d0] sm:$0xff] %v1264
  %2381 = vst [vmem:[%s2 + $0x4d8] sm:$0xff] %v1266
  %2382 = vst [vmem:[%s2 + $0x4e0] sm:$0xff] %v1317
  %2383 = vst [vmem:[%s2 + $0x4e8] sm:$0xff] %v1319
  %2384 = vst [vmem:[%s2 + $0x4f0] sm:$0xff] %v1370
  %2385 = vst [vmem:[%s2 + $0x4f8] sm:$0xff] %v1372
  %2386 = vst [vmem:[%s2 + $0x500] sm:$0xff] %v1423
  %2387 = vst [vmem:[%s2 + $0x508] sm:$0xff] %v1425
  %2388 = vst [vmem:[%s2 + $0x510] sm:$0xff] %v1476
  %2389 = vst [vmem:[%s2 + $0x518] sm:$0xff] %v1478
  %2390 = vst [vmem:[%s2 + $0x520] sm:$0xff] %v1529
  %2391 = vst [vmem:[%s2 + $0x528] sm:$0xff] %v1531
  %2392 = vst [vmem:[%s2 + $0x530] sm:$0xff] %v1582
  %2393 = vst [vmem:[%s2 + $0x538] sm:$0xff] %v1584
  %2394 = vst [vmem:[%s2 + $0x540] sm:$0xff] %v1635
  %2395 = vst [vmem:[%s2 + $0x548] sm:$0xff] %v1637
  %2396 = vst [vmem:[%s2 + $0x550] sm:$0xff] %v1688
  %2397 = vst [vmem:[%s2 + $0x558] sm:$0xff] %v1690
  %2398 = vst [vmem:[%s2 + $0x560] sm:$0xff] %v1741
  %2399 = vst [vmem:[%s2 + $0x568] sm:$0xff] %v1743
  %2400 = vst [vmem:[%s2 + $0x570] sm:$0xff] %v1794
  %2401 = vst [vmem:[%s2 + $0x578] sm:$0xff] %v1796
  %2402 = vst [vmem:[%s2 + $0x580] sm:$0xff] %v1847
  %2403 = vst [vmem:[%s2 + $0x588] sm:$0xff] %v1849
  %2404 = vst [vmem:[%s2 + $0x590] sm:$0xff] %v1900
  %2405 = vst [vmem:[%s2 + $0x598] sm:$0xff] %v1902
  %2406 = vst [vmem:[%s2 + $0x5a0] sm:$0xff] %v1953
  %2407 = vst [vmem:[%s2 + $0x5a8] sm:$0xff] %v1955
  %2408 = vst [vmem:[%s2 + $0x5b0] sm:$0xff] %v2006
  %2409 = vst [vmem:[%s2 + $0x5b8] sm:$0xff] %v2008
  %2410 = vst [vmem:[%s2 + $0x5c0] sm:$0xff] %v2059
  %2411 = vst [vmem:[%s2 + $0x5c8] sm:$0xff] %v2061
  %2412 = vst [vmem:[%s2 + $0x5d0] sm:$0xff] %v2112
  %2413 = vst [vmem:[%s2 + $0x5d8] sm:$0xff] %v2114
  %2414 = vst [vmem:[%s2 + $0x5e0] sm:$0xff] %v2165
  %2415 = vst [vmem:[%s2 + $0x5e8] sm:$0xff] %v2167
  %2416 = vst [vmem:[%s2 + $0x5f0] sm:$0xff] %v2218
  %2417 = vst [vmem:[%s2 + $0x5f8] sm:$0xff] %v2220
  %2418 = vst [vmem:[%s2 + $0x600] sm:$0xff] %v579
  %2419 = vst [vmem:[%s2 + $0x608] sm:$0xff] %v581
  %2420 = vst [vmem:[%s2 + $0x610] sm:$0xff] %v632
  %2421 = vst [vmem:[%s2 + $0x618] sm:$0xff] %v634
  %2422 = vst [vmem:[%s2 + $0x620] sm:$0xff] %v685
  %2423 = vst [vmem:[%s2 + $0x628] sm:$0xff] %v687
  %2424 = vst [vmem:[%s2 + $0x630] sm:$0xff] %v738
  %2425 = vst [vmem:[%s2 + $0x638] sm:$0xff] %v740
  %2426 = vst [vmem:[%s2 + $0x640] sm:$0xff] %v791
  %2427 = vst [vmem:[%s2 + $0x648] sm:$0xff] %v793
  %2428 = vst [vmem:[%s2 + $0x650] sm:$0xff] %v844
  %2429 = vst [vmem:[%s2 + $0x658] sm:$0xff] %v846
  %2430 = vst [vmem:[%s2 + $0x660] sm:$0xff] %v897
  %2431 = vst [vmem:[%s2 + $0x668] sm:$0xff] %v899
  %2432 = vst [vmem:[%s2 + $0x670] sm:$0xff] %v950
  %2433 = vst [vmem:[%s2 + $0x678] sm:$0xff] %v952
  %2434 = vst [vmem:[%s2 + $0x680] sm:$0xff] %v1003
  %2435 = vst [vmem:[%s2 + $0x688] sm:$0xff] %v1005
  %2436 = vst [vmem:[%s2 + $0x690] sm:$0xff] %v1056
  %2437 = vst [vmem:[%s2 + $0x698] sm:$0xff] %v1058
  %2438 = vst [vmem:[%s2 + $0x6a0] sm:$0xff] %v1109
  %2439 = vst [vmem:[%s2 + $0x6a8] sm:$0xff] %v1111
  %2440 = vst [vmem:[%s2 + $0x6b0] sm:$0xff] %v1162
  %2441 = vst [vmem:[%s2 + $0x6b8] sm:$0xff] %v1164
  %2442 = vst [vmem:[%s2 + $0x6c0] sm:$0xff] %v1215
  %2443 = vst [vmem:[%s2 + $0x6c8] sm:$0xff] %v1217
  %2444 = vst [vmem:[%s2 + $0x6d0] sm:$0xff] %v1268
  %2445 = vst [vmem:[%s2 + $0x6d8] sm:$0xff] %v1270
  %2446 = vst [vmem:[%s2 + $0x6e0] sm:$0xff] %v1321
  %2447 = vst [vmem:[%s2 + $0x6e8] sm:$0xff] %v1323
  %2448 = vst [vmem:[%s2 + $0x6f0] sm:$0xff] %v1374
  %2449 = vst [vmem:[%s2 + $0x6f8] sm:$0xff] %v1376
  %2450 = vst [vmem:[%s2 + $0x700] sm:$0xff] %v1427
  %2451 = vst [vmem:[%s2 + $0x708] sm:$0xff] %v1429
  %2452 = vst [vmem:[%s2 + $0x710] sm:$0xff] %v1480
  %2453 = vst [vmem:[%s2 + $0x718] sm:$0xff] %v1482
  %2454 = vst [vmem:[%s2 + $0x720] sm:$0xff] %v1533
  %2455 = vst [vmem:[%s2 + $0x728] sm:$0xff] %v1535
  %2456 = vst [vmem:[%s2 + $0x730] sm:$0xff] %v1586
  %2457 = vst [vmem:[%s2 + $0x738] sm:$0xff] %v1588
  %2458 = vst [vmem:[%s2 + $0x740] sm:$0xff] %v1639
  %2459 = vst [vmem:[%s2 + $0x748] sm:$0xff] %v1641
  %2460 = vst [vmem:[%s2 + $0x750] sm:$0xff] %v1692
  %2461 = vst [vmem:[%s2 + $0x758] sm:$0xff] %v1694
  %2462 = vst [vmem:[%s2 + $0x760] sm:$0xff] %v1745
  %2463 = vst [vmem:[%s2 + $0x768] sm:$0xff] %v1747
  %2464 = vst [vmem:[%s2 + $0x770] sm:$0xff] %v1798
  %2465 = vst [vmem:[%s2 + $0x778] sm:$0xff] %v1800
  %2466 = vst [vmem:[%s2 + $0x780] sm:$0xff] %v1851
  %2467 = vst [vmem:[%s2 + $0x788] sm:$0xff] %v1853
  %2468 = vst [vmem:[%s2 + $0x790] sm:$0xff] %v1904
  %2469 = vst [vmem:[%s2 + $0x798] sm:$0xff] %v1906
  %2470 = vst [vmem:[%s2 + $0x7a0] sm:$0xff] %v1957
  %2471 = vst [vmem:[%s2 + $0x7a8] sm:$0xff] %v1959
  %2472 = vst [vmem:[%s2 + $0x7b0] sm:$0xff] %v2010
  %2473 = vst [vmem:[%s2 + $0x7b8] sm:$0xff] %v2012
  %2474 = vst [vmem:[%s2 + $0x7c0] sm:$0xff] %v2063
  %2475 = vst [vmem:[%s2 + $0x7c8] sm:$0xff] %v2065
  %2476 = vst [vmem:[%s2 + $0x7d0] sm:$0xff] %v2116
  %2477 = vst [vmem:[%s2 + $0x7d8] sm:$0xff] %v2118
  %2478 = vst [vmem:[%s2 + $0x7e0] sm:$0xff] %v2169
  %2479 = vst [vmem:[%s2 + $0x7e8] sm:$0xff] %v2171
  %2480 = vst [vmem:[%s2 + $0x7f0] sm:$0xff] %v2222
  %2481 = vst [vmem:[%s2 + $0x7f8] sm:$0xff] %v2224
  // Predicated region
  $region10: #{fcn_small_forward.30} parent=0 // pred_check
    _
  $region11: #{fcn_small_forward.30} parent=0 // pred_check_branch
    %2483 = sbr.rel (0) target = $region13
  $region12: #{fcn_small_forward.30} parent=0 // pred_region
    _
  $region13: #{fcn_small_forward.30} parent=0 // pred_fallthru
    _
  // Predicated region
  $region14: #{fcn_small_forward.30} parent=0 // pred_check
    _
  $region15: #{fcn_small_forward.30} parent=0 // pred_check_branch
    %2485 = sbr.rel (0) target = $region17
  $region16: #{fcn_small_forward.30} parent=0 // pred_region
    _
  $region17: #{fcn_small_forward.30} parent=0 // pred_fallthru
    _

// kernel: fcn_small_forward.22
$region0: #{fcn_small_forward.22}
  #allocation0 [shape = 'u32[]', space=smem, size = 0x4, offset = 0x4, fixed_abs, tag = 'smem constant byte address 0x4 - core index']
  #allocation1 [shape = 'u32[144,128]{1,0:T(1,128)}', space=vmem, size = 0x12000, scoped, tag = 'internal scratch']
  %s0 = inlined_call_operand.vmem [shape: bf16[32,8], index: 0, kind: input, shape index: {}]
  %s1 = inlined_call_operand.vmem [shape: bf16[8,1024], index: 1, kind: input, shape index: {}]
  %s2 = inlined_call_operand.vmem [shape: f32[32,1024], index: 2, kind: output, shape index: {}]
  %s3 = sld [smem:[#allocation0]]
  $region18: #{fcn_small_forward.22} parent=0
    _
  %s5 = ssub.s32 1, %s3
  %s6 = scalar_select 0, %s5, %s3
  // Predicated region
  $region2: #{fcn_small_forward.22} parent=0 // pred_check
    _
  $region3: #{fcn_small_forward.22} parent=0 // pred_check_branch
    %8 = sbr.rel (0) target = $region5
  $region4: #{fcn_small_forward.22} parent=0 // pred_region
    _
  $region5: #{fcn_small_forward.22} parent=0 // pred_fallthru
    _
  // Predicated region
  $region6: #{fcn_small_forward.22} parent=0 // pred_check
    _
  $region7: #{fcn_small_forward.22} parent=0 // pred_check_branch
    %10 = sbr.rel (0) target = $region9
  $region8: #{fcn_small_forward.22} parent=0 // pred_region
    _
  $region9: #{fcn_small_forward.22} parent=0 // pred_fallthru
    _
  %v12 = vld [vmem:[%s0] sm:$0xf]
  %v13 = vld [vmem:[%s0 + $0x4] sm:$0xf]
  %v14 = vld [vmem:[%s0 + $0x8] sm:$0xf]
  %v15 = vld [vmem:[%s0 + $0xc] sm:$0xf]
  %v16 = vld [vmem:[%s1] sm:$0xff]
  %v17 = vld [vmem:[%s1 + $0x8] sm:$0xff]
  %v18 = vld [vmem:[%s1 + $0x10] sm:$0xff]
  %v19 = vld [vmem:[%s1 + $0x18] sm:$0xff]
  %v24 = vunpack.c.l.b16 %v12
  %v25 = vunpack.c.l.b16 %v13
  %v26 = vunpack.c.l.b16 %v14
  %v27 = vunpack.c.l.b16 %v15
  %v28 = vpack.c.b16 %v25, %v24
  %v29 = vpack.c.b16 %v27, %v26
  %v34 = vunpack.c.l.b16 %v16
  %v35 = vunpack.c.h.b16 %v16
  %v36 = vunpack.c.l.b16 %v17
  %v37 = vunpack.c.h.b16 %v17
  %v38 = vunpack.c.l.b16 %v18
  %v39 = vunpack.c.h.b16 %v18
  %v40 = vunpack.c.l.b16 %v19
  %v41 = vunpack.c.h.b16 %v19
  %v42 = vpack.c.b16 %v34, %v34
  %v43 = vpack.c.b16 %v35, %v35
  %v44 = vpack.c.b16 %v36, %v36
  %v45 = vpack.c.b16 %v37, %v37
  %v46 = vpack.c.b16 %v38, %v38
  %v47 = vpack.c.b16 %v39, %v39
  %v48 = vpack.c.b16 %v40, %v40
  %v49 = vpack.c.b16 %v41, %v41
  %vm50 = vcmask 64512
  %v52 = vsel %vm50, %v28, 0
  %v55 = vsel %vm50, %v29, 0
  %vm57 = vcmask 1043456
  %v59 = vsel %vm57, %v42, 0
  %v62 = vsel %vm57, %v43, 0
  %v65 = vsel %vm57, %v44, 0
  %v68 = vsel %vm57, %v45, 0
  %v71 = vsel %vm57, %v46, 0
  %v74 = vsel %vm57, %v47, 0
  %v77 = vsel %vm57, %v48, 0
  %v80 = vsel %vm57, %v49, 0
  %82 = vmatprep.subr.bf16.mxu0 %v62
  %83 = vmatpush1.bf16.msra.mxu0 %v59
  %84 = vmatprep.subr.bf16.mxu0 0
  %85 = vmatpush1.bf16.msra.mxu0 0
  %86 = vmatprep.subr.bf16.mxu0 0
  %87 = vmatpush1.bf16.msra.mxu0 0
  %88 = vmatprep.subr.bf16.mxu0 0
  %89 = vmatpush1.bf16.msra.mxu0 0
  %90 = vmatprep.subr.bf16.mxu0 0
  %91 = vmatpush1.bf16.msra.mxu0 0
  %92 = vmatprep.subr.bf16.mxu0 0
  %93 = vmatpush1.bf16.msra.mxu0 0
  %94 = vmatprep.subr.bf16.mxu0 0
  %95 = vmatpush1.bf16.msra.mxu0 0
  %96 = vmatprep.subr.bf16.mxu0 0
  %97 = vmatpush1.bf16.msra.mxu0 0
  %98 = vmatprep.subr.bf16.mxu0 0
  %99 = vmatpush1.bf16.msra.mxu0 0
  %100 = vmatprep.subr.bf16.mxu0 0
  %101 = vmatpush1.bf16.msra.mxu0 0
  %102 = vmatprep.subr.bf16.mxu0 0
  %103 = vmatpush1.bf16.msra.mxu0 0
  %104 = vmatprep.subr.bf16.mxu0 0
  %105 = vmatpush1.bf16.msra.mxu0 0
  %106 = vmatprep.subr.bf16.mxu0 0
  %107 = vmatpush1.bf16.msra.mxu0 0
  %108 = vmatprep.subr.bf16.mxu0 0
  %109 = vmatpush1.bf16.msra.mxu0 0
  %110 = vmatprep.subr.bf16.mxu0 0
  %111 = vmatpush1.bf16.msra.mxu0 0
  %112 = vmatprep.subr.bf16.mxu0 0
  %113 = vmatpush1.bf16.msra.mxu0 0
  %114 = vmatprep.mubr.bf16.mxu0 0
  %115 = vmatmul.mubr.bf16.gmra.mrb[0].mxu0 %v52
  %v116 = vpop.f32.mrb[0].mxu0
  %v117 = vadd.f32 0.0, %v116
  %v118 = vpop.f32.mrb[0].mxu0
  %v119 = vadd.f32 0.0, %v118
  %v120 = vpop.f32.mrb[0].mxu0
  %v121 = vadd.f32 0.0, %v120
  %v122 = vpop.f32.mrb[0].mxu0
  %v123 = vadd.f32 0.0, %v122
  %124 = vmatprep.mubr.bf16.mxu0 0
  %125 = vmatmul.mubr.bf16.gmra.mrb[0].mxu0 %v55
  %v126 = vpop.f32.mrb[0].mxu0
  %v127 = vadd.f32 0.0, %v126
  %v128 = vpop.f32.mrb[0].mxu0
  %v129 = vadd.f32 0.0, %v128
  %v130 = vpop.f32.mrb[0].mxu0
  %v131 = vadd.f32 0.0, %v130
  %v132 = vpop.f32.mrb[0].mxu0
  %v133 = vadd.f32 0.0, %v132
  %134 = vdwg.mxu0
  %135 = vmatprep.subr.bf16.mxu0 %v68
  %136 = vmatpush1.bf16.msra.mxu0 %v65
  %137 = vmatprep.subr.bf16.mxu0 0
  %138 = vmatpush1.bf16.msra.mxu0 0
  %139 = vmatprep.subr.bf16.mxu0 0
  %140 = vmatpush1.bf16.msra.mxu0 0
  %141 = vmatprep.subr.bf16.mxu0 0
  %142 = vmatpush1.bf16.msra.mxu0 0
  %143 = vmatprep.subr.bf16.mxu0 0
  %144 = vmatpush1.bf16.msra.mxu0 0
  %145 = vmatprep.subr.bf16.mxu0 0
  %146 = vmatpush1.bf16.msra.mxu0 0
  %147 = vmatprep.subr.bf16.mxu0 0
  %148 = vmatpush1.bf16.msra.mxu0 0
  %149 = vmatprep.subr.bf16.mxu0 0
  %150 = vmatpush1.bf16.msra.mxu0 0
  %151 = vmatprep.subr.bf16.mxu0 0
  %152 = vmatpush1.bf16.msra.mxu0 0
  %153 = vmatprep.subr.bf16.mxu0 0
  %154 = vmatpush1.bf16.msra.mxu0 0
  %155 = vmatprep.subr.bf16.mxu0 0
  %156 = vmatpush1.bf16.msra.mxu0 0
  %157 = vmatprep.subr.bf16.mxu0 0
  %158 = vmatpush1.bf16.msra.mxu0 0
  %159 = vmatprep.subr.bf16.mxu0 0
  %160 = vmatpush1.bf16.msra.mxu0 0
  %161 = vmatprep.subr.bf16.mxu0 0
  %162 = vmatpush1.bf16.msra.mxu0 0
  %163 = vmatprep.subr.bf16.mxu0 0
  %164 = vmatpush1.bf16.msra.mxu0 0
  %165 = vmatprep.subr.bf16.mxu0 0
  %166 = vmatpush1.bf16.msra.mxu0 0
  %167 = vmatprep.mubr.bf16.mxu0 0
  %168 = vmatmul.mubr.bf16.gmra.mrb[0].mxu0 %v52
  %v169 = vpop.f32.mrb[0].mxu0
  %v170 = vadd.f32 0.0, %v169
  %v171 = vpop.f32.mrb[0].mxu0
  %v172 = vadd.f32 0.0, %v171
  %v173 = vpop.f32.mrb[0].mxu0
  %v174 = vadd.f32 0.0, %v173
  %v175 = vpop.f32.mrb[0].mxu0
  %v176 = vadd.f32 0.0, %v175
  %177 = vmatprep.mubr.bf16.mxu0 0
  %178 = vmatmul.mubr.bf16.gmra.mrb[0].mxu0 %v55
  %v179 = vpop.f32.mrb[0].mxu0
  %v180 = vadd.f32 0.0, %v179
  %v181 = vpop.f32.mrb[0].mxu0
  %v182 = vadd.f32 0.0, %v181
  %v183 = vpop.f32.mrb[0].mxu0
  %v184 = vadd.f32 0.0, %v183
  %v185 = vpop.f32.mrb[0].mxu0
  %v186 = vadd.f32 0.0, %v185
  %187 = vdwg.mxu0
  %188 = vmatprep.subr.bf16.mxu0 %v74
  %189 = vmatpush1.bf16.msra.mxu0 %v71
  %190 = vmatprep.subr.bf16.mxu0 0
  %191 = vmatpush1.bf16.msra.mxu0 0
  %192 = vmatprep.subr.bf16.mxu0 0
  %193 = vmatpush1.bf16.msra.mxu0 0
  %194 = vmatprep.subr.bf16.mxu0 0
  %195 = vmatpush1.bf16.msra.mxu0 0
  %196 = vmatprep.subr.bf16.mxu0 0
  %197 = vmatpush1.bf16.msra.mxu0 0
  %198 = vmatprep.subr.bf16.mxu0 0
  %199 = vmatpush1.bf16.msra.mxu0 0
  %200 = vmatprep.subr.bf16.mxu0 0
  %201 = vmatpush1.bf16.msra.mxu0 0
  %202 = vmatprep.subr.bf16.mxu0 0
  %203 = vmatpush1.bf16.msra.mxu0 0
  %204 = vmatprep.subr.bf16.mxu0 0
  %205 = vmatpush1.bf16.msra.mxu0 0
  %206 = vmatprep.subr.bf16.mxu0 0
  %207 = vmatpush1.bf16.msra.mxu0 0
  %208 = vmatprep.subr.bf16.mxu0 0
  %209 = vmatpush1.bf16.msra.mxu0 0
  %210 = vmatprep.subr.bf16.mxu0 0
  %211 = vmatpush1.bf16.msra.mxu0 0
  %212 = vmatprep.subr.bf16.mxu0 0
  %213 = vmatpush1.bf16.msra.mxu0 0
  %214 = vmatprep.subr.bf16.mxu0 0
  %215 = vmatpush1.bf16.msra.mxu0 0
  %216 = vmatprep.subr.bf16.mxu0 0
  %217 = vmatpush1.bf16.msra.mxu0 0
  %218 = vmatprep.subr.bf16.mxu0 0
  %219 = vmatpush1.bf16.msra.mxu0 0
  %220 = vmatprep.mubr.bf16.mxu0 0
  %221 = vmatmul.mubr.bf16.gmra.mrb[0].mxu0 %v52
  %v222 = vpop.f32.mrb[0].mxu0
  %v223 = vadd.f32 0.0, %v222
  %v224 = vpop.f32.mrb[0].mxu0
  %v225 = vadd.f32 0.0, %v224
  %v226 = vpop.f32.mrb[0].mxu0
  %v227 = vadd.f32 0.0, %v226
  %v228 = vpop.f32.mrb[0].mxu0
  %v229 = vadd.f32 0.0, %v228
  %230 = vmatprep.mubr.bf16.mxu0 0
  %231 = vmatmul.mubr.bf16.gmra.mrb[0].mxu0 %v55
  %v232 = vpop.f32.mrb[0].mxu0
  %v233 = vadd.f32 0.0, %v232
  %v234 = vpop.f32.mrb[0].mxu0
  %v235 = vadd.f32 0.0, %v234
  %v236 = vpop.f32.mrb[0].mxu0
  %v237 = vadd.f32 0.0, %v236
  %v238 = vpop.f32.mrb[0].mxu0
  %v239 = vadd.f32 0.0, %v238
  %240 = vdwg.mxu0
  %241 = vmatprep.subr.bf16.mxu0 %v80
  %242 = vmatpush1.bf16.msra.mxu0 %v77
  %243 = vmatprep.subr.bf16.mxu0 0
  %244 = vmatpush1.bf16.msra.mxu0 0
  %245 = vmatprep.subr.bf16.mxu0 0
  %246 = vmatpush1.bf16.msra.mxu0 0
  %247 = vmatprep.subr.bf16.mxu0 0
  %248 = vmatpush1.bf16.msra.mxu0 0
  %249 = vmatprep.subr.bf16.mxu0 0
  %250 = vmatpush1.bf16.msra.mxu0 0
  %251 = vmatprep.subr.bf16.mxu0 0
  %252 = vmatpush1.bf16.msra.mxu0 0
  %253 = vmatprep.subr.bf16.mxu0 0
  %254 = vmatpush1.bf16.msra.mxu0 0
  %255 = vmatprep.subr.bf16.mxu0 0
  %256 = vmatpush1.bf16.msra.mxu0 0
  %257 = vmatprep.subr.bf16.mxu0 0
  %258 = vmatpush1.bf16.msra.mxu0 0
  %259 = vmatprep.subr.bf16.mxu0 0
  %260 = vmatpush1.bf16.msra.mxu0 0
  %261 = vmatprep.subr.bf16.mxu0 0
  %262 = vmatpush1.bf16.msra.mxu0 0
  %263 = vmatprep.subr.bf16.mxu0 0
  %264 = vmatpush1.bf16.msra.mxu0 0
  %265 = vmatprep.subr.bf16.mxu0 0
  %266 = vmatpush1.bf16.msra.mxu0 0
  %267 = vmatprep.subr.bf16.mxu0 0
  %268 = vmatpush1.bf16.msra.mxu0 0
  %269 = vmatprep.subr.bf16.mxu0 0
  %270 = vmatpush1.bf16.msra.mxu0 0
  %271 = vmatprep.subr.bf16.mxu0 0
  %272 = vmatpush1.bf16.msra.mxu0 0
  %273 = vmatprep.mubr.bf16.mxu0 0
  %274 = vmatmul.mubr.bf16.gmra.mrb[0].mxu0 %v52
  %v275 = vpop.f32.mrb[0].mxu0
  %v276 = vadd.f32 0.0, %v275
  %v277 = vpop.f32.mrb[0].mxu0
  %v278 = vadd.f32 0.0, %v277
  %v279 = vpop.f32.mrb[0].mxu0
  %v280 = vadd.f32 0.0, %v279
  %v281 = vpop.f32.mrb[0].mxu0
  %v282 = vadd.f32 0.0, %v281
  %283 = vmatprep.mubr.bf16.mxu0 0
  %284 = vmatmul.mubr.bf16.gmra.mrb[0].mxu0 %v55
  %v285 = vpop.f32.mrb[0].mxu0
  %v286 = vadd.f32 0.0, %v285
  %v287 = vpop.f32.mrb[0].mxu0
  %v288 = vadd.f32 0.0, %v287
  %v289 = vpop.f32.mrb[0].mxu0
  %v290 = vadd.f32 0.0, %v289
  %v291 = vpop.f32.mrb[0].mxu0
  %v292 = vadd.f32 0.0, %v291
  %293 = vdwg.mxu0
  %294 = vst [vmem:[%s2] sm:$0xff] %v117
  %295 = vst [vmem:[%s2 + $0x8] sm:$0xff] %v119
  %296 = vst [vmem:[%s2 + $0x10] sm:$0xff] %v170
  %297 = vst [vmem:[%s2 + $0x18] sm:$0xff] %v172
  %298 = vst [vmem:[%s2 + $0x20] sm:$0xff] %v223
  %299 = vst [vmem:[%s2 + $0x28] sm:$0xff] %v225
  %300 = vst [vmem:[%s2 + $0x30] sm:$0xff] %v276
  %301 = vst [vmem:[%s2 + $0x38] sm:$0xff] %v278
  %302 = vst [vmem:[%s2 + $0x40] sm:$0xff] %v121
  %303 = vst [vmem:[%s2 + $0x48] sm:$0xff] %v123
  %304 = vst [vmem:[%s2 + $0x50] sm:$0xff] %v174
  %305 = vst [vmem:[%s2 + $0x58] sm:$0xff] %v176
  %306 = vst [vmem:[%s2 + $0x60] sm:$0xff] %v227
  %307 = vst [vmem:[%s2 + $0x68] sm:$0xff] %v229
  %308 = vst [vmem:[%s2 + $0x70] sm:$0xff] %v280
  %309 = vst [vmem:[%s2 + $0x78] sm:$0xff] %v282
  %310 = vst [vmem:[%s2 + $0x80] sm:$0xff] %v127
  %311 = vst [vmem:[%s2 + $0x88] sm:$0xff] %v129
  %312 = vst [vmem:[%s2 + $0x90] sm:$0xff] %v180
  %313 = vst [vmem:[%s2 + $0x98] sm:$0xff] %v182
  %314 = vst [vmem:[%s2 + $0xa0] sm:$0xff] %v233
  %315 = vst [vmem:[%s2 + $0xa8] sm:$0xff] %v235
  %316 = vst [vmem:[%s2 + $0xb0] sm:$0xff] %v286
  %317 = vst [vmem:[%s2 + $0xb8] sm:$0xff] %v288
  %318 = vst [vmem:[%s2 + $0xc0] sm:$0xff] %v131
  %319 = vst [vmem:[%s2 + $0xc8] sm:$0xff] %v133
  %320 = vst [vmem:[%s2 + $0xd0] sm:$0xff] %v184
  %321 = vst [vmem:[%s2 + $0xd8] sm:$0xff] %v186
  %322 = vst [vmem:[%s2 + $0xe0] sm:$0xff] %v237
  %323 = vst [vmem:[%s2 + $0xe8] sm:$0xff] %v239
  %324 = vst [vmem:[%s2 + $0xf0] sm:$0xff] %v290
  %325 = vst [vmem:[%s2 + $0xf8] sm:$0xff] %v292
  // Predicated region
  $region10: #{fcn_small_forward.22} parent=0 // pred_check
    _
  $region11: #{fcn_small_forward.22} parent=0 // pred_check_branch
    %327 = sbr.rel (0) target = $region13
  $region12: #{fcn_small_forward.22} parent=0 // pred_region
    _
  $region13: #{fcn_small_forward.22} parent=0 // pred_fallthru
    _
  // Predicated region
  $region14: #{fcn_small_forward.22} parent=0 // pred_check
    _
  $region15: #{fcn_small_forward.22} parent=0 // pred_check_branch
    %329 = sbr.rel (0) target = $region17
  $region16: #{fcn_small_forward.22} parent=0 // pred_region
    _
  $region17: #{fcn_small_forward.22} parent=0 // pred_fallthru
    _

// kernel: fcn_small_forward.23
$region0: #{fcn_small_forward.23}
  #allocation0 [shape = 'u32[]', space=smem, size = 0x4, offset = 0x4, fixed_abs, tag = 'smem constant byte address 0x4 - core index']
  #allocation1 [shape = 'u32[144,128]{1,0:T(1,128)}', space=vmem, size = 0x12000, scoped, tag = 'internal scratch']
  %s0 = inlined_call_operand.vmem [shape: bf16[32,8], index: 0, kind: input, shape index: {}]
  %s1 = inlined_call_operand.vmem [shape: bf16[8,4096], index: 1, kind: input, shape index: {}]
  %s2 = inlined_call_operand.vmem [shape: f32[32,4096], index: 2, kind: output, shape index: {}]
  %s3 = sld [smem:[#allocation0]]
  $region18: #{fcn_small_forward.23} parent=0
    _
  %s5 = ssub.s32 1, %s3
  %s6 = scalar_select 0, %s5, %s3
  // Predicated region
  $region2: #{fcn_small_forward.23} parent=0 // pred_check
    _
  $region3: #{fcn_small_forward.23} parent=0 // pred_check_branch
    %8 = sbr.rel (0) target = $region5
  $region4: #{fcn_small_forward.23} parent=0 // pred_region
    _
  $region5: #{fcn_small_forward.23} parent=0 // pred_fallthru
    _
  // Predicated region
  $region6: #{fcn_small_forward.23} parent=0 // pred_check
    _
  $region7: #{fcn_small_forward.23} parent=0 // pred_check_branch
    %10 = sbr.rel (0) target = $region9
  $region8: #{fcn_small_forward.23} parent=0 // pred_region
    _
  $region9: #{fcn_small_forward.23} parent=0 // pred_fallthru
    _
  %v12 = vld [vmem:[%s0] sm:$0xf]
  %v13 = vld [vmem:[%s0 + $0x4] sm:$0xf]
  %v14 = vld [vmem:[%s0 + $0x8] sm:$0xf]
  %v15 = vld [vmem:[%s0 + $0xc] sm:$0xf]
  %v16 = vld [vmem:[%s1] sm:$0xff]
  %v17 = vld [vmem:[%s1 + $0x8] sm:$0xff]
  %v18 = vld [vmem:[%s1 + $0x10] sm:$0xff]
  %v19 = vld [vmem:[%s1 + $0x18] sm:$0xff]
  %v20 = vld [vmem:[%s1 + $0x20] sm:$0xff]
  %v21 = vld [vmem:[%s1 + $0x28] sm:$0xff]
  %v22 = vld [vmem:[%s1 + $0x30] sm:$0xff]
  %v23 = vld [vmem:[%s1 + $0x38] sm:$0xff]
  %v24 = vld [vmem:[%s1 + $0x40] sm:$0xff]
  %v25 = vld [vmem:[%s1 + $0x48] sm:$0xff]
  %v26 = vld [vmem:[%s1 + $0x50] sm:$0xff]
  %v27 = vld [vmem:[%s1 + $0x58] sm:$0xff]
  %v28 = vld [vmem:[%s1 + $0x60] sm:$0xff]
  %v29 = vld [vmem:[%s1 + $0x68] sm:$0xff]
  %v30 = vld [vmem:[%s1 + $0x70] sm:$0xff]
  %v31 = vld [vmem:[%s1 + $0x78] sm:$0xff]
  %v36 = vunpack.c.l.b16 %v12
  %v37 = vunpack.c.l.b16 %v13
  %v38 = vunpack.c.l.b16 %v14
  %v39 = vunpack.c.l.b16 %v15
  %v40 = vpack.c.b16 %v37, %v36
  %v41 = vpack.c.b16 %v39, %v38
  %v58 = vunpack.c.l.b16 %v16
  %v59 = vunpack.c.h.b16 %v16
  %v60 = vunpack.c.l.b16 %v17
  %v61 = vunpack.c.h.b16 %v17
  %v62 = vunpack.c.l.b16 %v18
  %v63 = vunpack.c.h.b16 %v18
  %v64 = vunpack.c.l.b16 %v19
  %v65 = vunpack.c.h.b16 %v19
  %v66 = vunpack.c.l.b16 %v20
  %v67 = vunpack.c.h.b16 %v20
  %v68 = vunpack.c.l.b16 %v21
  %v69 = vunpack.c.h.b16 %v21
  %v70 = vunpack.c.l.b16 %v22
  %v71 = vunpack.c.h.b16 %v22
  %v72 = vunpack.c.l.b16 %v23
  %v73 = vunpack.c.h.b16 %v23
  %v74 = vunpack.c.l.b16 %v24
  %v75 = vunpack.c.h.b16 %v24
  %v76 = vunpack.c.l.b16 %v25
  %v77 = vunpack.c.h.b16 %v25
  %v78 = vunpack.c.l.b16 %v26
  %v79 = vunpack.c.h.b16 %v26
  %v80 = vunpack.c.l.b16 %v27
  %v81 = vunpack.c.h.b16 %v27
  %v82 = vunpack.c.l.b16 %v28
  %v83 = vunpack.c.h.b16 %v28
  %v84 = vunpack.c.l.b16 %v29
  %v85 = vunpack.c.h.b16 %v29
  %v86 = vunpack.c.l.b16 %v30
  %v87 = vunpack.c.h.b16 %v30
  %v88 = vunpack.c.l.b16 %v31
  %v89 = vunpack.c.h.b16 %v31
  %v90 = vpack.c.b16 %v58, %v58
  %v91 = vpack.c.b16 %v59, %v59
  %v92 = vpack.c.b16 %v60, %v60
  %v93 = vpack.c.b16 %v61, %v61
  %v94 = vpack.c.b16 %v62, %v62
  %v95 = vpack.c.b16 %v63, %v63
  %v96 = vpack.c.b16 %v64, %v64
  %v97 = vpack.c.b16 %v65, %v65
  %v98 = vpack.c.b16 %v66, %v66
  %v99 = vpack.c.b16 %v67, %v67
  %v100 = vpack.c.b16 %v68, %v68
  %v101 = vpack.c.b16 %v69, %v69
  %v102 = vpack.c.b16 %v70, %v70
  %v103 = vpack.c.b16 %v71, %v71
  %v104 = vpack.c.b16 %v72, %v72
  %v105 = vpack.c.b16 %v73, %v73
  %v106 = vpack.c.b16 %v74, %v74
  %v107 = vpack.c.b16 %v75, %v75
  %v108 = vpack.c.b16 %v76, %v76
  %v109 = vpack.c.b16 %v77, %v77
  %v110 = vpack.c.b16 %v78, %v78
  %v111 = vpack.c.b16 %v79, %v79
  %v112 = vpack.c.b16 %v80, %v80
  %v113 = vpack.c.b16 %v81, %v81
  %v114 = vpack.c.b16 %v82, %v82
  %v115 = vpack.c.b16 %v83, %v83
  %v116 = vpack.c.b16 %v84, %v84
  %v117 = vpack.c.b16 %v85, %v85
  %v118 = vpack.c.b16 %v86, %v86
  %v119 = vpack.c.b16 %v87, %v87
  %v120 = vpack.c.b16 %v88, %v88
  %v121 = vpack.c.b16 %v89, %v89
  %vm122 = vcmask 64512
  %v124 = vsel %vm122, %v40, 0
  %v127 = vsel %vm122, %v41, 0
  %vm129 = vcmask 1043456
  %v131 = vsel %vm129, %v90, 0
  %v134 = vsel %vm129, %v91, 0
  %v137 = vsel %vm129, %v92, 0
  %v140 = vsel %vm129, %v93, 0
  %v143 = vsel %vm129, %v94, 0
  %v146 = vsel %vm129, %v95, 0
  %v149 = vsel %vm129, %v96, 0
  %v152 = vsel %vm129, %v97, 0
  %v155 = vsel %vm129, %v98, 0
  %v158 = vsel %vm129, %v99, 0
  %v161 = vsel %vm129, %v100, 0
  %v164 = vsel %vm129, %v101, 0
  %v167 = vsel %vm129, %v102, 0
  %v170 = vsel %vm129, %v103, 0
  %v173 = vsel %vm129, %v104, 0
  %v176 = vsel %vm129, %v105, 0
  %v179 = vsel %vm129, %v106, 0
  %v182 = vsel %vm129, %v107, 0
  %v185 = vsel %vm129, %v108, 0
  %v188 = vsel %vm129, %v109, 0
  %v191 = vsel %vm129, %v110, 0
  %v194 = vsel %vm129, %v111, 0
  %v197 = vsel %vm129, %v112, 0
  %v200 = vsel %vm129, %v113, 0
  %v203 = vsel %vm129, %v114, 0
  %v206 = vsel %vm129, %v115, 0
  %v209 = vsel %vm129, %v116, 0
  %v212 = vsel %vm129, %v117, 0
  %v215 = vsel %vm129, %v118, 0
  %v218 = vsel %vm129, %v119, 0
  %v221 = vsel %vm129, %v120, 0
  %v224 = vsel %vm129, %v121, 0
  %226 = vmatprep.subr.bf16.mxu0 %v134
  %227 = vmatpush1.bf16.msra.mxu0 %v131
  %228 = vmatprep.subr.bf16.mxu0 0
  %229 = vmatpush1.bf16.msra.mxu0 0
  %230 = vmatprep.subr.bf16.mxu0 0
  %231 = vmatpush1.bf16.msra.mxu0 0
  %232 = vmatprep.subr.bf16.mxu0 0
  %233 = vmatpush1.bf16.msra.mxu0 0
  %234 = vmatprep.subr.bf16.mxu0 0
  %235 = vmatpush1.bf16.msra.mxu0 0
  %236 = vmatprep.subr.bf16.mxu0 0
  %237 = vmatpush1.bf16.msra.mxu0 0
  %238 = vmatprep.subr.bf16.mxu0 0
  %239 = vmatpush1.bf16.msra.mxu0 0
  %240 = vmatprep.subr.bf16.mxu0 0
  %241 = vmatpush1.bf16.msra.mxu0 0
  %242 = vmatprep.subr.bf16.mxu0 0
  %243 = vmatpush1.bf16.msra.mxu0 0
  %244 = vmatprep.subr.bf16.mxu0 0
  %245 = vmatpush1.bf16.msra.mxu0 0
  %246 = vmatprep.subr.bf16.mxu0 0
  %247 = vmatpush1.bf16.msra.mxu0 0
  %248 = vmatprep.subr.bf16.mxu0 0
  %249 = vmatpush1.bf16.msra.mxu0 0
  %250 = vmatprep.subr.bf16.mxu0 0
  %251 = vmatpush1.bf16.msra.mxu0 0
  %252 = vmatprep.subr.bf16.mxu0 0
  %253 = vmatpush1.bf16.msra.mxu0 0
  %254 = vmatprep.subr.bf16.mxu0 0
  %255 = vmatpush1.bf16.msra.mxu0 0
  %256 = vmatprep.subr.bf16.mxu0 0
  %257 = vmatpush1.bf16.msra.mxu0 0
  %258 = vmatprep.mubr.bf16.mxu0 0
  %259 = vmatmul.mubr.bf16.gmra.mrb[0].mxu0 %v124
  %v260 = vpop.f32.mrb[0].mxu0
  %v261 = vadd.f32 0.0, %v260
  %v262 = vpop.f32.mrb[0].mxu0
  %v263 = vadd.f32 0.0, %v262
  %v264 = vpop.f32.mrb[0].mxu0
  %v265 = vadd.f32 0.0, %v264
  %v266 = vpop.f32.mrb[0].mxu0
  %v267 = vadd.f32 0.0, %v266
  %268 = vmatprep.mubr.bf16.mxu0 0
  %269 = vmatmul.mubr.bf16.gmra.mrb[0].mxu0 %v127
  %v270 = vpop.f32.mrb[0].mxu0
  %v271 = vadd.f32 0.0, %v270
  %v272 = vpop.f32.mrb[0].mxu0
  %v273 = vadd.f32 0.0, %v272
  %v274 = vpop.f32.mrb[0].mxu0
  %v275 = vadd.f32 0.0, %v274
  %v276 = vpop.f32.mrb[0].mxu0
  %v277 = vadd.f32 0.0, %v276
  %278 = vdwg.mxu0
  %279 = vmatprep.subr.bf16.mxu0 %v140
  %280 = vmatpush1.bf16.msra.mxu0 %v137
  %281 = vmatprep.subr.bf16.mxu0 0
  %282 = vmatpush1.bf16.msra.mxu0 0
  %283 = vmatprep.subr.bf16.mxu0 0
  %284 = vmatpush1.bf16.msra.mxu0 0
  %285 = vmatprep.subr.bf16.mxu0 0
  %286 = vmatpush1.bf16.msra.mxu0 0
  %287 = vmatprep.subr.bf16.mxu0 0
  %288 = vmatpush1.bf16.msra.mxu0 0
  %289 = vmatprep.subr.bf16.mxu0 0
  %290 = vmatpush1.bf16.msra.mxu0 0
  %291 = vmatprep.subr.bf16.mxu0 0
  %292 = vmatpush1.bf16.msra.mxu0 0
  %293 = vmatprep.subr.bf16.mxu0 0
  %294 = vmatpush1.bf16.msra.mxu0 0
  %295 = vmatprep.subr.bf16.mxu0 0
  %296 = vmatpush1.bf16.msra.mxu0 0
  %297 = vmatprep.subr.bf16.mxu0 0
  %298 = vmatpush1.bf16.msra.mxu0 0
  %299 = vmatprep.subr.bf16.mxu0 0
  %300 = vmatpush1.bf16.msra.mxu0 0
  %301 = vmatprep.subr.bf16.mxu0 0
  %302 = vmatpush1.bf16.msra.mxu0 0
  %303 = vmatprep.subr.bf16.mxu0 0
  %304 = vmatpush1.bf16.msra.mxu0 0
  %305 = vmatprep.subr.bf16.mxu0 0
  %306 = vmatpush1.bf16.msra.mxu0 0
  %307 = vmatprep.subr.bf16.mxu0 0
  %308 = vmatpush1.bf16.msra.mxu0 0
  %309 = vmatprep.subr.bf16.mxu0 0
  %310 = vmatpush1.bf16.msra.mxu0 0
  %311 = vmatprep.mubr.bf16.mxu0 0
  %312 = vmatmul.mubr.bf16.gmra.mrb[0].mxu0 %v124
  %v313 = vpop.f32.mrb[0].mxu0
  %v314 = vadd.f32 0.0, %v313
  %v315 = vpop.f32.mrb[0].mxu0
  %v316 = vadd.f32 0.0, %v315
  %v317 = vpop.f32.mrb[0].mxu0
  %v318 = vadd.f32 0.0, %v317
  %v319 = vpop.f32.mrb[0].mxu0
  %v320 = vadd.f32 0.0, %v319
  %321 = vmatprep.mubr.bf16.mxu0 0
  %322 = vmatmul.mubr.bf16.gmra.mrb[0].mxu0 %v127
  %v323 = vpop.f32.mrb[0].mxu0
  %v324 = vadd.f32 0.0, %v323
  %v325 = vpop.f32.mrb[0].mxu0
  %v326 = vadd.f32 0.0, %v325
  %v327 = vpop.f32.mrb[0].mxu0
  %v328 = vadd.f32 0.0, %v327
  %v329 = vpop.f32.mrb[0].mxu0
  %v330 = vadd.f32 0.0, %v329
  %331 = vdwg.mxu0
  %332 = vmatprep.subr.bf16.mxu0 %v146
  %333 = vmatpush1.bf16.msra.mxu0 %v143
  %334 = vmatprep.subr.bf16.mxu0 0
  %335 = vmatpush1.bf16.msra.mxu0 0
  %336 = vmatprep.subr.bf16.mxu0 0
  %337 = vmatpush1.bf16.msra.mxu0 0
  %338 = vmatprep.subr.bf16.mxu0 0
  %339 = vmatpush1.bf16.msra.mxu0 0
  %340 = vmatprep.subr.bf16.mxu0 0
  %341 = vmatpush1.bf16.msra.mxu0 0
  %342 = vmatprep.subr.bf16.mxu0 0
  %343 = vmatpush1.bf16.msra.mxu0 0
  %344 = vmatprep.subr.bf16.mxu0 0
  %345 = vmatpush1.bf16.msra.mxu0 0
  %346 = vmatprep.subr.bf16.mxu0 0
  %347 = vmatpush1.bf16.msra.mxu0 0
  %348 = vmatprep.subr.bf16.mxu0 0
  %349 = vmatpush1.bf16.msra.mxu0 0
  %350 = vmatprep.subr.bf16.mxu0 0
  %351 = vmatpush1.bf16.msra.mxu0 0
  %352 = vmatprep.subr.bf16.mxu0 0
  %353 = vmatpush1.bf16.msra.mxu0 0
  %354 = vmatprep.subr.bf16.mxu0 0
  %355 = vmatpush1.bf16.msra.mxu0 0
  %356 = vmatprep.subr.bf16.mxu0 0
  %357 = vmatpush1.bf16.msra.mxu0 0
  %358 = vmatprep.subr.bf16.mxu0 0
  %359 = vmatpush1.bf16.msra.mxu0 0
  %360 = vmatprep.subr.bf16.mxu0 0
  %361 = vmatpush1.bf16.msra.mxu0 0
  %362 = vmatprep.subr.bf16.mxu0 0
  %363 = vmatpush1.bf16.msra.mxu0 0
  %364 = vmatprep.mubr.bf16.mxu0 0
  %365 = vmatmul.mubr.bf16.gmra.mrb[0].mxu0 %v124
  %v366 = vpop.f32.mrb[0].mxu0
  %v367 = vadd.f32 0.0, %v366
  %v368 = vpop.f32.mrb[0].mxu0
  %v369 = vadd.f32 0.0, %v368
  %v370 = vpop.f32.mrb[0].mxu0
  %v371 = vadd.f32 0.0, %v370
  %v372 = vpop.f32.mrb[0].mxu0
  %v373 = vadd.f32 0.0, %v372
  %374 = vmatprep.mubr.bf16.mxu0 0
  %375 = vmatmul.mubr.bf16.gmra.mrb[0].mxu0 %v127
  %v376 = vpop.f32.mrb[0].mxu0
  %v377 = vadd.f32 0.0, %v376
  %v378 = vpop.f32.mrb[0].mxu0
  %v379 = vadd.f32 0.0, %v378
  %v380 = vpop.f32.mrb[0].mxu0
  %v381 = vadd.f32 0.0, %v380
  %v382 = vpop.f32.mrb[0].mxu0
  %v383 = vadd.f32 0.0, %v382
  %384 = vdwg.mxu0
  %385 = vmatprep.subr.bf16.mxu0 %v152
  %386 = vmatpush1.bf16.msra.mxu0 %v149
  %387 = vmatprep.subr.bf16.mxu0 0
  %388 = vmatpush1.bf16.msra.mxu0 0
  %389 = vmatprep.subr.bf16.mxu0 0
  %390 = vmatpush1.bf16.msra.mxu0 0
  %391 = vmatprep.subr.bf16.mxu0 0
  %392 = vmatpush1.bf16.msra.mxu0 0
  %393 = vmatprep.subr.bf16.mxu0 0
  %394 = vmatpush1.bf16.msra.mxu0 0
  %395 = vmatprep.subr.bf16.mxu0 0
  %396 = vmatpush1.bf16.msra.mxu0 0
  %397 = vmatprep.subr.bf16.mxu0 0
  %398 = vmatpush1.bf16.msra.mxu0 0
  %399 = vmatprep.subr.bf16.mxu0 0
  %400 = vmatpush1.bf16.msra.mxu0 0
  %401 = vmatprep.subr.bf16.mxu0 0
  %402 = vmatpush1.bf16.msra.mxu0 0
  %403 = vmatprep.subr.bf16.mxu0 0
  %404 = vmatpush1.bf16.msra.mxu0 0
  %405 = vmatprep.subr.bf16.mxu0 0
  %406 = vmatpush1.bf16.msra.mxu0 0
  %407 = vmatprep.subr.bf16.mxu0 0
  %408 = vmatpush1.bf16.msra.mxu0 0
  %409 = vmatprep.subr.bf16.mxu0 0
  %410 = vmatpush1.bf16.msra.mxu0 0
  %411 = vmatprep.subr.bf16.mxu0 0
  %412 = vmatpush1.bf16.msra.mxu0 0
  %413 = vmatprep.subr.bf16.mxu0 0
  %414 = vmatpush1.bf16.msra.mxu0 0
  %415 = vmatprep.subr.bf16.mxu0 0
  %416 = vmatpush1.bf16.msra.mxu0 0
  %417 = vmatprep.mubr.bf16.mxu0 0
  %418 = vmatmul.mubr.bf16.gmra.mrb[0].mxu0 %v124
  %v419 = vpop.f32.mrb[0].mxu0
  %v420 = vadd.f32 0.0, %v419
  %v421 = vpop.f32.mrb[0].mxu0
  %v422 = vadd.f32 0.0, %v421
  %v423 = vpop.f32.mrb[0].mxu0
  %v424 = vadd.f32 0.0, %v423
  %v425 = vpop.f32.mrb[0].mxu0
  %v426 = vadd.f32 0.0, %v425
  %427 = vmatprep.mubr.bf16.mxu0 0
  %428 = vmatmul.mubr.bf16.gmra.mrb[0].mxu0 %v127
  %v429 = vpop.f32.mrb[0].mxu0
  %v430 = vadd.f32 0.0, %v429
  %v431 = vpop.f32.mrb[0].mxu0
  %v432 = vadd.f32 0.0, %v431
  %v433 = vpop.f32.mrb[0].mxu0
  %v434 = vadd.f32 0.0, %v433
  %v435 = vpop.f32.mrb[0].mxu0
  %v436 = vadd.f32 0.0, %v435
  %437 = vdwg.mxu0
  %438 = vmatprep.subr.bf16.mxu0 %v158
  %439 = vmatpush1.bf16.msra.mxu0 %v155
  %440 = vmatprep.subr.bf16.mxu0 0
  %441 = vmatpush1.bf16.msra.mxu0 0
  %442 = vmatprep.subr.bf16.mxu0 0
  %443 = vmatpush1.bf16.msra.mxu0 0
  %444 = vmatprep.subr.bf16.mxu0 0
  %445 = vmatpush1.bf16.msra.mxu0 0
  %446 = vmatprep.subr.bf16.mxu0 0
  %447 = vmatpush1.bf16.msra.mxu0 0
  %448 = vmatprep.subr.bf16.mxu0 0
  %449 = vmatpush1.bf16.msra.mxu0 0
  %450 = vmatprep.subr.bf16.mxu0 0
  %451 = vmatpush1.bf16.msra.mxu0 0
  %452 = vmatprep.subr.bf16.mxu0 0
  %453 = vmatpush1.bf16.msra.mxu0 0
  %454 = vmatprep.subr.bf16.mxu0 0
  %455 = vmatpush1.bf16.msra.mxu0 0
  %456 = vmatprep.subr.bf16.mxu0 0
  %457 = vmatpush1.bf16.msra.mxu0 0
  %458 = vmatprep.subr.bf16.mxu0 0
  %459 = vmatpush1.bf16.msra.mxu0 0
  %460 = vmatprep.subr.bf16.mxu0 0
  %461 = vmatpush1.bf16.msra.mxu0 0
  %462 = vmatprep.subr.bf16.mxu0 0
  %463 = vmatpush1.bf16.msra.mxu0 0
  %464 = vmatprep.subr.bf16.mxu0 0
  %465 = vmatpush1.bf16.msra.mxu0 0
  %466 = vmatprep.subr.bf16.mxu0 0
  %467 = vmatpush1.bf16.msra.mxu0 0
  %468 = vmatprep.subr.bf16.mxu0 0
  %469 = vmatpush1.bf16.msra.mxu0 0
  %470 = vmatprep.mubr.bf16.mxu0 0
  %471 = vmatmul.mubr.bf16.gmra.mrb[0].mxu0 %v124
  %v472 = vpop.f32.mrb[0].mxu0
  %v473 = vadd.f32 0.0, %v472
  %v474 = vpop.f32.mrb[0].mxu0
  %v475 = vadd.f32 0.0, %v474
  %v476 = vpop.f32.mrb[0].mxu0
  %v477 = vadd.f32 0.0, %v476
  %v478 = vpop.f32.mrb[0].mxu0
  %v479 = vadd.f32 0.0, %v478
  %480 = vmatprep.mubr.bf16.mxu0 0
  %481 = vmatmul.mubr.bf16.gmra.mrb[0].mxu0 %v127
  %v482 = vpop.f32.mrb[0].mxu0
  %v483 = vadd.f32 0.0, %v482
  %v484 = vpop.f32.mrb[0].mxu0
  %v485 = vadd.f32 0.0, %v484
  %v486 = vpop.f32.mrb[0].mxu0
  %v487 = vadd.f32 0.0, %v486
  %v488 = vpop.f32.mrb[0].mxu0
  %v489 = vadd.f32 0.0, %v488
  %490 = vdwg.mxu0
  %491 = vmatprep.subr.bf16.mxu0 %v164
  %492 = vmatpush1.bf16.msra.mxu0 %v161
  %493 = vmatprep.subr.bf16.mxu0 0
  %494 = vmatpush1.bf16.msra.mxu0 0
  %495 = vmatprep.subr.bf16.mxu0 0
  %496 = vmatpush1.bf16.msra.mxu0 0
  %497 = vmatprep.subr.bf16.mxu0 0
  %498 = vmatpush1.bf16.msra.mxu0 0
  %499 = vmatprep.subr.bf16.mxu0 0
  %500 = vmatpush1.bf16.msra.mxu0 0
  %501 = vmatprep.subr.bf16.mxu0 0
  %502 = vmatpush1.bf16.msra.mxu0 0
  %503 = vmatprep.subr.bf16.mxu0 0
  %504 = vmatpush1.bf16.msra.mxu0 0
  %505 = vmatprep.subr.bf16.mxu0 0
  %506 = vmatpush1.bf16.msra.mxu0 0
  %507 = vmatprep.subr.bf16.mxu0 0
  %508 = vmatpush1.bf16.msra.mxu0 0
  %509 = vmatprep.subr.bf16.mxu0 0
  %510 = vmatpush1.bf16.msra.mxu0 0
  %511 = vmatprep.subr.bf16.mxu0 0
  %512 = vmatpush1.bf16.msra.mxu0 0
  %513 = vmatprep.subr.bf16.mxu0 0
  %514 = vmatpush1.bf16.msra.mxu0 0
  %515 = vmatprep.subr.bf16.mxu0 0
  %516 = vmatpush1.bf16.msra.mxu0 0
  %517 = vmatprep.subr.bf16.mxu0 0
  %518 = vmatpush1.bf16.msra.mxu0 0
  %519 = vmatprep.subr.bf16.mxu0 0
  %520 = vmatpush1.bf16.msra.mxu0 0
  %521 = vmatprep.subr.bf16.mxu0 0
  %522 = vmatpush1.bf16.msra.mxu0 0
  %523 = vmatprep.mubr.bf16.mxu0 0
  %524 = vmatmul.mubr.bf16.gmra.mrb[0].mxu0 %v124
  %v525 = vpop.f32.mrb[0].mxu0
  %v526 = vadd.f32 0.0, %v525
  %v527 = vpop.f32.mrb[0].mxu0
  %v528 = vadd.f32 0.0, %v527
  %v529 = vpop.f32.mrb[0].mxu0
  %v530 = vadd.f32 0.0, %v529
  %v531 = vpop.f32.mrb[0].mxu0
  %v532 = vadd.f32 0.0, %v531
  %533 = vmatprep.mubr.bf16.mxu0 0
  %534 = vmatmul.mubr.bf16.gmra.mrb[0].mxu0 %v127
  %v535 = vpop.f32.mrb[0].mxu0
  %v536 = vadd.f32 0.0, %v535
  %v537 = vpop.f32.mrb[0].mxu0
  %v538 = vadd.f32 0.0, %v537
  %v539 = vpop.f32.mrb[0].mxu0
  %v540 = vadd.f32 0.0, %v539
  %v541 = vpop.f32.mrb[0].mxu0
  %v542 = vadd.f32 0.0, %v541
  %543 = vdwg.mxu0
  %544 = vmatprep.subr.bf16.mxu0 %v170
  %545 = vmatpush1.bf16.msra.mxu0 %v167
  %546 = vmatprep.subr.bf16.mxu0 0
  %547 = vmatpush1.bf16.msra.mxu0 0
  %548 = vmatprep.subr.bf16.mxu0 0
  %549 = vmatpush1.bf16.msra.mxu0 0
  %550 = vmatprep.subr.bf16.mxu0 0
  %551 = vmatpush1.bf16.msra.mxu0 0
  %552 = vmatprep.subr.bf16.mxu0 0
  %553 = vmatpush1.bf16.msra.mxu0 0
  %554 = vmatprep.subr.bf16.mxu0 0
  %555 = vmatpush1.bf16.msra.mxu0 0
  %556 = vmatprep.subr.bf16.mxu0 0
  %557 = vmatpush1.bf16.msra.mxu0 0
  %558 = vmatprep.subr.bf16.mxu0 0
  %559 = vmatpush1.bf16.msra.mxu0 0
  %560 = vmatprep.subr.bf16.mxu0 0
  %561 = vmatpush1.bf16.msra.mxu0 0
  %562 = vmatprep.subr.bf16.mxu0 0
  %563 = vmatpush1.bf16.msra.mxu0 0
  %564 = vmatprep.subr.bf16.mxu0 0
  %565 = vmatpush1.bf16.msra.mxu0 0
  %566 = vmatprep.subr.bf16.mxu0 0
  %567 = vmatpush1.bf16.msra.mxu0 0
  %568 = vmatprep.subr.bf16.mxu0 0
  %569 = vmatpush1.bf16.msra.mxu0 0
  %570 = vmatprep.subr.bf16.mxu0 0
  %571 = vmatpush1.bf16.msra.mxu0 0
  %572 = vmatprep.subr.bf16.mxu0 0
  %573 = vmatpush1.bf16.msra.mxu0 0
  %574 = vmatprep.subr.bf16.mxu0 0
  %575 = vmatpush1.bf16.msra.mxu0 0
  %576 = vmatprep.mubr.bf16.mxu0 0
  %577 = vmatmul.mubr.bf16.gmra.mrb[0].mxu0 %v124
  %v578 = vpop.f32.mrb[0].mxu0
  %v579 = vadd.f32 0.0, %v578
  %v580 = vpop.f32.mrb[0].mxu0
  %v581 = vadd.f32 0.0, %v580
  %v582 = vpop.f32.mrb[0].mxu0
  %v583 = vadd.f32 0.0, %v582
  %v584 = vpop.f32.mrb[0].mxu0
  %v585 = vadd.f32 0.0, %v584
  %586 = vmatprep.mubr.bf16.mxu0 0
  %587 = vmatmul.mubr.bf16.gmra.mrb[0].mxu0 %v127
  %v588 = vpop.f32.mrb[0].mxu0
  %v589 = vadd.f32 0.0, %v588
  %v590 = vpop.f32.mrb[0].mxu0
  %v591 = vadd.f32 0.0, %v590
  %v592 = vpop.f32.mrb[0].mxu0
  %v593 = vadd.f32 0.0, %v592
  %v594 = vpop.f32.mrb[0].mxu0
  %v595 = vadd.f32 0.0, %v594
  %596 = vdwg.mxu0
  %597 = vmatprep.subr.bf16.mxu0 %v176
  %598 = vmatpush1.bf16.msra.mxu0 %v173
  %599 = vmatprep.subr.bf16.mxu0 0
  %600 = vmatpush1.bf16.msra.mxu0 0
  %601 = vmatprep.subr.bf16.mxu0 0
  %602 = vmatpush1.bf16.msra.mxu0 0
  %603 = vmatprep.subr.bf16.mxu0 0
  %604 = vmatpush1.bf16.msra.mxu0 0
  %605 = vmatprep.subr.bf16.mxu0 0
  %606 = vmatpush1.bf16.msra.mxu0 0
  %607 = vmatprep.subr.bf16.mxu0 0
  %608 = vmatpush1.bf16.msra.mxu0 0
  %609 = vmatprep.subr.bf16.mxu0 0
  %610 = vmatpush1.bf16.msra.mxu0 0
  %611 = vmatprep.subr.bf16.mxu0 0
  %612 = vmatpush1.bf16.msra.mxu0 0
  %613 = vmatprep.subr.bf16.mxu0 0
  %614 = vmatpush1.bf16.msra.mxu0 0
  %615 = vmatprep.subr.bf16.mxu0 0
  %616 = vmatpush1.bf16.msra.mxu0 0
  %617 = vmatprep.subr.bf16.mxu0 0
  %618 = vmatpush1.bf16.msra.mxu0 0
  %619 = vmatprep.subr.bf16.mxu0 0
  %620 = vmatpush1.bf16.msra.mxu0 0
  %621 = vmatprep.subr.bf16.mxu0 0
  %622 = vmatpush1.bf16.msra.mxu0 0
  %623 = vmatprep.subr.bf16.mxu0 0
  %624 = vmatpush1.bf16.msra.mxu0 0
  %625 = vmatprep.subr.bf16.mxu0 0
  %626 = vmatpush1.bf16.msra.mxu0 0
  %627 = vmatprep.subr.bf16.mxu0 0
  %628 = vmatpush1.bf16.msra.mxu0 0
  %629 = vmatprep.mubr.bf16.mxu0 0
  %630 = vmatmul.mubr.bf16.gmra.mrb[0].mxu0 %v124
  %v631 = vpop.f32.mrb[0].mxu0
  %v632 = vadd.f32 0.0, %v631
  %v633 = vpop.f32.mrb[0].mxu0
  %v634 = vadd.f32 0.0, %v633
  %v635 = vpop.f32.mrb[0].mxu0
  %v636 = vadd.f32 0.0, %v635
  %v637 = vpop.f32.mrb[0].mxu0
  %v638 = vadd.f32 0.0, %v637
  %639 = vmatprep.mubr.bf16.mxu0 0
  %640 = vmatmul.mubr.bf16.gmra.mrb[0].mxu0 %v127
  %v641 = vpop.f32.mrb[0].mxu0
  %v642 = vadd.f32 0.0, %v641
  %v643 = vpop.f32.mrb[0].mxu0
  %v644 = vadd.f32 0.0, %v643
  %v645 = vpop.f32.mrb[0].mxu0
  %v646 = vadd.f32 0.0, %v645
  %v647 = vpop.f32.mrb[0].mxu0
  %v648 = vadd.f32 0.0, %v647
  %649 = vdwg.mxu0
  %650 = vmatprep.subr.bf16.mxu0 %v182
  %651 = vmatpush1.bf16.msra.mxu0 %v179
  %652 = vmatprep.subr.bf16.mxu0 0
  %653 = vmatpush1.bf16.msra.mxu0 0
  %654 = vmatprep.subr.bf16.mxu0 0
  %655 = vmatpush1.bf16.msra.mxu0 0
  %656 = vmatprep.subr.bf16.mxu0 0
  %657 = vmatpush1.bf16.msra.mxu0 0
  %658 = vmatprep.subr.bf16.mxu0 0
  %659 = vmatpush1.bf16.msra.mxu0 0
  %660 = vmatprep.subr.bf16.mxu0 0
  %661 = vmatpush1.bf16.msra.mxu0 0
  %662 = vmatprep.subr.bf16.mxu0 0
  %663 = vmatpush1.bf16.msra.mxu0 0
  %664 = vmatprep.subr.bf16.mxu0 0
  %665 = vmatpush1.bf16.msra.mxu0 0
  %666 = vmatprep.subr.bf16.mxu0 0
  %667 = vmatpush1.bf16.msra.mxu0 0
  %668 = vmatprep.subr.bf16.mxu0 0
  %669 = vmatpush1.bf16.msra.mxu0 0
  %670 = vmatprep.subr.bf16.mxu0 0
  %671 = vmatpush1.bf16.msra.mxu0 0
  %672 = vmatprep.subr.bf16.mxu0 0
  %673 = vmatpush1.bf16.msra.mxu0 0
  %674 = vmatprep.subr.bf16.mxu0 0
  %675 = vmatpush1.bf16.msra.mxu0 0
  %676 = vmatprep.subr.bf16.mxu0 0
  %677 = vmatpush1.bf16.msra.mxu0 0
  %678 = vmatprep.subr.bf16.mxu0 0
  %679 = vmatpush1.bf16.msra.mxu0 0
  %680 = vmatprep.subr.bf16.mxu0 0
  %681 = vmatpush1.bf16.msra.mxu0 0
  %682 = vmatprep.mubr.bf16.mxu0 0
  %683 = vmatmul.mubr.bf16.gmra.mrb[0].mxu0 %v124
  %v684 = vpop.f32.mrb[0].mxu0
  %v685 = vadd.f32 0.0, %v684
  %v686 = vpop.f32.mrb[0].mxu0
  %v687 = vadd.f32 0.0, %v686
  %v688 = vpop.f32.mrb[0].mxu0
  %v689 = vadd.f32 0.0, %v688
  %v690 = vpop.f32.mrb[0].mxu0
  %v691 = vadd.f32 0.0, %v690
  %692 = vmatprep.mubr.bf16.mxu0 0
  %693 = vmatmul.mubr.bf16.gmra.mrb[0].mxu0 %v127
  %v694 = vpop.f32.mrb[0].mxu0
  %v695 = vadd.f32 0.0, %v694
  %v696 = vpop.f32.mrb[0].mxu0
  %v697 = vadd.f32 0.0, %v696
  %v698 = vpop.f32.mrb[0].mxu0
  %v699 = vadd.f32 0.0, %v698
  %v700 = vpop.f32.mrb[0].mxu0
  %v701 = vadd.f32 0.0, %v700
  %702 = vdwg.mxu0
  %703 = vmatprep.subr.bf16.mxu0 %v188
  %704 = vmatpush1.bf16.msra.mxu0 %v185
  %705 = vmatprep.subr.bf16.mxu0 0
  %706 = vmatpush1.bf16.msra.mxu0 0
  %707 = vmatprep.subr.bf16.mxu0 0
  %708 = vmatpush1.bf16.msra.mxu0 0
  %709 = vmatprep.subr.bf16.mxu0 0
  %710 = vmatpush1.bf16.msra.mxu0 0
  %711 = vmatprep.subr.bf16.mxu0 0
  %712 = vmatpush1.bf16.msra.mxu0 0
  %713 = vmatprep.subr.bf16.mxu0 0
  %714 = vmatpush1.bf16.msra.mxu0 0
  %715 = vmatprep.subr.bf16.mxu0 0
  %716 = vmatpush1.bf16.msra.mxu0 0
  %717 = vmatprep.subr.bf16.mxu0 0
  %718 = vmatpush1.bf16.msra.mxu0 0
  %719 = vmatprep.subr.bf16.mxu0 0
  %720 = vmatpush1.bf16.msra.mxu0 0
  %721 = vmatprep.subr.bf16.mxu0 0
  %722 = vmatpush1.bf16.msra.mxu0 0
  %723 = vmatprep.subr.bf16.mxu0 0
  %724 = vmatpush1.bf16.msra.mxu0 0
  %725 = vmatprep.subr.bf16.mxu0 0
  %726 = vmatpush1.bf16.msra.mxu0 0
  %727 = vmatprep.subr.bf16.mxu0 0
  %728 = vmatpush1.bf16.msra.mxu0 0
  %729 = vmatprep.subr.bf16.mxu0 0
  %730 = vmatpush1.bf16.msra.mxu0 0
  %731 = vmatprep.subr.bf16.mxu0 0
  %732 = vmatpush1.bf16.msra.mxu0 0
  %733 = vmatprep.subr.bf16.mxu0 0
  %734 = vmatpush1.bf16.msra.mxu0 0
  %735 = vmatprep.mubr.bf16.mxu0 0
  %736 = vmatmul.mubr.bf16.gmra.mrb[0].mxu0 %v124
  %v737 = vpop.f32.mrb[0].mxu0
  %v738 = vadd.f32 0.0, %v737
  %v739 = vpop.f32.mrb[0].mxu0
  %v740 = vadd.f32 0.0, %v739
  %v741 = vpop.f32.mrb[0].mxu0
  %v742 = vadd.f32 0.0, %v741
  %v743 = vpop.f32.mrb[0].mxu0
  %v744 = vadd.f32 0.0, %v743
  %745 = vmatprep.mubr.bf16.mxu0 0
  %746 = vmatmul.mubr.bf16.gmra.mrb[0].mxu0 %v127
  %v747 = vpop.f32.mrb[0].mxu0
  %v748 = vadd.f32 0.0, %v747
  %v749 = vpop.f32.mrb[0].mxu0
  %v750 = vadd.f32 0.0, %v749
  %v751 = vpop.f32.mrb[0].mxu0
  %v752 = vadd.f32 0.0, %v751
  %v753 = vpop.f32.mrb[0].mxu0
  %v754 = vadd.f32 0.0, %v753
  %755 = vdwg.mxu0
  %756 = vmatprep.subr.bf16.mxu0 %v194
  %757 = vmatpush1.bf16.msra.mxu0 %v191
  %758 = vmatprep.subr.bf16.mxu0 0
  %759 = vmatpush1.bf16.msra.mxu0 0
  %760 = vmatprep.subr.bf16.mxu0 0
  %761 = vmatpush1.bf16.msra.mxu0 0
  %762 = vmatprep.subr.bf16.mxu0 0
  %763 = vmatpush1.bf16.msra.mxu0 0
  %764 = vmatprep.subr.bf16.mxu0 0
  %765 = vmatpush1.bf16.msra.mxu0 0
  %766 = vmatprep.subr.bf16.mxu0 0
  %767 = vmatpush1.bf16.msra.mxu0 0
  %768 = vmatprep.subr.bf16.mxu0 0
  %769 = vmatpush1.bf16.msra.mxu0 0
  %770 = vmatprep.subr.bf16.mxu0 0
  %771 = vmatpush1.bf16.msra.mxu0 0
  %772 = vmatprep.subr.bf16.mxu0 0
  %773 = vmatpush1.bf16.msra.mxu0 0
  %774 = vmatprep.subr.bf16.mxu0 0
  %775 = vmatpush1.bf16.msra.mxu0 0
  %776 = vmatprep.subr.bf16.mxu0 0
  %777 = vmatpush1.bf16.msra.mxu0 0
  %778 = vmatprep.subr.bf16.mxu0 0
  %779 = vmatpush1.bf16.msra.mxu0 0
  %780 = vmatprep.subr.bf16.mxu0 0
  %781 = vmatpush1.bf16.msra.mxu0 0
  %782 = vmatprep.subr.bf16.mxu0 0
  %783 = vmatpush1.bf16.msra.mxu0 0
  %784 = vmatprep.subr.bf16.mxu0 0
  %785 = vmatpush1.bf16.msra.mxu0 0
  %786 = vmatprep.subr.bf16.mxu0 0
  %787 = vmatpush1.bf16.msra.mxu0 0
  %788 = vmatprep.mubr.bf16.mxu0 0
  %789 = vmatmul.mubr.bf16.gmra.mrb[0].mxu0 %v124
  %v790 = vpop.f32.mrb[0].mxu0
  %v791 = vadd.f32 0.0, %v790
  %v792 = vpop.f32.mrb[0].mxu0
  %v793 = vadd.f32 0.0, %v792
  %v794 = vpop.f32.mrb[0].mxu0
  %v795 = vadd.f32 0.0, %v794
  %v796 = vpop.f32.mrb[0].mxu0
  %v797 = vadd.f32 0.0, %v796
  %798 = vmatprep.mubr.bf16.mxu0 0
  %799 = vmatmul.mubr.bf16.gmra.mrb[0].mxu0 %v127
  %v800 = vpop.f32.mrb[0].mxu0
  %v801 = vadd.f32 0.0, %v800
  %v802 = vpop.f32.mrb[0].mxu0
  %v803 = vadd.f32 0.0, %v802
  %v804 = vpop.f32.mrb[0].mxu0
  %v805 = vadd.f32 0.0, %v804
  %v806 = vpop.f32.mrb[0].mxu0
  %v807 = vadd.f32 0.0, %v806
  %808 = vdwg.mxu0
  %809 = vmatprep.subr.bf16.mxu0 %v200
  %810 = vmatpush1.bf16.msra.mxu0 %v197
  %811 = vmatprep.subr.bf16.mxu0 0
  %812 = vmatpush1.bf16.msra.mxu0 0
  %813 = vmatprep.subr.bf16.mxu0 0
  %814 = vmatpush1.bf16.msra.mxu0 0
  %815 = vmatprep.subr.bf16.mxu0 0
  %816 = vmatpush1.bf16.msra.mxu0 0
  %817 = vmatprep.subr.bf16.mxu0 0
  %818 = vmatpush1.bf16.msra.mxu0 0
  %819 = vmatprep.subr.bf16.mxu0 0
  %820 = vmatpush1.bf16.msra.mxu0 0
  %821 = vmatprep.subr.bf16.mxu0 0
  %822 = vmatpush1.bf16.msra.mxu0 0
  %823 = vmatprep.subr.bf16.mxu0 0
  %824 = vmatpush1.bf16.msra.mxu0 0
  %825 = vmatprep.subr.bf16.mxu0 0
  %826 = vmatpush1.bf16.msra.mxu0 0
  %827 = vmatprep.subr.bf16.mxu0 0
  %828 = vmatpush1.bf16.msra.mxu0 0
  %829 = vmatprep.subr.bf16.mxu0 0
  %830 = vmatpush1.bf16.msra.mxu0 0
  %831 = vmatprep.subr.bf16.mxu0 0
  %832 = vmatpush1.bf16.msra.mxu0 0
  %833 = vmatprep.subr.bf16.mxu0 0
  %834 = vmatpush1.bf16.msra.mxu0 0
  %835 = vmatprep.subr.bf16.mxu0 0
  %836 = vmatpush1.bf16.msra.mxu0 0
  %837 = vmatprep.subr.bf16.mxu0 0
  %838 = vmatpush1.bf16.msra.mxu0 0
  %839 = vmatprep.subr.bf16.mxu0 0
  %840 = vmatpush1.bf16.msra.mxu0 0
  %841 = vmatprep.mubr.bf16.mxu0 0
  %842 = vmatmul.mubr.bf16.gmra.mrb[0].mxu0 %v124
  %v843 = vpop.f32.mrb[0].mxu0
  %v844 = vadd.f32 0.0, %v843
  %v845 = vpop.f32.mrb[0].mxu0
  %v846 = vadd.f32 0.0, %v845
  %v847 = vpop.f32.mrb[0].mxu0
  %v848 = vadd.f32 0.0, %v847
  %v849 = vpop.f32.mrb[0].mxu0
  %v850 = vadd.f32 0.0, %v849
  %851 = vmatprep.mubr.bf16.mxu0 0
  %852 = vmatmul.mubr.bf16.gmra.mrb[0].mxu0 %v127
  %v853 = vpop.f32.mrb[0].mxu0
  %v854 = vadd.f32 0.0, %v853
  %v855 = vpop.f32.mrb[0].mxu0
  %v856 = vadd.f32 0.0, %v855
  %v857 = vpop.f32.mrb[0].mxu0
  %v858 = vadd.f32 0.0, %v857
  %v859 = vpop.f32.mrb[0].mxu0
  %v860 = vadd.f32 0.0, %v859
  %861 = vdwg.mxu0
  %862 = vmatprep.subr.bf16.mxu0 %v206
  %863 = vmatpush1.bf16.msra.mxu0 %v203
  %864 = vmatprep.subr.bf16.mxu0 0
  %865 = vmatpush1.bf16.msra.mxu0 0
  %866 = vmatprep.subr.bf16.mxu0 0
  %867 = vmatpush1.bf16.msra.mxu0 0
  %868 = vmatprep.subr.bf16.mxu0 0
  %869 = vmatpush1.bf16.msra.mxu0 0
  %870 = vmatprep.subr.bf16.mxu0 0
  %871 = vmatpush1.bf16.msra.mxu0 0
  %872 = vmatprep.subr.bf16.mxu0 0
  %873 = vmatpush1.bf16.msra.mxu0 0
  %874 = vmatprep.subr.bf16.mxu0 0
  %875 = vmatpush1.bf16.msra.mxu0 0
  %876 = vmatprep.subr.bf16.mxu0 0
  %877 = vmatpush1.bf16.msra.mxu0 0
  %878 = vmatprep.subr.bf16.mxu0 0
  %879 = vmatpush1.bf16.msra.mxu0 0
  %880 = vmatprep.subr.bf16.mxu0 0
  %881 = vmatpush1.bf16.msra.mxu0 0
  %882 = vmatprep.subr.bf16.mxu0 0
  %883 = vmatpush1.bf16.msra.mxu0 0
  %884 = vmatprep.subr.bf16.mxu0 0
  %885 = vmatpush1.bf16.msra.mxu0 0
  %886 = vmatprep.subr.bf16.mxu0 0
  %887 = vmatpush1.bf16.msra.mxu0 0
  %888 = vmatprep.subr.bf16.mxu0 0
  %889 = vmatpush1.bf16.msra.mxu0 0
  %890 = vmatprep.subr.bf16.mxu0 0
  %891 = vmatpush1.bf16.msra.mxu0 0
  %892 = vmatprep.subr.bf16.mxu0 0
  %893 = vmatpush1.bf16.msra.mxu0 0
  %894 = vmatprep.mubr.bf16.mxu0 0
  %895 = vmatmul.mubr.bf16.gmra.mrb[0].mxu0 %v124
  %v896 = vpop.f32.mrb[0].mxu0
  %v897 = vadd.f32 0.0, %v896
  %v898 = vpop.f32.mrb[0].mxu0
  %v899 = vadd.f32 0.0, %v898
  %v900 = vpop.f32.mrb[0].mxu0
  %v901 = vadd.f32 0.0, %v900
  %v902 = vpop.f32.mrb[0].mxu0
  %v903 = vadd.f32 0.0, %v902
  %904 = vmatprep.mubr.bf16.mxu0 0
  %905 = vmatmul.mubr.bf16.gmra.mrb[0].mxu0 %v127
  %v906 = vpop.f32.mrb[0].mxu0
  %v907 = vadd.f32 0.0, %v906
  %v908 = vpop.f32.mrb[0].mxu0
  %v909 = vadd.f32 0.0, %v908
  %v910 = vpop.f32.mrb[0].mxu0
  %v911 = vadd.f32 0.0, %v910
  %v912 = vpop.f32.mrb[0].mxu0
  %v913 = vadd.f32 0.0, %v912
  %914 = vdwg.mxu0
  %915 = vmatprep.subr.bf16.mxu0 %v212
  %916 = vmatpush1.bf16.msra.mxu0 %v209
  %917 = vmatprep.subr.bf16.mxu0 0
  %918 = vmatpush1.bf16.msra.mxu0 0
  %919 = vmatprep.subr.bf16.mxu0 0
  %920 = vmatpush1.bf16.msra.mxu0 0
  %921 = vmatprep.subr.bf16.mxu0 0
  %922 = vmatpush1.bf16.msra.mxu0 0
  %923 = vmatprep.subr.bf16.mxu0 0
  %924 = vmatpush1.bf16.msra.mxu0 0
  %925 = vmatprep.subr.bf16.mxu0 0
  %926 = vmatpush1.bf16.msra.mxu0 0
  %927 = vmatprep.subr.bf16.mxu0 0
  %928 = vmatpush1.bf16.msra.mxu0 0
  %929 = vmatprep.subr.bf16.mxu0 0
  %930 = vmatpush1.bf16.msra.mxu0 0
  %931 = vmatprep.subr.bf16.mxu0 0
  %932 = vmatpush1.bf16.msra.mxu0 0
  %933 = vmatprep.subr.bf16.mxu0 0
  %934 = vmatpush1.bf16.msra.mxu0 0
  %935 = vmatprep.subr.bf16.mxu0 0
  %936 = vmatpush1.bf16.msra.mxu0 0
  %937 = vmatprep.subr.bf16.mxu0 0
  %938 = vmatpush1.bf16.msra.mxu0 0
  %939 = vmatprep.subr.bf16.mxu0 0
  %940 = vmatpush1.bf16.msra.mxu0 0
  %941 = vmatprep.subr.bf16.mxu0 0
  %942 = vmatpush1.bf16.msra.mxu0 0
  %943 = vmatprep.subr.bf16.mxu0 0
  %944 = vmatpush1.bf16.msra.mxu0 0
  %945 = vmatprep.subr.bf16.mxu0 0
  %946 = vmatpush1.bf16.msra.mxu0 0
  %947 = vmatprep.mubr.bf16.mxu0 0
  %948 = vmatmul.mubr.bf16.gmra.mrb[0].mxu0 %v124
  %v949 = vpop.f32.mrb[0].mxu0
  %v950 = vadd.f32 0.0, %v949
  %v951 = vpop.f32.mrb[0].mxu0
  %v952 = vadd.f32 0.0, %v951
  %v953 = vpop.f32.mrb[0].mxu0
  %v954 = vadd.f32 0.0, %v953
  %v955 = vpop.f32.mrb[0].mxu0
  %v956 = vadd.f32 0.0, %v955
  %957 = vmatprep.mubr.bf16.mxu0 0
  %958 = vmatmul.mubr.bf16.gmra.mrb[0].mxu0 %v127
  %v959 = vpop.f32.mrb[0].mxu0
  %v960 = vadd.f32 0.0, %v959
  %v961 = vpop.f32.mrb[0].mxu0
  %v962 = vadd.f32 0.0, %v961
  %v963 = vpop.f32.mrb[0].mxu0
  %v964 = vadd.f32 0.0, %v963
  %v965 = vpop.f32.mrb[0].mxu0
  %v966 = vadd.f32 0.0, %v965
  %967 = vdwg.mxu0
  %968 = vmatprep.subr.bf16.mxu0 %v218
  %969 = vmatpush1.bf16.msra.mxu0 %v215
  %970 = vmatprep.subr.bf16.mxu0 0
  %971 = vmatpush1.bf16.msra.mxu0 0
  %972 = vmatprep.subr.bf16.mxu0 0
  %973 = vmatpush1.bf16.msra.mxu0 0
  %974 = vmatprep.subr.bf16.mxu0 0
  %975 = vmatpush1.bf16.msra.mxu0 0
  %976 = vmatprep.subr.bf16.mxu0 0
  %977 = vmatpush1.bf16.msra.mxu0 0
  %978 = vmatprep.subr.bf16.mxu0 0
  %979 = vmatpush1.bf16.msra.mxu0 0
  %980 = vmatprep.subr.bf16.mxu0 0
  %981 = vmatpush1.bf16.msra.mxu0 0
  %982 = vmatprep.subr.bf16.mxu0 0
  %983 = vmatpush1.bf16.msra.mxu0 0
  %984 = vmatprep.subr.bf16.mxu0 0
  %985 = vmatpush1.bf16.msra.mxu0 0
  %986 = vmatprep.subr.bf16.mxu0 0
  %987 = vmatpush1.bf16.msra.mxu0 0
  %988 = vmatprep.subr.bf16.mxu0 0
  %989 = vmatpush1.bf16.msra.mxu0 0
  %990 = vmatprep.subr.bf16.mxu0 0
  %991 = vmatpush1.bf16.msra.mxu0 0
  %992 = vmatprep.subr.bf16.mxu0 0
  %993 = vmatpush1.bf16.msra.mxu0 0
  %994 = vmatprep.subr.bf16.mxu0 0
  %995 = vmatpush1.bf16.msra.mxu0 0
  %996 = vmatprep.subr.bf16.mxu0 0
  %997 = vmatpush1.bf16.msra.mxu0 0
  %998 = vmatprep.subr.bf16.mxu0 0
  %999 = vmatpush1.bf16.msra.mxu0 0
  %1000 = vmatprep.mubr.bf16.mxu0 0
  %1001 = vmatmul.mubr.bf16.gmra.mrb[0].mxu0 %v124
  %v1002 = vpop.f32.mrb[0].mxu0
  %v1003 = vadd.f32 0.0, %v1002
  %v1004 = vpop.f32.mrb[0].mxu0
  %v1005 = vadd.f32 0.0, %v1004
  %v1006 = vpop.f32.mrb[0].mxu0
  %v1007 = vadd.f32 0.0, %v1006
  %v1008 = vpop.f32.mrb[0].mxu0
  %v1009 = vadd.f32 0.0, %v1008
  %1010 = vmatprep.mubr.bf16.mxu0 0
  %1011 = vmatmul.mubr.bf16.gmra.mrb[0].mxu0 %v127
  %v1012 = vpop.f32.mrb[0].mxu0
  %v1013 = vadd.f32 0.0, %v1012
  %v1014 = vpop.f32.mrb[0].mxu0
  %v1015 = vadd.f32 0.0, %v1014
  %v1016 = vpop.f32.mrb[0].mxu0
  %v1017 = vadd.f32 0.0, %v1016
  %v1018 = vpop.f32.mrb[0].mxu0
  %v1019 = vadd.f32 0.0, %v1018
  %1020 = vdwg.mxu0
  %1021 = vmatprep.subr.bf16.mxu0 %v224
  %1022 = vmatpush1.bf16.msra.mxu0 %v221
  %1023 = vmatprep.subr.bf16.mxu0 0
  %1024 = vmatpush1.bf16.msra.mxu0 0
  %1025 = vmatprep.subr.bf16.mxu0 0
  %1026 = vmatpush1.bf16.msra.mxu0 0
  %1027 = vmatprep.subr.bf16.mxu0 0
  %1028 = vmatpush1.bf16.msra.mxu0 0
  %1029 = vmatprep.subr.bf16.mxu0 0
  %1030 = vmatpush1.bf16.msra.mxu0 0
  %1031 = vmatprep.subr.bf16.mxu0 0
  %1032 = vmatpush1.bf16.msra.mxu0 0
  %1033 = vmatprep.subr.bf16.mxu0 0
  %1034 = vmatpush1.bf16.msra.mxu0 0
  %1035 = vmatprep.subr.bf16.mxu0 0
  %1036 = vmatpush1.bf16.msra.mxu0 0
  %1037 = vmatprep.subr.bf16.mxu0 0
  %1038 = vmatpush1.bf16.msra.mxu0 0
  %1039 = vmatprep.subr.bf16.mxu0 0
  %1040 = vmatpush1.bf16.msra.mxu0 0
  %1041 = vmatprep.subr.bf16.mxu0 0
  %1042 = vmatpush1.bf16.msra.mxu0 0
  %1043 = vmatprep.subr.bf16.mxu0 0
  %1044 = vmatpush1.bf16.msra.mxu0 0
  %1045 = vmatprep.subr.bf16.mxu0 0
  %1046 = vmatpush1.bf16.msra.mxu0 0
  %1047 = vmatprep.subr.bf16.mxu0 0
  %1048 = vmatpush1.bf16.msra.mxu0 0
  %1049 = vmatprep.subr.bf16.mxu0 0
  %1050 = vmatpush1.bf16.msra.mxu0 0
  %1051 = vmatprep.subr.bf16.mxu0 0
  %1052 = vmatpush1.bf16.msra.mxu0 0
  %1053 = vmatprep.mubr.bf16.mxu0 0
  %1054 = vmatmul.mubr.bf16.gmra.mrb[0].mxu0 %v124
  %v1055 = vpop.f32.mrb[0].mxu0
  %v1056 = vadd.f32 0.0, %v1055
  %v1057 = vpop.f32.mrb[0].mxu0
  %v1058 = vadd.f32 0.0, %v1057
  %v1059 = vpop.f32.mrb[0].mxu0
  %v1060 = vadd.f32 0.0, %v1059
  %v1061 = vpop.f32.mrb[0].mxu0
  %v1062 = vadd.f32 0.0, %v1061
  %1063 = vmatprep.mubr.bf16.mxu0 0
  %1064 = vmatmul.mubr.bf16.gmra.mrb[0].mxu0 %v127
  %v1065 = vpop.f32.mrb[0].mxu0
  %v1066 = vadd.f32 0.0, %v1065
  %v1067 = vpop.f32.mrb[0].mxu0
  %v1068 = vadd.f32 0.0, %v1067
  %v1069 = vpop.f32.mrb[0].mxu0
  %v1070 = vadd.f32 0.0, %v1069
  %v1071 = vpop.f32.mrb[0].mxu0
  %v1072 = vadd.f32 0.0, %v1071
  %1073 = vdwg.mxu0
  %1074 = vst [vmem:[%s2] sm:$0xff] %v261
  %1075 = vst [vmem:[%s2 + $0x8] sm:$0xff] %v263
  %1076 = vst [vmem:[%s2 + $0x10] sm:$0xff] %v314
  %1077 = vst [vmem:[%s2 + $0x18] sm:$0xff] %v316
  %1078 = vst [vmem:[%s2 + $0x20] sm:$0xff] %v367
  %1079 = vst [vmem:[%s2 + $0x28] sm:$0xff] %v369
  %1080 = vst [vmem:[%s2 + $0x30] sm:$0xff] %v420
  %1081 = vst [vmem:[%s2 + $0x38] sm:$0xff] %v422
  %1082 = vst [vmem:[%s2 + $0x40] sm:$0xff] %v473
  %1083 = vst [vmem:[%s2 + $0x48] sm:$0xff] %v475
  %1084 = vst [vmem:[%s2 + $0x50] sm:$0xff] %v526
  %1085 = vst [vmem:[%s2 + $0x58] sm:$0xff] %v528
  %1086 = vst [vmem:[%s2 + $0x60] sm:$0xff] %v579
  %1087 = vst [vmem:[%s2 + $0x68] sm:$0xff] %v581
  %1088 = vst [vmem:[%s2 + $0x70] sm:$0xff] %v632
  %1089 = vst [vmem:[%s2 + $0x78] sm:$0xff] %v634
  %1090 = vst [vmem:[%s2 + $0x80] sm:$0xff] %v685
  %1091 = vst [vmem:[%s2 + $0x88] sm:$0xff] %v687
  %1092 = vst [vmem:[%s2 + $0x90] sm:$0xff] %v738
  %1093 = vst [vmem:[%s2 + $0x98] sm:$0xff] %v740
  %1094 = vst [vmem:[%s2 + $0xa0] sm:$0xff] %v791
  %1095 = vst [vmem:[%s2 + $0xa8] sm:$0xff] %v793
  %1096 = vst [vmem:[%s2 + $0xb0] sm:$0xff] %v844
  %1097 = vst [vmem:[%s2 + $0xb8] sm:$0xff] %v846
  %1098 = vst [vmem:[%s2 + $0xc0] sm:$0xff] %v897
  %1099 = vst [vmem:[%s2 + $0xc8] sm:$0xff] %v899
  %1100 = vst [vmem:[%s2 + $0xd0] sm:$0xff] %v950
  %1101 = vst [vmem:[%s2 + $0xd8] sm:$0xff] %v952
  %1102 = vst [vmem:[%s2 + $0xe0] sm:$0xff] %v1003
  %1103 = vst [vmem:[%s2 + $0xe8] sm:$0xff] %v1005
  %1104 = vst [vmem:[%s2 + $0xf0] sm:$0xff] %v1056
  %1105 = vst [vmem:[%s2 + $0xf8] sm:$0xff] %v1058
  %1106 = vst [vmem:[%s2 + $0x100] sm:$0xff] %v265
  %1107 = vst [vmem:[%s2 + $0x108] sm:$0xff] %v267
  %1108 = vst [vmem:[%s2 + $0x110] sm:$0xff] %v318
  %1109 = vst [vmem:[%s2 + $0x118] sm:$0xff] %v320
  %1110 = vst [vmem:[%s2 + $0x120] sm:$0xff] %v371
  %1111 = vst [vmem:[%s2 + $0x128] sm:$0xff] %v373
  %1112 = vst [vmem:[%s2 + $0x130] sm:$0xff] %v424
  %1113 = vst [vmem:[%s2 + $0x138] sm:$0xff] %v426
  %1114 = vst [vmem:[%s2 + $0x140] sm:$0xff] %v477
  %1115 = vst [vmem:[%s2 + $0x148] sm:$0xff] %v479
  %1116 = vst [vmem:[%s2 + $0x150] sm:$0xff] %v530
  %1117 = vst [vmem:[%s2 + $0x158] sm:$0xff] %v532
  %1118 = vst [vmem:[%s2 + $0x160] sm:$0xff] %v583
  %1119 = vst [vmem:[%s2 + $0x168] sm:$0xff] %v585
  %1120 = vst [vmem:[%s2 + $0x170] sm:$0xff] %v636
  %1121 = vst [vmem:[%s2 + $0x178] sm:$0xff] %v638
  %1122 = vst [vmem:[%s2 + $0x180] sm:$0xff] %v689
  %1123 = vst [vmem:[%s2 + $0x188] sm:$0xff] %v691
  %1124 = vst [vmem:[%s2 + $0x190] sm:$0xff] %v742
  %1125 = vst [vmem:[%s2 + $0x198] sm:$0xff] %v744
  %1126 = vst [vmem:[%s2 + $0x1a0] sm:$0xff] %v795
  %1127 = vst [vmem:[%s2 + $0x1a8] sm:$0xff] %v797
  %1128 = vst [vmem:[%s2 + $0x1b0] sm:$0xff] %v848
  %1129 = vst [vmem:[%s2 + $0x1b8] sm:$0xff] %v850
  %1130 = vst [vmem:[%s2 + $0x1c0] sm:$0xff] %v901
  %1131 = vst [vmem:[%s2 + $0x1c8] sm:$0xff] %v903
  %1132 = vst [vmem:[%s2 + $0x1d0] sm:$0xff] %v954
  %1133 = vst [vmem:[%s2 + $0x1d8] sm:$0xff] %v956
  %1134 = vst [vmem:[%s2 + $0x1e0] sm:$0xff] %v1007
  %1135 = vst [vmem:[%s2 + $0x1e8] sm:$0xff] %v1009
  %1136 = vst [vmem:[%s2 + $0x1f0] sm:$0xff] %v1060
  %1137 = vst [vmem:[%s2 + $0x1f8] sm:$0xff] %v1062
  %1138 = vst [vmem:[%s2 + $0x200] sm:$0xff] %v271
  %1139 = vst [vmem:[%s2 + $0x208] sm:$0xff] %v273
  %1140 = vst [vmem:[%s2 + $0x210] sm:$0xff] %v324
  %1141 = vst [vmem:[%s2 + $0x218] sm:$0xff] %v326
  %1142 = vst [vmem:[%s2 + $0x220] sm:$0xff] %v377
  %1143 = vst [vmem:[%s2 + $0x228] sm:$0xff] %v379
  %1144 = vst [vmem:[%s2 + $0x230] sm:$0xff] %v430
  %1145 = vst [vmem:[%s2 + $0x238] sm:$0xff] %v432
  %1146 = vst [vmem:[%s2 + $0x240] sm:$0xff] %v483
  %1147 = vst [vmem:[%s2 + $0x248] sm:$0xff] %v485
  %1148 = vst [vmem:[%s2 + $0x250] sm:$0xff] %v536
  %1149 = vst [vmem:[%s2 + $0x258] sm:$0xff] %v538
  %1150 = vst [vmem:[%s2 + $0x260] sm:$0xff] %v589
  %1151 = vst [vmem:[%s2 + $0x268] sm:$0xff] %v591
  %1152 = vst [vmem:[%s2 + $0x270] sm:$0xff] %v642
  %1153 = vst [vmem:[%s2 + $0x278] sm:$0xff] %v644
  %1154 = vst [vmem:[%s2 + $0x280] sm:$0xff] %v695
  %1155 = vst [vmem:[%s2 + $0x288] sm:$0xff] %v697
  %1156 = vst [vmem:[%s2 + $0x290] sm:$0xff] %v748
  %1157 = vst [vmem:[%s2 + $0x298] sm:$0xff] %v750
  %1158 = vst [vmem:[%s2 + $0x2a0] sm:$0xff] %v801
  %1159 = vst [vmem:[%s2 + $0x2a8] sm:$0xff] %v803
  %1160 = vst [vmem:[%s2 + $0x2b0] sm:$0xff] %v854
  %1161 = vst [vmem:[%s2 + $0x2b8] sm:$0xff] %v856
  %1162 = vst [vmem:[%s2 + $0x2c0] sm:$0xff] %v907
  %1163 = vst [vmem:[%s2 + $0x2c8] sm:$0xff] %v909
  %1164 = vst [vmem:[%s2 + $0x2d0] sm:$0xff] %v960
  %1165 = vst [vmem:[%s2 + $0x2d8] sm:$0xff] %v962
  %1166 = vst [vmem:[%s2 + $0x2e0] sm:$0xff] %v1013
  %1167 = vst [vmem:[%s2 + $0x2e8] sm:$0xff] %v1015
  %1168 = vst [vmem:[%s2 + $0x2f0] sm:$0xff] %v1066
  %1169 = vst [vmem:[%s2 + $0x2f8] sm:$0xff] %v1068
  %1170 = vst [vmem:[%s2 + $0x300] sm:$0xff] %v275
  %1171 = vst [vmem:[%s2 + $0x308] sm:$0xff] %v277
  %1172 = vst [vmem:[%s2 + $0x310] sm:$0xff] %v328
  %1173 = vst [vmem:[%s2 + $0x318] sm:$0xff] %v330
  %1174 = vst [vmem:[%s2 + $0x320] sm:$0xff] %v381
  %1175 = vst [vmem:[%s2 + $0x328] sm:$0xff] %v383
  %1176 = vst [vmem:[%s2 + $0x330] sm:$0xff] %v434
  %1177 = vst [vmem:[%s2 + $0x338] sm:$0xff] %v436
  %1178 = vst [vmem:[%s2 + $0x340] sm:$0xff] %v487
  %1179 = vst [vmem:[%s2 + $0x348] sm:$0xff] %v489
  %1180 = vst [vmem:[%s2 + $0x350] sm:$0xff] %v540
  %1181 = vst [vmem:[%s2 + $0x358] sm:$0xff] %v542
  %1182 = vst [vmem:[%s2 + $0x360] sm:$0xff] %v593
  %1183 = vst [vmem:[%s2 + $0x368] sm:$0xff] %v595
  %1184 = vst [vmem:[%s2 + $0x370] sm:$0xff] %v646
  %1185 = vst [vmem:[%s2 + $0x378] sm:$0xff] %v648
  %1186 = vst [vmem:[%s2 + $0x380] sm:$0xff] %v699
  %1187 = vst [vmem:[%s2 + $0x388] sm:$0xff] %v701
  %1188 = vst [vmem:[%s2 + $0x390] sm:$0xff] %v752
  %1189 = vst [vmem:[%s2 + $0x398] sm:$0xff] %v754
  %1190 = vst [vmem:[%s2 + $0x3a0] sm:$0xff] %v805
  %1191 = vst [vmem:[%s2 + $0x3a8] sm:$0xff] %v807
  %1192 = vst [vmem:[%s2 + $0x3b0] sm:$0xff] %v858
  %1193 = vst [vmem:[%s2 + $0x3b8] sm:$0xff] %v860
  %1194 = vst [vmem:[%s2 + $0x3c0] sm:$0xff] %v911
  %1195 = vst [vmem:[%s2 + $0x3c8] sm:$0xff] %v913
  %1196 = vst [vmem:[%s2 + $0x3d0] sm:$0xff] %v964
  %1197 = vst [vmem:[%s2 + $0x3d8] sm:$0xff] %v966
  %1198 = vst [vmem:[%s2 + $0x3e0] sm:$0xff] %v1017
  %1199 = vst [vmem:[%s2 + $0x3e8] sm:$0xff] %v1019
  %1200 = vst [vmem:[%s2 + $0x3f0] sm:$0xff] %v1070
  %1201 = vst [vmem:[%s2 + $0x3f8] sm:$0xff] %v1072
  // Predicated region
  $region10: #{fcn_small_forward.23} parent=0 // pred_check
    _
  $region11: #{fcn_small_forward.23} parent=0 // pred_check_branch
    %1203 = sbr.rel (0) target = $region13
  $region12: #{fcn_small_forward.23} parent=0 // pred_region
    _
  $region13: #{fcn_small_forward.23} parent=0 // pred_fallthru
    _
  // Predicated region
  $region14: #{fcn_small_forward.23} parent=0 // pred_check
    _
  $region15: #{fcn_small_forward.23} parent=0 // pred_check_branch
    %1205 = sbr.rel (0) target = $region17
  $region16: #{fcn_small_forward.23} parent=0 // pred_region
    _
  $region17: #{fcn_small_forward.23} parent=0 // pred_fallthru
    _

// kernel: fcn_small_forward.31
$region0: #{fcn_small_forward.31}
  #allocation0 [shape = 'u32[]', space=smem, size = 0x4, offset = 0x4, fixed_abs, tag = 'smem constant byte address 0x4 - core index']
  #allocation1 [shape = 'u32[144,128]{1,0:T(1,128)}', space=vmem, size = 0x12000, scoped, tag = 'internal scratch']
  %s0 = inlined_call_operand.vmem [shape: bf16[2048,192], index: 0, kind: input, shape index: {}]
  %s1 = inlined_call_operand.vmem [shape: bf16[192,128], index: 1, kind: input, shape index: {}]
  %s2 = inlined_call_operand.vmem [shape: f32[1,128], index: 2, kind: input, shape index: {}]
  %s3 = inlined_call_operand.vmem [shape: f32[2048,128], index: 3, kind: output, shape index: {}]
  %s4 = sld [smem:[#allocation0]]
  $region45: #{fcn_small_forward.31} parent=0
    _
  %s6 = ssub.s32 1, %s4
  %s7 = scalar_select 0, %s6, %s4
  loop: start=0, step=1, limit=6
  $region2: #{fcn_small_forward.31} parent=0 // loop_pre_header
    _
  $region3: #{fcn_small_forward.31} parent=0 // loop_header
    %s9 = sphi 0, %s13
    %p10 = scmp.ge.s32.totalorder %s9, 6
    %s19 = sphi 0, %s21
    %s22 = sphi 0, %s19
    %s23 = sphi 0, %s22
    %s39 = sphi 0, %s23
    %s43 = sphi 0, %s43
    %s45 = sphi 0, %s43
    %s46 = sphi 0, %s45
    %s60 = sphi 0, %s46
    %s64 = sphi 0, %s64
    %s66 = sphi 0, %s64
    %s67 = sphi 0, %s66
    %s81 = sphi 0, %s67
    %s87 = sphi 0, %s89
    %s90 = sphi 0, %s87
    %s91 = sphi 0, %s90
    %s107 = sphi 0, %s91
  $region4: #{fcn_small_forward.31} parent=0 // loop_header_branch
    %12 = sbr.rel (%p10) target = $region8
  $region5: #{fcn_small_forward.31} parent=0 // loop_body
    %s14 = ssub.s32 %s9, 1
    %s15 = ssub.s32 %s9, 2
    %s16 = sadd.s32 %s9, 1
    %s17 = ssub.s32 %s9, %s16
    %p18 = scmp.eq.s32.totalorder %s17, 0
    %s20 = sadd.s32 %s19, 1
    %s21 = scalar_select %p18, %s19, %s20
    %p24 = pneg %p18
    %p25 = scmp.eq.s32.totalorder %s9, 3
    %p26 = por %p24, %p25
    %p27 = scmp.ne.s32.totalorder %s19, %s22
    %p28 = scmp.eq.s32.totalorder %s9, 0
    %p29 = por %p27, %p28
    %p30 = scmp.ne.s32.totalorder %s19, %s22
    %p31 = scmp.eq.s32.totalorder %s14, 3
    %p32 = por %p30, %p31
    %p33 = scmp.ne.s32.totalorder %s22, %s23
    %p34 = scmp.eq.s32.totalorder %s14, 0
    %p35 = por %p33, %p34
    %p36 = scmp.ne.s32.totalorder %s22, %s23
    %p37 = scmp.eq.s32.totalorder %s15, 3
    %p38 = por %p36, %p37
    %p40 = scmp.ne.s32.totalorder %s23, %s39
    %p41 = scmp.eq.s32.totalorder %s15, 0
    %p42 = por %p40, %p41
    %s44 = sadd.s32 %s43, 1
    %p47 = scmp.eq.s32.totalorder %s9, 3
    %p48 = scmp.ne.s32.totalorder %s43, %s45
    %p49 = scmp.eq.s32.totalorder %s9, 0
    %p50 = por %p48, %p49
    %p51 = scmp.ne.s32.totalorder %s43, %s45
    %p52 = scmp.eq.s32.totalorder %s14, 3
    %p53 = por %p51, %p52
    %p54 = scmp.ne.s32.totalorder %s45, %s46
    %p55 = scmp.eq.s32.totalorder %s14, 0
    %p56 = por %p54, %p55
    %p57 = scmp.ne.s32.totalorder %s45, %s46
    %p58 = scmp.eq.s32.totalorder %s15, 3
    %p59 = por %p57, %p58
    %p61 = scmp.ne.s32.totalorder %s46, %s60
    %p62 = scmp.eq.s32.totalorder %s15, 0
    %p63 = por %p61, %p62
    %s65 = sadd.s32 %s64, 1
    %p68 = scmp.eq.s32.totalorder %s9, 3
    %p69 = scmp.ne.s32.totalorder %s64, %s66
    %p70 = scmp.eq.s32.totalorder %s9, 0
    %p71 = por %p69, %p70
    %p72 = scmp.ne.s32.totalorder %s64, %s66
    %p73 = scmp.eq.s32.totalorder %s14, 3
    %p74 = por %p72, %p73
    %p75 = scmp.ne.s32.totalorder %s66, %s67
    %p76 = scmp.eq.s32.totalorder %s14, 0
    %p77 = por %p75, %p76
    %p78 = scmp.ne.s32.totalorder %s66, %s67
    %p79 = scmp.eq.s32.totalorder %s15, 3
    %p80 = por %p78, %p79
    %p82 = scmp.ne.s32.totalorder %s67, %s81
    %p83 = scmp.eq.s32.totalorder %s15, 0
    %p84 = por %p82, %p83
    %s85 = ssub.s32 %s9, %s16
    %p86 = scmp.eq.s32.totalorder %s85, 0
    %s88 = sadd.s32 %s87, 1
    %s89 = scalar_select %p86, %s87, %s88
    %p92 = pneg %p86
    %p93 = scmp.eq.s32.totalorder %s9, 3
    %p94 = por %p92, %p93
    %p95 = scmp.ne.s32.totalorder %s87, %s90
    %p96 = scmp.eq.s32.totalorder %s9, 0
    %p97 = por %p95, %p96
    %p98 = scmp.ne.s32.totalorder %s87, %s90
    %p99 = scmp.eq.s32.totalorder %s14, 3
    %p100 = por %p98, %p99
    %p101 = scmp.ne.s32.totalorder %s90, %s91
    %p102 = scmp.eq.s32.totalorder %s14, 0
    %p103 = por %p101, %p102
    %p104 = scmp.ne.s32.totalorder %s90, %s91
    %p105 = scmp.eq.s32.totalorder %s15, 3
    %p106 = por %p104, %p105
    %p108 = scmp.ne.s32.totalorder %s91, %s107
    %p109 = scmp.eq.s32.totalorder %s15, 0
    %p110 = por %p108, %p109
    %p111 = scmp.le.s32.totalorder 1, %s9
    %p112 = scmp.lt.s32.totalorder %s9, 5
    %p113 = pnand %p111, %p112
    %p114 = pneg %p113
    // Predicated region
    $region9: #{fcn_small_forward.31} parent=5 // pred_check
      _
    $region10: #{fcn_small_forward.31} parent=5 // pred_check_branch
      %116 = sbr.rel (%p113) target = $region12
    $region11: #{fcn_small_forward.31} parent=5 // pred_region
      %s117 = ssub.s32 %s9, 1
      // Predicated region
      $region13: #{fcn_small_forward.31} parent=11 // pred_check
        %p118 = pneg %p56
      $region14: #{fcn_small_forward.31} parent=11 // pred_check_branch
        %120 = sbr.rel (%p118) target = $region16
      $region15: #{fcn_small_forward.31} parent=11 // pred_region
        _
      $region16: #{fcn_small_forward.31} parent=11 // pred_fallthru
        _
      // Predicated region
      $region17: #{fcn_small_forward.31} parent=11 // pred_check
        %p121 = pneg %p77
      $region18: #{fcn_small_forward.31} parent=11 // pred_check_branch
        %123 = sbr.rel (%p121) target = $region20
      $region19: #{fcn_small_forward.31} parent=11 // pred_region
        _
      $region20: #{fcn_small_forward.31} parent=11 // pred_fallthru
        _
    $region12: #{fcn_small_forward.31} parent=5 // pred_fallthru
      _
    %p124 = scmp.lt.s32.totalorder %s9, 4
    // Predicated region
    $region21: #{fcn_small_forward.31} parent=5 // pred_check
      %p125 = pneg %p124
    $region22: #{fcn_small_forward.31} parent=5 // pred_check_branch
      %127 = sbr.rel (%p125) target = $region24
    $region23: #{fcn_small_forward.31} parent=5 // pred_region
      // Predicated region
      $region25: #{fcn_small_forward.31} parent=23 // pred_check
        %p128 = pneg %p29
      $region26: #{fcn_small_forward.31} parent=23 // pred_check_branch
        %130 = sbr.rel (%p128) target = $region28
      $region27: #{fcn_small_forward.31} parent=23 // pred_region
        %s131 = smul.u32 64, %s9
        %p132 = scmp.lt.s32.totalorder %s131, 255
        %s133 = scalar_select %p132, %s131, 255
        %s134 = smul.addr %s133, 2
        %s135 = smul.addr %s134, 4
        %s136 = scalar_lea.vmem %s0, %s135
        %s137 = smul.u32 64, %s9
      $region28: #{fcn_small_forward.31} parent=23 // pred_fallthru
        _
    $region24: #{fcn_small_forward.31} parent=5 // pred_fallthru
      _
    %p138 = scmp.le.s32.totalorder 1, %s9
    %p139 = scmp.lt.s32.totalorder %s9, 5
    %p140 = pnand %p138, %p139
    %p141 = pneg %p140
    // Predicated region
    $region29: #{fcn_small_forward.31} parent=5 // pred_check
      _
    $region30: #{fcn_small_forward.31} parent=5 // pred_check_branch
      %143 = sbr.rel (%p140) target = $region32
    $region31: #{fcn_small_forward.31} parent=5 // pred_region
      %s144 = ssub.s32 %s9, 1
      %s145 = smul.u32 64, %s14
      %p146 = scmp.lt.s32.totalorder %s145, 255
      %s147 = scalar_select %p146, %s145, 255
      %s148 = smul.addr %s147, 2
      %s149 = smul.addr %s148, 4
      %s150 = scalar_lea.vmem %s0, %s149
      %p151 = pneg %p35
      %p152 = pneg %p32
      %p153 = pneg %p56
      %p154 = pneg %p53
      %p155 = pneg %p77
      %p156 = pneg %p74
      %p157 = pneg %p103
      %p158 = pneg %p100
      %s159 = smul.u32 64, %s14
      %p160 = scmp.lt.s32.totalorder %s159, 255
      %s161 = scalar_select %p160, %s159, 255
      %s162 = smul.addr %s161, 8
      %s163 = scalar_lea.vmem %s3, %s162
      %s164 = smul.u32 64, %s14
      %p165 = scmp.lt.s32.totalorder %s164, 255
      %s166 = scalar_select %p165, %s164, 255
      %s167 = smul.addr %s166, 2
      %s168 = smul.addr %s167, 4
      %s169 = scalar_lea.vmem %s0, %s168
      %s170 = smul.u32 64, %s14
      %s171 = smul.u32 64, %s14
      %p172 = scmp.lt.s32.totalorder %s171, 255
      %s173 = scalar_select %p172, %s171, 255
      %s174 = smul.addr %s173, 8
      %s175 = scalar_lea.vmem %s3, %s174
      %s176 = smul.u32 64, %s14
      %v178 = vld [vmem:[%s169] sm:$0xff]
      %v179 = vld [vmem:[%s169 + $0x8] sm:$0xff]
      %v180 = vld [vmem:[%s169 + $0x10] sm:$0xff]
      %v181 = vld [vmem:[%s169 + $0x18] sm:$0xff]
      %v182 = vld [vmem:[%s169 + $0x20] sm:$0xff]
      %v183 = vld [vmem:[%s169 + $0x28] sm:$0xff]
      %v184 = vld [vmem:[%s169 + $0x30] sm:$0xff]
      %v185 = vld [vmem:[%s169 + $0x38] sm:$0xff]
      %v186 = vld [vmem:[%s169 + $0x40] sm:$0xff]
      %v187 = vld [vmem:[%s169 + $0x48] sm:$0xff]
      %v188 = vld [vmem:[%s169 + $0x50] sm:$0xff]
      %v189 = vld [vmem:[%s169 + $0x58] sm:$0xff]
      %v190 = vld [vmem:[%s169 + $0x60] sm:$0xff]
      %v191 = vld [vmem:[%s169 + $0x68] sm:$0xff]
      %v192 = vld [vmem:[%s169 + $0x70] sm:$0xff]
      %v193 = vld [vmem:[%s169 + $0x78] sm:$0xff]
      %v194 = vld [vmem:[%s169 + $0x80] sm:$0xff]
      %v195 = vld [vmem:[%s169 + $0x88] sm:$0xff]
      %v196 = vld [vmem:[%s169 + $0x90] sm:$0xff]
      %v197 = vld [vmem:[%s169 + $0x98] sm:$0xff]
      %v198 = vld [vmem:[%s169 + $0xa0] sm:$0xff]
      %v199 = vld [vmem:[%s169 + $0xa8] sm:$0xff]
      %v200 = vld [vmem:[%s169 + $0xb0] sm:$0xff]
      %v201 = vld [vmem:[%s169 + $0xb8] sm:$0xff]
      %v202 = vld [vmem:[%s169 + $0xc0] sm:$0xff]
      %v203 = vld [vmem:[%s169 + $0xc8] sm:$0xff]
      %v204 = vld [vmem:[%s169 + $0xd0] sm:$0xff]
      %v205 = vld [vmem:[%s169 + $0xd8] sm:$0xff]
      %v206 = vld [vmem:[%s169 + $0xe0] sm:$0xff]
      %v207 = vld [vmem:[%s169 + $0xe8] sm:$0xff]
      %v208 = vld [vmem:[%s169 + $0xf0] sm:$0xff]
      %v209 = vld [vmem:[%s169 + $0xf8] sm:$0xff]
      %v210 = vld [vmem:[%s169 + $0x100] sm:$0xff]
      %v211 = vld [vmem:[%s169 + $0x108] sm:$0xff]
      %v212 = vld [vmem:[%s169 + $0x110] sm:$0xff]
      %v213 = vld [vmem:[%s169 + $0x118] sm:$0xff]
      %v214 = vld [vmem:[%s169 + $0x120] sm:$0xff]
      %v215 = vld [vmem:[%s169 + $0x128] sm:$0xff]
      %v216 = vld [vmem:[%s169 + $0x130] sm:$0xff]
      %v217 = vld [vmem:[%s169 + $0x138] sm:$0xff]
      %v218 = vld [vmem:[%s169 + $0x140] sm:$0xff]
      %v219 = vld [vmem:[%s169 + $0x148] sm:$0xff]
      %v220 = vld [vmem:[%s169 + $0x150] sm:$0xff]
      %v221 = vld [vmem:[%s169 + $0x158] sm:$0xff]
      %v222 = vld [vmem:[%s169 + $0x160] sm:$0xff]
      %v223 = vld [vmem:[%s169 + $0x168] sm:$0xff]
      %v224 = vld [vmem:[%s169 + $0x170] sm:$0xff]
      %v225 = vld [vmem:[%s169 + $0x178] sm:$0xff]
      %v226 = vld [vmem:[%s169 + $0x180] sm:$0xff]
      %v227 = vld [vmem:[%s169 + $0x188] sm:$0xff]
      %v228 = vld [vmem:[%s169 + $0x190] sm:$0xff]
      %v229 = vld [vmem:[%s169 + $0x198] sm:$0xff]
      %v230 = vld [vmem:[%s169 + $0x1a0] sm:$0xff]
      %v231 = vld [vmem:[%s169 + $0x1a8] sm:$0xff]
      %v232 = vld [vmem:[%s169 + $0x1b0] sm:$0xff]
      %v233 = vld [vmem:[%s169 + $0x1b8] sm:$0xff]
      %v234 = vld [vmem:[%s169 + $0x1c0] sm:$0xff]
      %v235 = vld [vmem:[%s169 + $0x1c8] sm:$0xff]
      %v236 = vld [vmem:[%s169 + $0x1d0] sm:$0xff]
      %v237 = vld [vmem:[%s169 + $0x1d8] sm:$0xff]
      %v238 = vld [vmem:[%s169 + $0x1e0] sm:$0xff]
      %v239 = vld [vmem:[%s169 + $0x1e8] sm:$0xff]
      %v240 = vld [vmem:[%s169 + $0x1f0] sm:$0xff]
      %v241 = vld [vmem:[%s169 + $0x1f8] sm:$0xff]
      %v242 = vld [vmem:[%s1] sm:$0xf]
      %v243 = vld [vmem:[%s1 + $0x4] sm:$0xf]
      %v244 = vld [vmem:[%s1 + $0x8] sm:$0xf]
      %v245 = vld [vmem:[%s1 + $0xc] sm:$0xf]
      %v246 = vld [vmem:[%s1 + $0x10] sm:$0xf]
      %v247 = vld [vmem:[%s1 + $0x14] sm:$0xf]
      %v248 = vld [vmem:[%s1 + $0x18] sm:$0xf]
      %v249 = vld [vmem:[%s1 + $0x1c] sm:$0xf]
      %v250 = vld [vmem:[%s1 + $0x20] sm:$0xf]
      %v251 = vld [vmem:[%s1 + $0x24] sm:$0xf]
      %v252 = vld [vmem:[%s1 + $0x28] sm:$0xf]
      %v253 = vld [vmem:[%s1 + $0x2c] sm:$0xf]
      %v254 = vld [vmem:[%s1 + $0x30] sm:$0xf]
      %v255 = vld [vmem:[%s1 + $0x34] sm:$0xf]
      %v256 = vld [vmem:[%s1 + $0x38] sm:$0xf]
      %v257 = vld [vmem:[%s1 + $0x3c] sm:$0xf]
      %v258 = vld [vmem:[%s1 + $0x40] sm:$0xf]
      %v259 = vld [vmem:[%s1 + $0x44] sm:$0xf]
      %v260 = vld [vmem:[%s1 + $0x48] sm:$0xf]
      %v261 = vld [vmem:[%s1 + $0x4c] sm:$0xf]
      %v262 = vld [vmem:[%s1 + $0x50] sm:$0xf]
      %v263 = vld [vmem:[%s1 + $0x54] sm:$0xf]
      %v264 = vld [vmem:[%s1 + $0x58] sm:$0xf]
      %v265 = vld [vmem:[%s1 + $0x5c] sm:$0xf]
      %v266 = vld [vmem:[%s2] sm:$0x1]
      %v268 = vlaneseq
      %v269 = vshrl.u32 %v268, 7
      %v270 = vsub.s32 0, %v269
      %v271 = vrot.slane %v266, %v270
      %v337 = vunpack.c.l.b16 %v178
      %v338 = vunpack.c.h.b16 %v178
      %v339 = vunpack.c.l.b16 %v179
      %v340 = vunpack.c.h.b16 %v179
      %v341 = vunpack.c.l.b16 %v180
      %v342 = vunpack.c.h.b16 %v180
      %v343 = vunpack.c.l.b16 %v181
      %v344 = vunpack.c.h.b16 %v181
      %v345 = vunpack.c.l.b16 %v182
      %v346 = vunpack.c.h.b16 %v182
      %v347 = vunpack.c.l.b16 %v183
      %v348 = vunpack.c.h.b16 %v183
      %v349 = vunpack.c.l.b16 %v184
      %v350 = vunpack.c.h.b16 %v184
      %v351 = vunpack.c.l.b16 %v185
      %v352 = vunpack.c.h.b16 %v185
      %v353 = vunpack.c.l.b16 %v186
      %v354 = vunpack.c.h.b16 %v186
      %v355 = vunpack.c.l.b16 %v187
      %v356 = vunpack.c.h.b16 %v187
      %v357 = vunpack.c.l.b16 %v188
      %v358 = vunpack.c.h.b16 %v188
      %v359 = vunpack.c.l.b16 %v189
      %v360 = vunpack.c.h.b16 %v189
      %v361 = vunpack.c.l.b16 %v190
      %v362 = vunpack.c.h.b16 %v190
      %v363 = vunpack.c.l.b16 %v191
      %v364 = vunpack.c.h.b16 %v191
      %v365 = vunpack.c.l.b16 %v192
      %v366 = vunpack.c.h.b16 %v192
      %v367 = vunpack.c.l.b16 %v193
      %v368 = vunpack.c.h.b16 %v193
      %v369 = vunpack.c.l.b16 %v194
      %v370 = vunpack.c.h.b16 %v194
      %v371 = vunpack.c.l.b16 %v195
      %v372 = vunpack.c.h.b16 %v195
      %v373 = vunpack.c.l.b16 %v196
      %v374 = vunpack.c.h.b16 %v196
      %v375 = vunpack.c.l.b16 %v197
      %v376 = vunpack.c.h.b16 %v197
      %v377 = vunpack.c.l.b16 %v198
      %v378 = vunpack.c.h.b16 %v198
      %v379 = vunpack.c.l.b16 %v199
      %v380 = vunpack.c.h.b16 %v199
      %v381 = vunpack.c.l.b16 %v200
      %v382 = vunpack.c.h.b16 %v200
      %v383 = vunpack.c.l.b16 %v201
      %v384 = vunpack.c.h.b16 %v201
      %v385 = vunpack.c.l.b16 %v202
      %v386 = vunpack.c.h.b16 %v202
      %v387 = vunpack.c.l.b16 %v203
      %v388 = vunpack.c.h.b16 %v203
      %v389 = vunpack.c.l.b16 %v204
      %v390 = vunpack.c.h.b16 %v204
      %v391 = vunpack.c.l.b16 %v205
      %v392 = vunpack.c.h.b16 %v205
      %v393 = vunpack.c.l.b16 %v206
      %v394 = vunpack.c.h.b16 %v206
      %v395 = vunpack.c.l.b16 %v207
      %v396 = vunpack.c.h.b16 %v207
      %v397 = vunpack.c.l.b16 %v208
      %v398 = vunpack.c.h.b16 %v208
      %v399 = vunpack.c.l.b16 %v209
      %v400 = vunpack.c.h.b16 %v209
      %v401 = vunpack.c.l.b16 %v210
      %v402 = vunpack.c.h.b16 %v210
      %v403 = vunpack.c.l.b16 %v211
      %v404 = vunpack.c.h.b16 %v211
      %v405 = vunpack.c.l.b16 %v212
      %v406 = vunpack.c.h.b16 %v212
      %v407 = vunpack.c.l.b16 %v213
      %v408 = vunpack.c.h.b16 %v213
      %v409 = vunpack.c.l.b16 %v214
      %v410 = vunpack.c.h.b16 %v214
      %v411 = vunpack.c.l.b16 %v215
      %v412 = vunpack.c.h.b16 %v215
      %v413 = vunpack.c.l.b16 %v216
      %v414 = vunpack.c.h.b16 %v216
      %v415 = vunpack.c.l.b16 %v217
      %v416 = vunpack.c.h.b16 %v217
      %v417 = vunpack.c.l.b16 %v218
      %v418 = vunpack.c.h.b16 %v218
      %v419 = vunpack.c.l.b16 %v219
      %v420 = vunpack.c.h.b16 %v219
      %v421 = vunpack.c.l.b16 %v220
      %v422 = vunpack.c.h.b16 %v220
      %v423 = vunpack.c.l.b16 %v221
      %v424 = vunpack.c.h.b16 %v221
      %v425 = vunpack.c.l.b16 %v222
      %v426 = vunpack.c.h.b16 %v222
      %v427 = vunpack.c.l.b16 %v223
      %v428 = vunpack.c.h.b16 %v223
      %v429 = vunpack.c.l.b16 %v224
      %v430 = vunpack.c.h.b16 %v224
      %v431 = vunpack.c.l.b16 %v225
      %v432 = vunpack.c.h.b16 %v225
      %v433 = vunpack.c.l.b16 %v226
      %v434 = vunpack.c.h.b16 %v226
      %v435 = vunpack.c.l.b16 %v227
      %v436 = vunpack.c.h.b16 %v227
      %v437 = vunpack.c.l.b16 %v228
      %v438 = vunpack.c.h.b16 %v228
      %v439 = vunpack.c.l.b16 %v229
      %v440 = vunpack.c.h.b16 %v229
      %v441 = vunpack.c.l.b16 %v230
      %v442 = vunpack.c.h.b16 %v230
      %v443 = vunpack.c.l.b16 %v231
      %v444 = vunpack.c.h.b16 %v231
      %v445 = vunpack.c.l.b16 %v232
      %v446 = vunpack.c.h.b16 %v232
      %v447 = vunpack.c.l.b16 %v233
      %v448 = vunpack.c.h.b16 %v233
      %v449 = vunpack.c.l.b16 %v234
      %v450 = vunpack.c.h.b16 %v234
      %v451 = vunpack.c.l.b16 %v235
      %v452 = vunpack.c.h.b16 %v235
      %v453 = vunpack.c.l.b16 %v236
      %v454 = vunpack.c.h.b16 %v236
      %v455 = vunpack.c.l.b16 %v237
      %v456 = vunpack.c.h.b16 %v237
      %v457 = vunpack.c.l.b16 %v238
      %v458 = vunpack.c.h.b16 %v238
      %v459 = vunpack.c.l.b16 %v239
      %v460 = vunpack.c.h.b16 %v239
      %v461 = vunpack.c.l.b16 %v240
      %v462 = vunpack.c.h.b16 %v240
      %v463 = vunpack.c.l.b16 %v241
      %v464 = vunpack.c.h.b16 %v241
      %v465 = vpack.c.b16 %v339, %v337
      %v466 = vpack.c.b16 %v340, %v338
      %v467 = vpack.c.b16 %v343, %v341
      %v468 = vpack.c.b16 %v344, %v342
      %v469 = vpack.c.b16 %v347, %v345
      %v470 = vpack.c.b16 %v348, %v346
      %v471 = vpack.c.b16 %v351, %v349
      %v472 = vpack.c.b16 %v352, %v350
      %v473 = vpack.c.b16 %v355, %v353
      %v474 = vpack.c.b16 %v356, %v354
      %v475 = vpack.c.b16 %v359, %v357
      %v476 = vpack.c.b16 %v360, %v358
      %v477 = vpack.c.b16 %v363, %v361
      %v478 = vpack.c.b16 %v364, %v362
      %v479 = vpack.c.b16 %v367, %v365
      %v480 = vpack.c.b16 %v368, %v366
      %v481 = vpack.c.b16 %v371, %v369
      %v482 = vpack.c.b16 %v372, %v370
      %v483 = vpack.c.b16 %v375, %v373
      %v484 = vpack.c.b16 %v376, %v374
      %v485 = vpack.c.b16 %v379, %v377
      %v486 = vpack.c.b16 %v380, %v378
      %v487 = vpack.c.b16 %v383, %v381
      %v488 = vpack.c.b16 %v384, %v382
      %v489 = vpack.c.b16 %v387, %v385
      %v490 = vpack.c.b16 %v388, %v386
      %v491 = vpack.c.b16 %v391, %v389
      %v492 = vpack.c.b16 %v392, %v390
      %v493 = vpack.c.b16 %v395, %v393
      %v494 = vpack.c.b16 %v396, %v394
      %v495 = vpack.c.b16 %v399, %v397
      %v496 = vpack.c.b16 %v400, %v398
      %v497 = vpack.c.b16 %v403, %v401
      %v498 = vpack.c.b16 %v404, %v402
      %v499 = vpack.c.b16 %v407, %v405
      %v500 = vpack.c.b16 %v408, %v406
      %v501 = vpack.c.b16 %v411, %v409
      %v502 = vpack.c.b16 %v412, %v410
      %v503 = vpack.c.b16 %v415, %v413
      %v504 = vpack.c.b16 %v416, %v414
      %v505 = vpack.c.b16 %v419, %v417
      %v506 = vpack.c.b16 %v420, %v418
      %v507 = vpack.c.b16 %v423, %v421
      %v508 = vpack.c.b16 %v424, %v422
      %v509 = vpack.c.b16 %v427, %v425
      %v510 = vpack.c.b16 %v428, %v426
      %v511 = vpack.c.b16 %v431, %v429
      %v512 = vpack.c.b16 %v432, %v430
      %v513 = vpack.c.b16 %v435, %v433
      %v514 = vpack.c.b16 %v436, %v434
      %v515 = vpack.c.b16 %v439, %v437
      %v516 = vpack.c.b16 %v440, %v438
      %v517 = vpack.c.b16 %v443, %v441
      %v518 = vpack.c.b16 %v444, %v442
      %v519 = vpack.c.b16 %v447, %v445
      %v520 = vpack.c.b16 %v448, %v446
      %v521 = vpack.c.b16 %v451, %v449
      %v522 = vpack.c.b16 %v452, %v450
      %v523 = vpack.c.b16 %v455, %v453
      %v524 = vpack.c.b16 %v456, %v454
      %v525 = vpack.c.b16 %v459, %v457
      %v526 = vpack.c.b16 %v460, %v458
      %v527 = vpack.c.b16 %v463, %v461
      %v528 = vpack.c.b16 %v464, %v462
      %v585 = vunpack.c.l.b16 %v242
      %v586 = vunpack.c.l.b16 %v243
      %v587 = vunpack.c.l.b16 %v244
      %v588 = vunpack.c.l.b16 %v245
      %v589 = vunpack.c.l.b16 %v246
      %v590 = vunpack.c.l.b16 %v247
      %v591 = vunpack.c.l.b16 %v248
      %v592 = vunpack.c.l.b16 %v249
      %v593 = vunpack.c.l.b16 %v250
      %v594 = vunpack.c.l.b16 %v251
      %v595 = vunpack.c.l.b16 %v252
      %v596 = vunpack.c.l.b16 %v253
      %v597 = vunpack.c.l.b16 %v254
      %v598 = vunpack.c.l.b16 %v255
      %v599 = vunpack.c.l.b16 %v256
      %v600 = vunpack.c.l.b16 %v257
      %v601 = vunpack.c.l.b16 %v258
      %v602 = vunpack.c.l.b16 %v259
      %v603 = vunpack.c.l.b16 %v260
      %v604 = vunpack.c.l.b16 %v261
      %v605 = vunpack.c.l.b16 %v262
      %v606 = vunpack.c.l.b16 %v263
      %v607 = vunpack.c.l.b16 %v264
      %v608 = vunpack.c.l.b16 %v265
      %v609 = vpack.c.b16 %v586, %v585
      %v610 = vpack.c.b16 %v588, %v587
      %v611 = vpack.c.b16 %v590, %v589
      %v612 = vpack.c.b16 %v592, %v591
      %v613 = vpack.c.b16 %v594, %v593
      %v614 = vpack.c.b16 %v596, %v595
      %v615 = vpack.c.b16 %v598, %v597
      %v616 = vpack.c.b16 %v600, %v599
      %v617 = vpack.c.b16 %v602, %v601
      %v618 = vpack.c.b16 %v604, %v603
      %v619 = vpack.c.b16 %v606, %v605
      %v620 = vpack.c.b16 %v608, %v607
      %vm633 = vcmask 523264
      %v635 = vsel %vm633, %v466, 0
      %v638 = vsel %vm633, %v468, 0
      %v641 = vsel %vm633, %v470, 0
      %v644 = vsel %vm633, %v472, 0
      %v647 = vsel %vm633, %v474, 0
      %v650 = vsel %vm633, %v476, 0
      %v653 = vsel %vm633, %v478, 0
      %v656 = vsel %vm633, %v480, 0
      %v659 = vsel %vm633, %v482, 0
      %v662 = vsel %vm633, %v484, 0
      %v665 = vsel %vm633, %v486, 0
      %v668 = vsel %vm633, %v488, 0
      %v671 = vsel %vm633, %v490, 0
      %v674 = vsel %vm633, %v492, 0
      %v677 = vsel %vm633, %v494, 0
      %v680 = vsel %vm633, %v496, 0
      %v683 = vsel %vm633, %v498, 0
      %v686 = vsel %vm633, %v500, 0
      %v689 = vsel %vm633, %v502, 0
      %v692 = vsel %vm633, %v504, 0
      %v695 = vsel %vm633, %v506, 0
      %v698 = vsel %vm633, %v508, 0
      %v701 = vsel %vm633, %v510, 0
      %v704 = vsel %vm633, %v512, 0
      %v707 = vsel %vm633, %v514, 0
      %v710 = vsel %vm633, %v516, 0
      %v713 = vsel %vm633, %v518, 0
      %v716 = vsel %vm633, %v520, 0
      %v719 = vsel %vm633, %v522, 0
      %v722 = vsel %vm633, %v524, 0
      %v725 = vsel %vm633, %v526, 0
      %v728 = vsel %vm633, %v528, 0
      %730 = vmatprep.subr.bf16.mxu0 0
      %731 = vmatpush1.bf16.msra.mxu0 %v609
      %732 = vmatprep.subr.bf16.mxu0 0
      %733 = vmatpush1.bf16.msra.mxu0 %v610
      %734 = vmatprep.subr.bf16.mxu0 0
      %735 = vmatpush1.bf16.msra.mxu0 %v611
      %736 = vmatprep.subr.bf16.mxu0 0
      %737 = vmatpush1.bf16.msra.mxu0 %v612
      %738 = vmatprep.subr.bf16.mxu0 0
      %739 = vmatpush1.bf16.msra.mxu0 %v613
      %740 = vmatprep.subr.bf16.mxu0 0
      %741 = vmatpush1.bf16.msra.mxu0 %v614
      %742 = vmatprep.subr.bf16.mxu0 0
      %743 = vmatpush1.bf16.msra.mxu0 %v615
      %744 = vmatprep.subr.bf16.mxu0 0
      %745 = vmatpush1.bf16.msra.mxu0 %v616
      %746 = vmatprep.subr.bf16.mxu0 0
      %747 = vmatpush1.bf16.msra.mxu0 %v617
      %748 = vmatprep.subr.bf16.mxu0 0
      %749 = vmatpush1.bf16.msra.mxu0 %v618
      %750 = vmatprep.subr.bf16.mxu0 0
      %751 = vmatpush1.bf16.msra.mxu0 %v619
      %752 = vmatprep.subr.bf16.mxu0 0
      %753 = vmatpush1.bf16.msra.mxu0 %v620
      %754 = vmatprep.subr.bf16.mxu0 0
      %755 = vmatpush1.bf16.msra.mxu0 0
      %756 = vmatprep.subr.bf16.mxu0 0
      %757 = vmatpush1.bf16.msra.mxu0 0
      %758 = vmatprep.subr.bf16.mxu0 0
      %759 = vmatpush1.bf16.msra.mxu0 0
      %760 = vmatprep.subr.bf16.mxu0 0
      %761 = vmatpush1.bf16.msra.mxu0 0
      %762 = vmatprep.mubr.bf16.mxu0 %v635
      %763 = vmatmul.mubr.bf16.gmra.mrb[0].mxu0 %v465
      %v764 = vpop.f32.mrb[0].mxu0
      %v765 = vadd.f32 %v271, %v764
      %v766 = vpop.f32.mrb[0].mxu0
      %v767 = vpop.f32.mrb[0].mxu0
      %v768 = vadd.f32 %v271, %v767
      %v769 = vpop.f32.mrb[0].mxu0
      %770 = vmatprep.mubr.bf16.mxu0 %v638
      %771 = vmatmul.mubr.bf16.gmra.mrb[0].mxu0 %v467
      %v772 = vpop.f32.mrb[0].mxu0
      %v773 = vadd.f32 %v271, %v772
      %v774 = vpop.f32.mrb[0].mxu0
      %v775 = vpop.f32.mrb[0].mxu0
      %v776 = vadd.f32 %v271, %v775
      %v777 = vpop.f32.mrb[0].mxu0
      %778 = vmatprep.mubr.bf16.mxu0 %v641
      %779 = vmatmul.mubr.bf16.gmra.mrb[0].mxu0 %v469
      %v780 = vpop.f32.mrb[0].mxu0
      %v781 = vadd.f32 %v271, %v780
      %v782 = vpop.f32.mrb[0].mxu0
      %v783 = vpop.f32.mrb[0].mxu0
      %v784 = vadd.f32 %v271, %v783
      %v785 = vpop.f32.mrb[0].mxu0
      %786 = vmatprep.mubr.bf16.mxu0 %v644
      %787 = vmatmul.mubr.bf16.gmra.mrb[0].mxu0 %v471
      %v788 = vpop.f32.mrb[0].mxu0
      %v789 = vadd.f32 %v271, %v788
      %v790 = vpop.f32.mrb[0].mxu0
      %v791 = vpop.f32.mrb[0].mxu0
      %v792 = vadd.f32 %v271, %v791
      %v793 = vpop.f32.mrb[0].mxu0
      %794 = vmatprep.mubr.bf16.mxu0 %v647
      %795 = vmatmul.mubr.bf16.gmra.mrb[0].mxu0 %v473
      %v796 = vpop.f32.mrb[0].mxu0
      %v797 = vadd.f32 %v271, %v796
      %v798 = vpop.f32.mrb[0].mxu0
      %v799 = vpop.f32.mrb[0].mxu0
      %v800 = vadd.f32 %v271, %v799
      %v801 = vpop.f32.mrb[0].mxu0
      %802 = vmatprep.mubr.bf16.mxu0 %v650
      %803 = vmatmul.mubr.bf16.gmra.mrb[0].mxu0 %v475
      %v804 = vpop.f32.mrb[0].mxu0
      %v805 = vadd.f32 %v271, %v804
      %v806 = vpop.f32.mrb[0].mxu0
      %v807 = vpop.f32.mrb[0].mxu0
      %v808 = vadd.f32 %v271, %v807
      %v809 = vpop.f32.mrb[0].mxu0
      %810 = vmatprep.mubr.bf16.mxu0 %v653
      %811 = vmatmul.mubr.bf16.gmra.mrb[0].mxu0 %v477
      %v812 = vpop.f32.mrb[0].mxu0
      %v813 = vadd.f32 %v271, %v812
      %v814 = vpop.f32.mrb[0].mxu0
      %v815 = vpop.f32.mrb[0].mxu0
      %v816 = vadd.f32 %v271, %v815
      %v817 = vpop.f32.mrb[0].mxu0
      %818 = vmatprep.mubr.bf16.mxu0 %v656
      %819 = vmatmul.mubr.bf16.gmra.mrb[0].mxu0 %v479
      %v820 = vpop.f32.mrb[0].mxu0
      %v821 = vadd.f32 %v271, %v820
      %v822 = vpop.f32.mrb[0].mxu0
      %v823 = vpop.f32.mrb[0].mxu0
      %v824 = vadd.f32 %v271, %v823
      %v825 = vpop.f32.mrb[0].mxu0
      %826 = vmatprep.mubr.bf16.mxu0 %v659
      %827 = vmatmul.mubr.bf16.gmra.mrb[0].mxu0 %v481
      %v828 = vpop.f32.mrb[0].mxu0
      %v829 = vadd.f32 %v271, %v828
      %v830 = vpop.f32.mrb[0].mxu0
      %v831 = vpop.f32.mrb[0].mxu0
      %v832 = vadd.f32 %v271, %v831
      %v833 = vpop.f32.mrb[0].mxu0
      %834 = vmatprep.mubr.bf16.mxu0 %v662
      %835 = vmatmul.mubr.bf16.gmra.mrb[0].mxu0 %v483
      %v836 = vpop.f32.mrb[0].mxu0
      %v837 = vadd.f32 %v271, %v836
      %v838 = vpop.f32.mrb[0].mxu0
      %v839 = vpop.f32.mrb[0].mxu0
      %v840 = vadd.f32 %v271, %v839
      %v841 = vpop.f32.mrb[0].mxu0
      %842 = vmatprep.mubr.bf16.mxu0 %v665
      %843 = vmatmul.mubr.bf16.gmra.mrb[0].mxu0 %v485
      %v844 = vpop.f32.mrb[0].mxu0
      %v845 = vadd.f32 %v271, %v844
      %v846 = vpop.f32.mrb[0].mxu0
      %v847 = vpop.f32.mrb[0].mxu0
      %v848 = vadd.f32 %v271, %v847
      %v849 = vpop.f32.mrb[0].mxu0
      %850 = vmatprep.mubr.bf16.mxu0 %v668
      %851 = vmatmul.mubr.bf16.gmra.mrb[0].mxu0 %v487
      %v852 = vpop.f32.mrb[0].mxu0
      %v853 = vadd.f32 %v271, %v852
      %v854 = vpop.f32.mrb[0].mxu0
      %v855 = vpop.f32.mrb[0].mxu0
      %v856 = vadd.f32 %v271, %v855
      %v857 = vpop.f32.mrb[0].mxu0
      %858 = vmatprep.mubr.bf16.mxu0 %v671
      %859 = vmatmul.mubr.bf16.gmra.mrb[0].mxu0 %v489
      %v860 = vpop.f32.mrb[0].mxu0
      %v861 = vadd.f32 %v271, %v860
      %v862 = vpop.f32.mrb[0].mxu0
      %v863 = vpop.f32.mrb[0].mxu0
      %v864 = vadd.f32 %v271, %v863
      %v865 = vpop.f32.mrb[0].mxu0
      %866 = vmatprep.mubr.bf16.mxu0 %v674
      %867 = vmatmul.mubr.bf16.gmra.mrb[0].mxu0 %v491
      %v868 = vpop.f32.mrb[0].mxu0
      %v869 = vadd.f32 %v271, %v868
      %v870 = vpop.f32.mrb[0].mxu0
      %v871 = vpop.f32.mrb[0].mxu0
      %v872 = vadd.f32 %v271, %v871
      %v873 = vpop.f32.mrb[0].mxu0
      %874 = vmatprep.mubr.bf16.mxu0 %v677
      %875 = vmatmul.mubr.bf16.gmra.mrb[0].mxu0 %v493
      %v876 = vpop.f32.mrb[0].mxu0
      %v877 = vadd.f32 %v271, %v876
      %v878 = vpop.f32.mrb[0].mxu0
      %v879 = vpop.f32.mrb[0].mxu0
      %v880 = vadd.f32 %v271, %v879
      %v881 = vpop.f32.mrb[0].mxu0
      %882 = vmatprep.mubr.bf16.mxu0 %v680
      %883 = vmatmul.mubr.bf16.gmra.mrb[0].mxu0 %v495
      %v884 = vpop.f32.mrb[0].mxu0
      %v885 = vadd.f32 %v271, %v884
      %v886 = vpop.f32.mrb[0].mxu0
      %v887 = vpop.f32.mrb[0].mxu0
      %v888 = vadd.f32 %v271, %v887
      %v889 = vpop.f32.mrb[0].mxu0
      %890 = vmatprep.mubr.bf16.mxu0 %v683
      %891 = vmatmul.mubr.bf16.gmra.mrb[0].mxu0 %v497
      %v892 = vpop.f32.mrb[0].mxu0
      %v893 = vadd.f32 %v271, %v892
      %v894 = vpop.f32.mrb[0].mxu0
      %v895 = vpop.f32.mrb[0].mxu0
      %v896 = vadd.f32 %v271, %v895
      %v897 = vpop.f32.mrb[0].mxu0
      %898 = vmatprep.mubr.bf16.mxu0 %v686
      %899 = vmatmul.mubr.bf16.gmra.mrb[0].mxu0 %v499
      %v900 = vpop.f32.mrb[0].mxu0
      %v901 = vadd.f32 %v271, %v900
      %v902 = vpop.f32.mrb[0].mxu0
      %v903 = vpop.f32.mrb[0].mxu0
      %v904 = vadd.f32 %v271, %v903
      %v905 = vpop.f32.mrb[0].mxu0
      %906 = vmatprep.mubr.bf16.mxu0 %v689
      %907 = vmatmul.mubr.bf16.gmra.mrb[0].mxu0 %v501
      %v908 = vpop.f32.mrb[0].mxu0
      %v909 = vadd.f32 %v271, %v908
      %v910 = vpop.f32.mrb[0].mxu0
      %v911 = vpop.f32.mrb[0].mxu0
      %v912 = vadd.f32 %v271, %v911
      %v913 = vpop.f32.mrb[0].mxu0
      %914 = vmatprep.mubr.bf16.mxu0 %v692
      %915 = vmatmul.mubr.bf16.gmra.mrb[0].mxu0 %v503
      %v916 = vpop.f32.mrb[0].mxu0
      %v917 = vadd.f32 %v271, %v916
      %v918 = vpop.f32.mrb[0].mxu0
      %v919 = vpop.f32.mrb[0].mxu0
      %v920 = vadd.f32 %v271, %v919
      %v921 = vpop.f32.mrb[0].mxu0
      %922 = vmatprep.mubr.bf16.mxu0 %v695
      %923 = vmatmul.mubr.bf16.gmra.mrb[0].mxu0 %v505
      %v924 = vpop.f32.mrb[0].mxu0
      %v925 = vadd.f32 %v271, %v924
      %v926 = vpop.f32.mrb[0].mxu0
      %v927 = vpop.f32.mrb[0].mxu0
      %v928 = vadd.f32 %v271, %v927
      %v929 = vpop.f32.mrb[0].mxu0
      %930 = vmatprep.mubr.bf16.mxu0 %v698
      %931 = vmatmul.mubr.bf16.gmra.mrb[0].mxu0 %v507
      %v932 = vpop.f32.mrb[0].mxu0
      %v933 = vadd.f32 %v271, %v932
      %v934 = vpop.f32.mrb[0].mxu0
      %v935 = vpop.f32.mrb[0].mxu0
      %v936 = vadd.f32 %v271, %v935
      %v937 = vpop.f32.mrb[0].mxu0
      %938 = vmatprep.mubr.bf16.mxu0 %v701
      %939 = vmatmul.mubr.bf16.gmra.mrb[0].mxu0 %v509
      %v940 = vpop.f32.mrb[0].mxu0
      %v941 = vadd.f32 %v271, %v940
      %v942 = vpop.f32.mrb[0].mxu0
      %v943 = vpop.f32.mrb[0].mxu0
      %v944 = vadd.f32 %v271, %v943
      %v945 = vpop.f32.mrb[0].mxu0
      %946 = vmatprep.mubr.bf16.mxu0 %v704
      %947 = vmatmul.mubr.bf16.gmra.mrb[0].mxu0 %v511
      %v948 = vpop.f32.mrb[0].mxu0
      %v949 = vadd.f32 %v271, %v948
      %v950 = vpop.f32.mrb[0].mxu0
      %v951 = vpop.f32.mrb[0].mxu0
      %v952 = vadd.f32 %v271, %v951
      %v953 = vpop.f32.mrb[0].mxu0
      %954 = vmatprep.mubr.bf16.mxu0 %v707
      %955 = vmatmul.mubr.bf16.gmra.mrb[0].mxu0 %v513
      %v956 = vpop.f32.mrb[0].mxu0
      %v957 = vadd.f32 %v271, %v956
      %v958 = vpop.f32.mrb[0].mxu0
      %v959 = vpop.f32.mrb[0].mxu0
      %v960 = vadd.f32 %v271, %v959
      %v961 = vpop.f32.mrb[0].mxu0
      %962 = vmatprep.mubr.bf16.mxu0 %v710
      %963 = vmatmul.mubr.bf16.gmra.mrb[0].mxu0 %v515
      %v964 = vpop.f32.mrb[0].mxu0
      %v965 = vadd.f32 %v271, %v964
      %v966 = vpop.f32.mrb[0].mxu0
      %v967 = vpop.f32.mrb[0].mxu0
      %v968 = vadd.f32 %v271, %v967
      %v969 = vpop.f32.mrb[0].mxu0
      %970 = vmatprep.mubr.bf16.mxu0 %v713
      %971 = vmatmul.mubr.bf16.gmra.mrb[0].mxu0 %v517
      %v972 = vpop.f32.mrb[0].mxu0
      %v973 = vadd.f32 %v271, %v972
      %v974 = vpop.f32.mrb[0].mxu0
      %v975 = vpop.f32.mrb[0].mxu0
      %v976 = vadd.f32 %v271, %v975
      %v977 = vpop.f32.mrb[0].mxu0
      %978 = vmatprep.mubr.bf16.mxu0 %v716
      %979 = vmatmul.mubr.bf16.gmra.mrb[0].mxu0 %v519
      %v980 = vpop.f32.mrb[0].mxu0
      %v981 = vadd.f32 %v271, %v980
      %v982 = vpop.f32.mrb[0].mxu0
      %v983 = vpop.f32.mrb[0].mxu0
      %v984 = vadd.f32 %v271, %v983
      %v985 = vpop.f32.mrb[0].mxu0
      %986 = vmatprep.mubr.bf16.mxu0 %v719
      %987 = vmatmul.mubr.bf16.gmra.mrb[0].mxu0 %v521
      %v988 = vpop.f32.mrb[0].mxu0
      %v989 = vadd.f32 %v271, %v988
      %v990 = vpop.f32.mrb[0].mxu0
      %v991 = vpop.f32.mrb[0].mxu0
      %v992 = vadd.f32 %v271, %v991
      %v993 = vpop.f32.mrb[0].mxu0
      %994 = vmatprep.mubr.bf16.mxu0 %v722
      %995 = vmatmul.mubr.bf16.gmra.mrb[0].mxu0 %v523
      %v996 = vpop.f32.mrb[0].mxu0
      %v997 = vadd.f32 %v271, %v996
      %v998 = vpop.f32.mrb[0].mxu0
      %v999 = vpop.f32.mrb[0].mxu0
      %v1000 = vadd.f32 %v271, %v999
      %v1001 = vpop.f32.mrb[0].mxu0
      %1002 = vmatprep.mubr.bf16.mxu0 %v725
      %1003 = vmatmul.mubr.bf16.gmra.mrb[0].mxu0 %v525
      %v1004 = vpop.f32.mrb[0].mxu0
      %v1005 = vadd.f32 %v271, %v1004
      %v1006 = vpop.f32.mrb[0].mxu0
      %v1007 = vpop.f32.mrb[0].mxu0
      %v1008 = vadd.f32 %v271, %v1007
      %v1009 = vpop.f32.mrb[0].mxu0
      %1010 = vmatprep.mubr.bf16.mxu0 %v728
      %1011 = vmatmul.mubr.bf16.gmra.mrb[0].mxu0 %v527
      %v1012 = vpop.f32.mrb[0].mxu0
      %v1013 = vadd.f32 %v271, %v1012
      %v1014 = vpop.f32.mrb[0].mxu0
      %v1015 = vpop.f32.mrb[0].mxu0
      %v1016 = vadd.f32 %v271, %v1015
      %v1017 = vpop.f32.mrb[0].mxu0
      %1018 = vdwg.mxu0
      %1019 = vst [vmem:[%s175] sm:$0xff] %v765
      %1020 = vst [vmem:[%s175 + $0x8] sm:$0xff] %v768
      %1021 = vst [vmem:[%s175 + $0x10] sm:$0xff] %v773
      %1022 = vst [vmem:[%s175 + $0x18] sm:$0xff] %v776
      %1023 = vst [vmem:[%s175 + $0x20] sm:$0xff] %v781
      %1024 = vst [vmem:[%s175 + $0x28] sm:$0xff] %v784
      %1025 = vst [vmem:[%s175 + $0x30] sm:$0xff] %v789
      %1026 = vst [vmem:[%s175 + $0x38] sm:$0xff] %v792
      %1027 = vst [vmem:[%s175 + $0x40] sm:$0xff] %v797
      %1028 = vst [vmem:[%s175 + $0x48] sm:$0xff] %v800
      %1029 = vst [vmem:[%s175 + $0x50] sm:$0xff] %v805
      %1030 = vst [vmem:[%s175 + $0x58] sm:$0xff] %v808
      %1031 = vst [vmem:[%s175 + $0x60] sm:$0xff] %v813
      %1032 = vst [vmem:[%s175 + $0x68] sm:$0xff] %v816
      %1033 = vst [vmem:[%s175 + $0x70] sm:$0xff] %v821
      %1034 = vst [vmem:[%s175 + $0x78] sm:$0xff] %v824
      %1035 = vst [vmem:[%s175 + $0x80] sm:$0xff] %v829
      %1036 = vst [vmem:[%s175 + $0x88] sm:$0xff] %v832
      %1037 = vst [vmem:[%s175 + $0x90] sm:$0xff] %v837
      %1038 = vst [vmem:[%s175 + $0x98] sm:$0xff] %v840
      %1039 = vst [vmem:[%s175 + $0xa0] sm:$0xff] %v845
      %1040 = vst [vmem:[%s175 + $0xa8] sm:$0xff] %v848
      %1041 = vst [vmem:[%s175 + $0xb0] sm:$0xff] %v853
      %1042 = vst [vmem:[%s175 + $0xb8] sm:$0xff] %v856
      %1043 = vst [vmem:[%s175 + $0xc0] sm:$0xff] %v861
      %1044 = vst [vmem:[%s175 + $0xc8] sm:$0xff] %v864
      %1045 = vst [vmem:[%s175 + $0xd0] sm:$0xff] %v869
      %1046 = vst [vmem:[%s175 + $0xd8] sm:$0xff] %v872
      %1047 = vst [vmem:[%s175 + $0xe0] sm:$0xff] %v877
      %1048 = vst [vmem:[%s175 + $0xe8] sm:$0xff] %v880
      %1049 = vst [vmem:[%s175 + $0xf0] sm:$0xff] %v885
      %1050 = vst [vmem:[%s175 + $0xf8] sm:$0xff] %v888
      %1051 = vst [vmem:[%s175 + $0x100] sm:$0xff] %v893
      %1052 = vst [vmem:[%s175 + $0x108] sm:$0xff] %v896
      %1053 = vst [vmem:[%s175 + $0x110] sm:$0xff] %v901
      %1054 = vst [vmem:[%s175 + $0x118] sm:$0xff] %v904
      %1055 = vst [vmem:[%s175 + $0x120] sm:$0xff] %v909
      %1056 = vst [vmem:[%s175 + $0x128] sm:$0xff] %v912
      %1057 = vst [vmem:[%s175 + $0x130] sm:$0xff] %v917
      %1058 = vst [vmem:[%s175 + $0x138] sm:$0xff] %v920
      %1059 = vst [vmem:[%s175 + $0x140] sm:$0xff] %v925
      %1060 = vst [vmem:[%s175 + $0x148] sm:$0xff] %v928
      %1061 = vst [vmem:[%s175 + $0x150] sm:$0xff] %v933
      %1062 = vst [vmem:[%s175 + $0x158] sm:$0xff] %v936
      %1063 = vst [vmem:[%s175 + $0x160] sm:$0xff] %v941
      %1064 = vst [vmem:[%s175 + $0x168] sm:$0xff] %v944
      %1065 = vst [vmem:[%s175 + $0x170] sm:$0xff] %v949
      %1066 = vst [vmem:[%s175 + $0x178] sm:$0xff] %v952
      %1067 = vst [vmem:[%s175 + $0x180] sm:$0xff] %v957
      %1068 = vst [vmem:[%s175 + $0x188] sm:$0xff] %v960
      %1069 = vst [vmem:[%s175 + $0x190] sm:$0xff] %v965
      %1070 = vst [vmem:[%s175 + $0x198] sm:$0xff] %v968
      %1071 = vst [vmem:[%s175 + $0x1a0] sm:$0xff] %v973
      %1072 = vst [vmem:[%s175 + $0x1a8] sm:$0xff] %v976
      %1073 = vst [vmem:[%s175 + $0x1b0] sm:$0xff] %v981
      %1074 = vst [vmem:[%s175 + $0x1b8] sm:$0xff] %v984
      %1075 = vst [vmem:[%s175 + $0x1c0] sm:$0xff] %v989
      %1076 = vst [vmem:[%s175 + $0x1c8] sm:$0xff] %v992
      %1077 = vst [vmem:[%s175 + $0x1d0] sm:$0xff] %v997
      %1078 = vst [vmem:[%s175 + $0x1d8] sm:$0xff] %v1000
      %1079 = vst [vmem:[%s175 + $0x1e0] sm:$0xff] %v1005
      %1080 = vst [vmem:[%s175 + $0x1e8] sm:$0xff] %v1008
      %1081 = vst [vmem:[%s175 + $0x1f0] sm:$0xff] %v1013
      %1082 = vst [vmem:[%s175 + $0x1f8] sm:$0xff] %v1016
      %s1083 = smul.u32 64, %s14
      %p1084 = scmp.lt.s32.totalorder %s1083, 255
      %s1085 = scalar_select %p1084, %s1083, 255
      %s1086 = smul.addr %s1085, 8
      %s1087 = scalar_lea.vmem %s3, %s1086
      // Predicated region
      $region33: #{fcn_small_forward.31} parent=31 // pred_check
        %p1088 = pneg %p100
      $region34: #{fcn_small_forward.31} parent=31 // pred_check_branch
        %1090 = sbr.rel (%p1088) target = $region36
      $region35: #{fcn_small_forward.31} parent=31 // pred_region
        %s1091 = smul.u32 64, %s14
      $region36: #{fcn_small_forward.31} parent=31 // pred_fallthru
        _
    $region32: #{fcn_small_forward.31} parent=5 // pred_fallthru
      _
    %p1092 = scmp.le.s32.totalorder 2, %s9
    // Predicated region
    $region37: #{fcn_small_forward.31} parent=5 // pred_check
      %p1093 = pneg %p1092
    $region38: #{fcn_small_forward.31} parent=5 // pred_check_branch
      %1095 = sbr.rel (%p1093) target = $region40
    $region39: #{fcn_small_forward.31} parent=5 // pred_region
      %s1096 = ssub.s32 %s9, 2
      // Predicated region
      $region41: #{fcn_small_forward.31} parent=39 // pred_check
        %p1097 = pneg %p106
      $region42: #{fcn_small_forward.31} parent=39 // pred_check_branch
        %1099 = sbr.rel (%p1097) target = $region44
      $region43: #{fcn_small_forward.31} parent=39 // pred_region
        %s1100 = smul.u32 64, %s15
        %p1101 = scmp.lt.s32.totalorder %s1100, 255
        %s1102 = scalar_select %p1101, %s1100, 255
        %s1103 = smul.addr %s1102, 8
        %s1104 = scalar_lea.vmem %s3, %s1103
      $region44: #{fcn_small_forward.31} parent=39 // pred_fallthru
        _
    $region40: #{fcn_small_forward.31} parent=5 // pred_fallthru
      _
  $region6: #{fcn_small_forward.31} parent=0 // loop_footer
    %s13 = sadd.s32 1, %s9
  $region7: #{fcn_small_forward.31} parent=0 // loop_footer_branch
    %8 = sbr.rel target = $region3
  $region8: #{fcn_small_forward.31} parent=0 // loop_exit
    _

</llo_original>
